<compile_context>
chip_gen: v7x
topology: tpu7x:2x2x1
jax: 0.10.0
libtpu: 0.0.40
codegen_flags: <defaults>
</compile_context>

<pallas_src>
import functools

import numpy as np
import jax
import jax.numpy as jnp
from jax import lax
from jax.experimental import pallas as pl
from jax.experimental.pallas import tpu as pltpu

# ----------------------------- problem sizes (small, consistent with module) --------------
DIM_X, DIM_Y = 2, 2                      # 4x4 sudoku
MAX_DIGIT = DIM_X * DIM_Y                # 4
NUM_NODES = MAX_DIGIT ** 2               # 16 cells
DP1 = MAX_DIGIT + 1                      # 5
EMBED = 16
HIDDEN = 32
BATCH = 2
ITERS = 2

LANE = 128                               # lane-dense output width (DP1 padded to 128)
NEG = -1e30                              # pad value for the final r-MLP bias (softmax-safe)


def determine_edges(dim_x, dim_y):
    """Sudoku constraint graph: peers in same row / column / box, excluding self."""
    md = dim_x * dim_y
    n = md * md
    edges = []
    for idx in range(n):
        r, c = idx // md, idx % md
        br, bc = r // dim_x, c // dim_y
        peers = set()
        for k in range(md):
            peers.add(r * md + k)        # same row
            peers.add(k * md + c)        # same column
        for rr in range(br * dim_x, (br + 1) * dim_x):
            for cc in range(bc * dim_y, (bc + 1) * dim_y):
                peers.add(rr * md + cc)  # same box
        peers.discard(idx)
        edges.append(sorted(peers))
    return np.asarray(edges, dtype=np.int32)   # (N, deg) -- uniform degree


_EDGES = determine_edges(DIM_X, DIM_Y)          # hoisted out of the forward
DEG = _EDGES.shape[1]                            # 7
ND = NUM_NODES * DEG                             # 112


@functools.lru_cache(maxsize=None)
def _graph_matrices_single():
    """Per-board 0/1 matrices (block-diagonal batch structure exploited in the kernel)."""
    n, deg = _EDGES.shape
    nd = n * deg
    rep = np.zeros((nd, n), np.float32)    # repeats the self row over its deg edges
    gath = np.zeros((nd, n), np.float32)   # gathers the neighbor rows
    summ = np.zeros((n, nd), np.float32)   # sums per-edge messages back to nodes
    for node in range(n):
        for d in range(deg):
            r = node * deg + d
            rep[r, node] = 1.0
            gath[r, _EDGES[node, d]] = 1.0
            summ[node, r] = 1.0
    return rep, gath, summ


# ----------------------------------- parameters -------------------------------------------
def _lin_init(key, fan_in, fan_out):
    k1, k2 = jax.random.split(key)
    w = jax.random.normal(k1, (fan_in, fan_out), jnp.float32) / np.sqrt(fan_in)
    b = jax.random.normal(k2, (fan_out,), jnp.float32) * 0.01
    return w, b


def _mlp_init(key, sizes):
    ks = jax.random.split(key, len(sizes) - 1)
    return [_lin_init(k, sizes[i], sizes[i + 1]) for i, k in enumerate(ks)]


def init_params(key):
    keys = jax.random.split(key, 9)
    return {
        "embed": _lin_init(keys[0], DP1, EMBED),
        "decoder": _lin_init(keys[1], EMBED, DP1),
        # TODO(synk): original MLP class not shown; assuming ReLU between layers, none after last.
        "input_mlp": _mlp_init(keys[2], [EMBED, HIDDEN, HIDDEN, HIDDEN]),
        "f": _mlp_init(keys[3], [2 * HIDDEN, HIDDEN, HIDDEN, HIDDEN]),
        "g_mlp": _mlp_init(keys[4], [2 * HIDDEN, HIDDEN, HIDDEN, HIDDEN]),
        "r": _mlp_init(keys[5], [HIDDEN, HIDDEN, HIDDEN, DP1]),
        "lstm_wih": jax.random.normal(keys[6], (HIDDEN, 4 * HIDDEN), jnp.float32) / np.sqrt(HIDDEN),
        "lstm_whh": jax.random.normal(keys[7], (HIDDEN, 4 * HIDDEN), jnp.float32) / np.sqrt(HIDDEN),
        "lstm_b": jax.random.normal(keys[8], (4 * HIDDEN,), jnp.float32) * 0.01,  # b_ih + b_hh folded
    }


def _round8(r):
    return -(-r // 8) * 8


def _pack_params(params):
    """Pack every weight / bias / graph constant into one (rows, 128) f32 slab.

    Each block sits at an 8-aligned row offset; unused lanes are zero except the final
    r-MLP bias, whose padded lanes are -1e30 so the in-kernel softmax over 128 lanes is
    exact for the first DP1 lanes.  Returns (slab, layout) with layout[name] = (off, rows, cols).
    """
    H = HIDDEN
    rep, gath, summ = _graph_matrices_single()
    items = []

    def add(name, arr):
        arr = jnp.asarray(arr, jnp.float32)
        if arr.ndim == 1:
            arr = arr.reshape(1, -1)
        items.append((name, arr))

    we, be = params["embed"]                       # (DP1, E), (E,)
    add("w_e", jnp.pad(we, ((0, LANE - we.shape[0]), (0, 0))))          # (128, E): rows DP1..127 zero
    add("b_e", be)
    wd, bd = params["decoder"]                     # (E, DP1), (DP1,)
    add("w_dec", jnp.pad(wd, ((0, 0), (0, LANE - wd.shape[1]))))        # (E, 128): lane-dense decode
    add("b_dec", jnp.pad(bd.reshape(1, -1), ((0, 0), (0, LANE - bd.shape[0]))))
    for li, (w, b) in enumerate(params["input_mlp"]):
        add(f"in_w{li}", w)
        add(f"in_b{li}", b)
    (wf1, bf1), (wf2, bf2), (wf3, bf3) = params["f"]
    add("f_w1s", wf1[:H]); add("f_w1n", wf1[H:]); add("f_b1", bf1)
    add("f_w2", wf2); add("f_b2", bf2)
    add("f_w3", wf3); add("f_b3", bf3)
    (wg1, bg1), (wg2, bg2), (wg3, bg3) = params["g_mlp"]
    add("g_w1x", wg1[:H]); add("g_w1m", wg1[H:]); add("g_b1", bg1)
    add("g_w2", wg2); add("g_b2", bg2)
    add("g_w3", wg3); add("g_b3", bg3)
    wih, whh, lb = params["lstm_wih"], params["lstm_whh"], params["lstm_b"]
    for gi, gname in enumerate("ifgo"):            # PyTorch gate order i, f, g, o
        sl = slice(gi * H, (gi + 1) * H)
        add(f"lstm_w{gname}", jnp.concatenate([wih[:, sl], whh[:, sl]], axis=0))   # (2H, H)
        add(f"lstm_b{gname}", lb[sl])
    (rw0, rb0), (rw1, rb1), (rw2, rb2) = params["r"]
    add("r_w0", rw0); add("r_b0", rb0)
    add("r_w1", rw1); add("r_b1", rb1)
    add("r_w2", jnp.pad(rw2, ((0, 0), (0, LANE - rw2.shape[1]))))       # (H, 128): lane-dense pre
    add("r_b2", jnp.concatenate(
        [rb2.reshape(1, -1), jnp.full((1, LANE - rb2.shape[0]), NEG, jnp.float32)], axis=1))
    add("rep", rep); add("gath", gath); add("summ", summ)

    layout = {}
    blocks = []
    off = 0
    for name, arr in items:
        r, c = arr.shape
        layout[name] = (off, r, c)
        blocks.append(jnp.pad(arr, ((0, _round8(r) - r), (0, LANE - c))))
        off += _round8(r)
    slab = jnp.concatenate(blocks, axis=0)         # (total_rows, 128) f32, one DMA
    return slab, layout


# ----------------------------------- fused Pallas kernel ----------------------------------
def _fused_rrn_kernel(grids_ref, c0_ref, slab_ref, dec_ref, pre_ref, out_ref,
                      *, layout, iters, batch):
    N = NUM_NODES
    nd = ND

    def W(name):
        off, r, c = layout[name]
        v = slab_ref[off:off + r, :]        # static, 8-aligned sublane slice; full 128 lanes
        return v[:, :c]                     # in-register lane slice (start 0)

    def dot(a, b):
        return jnp.dot(a, b, preferred_element_type=jnp.float32)

    def relu(v):
        return jnp.maximum(v, 0.0)

    # ---- prologue (runs once): embed -> decode, input MLP, state init --------------------
    emb = dot(grids_ref[...], W("w_e")) + W("b_e")                    # (BN, E)
    dec_ref[...] = dot(emb, W("w_dec")) + W("b_dec")                  # (BN, 128) lane-dense

    x = relu(dot(emb, W("in_w0")) + W("in_b0"))
    x = relu(dot(x, W("in_w1")) + W("in_b1"))
    x = dot(x, W("in_w2")) + W("in_b2")                               # X = input_mlp(emb), fixed

    h0 = x                                                            # H = X.clone()
    c0 = c0_ref[...]                                                  # g_lstm_c = randn(...)

    # ---- iteration recurrence as an in-kernel loop (h, c carried as values) --------------
    def body(it, carry):
        h, c = carry

        # message passing: sum_nbr f(cat(h_self, h_nbr)).  Split first-layer weights kill the
        # concat; per-board 0/1 matmuls (block-diagonal batch) do the self-repeat / gather /
        # sum on the MXU; neighbor path is project-then-gather.
        self_proj = dot(h, W("f_w1s"))                                # (BN, H)
        nbr_proj = dot(h, W("f_w1n"))                                 # (BN, H)
        rep, gath, summ = W("rep"), W("gath"), W("summ")
        edge_pre = []
        for b in range(batch):                                        # static unroll, B small
            sp = self_proj[b * N:(b + 1) * N, :]                      # (N, H)
            nb = nbr_proj[b * N:(b + 1) * N, :]
            edge_pre.append(dot(rep, sp) + dot(gath, nb))             # (N*deg, H)
        p = relu(jnp.concatenate(edge_pre, axis=0) + W("f_b1"))       # (B*N*deg, H), batched
        p = relu(dot(p, W("f_w2")) + W("f_b2"))
        p = dot(p, W("f_w3")) + W("f_b3")
        m = jnp.concatenate(
            [dot(summ, p[b * nd:(b + 1) * nd, :]) for b in range(batch)], axis=0)   # (BN, H)

        # g MLP on cat(X, M): concat replaced by split first-layer weights
        g = relu(dot(x, W("g_w1x")) + dot(m, W("g_w1m")) + W("g_b1"))
        g = relu(dot(g, W("g_w2")) + W("g_b2"))
        g = dot(g, W("g_w3")) + W("g_b3")

        # fused single-step LSTM: one K=2H matmul per gate with prestacked [[W_ih];[W_hh]]
        gh = jnp.concatenate([g, h], axis=-1)                         # (BN, 2H)
        i_g = jax.nn.sigmoid(dot(gh, W("lstm_wi")) + W("lstm_bi"))
        f_g = jax.nn.sigmoid(dot(gh, W("lstm_wf")) + W("lstm_bf"))
        g_g = jnp.tanh(dot(gh, W("lstm_wg")) + W("lstm_bg"))
        o_g = jax.nn.sigmoid(dot(gh, W("lstm_wo")) + W("lstm_bo"))
        c_new = f_g * c + i_g * g_g
        h_new = o_g * jnp.tanh(c_new)

        # output head: r MLP (lane-padded last layer) -> softmax -> re-embed -> decode
        pre = relu(dot(h_new, W("r_w0")) + W("r_b0"))
        pre = relu(dot(pre, W("r_w1")) + W("r_b1"))
        pre = dot(pre, W("r_w2")) + W("r_b2")                         # (BN, 128); pad lanes = -1e30
        pre_ref[it] = pre

        mx = jnp.max(pre, axis=-1, keepdims=True)
        e = jnp.exp(pre - mx)                                         # padded lanes underflow to 0
        sm = e * pl.reciprocal(jnp.sum(e, axis=-1, keepdims=True), approx=True)
        re_emb = dot(sm, W("w_e")) + W("b_e")
        out_ref[it] = dot(re_emb, W("w_dec")) + W("b_dec")            # (BN, 128) lane-dense

        return h_new, c_new

    lax.fori_loop(0, iters, body, (h0, c0), unroll=True)


# ----------------------------------- ReEmbedRRN forward -----------------------------------
@functools.partial(jax.jit, static_argnames=("iters",))
def re_embed_rrn_forward(params, grids, c0, iters):
    B, N, dp1 = grids.shape
    BN = B * N

    slab, layout = _pack_params(params)                               # one weight slab input
    grids_pad = jnp.pad(grids.reshape(BN, dp1).astype(jnp.float32),
                        ((0, 0), (0, LANE - dp1)))                    # lane-dense grids input
    c0_flat = c0.reshape(BN, HIDDEN).astype(jnp.float32)

    kernel = functools.partial(_fused_rrn_kernel, layout=layout, iters=iters, batch=B)

    dec, pre, outs = pl.pallas_call(
        kernel,
        out_shape=(
            jax.ShapeDtypeStruct((BN, LANE), jnp.float32),            # decode_output (padded)
            jax.ShapeDtypeStruct((iters, BN, LANE), jnp.float32),     # pre_outputs   (padded)
            jax.ShapeDtypeStruct((iters, BN, LANE), jnp.float32),     # outputs       (padded)
        ),
        grid=(1,),                                                    # single launch, single step
        in_specs=[
            pl.BlockSpec((BN, LANE), lambda i: (0, 0)),
            pl.BlockSpec((BN, HIDDEN), lambda i: (0, 0)),
            pl.BlockSpec(slab.shape, lambda i: (0, 0)),
        ],
        out_specs=(
            pl.BlockSpec((BN, LANE), lambda i: (0, 0)),
            pl.BlockSpec((iters, BN, LANE), lambda i: (0, 0, 0)),
            pl.BlockSpec((iters, BN, LANE), lambda i: (0, 0, 0)),
        ),
        compiler_params=pltpu.CompilerParams(
            dimension_semantics=("arbitrary",),
        ),
    )(grids_pad, c0_flat, slab)

    dec = dec[:, :dp1].reshape(B, N, dp1)
    pre = pre[:, :, :dp1].reshape(iters, B, N, dp1)
    outs = outs[:, :, :dp1].reshape(iters, B, N, dp1)
    return dec, pre, outs


# ----------------------------------------- main --------------------------------------------
if __name__ == "__main__":
    key = jax.random.PRNGKey(0)
    k_in, k_par, k_c = jax.random.split(key, 3)

    params = init_params(k_par)

    # one-hot sudoku grids: (batch, num_nodes, max_digit+1)
    digits = jax.random.randint(k_in, (BATCH, NUM_NODES), 0, MAX_DIGIT + 1)
    grids = jax.nn.one_hot(digits, DP1, dtype=jnp.float32)

    # initial LSTM cell state (torch.randn in the reference)
    c0 = jax.random.normal(k_c, (1, BATCH * NUM_NODES, HIDDEN), jnp.float32)

    dec, pre, outs = re_embed_rrn_forward(params, grids, c0, iters=ITERS)
    jax.block_until_ready((dec, pre, outs))

    assert dec.shape == (BATCH, NUM_NODES, DP1)
    assert pre.shape == (ITERS, BATCH, NUM_NODES, DP1)
    assert outs.shape == (ITERS, BATCH, NUM_NODES, DP1)
    assert bool(jnp.all(jnp.isfinite(dec)))
    assert bool(jnp.all(jnp.isfinite(pre)))
    assert bool(jnp.all(jnp.isfinite(outs)))
    print("KERNEL_OK")
</pallas_src>

<mosaic_0001>
module attributes {stable_mosaic.version = 11 : i64} {
  func.func @_fused_rrn_kernel(%arg0: i32, %arg1: memref<32x128xf32, #tpu.memory_space<vmem>>, %arg2: memref<32x32xf32, #tpu.memory_space<vmem>>, %arg3: memref<1216x128xf32, #tpu.memory_space<vmem>>, %arg4: memref<32x128xf32, #tpu.memory_space<vmem>>, %arg5: memref<2x32x128xf32, #tpu.memory_space<vmem>>, %arg6: memref<2x32x128xf32, #tpu.memory_space<vmem>>) attributes {dimension_semantics = [#tpu.dimension_semantics<arbitrary>], iteration_bounds = array<i64: 1>, scalar_prefetch = 0 : i64, scratch_operands = 0 : i64, tpu.core_type = #tpu.core_type<tc>, window_params = [{pipeline_mode = #tpu.pipeline_mode<synchronous>, transform_indices = @transform_0, window_bounds = array<i64: 32, 128>}, {pipeline_mode = #tpu.pipeline_mode<synchronous>, transform_indices = @transform_1, window_bounds = array<i64: 32, 32>}, {pipeline_mode = #tpu.pipeline_mode<synchronous>, transform_indices = @transform_2, window_bounds = array<i64: 1216, 128>}, {pipeline_mode = #tpu.pipeline_mode<synchronous>, transform_indices = @transform_3, window_bounds = array<i64: 32, 128>}, {pipeline_mode = #tpu.pipeline_mode<synchronous>, transform_indices = @transform_4, window_bounds = array<i64: 2, 32, 128>}, {pipeline_mode = #tpu.pipeline_mode<synchronous>, transform_indices = @transform_5, window_bounds = array<i64: 2, 32, 128>}]} {
    %c0 = arith.constant 0 : index
    %c0_0 = arith.constant 0 : index
    %0 = vector.load %arg1[%c0, %c0_0] : memref<32x128xf32, #tpu.memory_space<vmem>>, vector<32x128xf32>
    %c0_1 = arith.constant 0 : index
    %c0_2 = arith.constant 0 : index
    %1 = vector.load %arg3[%c0_1, %c0_2] : memref<1216x128xf32, #tpu.memory_space<vmem>>, vector<128x128xf32>
    %2 = vector.extract_strided_slice %1 {offsets = [0, 0], sizes = [128, 16], strides = [1, 1]} : vector<128x128xf32> to vector<128x16xf32>
    %cst = arith.constant dense<0.000000e+00> : vector<32x16xf32>
    %3 = tpu.matmul %0, %2, %cst {dimension_numbers = #tpu.dot_dimension_numbers<[1], [0], [0], [1], [0, 0, 1, 1], [], []>} : vector<32x128xf32>, vector<128x16xf32>, vector<32x16xf32> -> vector<32x16xf32>
    %c128 = arith.constant 128 : index
    %c0_3 = arith.constant 0 : index
    %4 = vector.load %arg3[%c128, %c0_3] : memref<1216x128xf32, #tpu.memory_space<vmem>>, vector<1x128xf32>
    %5 = vector.extract_strided_slice %4 {offsets = [0, 0], sizes = [1, 16], strides = [1, 1]} : vector<1x128xf32> to vector<1x16xf32>
    %6 = vector.broadcast %5 : vector<1x16xf32> to vector<32x16xf32>
    %7 = arith.addf %3, %6 : vector<32x16xf32>
    %c136 = arith.constant 136 : index
    %c0_4 = arith.constant 0 : index
    %8 = vector.load %arg3[%c136, %c0_4] : memref<1216x128xf32, #tpu.memory_space<vmem>>, vector<16x128xf32>
    %cst_5 = arith.constant dense<0.000000e+00> : vector<32x128xf32>
    %9 = tpu.matmul %7, %8, %cst_5 {dimension_numbers = #tpu.dot_dimension_numbers<[1], [0], [0], [1], [0, 0, 1, 1], [], []>} : vector<32x16xf32>, vector<16x128xf32>, vector<32x128xf32> -> vector<32x128xf32>
    %c152 = arith.constant 152 : index
    %c0_6 = arith.constant 0 : index
    %10 = vector.load %arg3[%c152, %c0_6] : memref<1216x128xf32, #tpu.memory_space<vmem>>, vector<1x128xf32>
    %11 = vector.broadcast %10 : vector<1x128xf32> to vector<32x128xf32>
    %12 = arith.addf %9, %11 : vector<32x128xf32>
    %c0_7 = arith.constant 0 : index
    %c0_8 = arith.constant 0 : index
    %13 = vector.load %arg4[%c0_7, %c0_8] : memref<32x128xf32, #tpu.memory_space<vmem>>, vector<32x128xf32>
    tpu.vector_store %arg4[%c0_7, %c0_8], %12 {strides = array<i32>} : memref<32x128xf32, #tpu.memory_space<vmem>>, vector<32x128xf32>,
    %c160 = arith.constant 160 : index
    %c0_9 = arith.constant 0 : index
    %14 = vector.load %arg3[%c160, %c0_9] : memref<1216x128xf32, #tpu.memory_space<vmem>>, vector<16x128xf32>
    %15 = vector.extract_strided_slice %14 {offsets = [0, 0], sizes = [16, 32], strides = [1, 1]} : vector<16x128xf32> to vector<16x32xf32>
    %cst_10 = arith.constant dense<0.000000e+00> : vector<32x32xf32>
    %16 = tpu.matmul %7, %15, %cst_10 {dimension_numbers = #tpu.dot_dimension_numbers<[1], [0], [0], [1], [0, 0, 1, 1], [], []>} : vector<32x16xf32>, vector<16x32xf32>, vector<32x32xf32> -> vector<32x32xf32>
    %c176 = arith.constant 176 : index
    %c0_11 = arith.constant 0 : index
    %17 = vector.load %arg3[%c176, %c0_11] : memref<1216x128xf32, #tpu.memory_space<vmem>>, vector<1x128xf32>
    %18 = vector.extract_strided_slice %17 {offsets = [0, 0], sizes = [1, 32], strides = [1, 1]} : vector<1x128xf32> to vector<1x32xf32>
    %19 = vector.broadcast %18 : vector<1x32xf32> to vector<32x32xf32>
    %20 = arith.addf %16, %19 : vector<32x32xf32>
    %cst_12 = arith.constant 0.000000e+00 : f32
    %21 = vector.broadcast %cst_12 : f32 to vector<32x32xf32>
    %22 = arith.maximumf %20, %21 : vector<32x32xf32>
    %c184 = arith.constant 184 : index
    %c0_13 = arith.constant 0 : index
    %23 = vector.load %arg3[%c184, %c0_13] : memref<1216x128xf32, #tpu.memory_space<vmem>>, vector<32x128xf32>
    %24 = vector.extract_strided_slice %23 {offsets = [0, 0], sizes = [32, 32], strides = [1, 1]} : vector<32x128xf32> to vector<32x32xf32>
    %cst_14 = arith.constant dense<0.000000e+00> : vector<32x32xf32>
    %25 = tpu.matmul %22, %24, %cst_14 {dimension_numbers = #tpu.dot_dimension_numbers<[1], [0], [0], [1], [0, 0, 1, 1], [], []>} : vector<32x32xf32>, vector<32x32xf32>, vector<32x32xf32> -> vector<32x32xf32>
    %c216 = arith.constant 216 : index
    %c0_15 = arith.constant 0 : index
    %26 = vector.load %arg3[%c216, %c0_15] : memref<1216x128xf32, #tpu.memory_space<vmem>>, vector<1x128xf32>
    %27 = vector.extract_strided_slice %26 {offsets = [0, 0], sizes = [1, 32], strides = [1, 1]} : vector<1x128xf32> to vector<1x32xf32>
    %28 = vector.broadcast %27 : vector<1x32xf32> to vector<32x32xf32>
    %29 = arith.addf %25, %28 : vector<32x32xf32>
    %cst_16 = arith.constant 0.000000e+00 : f32
    %30 = vector.broadcast %cst_16 : f32 to vector<32x32xf32>
    %31 = arith.maximumf %29, %30 : vector<32x32xf32>
    %c224 = arith.constant 224 : index
    %c0_17 = arith.constant 0 : index
    %32 = vector.load %arg3[%c224, %c0_17] : memref<1216x128xf32, #tpu.memory_space<vmem>>, vector<32x128xf32>
    %33 = vector.extract_strided_slice %32 {offsets = [0, 0], sizes = [32, 32], strides = [1, 1]} : vector<32x128xf32> to vector<32x32xf32>
    %cst_18 = arith.constant dense<0.000000e+00> : vector<32x32xf32>
    %34 = tpu.matmul %31, %33, %cst_18 {dimension_numbers = #tpu.dot_dimension_numbers<[1], [0], [0], [1], [0, 0, 1, 1], [], []>} : vector<32x32xf32>, vector<32x32xf32>, vector<32x32xf32> -> vector<32x32xf32>
    %c256 = arith.constant 256 : index
    %c0_19 = arith.constant 0 : index
    %35 = vector.load %arg3[%c256, %c0_19] : memref<1216x128xf32, #tpu.memory_space<vmem>>, vector<1x128xf32>
    %36 = vector.extract_strided_slice %35 {offsets = [0, 0], sizes = [1, 32], strides = [1, 1]} : vector<1x128xf32> to vector<1x32xf32>
    %37 = vector.broadcast %36 : vector<1x32xf32> to vector<32x32xf32>
    %38 = arith.addf %34, %37 : vector<32x32xf32>
    %c0_20 = arith.constant 0 : index
    %c0_21 = arith.constant 0 : index
    %39 = vector.load %arg2[%c0_20, %c0_21] : memref<32x32xf32, #tpu.memory_space<vmem>>, vector<32x32xf32>
    %c0_i32 = arith.constant 0 : i32
    %c264 = arith.constant 264 : index
    %c0_22 = arith.constant 0 : index
    %40 = vector.load %arg3[%c264, %c0_22] : memref<1216x128xf32, #tpu.memory_space<vmem>>, vector<32x128xf32>
    %41 = vector.extract_strided_slice %40 {offsets = [0, 0], sizes = [32, 32], strides = [1, 1]} : vector<32x128xf32> to vector<32x32xf32>
    %cst_23 = arith.constant dense<0.000000e+00> : vector<32x32xf32>
    %42 = tpu.matmul %38, %41, %cst_23 {dimension_numbers = #tpu.dot_dimension_numbers<[1], [0], [0], [1], [0, 0, 1, 1], [], []>} : vector<32x32xf32>, vector<32x32xf32>, vector<32x32xf32> -> vector<32x32xf32>
    %c296 = arith.constant 296 : index
    %c0_24 = arith.constant 0 : index
    %43 = vector.load %arg3[%c296, %c0_24] : memref<1216x128xf32, #tpu.memory_space<vmem>>, vector<32x128xf32>
    %44 = vector.extract_strided_slice %43 {offsets = [0, 0], sizes = [32, 32], strides = [1, 1]} : vector<32x128xf32> to vector<32x32xf32>
    %cst_25 = arith.constant dense<0.000000e+00> : vector<32x32xf32>
    %45 = tpu.matmul %38, %44, %cst_25 {dimension_numbers = #tpu.dot_dimension_numbers<[1], [0], [0], [1], [0, 0, 1, 1], [], []>} : vector<32x32xf32>, vector<32x32xf32>, vector<32x32xf32> -> vector<32x32xf32>
    %c976 = arith.constant 976 : index
    %c0_26 = arith.constant 0 : index
    %46 = vector.load %arg3[%c976, %c0_26] : memref<1216x128xf32, #tpu.memory_space<vmem>>, vector<112x128xf32>
    %47 = vector.extract_strided_slice %46 {offsets = [0, 0], sizes = [112, 16], strides = [1, 1]} : vector<112x128xf32> to vector<112x16xf32>
    %c1088 = arith.constant 1088 : index
    %c0_27 = arith.constant 0 : index
    %48 = vector.load %arg3[%c1088, %c0_27] : memref<1216x128xf32, #tpu.memory_space<vmem>>, vector<112x128xf32>
    %49 = vector.extract_strided_slice %48 {offsets = [0, 0], sizes = [112, 16], strides = [1, 1]} : vector<112x128xf32> to vector<112x16xf32>
    %c1200 = arith.constant 1200 : index
    %c0_28 = arith.constant 0 : index
    %50 = vector.load %arg3[%c1200, %c0_28] : memref<1216x128xf32, #tpu.memory_space<vmem>>, vector<16x128xf32>
    %51 = vector.extract_strided_slice %50 {offsets = [0, 0], sizes = [16, 112], strides = [1, 1]} : vector<16x128xf32> to vector<16x112xf32>
    %52 = vector.extract_strided_slice %42 {offsets = [0, 0], sizes = [16, 32], strides = [1, 1]} : vector<32x32xf32> to vector<16x32xf32>
    %53 = vector.extract_strided_slice %45 {offsets = [0, 0], sizes = [16, 32], strides = [1, 1]} : vector<32x32xf32> to vector<16x32xf32>
    %cst_29 = arith.constant dense<0.000000e+00> : vector<112x32xf32>
    %54 = tpu.matmul %47, %52, %cst_29 {dimension_numbers = #tpu.dot_dimension_numbers<[1], [0], [0], [1], [0, 0, 1, 1], [], []>} : vector<112x16xf32>, vector<16x32xf32>, vector<112x32xf32> -> vector<112x32xf32>
    %cst_30 = arith.constant dense<0.000000e+00> : vector<112x32xf32>
    %55 = tpu.matmul %49, %53, %cst_30 {dimension_numbers = #tpu.dot_dimension_numbers<[1], [0], [0], [1], [0, 0, 1, 1], [], []>} : vector<112x16xf32>, vector<16x32xf32>, vector<112x32xf32> -> vector<112x32xf32>
    %56 = arith.addf %54, %55 : vector<112x32xf32>
    %57 = vector.extract_strided_slice %42 {offsets = [16, 0], sizes = [16, 32], strides = [1, 1]} : vector<32x32xf32> to vector<16x32xf32>
    %58 = vector.extract_strided_slice %45 {offsets = [16, 0], sizes = [16, 32], strides = [1, 1]} : vector<32x32xf32> to vector<16x32xf32>
    %cst_31 = arith.constant dense<0.000000e+00> : vector<112x32xf32>
    %59 = tpu.matmul %47, %57, %cst_31 {dimension_numbers = #tpu.dot_dimension_numbers<[1], [0], [0], [1], [0, 0, 1, 1], [], []>} : vector<112x16xf32>, vector<16x32xf32>, vector<112x32xf32> -> vector<112x32xf32>
    %cst_32 = arith.constant dense<0.000000e+00> : vector<112x32xf32>
    %60 = tpu.matmul %49, %58, %cst_32 {dimension_numbers = #tpu.dot_dimension_numbers<[1], [0], [0], [1], [0, 0, 1, 1], [], []>} : vector<112x16xf32>, vector<16x32xf32>, vector<112x32xf32> -> vector<112x32xf32>
    %61 = arith.addf %59, %60 : vector<112x32xf32>
    %62 = tpu.concatenate %56, %61 in 0 : vector<112x32xf32>, vector<112x32xf32> -> vector<224x32xf32>
    %c328 = arith.constant 328 : index
    %c0_33 = arith.constant 0 : index
    %63 = vector.load %arg3[%c328, %c0_33] : memref<1216x128xf32, #tpu.memory_space<vmem>>, vector<1x128xf32>
    %64 = vector.extract_strided_slice %63 {offsets = [0, 0], sizes = [1, 32], strides = [1, 1]} : vector<1x128xf32> to vector<1x32xf32>
    %65 = vector.broadcast %64 : vector<1x32xf32> to vector<224x32xf32>
    %66 = arith.addf %62, %65 : vector<224x32xf32>
    %cst_34 = arith.constant 0.000000e+00 : f32
    %67 = vector.broadcast %cst_34 : f32 to vector<224x32xf32>
    %68 = arith.maximumf %66, %67 : vector<224x32xf32>
    %c336 = arith.constant 336 : index
    %c0_35 = arith.constant 0 : index
    %69 = vector.load %arg3[%c336, %c0_35] : memref<1216x128xf32, #tpu.memory_space<vmem>>, vector<32x128xf32>
    %70 = vector.extract_strided_slice %69 {offsets = [0, 0], sizes = [32, 32], strides = [1, 1]} : vector<32x128xf32> to vector<32x32xf32>
    %cst_36 = arith.constant dense<0.000000e+00> : vector<224x32xf32>
    %71 = tpu.matmul %68, %70, %cst_36 {dimension_numbers = #tpu.dot_dimension_numbers<[1], [0], [0], [1], [0, 0, 1, 1], [], []>} : vector<224x32xf32>, vector<32x32xf32>, vector<224x32xf32> -> vector<224x32xf32>
    %c368 = arith.constant 368 : index
    %c0_37 = arith.constant 0 : index
    %72 = vector.load %arg3[%c368, %c0_37] : memref<1216x128xf32, #tpu.memory_space<vmem>>, vector<1x128xf32>
    %73 = vector.extract_strided_slice %72 {offsets = [0, 0], sizes = [1, 32], strides = [1, 1]} : vector<1x128xf32> to vector<1x32xf32>
    %74 = vector.broadcast %73 : vector<1x32xf32> to vector<224x32xf32>
    %75 = arith.addf %71, %74 : vector<224x32xf32>
    %cst_38 = arith.constant 0.000000e+00 : f32
    %76 = vector.broadcast %cst_38 : f32 to vector<224x32xf32>
    %77 = arith.maximumf %75, %76 : vector<224x32xf32>
    %c376 = arith.constant 376 : index
    %c0_39 = arith.constant 0 : index
    %78 = vector.load %arg3[%c376, %c0_39] : memref<1216x128xf32, #tpu.memory_space<vmem>>, vector<32x128xf32>
    %79 = vector.extract_strided_slice %78 {offsets = [0, 0], sizes = [32, 32], strides = [1, 1]} : vector<32x128xf32> to vector<32x32xf32>
    %cst_40 = arith.constant dense<0.000000e+00> : vector<224x32xf32>
    %80 = tpu.matmul %77, %79, %cst_40 {dimension_numbers = #tpu.dot_dimension_numbers<[1], [0], [0], [1], [0, 0, 1, 1], [], []>} : vector<224x32xf32>, vector<32x32xf32>, vector<224x32xf32> -> vector<224x32xf32>
    %c408 = arith.constant 408 : index
    %c0_41 = arith.constant 0 : index
    %81 = vector.load %arg3[%c408, %c0_41] : memref<1216x128xf32, #tpu.memory_space<vmem>>, vector<1x128xf32>
    %82 = vector.extract_strided_slice %81 {offsets = [0, 0], sizes = [1, 32], strides = [1, 1]} : vector<1x128xf32> to vector<1x32xf32>
    %83 = vector.broadcast %82 : vector<1x32xf32> to vector<224x32xf32>
    %84 = arith.addf %80, %83 : vector<224x32xf32>
    %85 = vector.extract_strided_slice %84 {offsets = [0, 0], sizes = [112, 32], strides = [1, 1]} : vector<224x32xf32> to vector<112x32xf32>
    %cst_42 = arith.constant dense<0.000000e+00> : vector<16x32xf32>
    %86 = tpu.matmul %51, %85, %cst_42 {dimension_numbers = #tpu.dot_dimension_numbers<[1], [0], [0], [1], [0, 0, 1, 1], [], []>} : vector<16x112xf32>, vector<112x32xf32>, vector<16x32xf32> -> vector<16x32xf32>
    %87 = vector.extract_strided_slice %84 {offsets = [112, 0], sizes = [112, 32], strides = [1, 1]} : vector<224x32xf32> to vector<112x32xf32>
    %cst_43 = arith.constant dense<0.000000e+00> : vector<16x32xf32>
    %88 = tpu.matmul %51, %87, %cst_43 {dimension_numbers = #tpu.dot_dimension_numbers<[1], [0], [0], [1], [0, 0, 1, 1], [], []>} : vector<16x112xf32>, vector<112x32xf32>, vector<16x32xf32> -> vector<16x32xf32>
    %89 = tpu.concatenate %86, %88 in 0 : vector<16x32xf32>, vector<16x32xf32> -> vector<32x32xf32>
    %c416 = arith.constant 416 : index
    %c0_44 = arith.constant 0 : index
    %90 = vector.load %arg3[%c416, %c0_44] : memref<1216x128xf32, #tpu.memory_space<vmem>>, vector<32x128xf32>
    %91 = vector.extract_strided_slice %90 {offsets = [0, 0], sizes = [32, 32], strides = [1, 1]} : vector<32x128xf32> to vector<32x32xf32>
    %cst_45 = arith.constant dense<0.000000e+00> : vector<32x32xf32>
    %92 = tpu.matmul %38, %91, %cst_45 {dimension_numbers = #tpu.dot_dimension_numbers<[1], [0], [0], [1], [0, 0, 1, 1], [], []>} : vector<32x32xf32>, vector<32x32xf32>, vector<32x32xf32> -> vector<32x32xf32>
    %c448 = arith.constant 448 : index
    %c0_46 = arith.constant 0 : index
    %93 = vector.load %arg3[%c448, %c0_46] : memref<1216x128xf32, #tpu.memory_space<vmem>>, vector<32x128xf32>
    %94 = vector.extract_strided_slice %93 {offsets = [0, 0], sizes = [32, 32], strides = [1, 1]} : vector<32x128xf32> to vector<32x32xf32>
    %cst_47 = arith.constant dense<0.000000e+00> : vector<32x32xf32>
    %95 = tpu.matmul %89, %94, %cst_47 {dimension_numbers = #tpu.dot_dimension_numbers<[1], [0], [0], [1], [0, 0, 1, 1], [], []>} : vector<32x32xf32>, vector<32x32xf32>, vector<32x32xf32> -> vector<32x32xf32>
    %96 = arith.addf %92, %95 : vector<32x32xf32>
    %c480 = arith.constant 480 : index
    %c0_48 = arith.constant 0 : index
    %97 = vector.load %arg3[%c480, %c0_48] : memref<1216x128xf32, #tpu.memory_space<vmem>>, vector<1x128xf32>
    %98 = vector.extract_strided_slice %97 {offsets = [0, 0], sizes = [1, 32], strides = [1, 1]} : vector<1x128xf32> to vector<1x32xf32>
    %99 = vector.broadcast %98 : vector<1x32xf32> to vector<32x32xf32>
    %100 = arith.addf %96, %99 : vector<32x32xf32>
    %cst_49 = arith.constant 0.000000e+00 : f32
    %101 = vector.broadcast %cst_49 : f32 to vector<32x32xf32>
    %102 = arith.maximumf %100, %101 : vector<32x32xf32>
    %c488 = arith.constant 488 : index
    %c0_50 = arith.constant 0 : index
    %103 = vector.load %arg3[%c488, %c0_50] : memref<1216x128xf32, #tpu.memory_space<vmem>>, vector<32x128xf32>
    %104 = vector.extract_strided_slice %103 {offsets = [0, 0], sizes = [32, 32], strides = [1, 1]} : vector<32x128xf32> to vector<32x32xf32>
    %cst_51 = arith.constant dense<0.000000e+00> : vector<32x32xf32>
    %105 = tpu.matmul %102, %104, %cst_51 {dimension_numbers = #tpu.dot_dimension_numbers<[1], [0], [0], [1], [0, 0, 1, 1], [], []>} : vector<32x32xf32>, vector<32x32xf32>, vector<32x32xf32> -> vector<32x32xf32>
    %c520 = arith.constant 520 : index
    %c0_52 = arith.constant 0 : index
    %106 = vector.load %arg3[%c520, %c0_52] : memref<1216x128xf32, #tpu.memory_space<vmem>>, vector<1x128xf32>
    %107 = vector.extract_strided_slice %106 {offsets = [0, 0], sizes = [1, 32], strides = [1, 1]} : vector<1x128xf32> to vector<1x32xf32>
    %108 = vector.broadcast %107 : vector<1x32xf32> to vector<32x32xf32>
    %109 = arith.addf %105, %108 : vector<32x32xf32>
    %cst_53 = arith.constant 0.000000e+00 : f32
    %110 = vector.broadcast %cst_53 : f32 to vector<32x32xf32>
    %111 = arith.maximumf %109, %110 : vector<32x32xf32>
    %c528 = arith.constant 528 : index
    %c0_54 = arith.constant 0 : index
    %112 = vector.load %arg3[%c528, %c0_54] : memref<1216x128xf32, #tpu.memory_space<vmem>>, vector<32x128xf32>
    %113 = vector.extract_strided_slice %112 {offsets = [0, 0], sizes = [32, 32], strides = [1, 1]} : vector<32x128xf32> to vector<32x32xf32>
    %cst_55 = arith.constant dense<0.000000e+00> : vector<32x32xf32>
    %114 = tpu.matmul %111, %113, %cst_55 {dimension_numbers = #tpu.dot_dimension_numbers<[1], [0], [0], [1], [0, 0, 1, 1], [], []>} : vector<32x32xf32>, vector<32x32xf32>, vector<32x32xf32> -> vector<32x32xf32>
    %c560 = arith.constant 560 : index
    %c0_56 = arith.constant 0 : index
    %115 = vector.load %arg3[%c560, %c0_56] : memref<1216x128xf32, #tpu.memory_space<vmem>>, vector<1x128xf32>
    %116 = vector.extract_strided_slice %115 {offsets = [0, 0], sizes = [1, 32], strides = [1, 1]} : vector<1x128xf32> to vector<1x32xf32>
    %117 = vector.broadcast %116 : vector<1x32xf32> to vector<32x32xf32>
    %118 = arith.addf %114, %117 : vector<32x32xf32>
    %119 = tpu.concatenate %118, %38 in 1 : vector<32x32xf32>, vector<32x32xf32> -> vector<32x64xf32>
    %c568 = arith.constant 568 : index
    %c0_57 = arith.constant 0 : index
    %120 = vector.load %arg3[%c568, %c0_57] : memref<1216x128xf32, #tpu.memory_space<vmem>>, vector<64x128xf32>
    %121 = vector.extract_strided_slice %120 {offsets = [0, 0], sizes = [64, 32], strides = [1, 1]} : vector<64x128xf32> to vector<64x32xf32>
    %cst_58 = arith.constant dense<0.000000e+00> : vector<32x32xf32>
    %122 = tpu.matmul %119, %121, %cst_58 {dimension_numbers = #tpu.dot_dimension_numbers<[1], [0], [0], [1], [0, 0, 1, 1], [], []>} : vector<32x64xf32>, vector<64x32xf32>, vector<32x32xf32> -> vector<32x32xf32>
    %c632 = arith.constant 632 : index
    %c0_59 = arith.constant 0 : index
    %123 = vector.load %arg3[%c632, %c0_59] : memref<1216x128xf32, #tpu.memory_space<vmem>>, vector<1x128xf32>
    %124 = vector.extract_strided_slice %123 {offsets = [0, 0], sizes = [1, 32], strides = [1, 1]} : vector<1x128xf32> to vector<1x32xf32>
    %125 = vector.broadcast %124 : vector<1x32xf32> to vector<32x32xf32>
    %126 = arith.addf %122, %125 : vector<32x32xf32>
    %127 = arith.negf %126 : vector<32x32xf32>
    %128 = math.exp %127 : vector<32x32xf32>
    %cst_60 = arith.constant 1.000000e+00 : f32
    %129 = vector.broadcast %cst_60 : f32 to vector<32x32xf32>
    %130 = arith.addf %129, %128 : vector<32x32xf32>
    %131 = arith.divf %129, %130 : vector<32x32xf32>
    %c640 = arith.constant 640 : index
    %c0_61 = arith.constant 0 : index
    %132 = vector.load %arg3[%c640, %c0_61] : memref<1216x128xf32, #tpu.memory_space<vmem>>, vector<64x128xf32>
    %133 = vector.extract_strided_slice %132 {offsets = [0, 0], sizes = [64, 32], strides = [1, 1]} : vector<64x128xf32> to vector<64x32xf32>
    %cst_62 = arith.constant dense<0.000000e+00> : vector<32x32xf32>
    %134 = tpu.matmul %119, %133, %cst_62 {dimension_numbers = #tpu.dot_dimension_numbers<[1], [0], [0], [1], [0, 0, 1, 1], [], []>} : vector<32x64xf32>, vector<64x32xf32>, vector<32x32xf32> -> vector<32x32xf32>
    %c704 = arith.constant 704 : index
    %c0_63 = arith.constant 0 : index
    %135 = vector.load %arg3[%c704, %c0_63] : memref<1216x128xf32, #tpu.memory_space<vmem>>, vector<1x128xf32>
    %136 = vector.extract_strided_slice %135 {offsets = [0, 0], sizes = [1, 32], strides = [1, 1]} : vector<1x128xf32> to vector<1x32xf32>
    %137 = vector.broadcast %136 : vector<1x32xf32> to vector<32x32xf32>
    %138 = arith.addf %134, %137 : vector<32x32xf32>
    %139 = arith.negf %138 : vector<32x32xf32>
    %140 = math.exp %139 : vector<32x32xf32>
    %cst_64 = arith.constant 1.000000e+00 : f32
    %141 = vector.broadcast %cst_64 : f32 to vector<32x32xf32>
    %142 = arith.addf %141, %140 : vector<32x32xf32>
    %143 = arith.divf %141, %142 : vector<32x32xf32>
    %c712 = arith.constant 712 : index
    %c0_65 = arith.constant 0 : index
    %144 = vector.load %arg3[%c712, %c0_65] : memref<1216x128xf32, #tpu.memory_space<vmem>>, vector<64x128xf32>
    %145 = vector.extract_strided_slice %144 {offsets = [0, 0], sizes = [64, 32], strides = [1, 1]} : vector<64x128xf32> to vector<64x32xf32>
    %cst_66 = arith.constant dense<0.000000e+00> : vector<32x32xf32>
    %146 = tpu.matmul %119, %145, %cst_66 {dimension_numbers = #tpu.dot_dimension_numbers<[1], [0], [0], [1], [0, 0, 1, 1], [], []>} : vector<32x64xf32>, vector<64x32xf32>, vector<32x32xf32> -> vector<32x32xf32>
    %c776 = arith.constant 776 : index
    %c0_67 = arith.constant 0 : index
    %147 = vector.load %arg3[%c776, %c0_67] : memref<1216x128xf32, #tpu.memory_space<vmem>>, vector<1x128xf32>
    %148 = vector.extract_strided_slice %147 {offsets = [0, 0], sizes = [1, 32], strides = [1, 1]} : vector<1x128xf32> to vector<1x32xf32>
    %149 = vector.broadcast %148 : vector<1x32xf32> to vector<32x32xf32>
    %150 = arith.addf %146, %149 : vector<32x32xf32>
    %151 = math.tanh %150 : vector<32x32xf32>
    %c784 = arith.constant 784 : index
    %c0_68 = arith.constant 0 : index
    %152 = vector.load %arg3[%c784, %c0_68] : memref<1216x128xf32, #tpu.memory_space<vmem>>, vector<64x128xf32>
    %153 = vector.extract_strided_slice %152 {offsets = [0, 0], sizes = [64, 32], strides = [1, 1]} : vector<64x128xf32> to vector<64x32xf32>
    %cst_69 = arith.constant dense<0.000000e+00> : vector<32x32xf32>
    %154 = tpu.matmul %119, %153, %cst_69 {dimension_numbers = #tpu.dot_dimension_numbers<[1], [0], [0], [1], [0, 0, 1, 1], [], []>} : vector<32x64xf32>, vector<64x32xf32>, vector<32x32xf32> -> vector<32x32xf32>
    %c848 = arith.constant 848 : index
    %c0_70 = arith.constant 0 : index
    %155 = vector.load %arg3[%c848, %c0_70] : memref<1216x128xf32, #tpu.memory_space<vmem>>, vector<1x128xf32>
    %156 = vector.extract_strided_slice %155 {offsets = [0, 0], sizes = [1, 32], strides = [1, 1]} : vector<1x128xf32> to vector<1x32xf32>
    %157 = vector.broadcast %156 : vector<1x32xf32> to vector<32x32xf32>
    %158 = arith.addf %154, %157 : vector<32x32xf32>
    %159 = arith.negf %158 : vector<32x32xf32>
    %160 = math.exp %159 : vector<32x32xf32>
    %cst_71 = arith.constant 1.000000e+00 : f32
    %161 = vector.broadcast %cst_71 : f32 to vector<32x32xf32>
    %162 = arith.addf %161, %160 : vector<32x32xf32>
    %163 = arith.divf %161, %162 : vector<32x32xf32>
    %164 = arith.mulf %143, %39 : vector<32x32xf32>
    %165 = arith.mulf %131, %151 : vector<32x32xf32>
    %166 = arith.addf %164, %165 : vector<32x32xf32>
    %167 = math.tanh %166 : vector<32x32xf32>
    %168 = arith.mulf %163, %167 : vector<32x32xf32>
    %c856 = arith.constant 856 : index
    %c0_72 = arith.constant 0 : index
    %169 = vector.load %arg3[%c856, %c0_72] : memref<1216x128xf32, #tpu.memory_space<vmem>>, vector<32x128xf32>
    %170 = vector.extract_strided_slice %169 {offsets = [0, 0], sizes = [32, 32], strides = [1, 1]} : vector<32x128xf32> to vector<32x32xf32>
    %cst_73 = arith.constant dense<0.000000e+00> : vector<32x32xf32>
    %171 = tpu.matmul %168, %170, %cst_73 {dimension_numbers = #tpu.dot_dimension_numbers<[1], [0], [0], [1], [0, 0, 1, 1], [], []>} : vector<32x32xf32>, vector<32x32xf32>, vector<32x32xf32> -> vector<32x32xf32>
    %c888 = arith.constant 888 : index
    %c0_74 = arith.constant 0 : index
    %172 = vector.load %arg3[%c888, %c0_74] : memref<1216x128xf32, #tpu.memory_space<vmem>>, vector<1x128xf32>
    %173 = vector.extract_strided_slice %172 {offsets = [0, 0], sizes = [1, 32], strides = [1, 1]} : vector<1x128xf32> to vector<1x32xf32>
    %174 = vector.broadcast %173 : vector<1x32xf32> to vector<32x32xf32>
    %175 = arith.addf %171, %174 : vector<32x32xf32>
    %cst_75 = arith.constant 0.000000e+00 : f32
    %176 = vector.broadcast %cst_75 : f32 to vector<32x32xf32>
    %177 = arith.maximumf %175, %176 : vector<32x32xf32>
    %c896 = arith.constant 896 : index
    %c0_76 = arith.constant 0 : index
    %178 = vector.load %arg3[%c896, %c0_76] : memref<1216x128xf32, #tpu.memory_space<vmem>>, vector<32x128xf32>
    %179 = vector.extract_strided_slice %178 {offsets = [0, 0], sizes = [32, 32], strides = [1, 1]} : vector<32x128xf32> to vector<32x32xf32>
    %cst_77 = arith.constant dense<0.000000e+00> : vector<32x32xf32>
    %180 = tpu.matmul %177, %179, %cst_77 {dimension_numbers = #tpu.dot_dimension_numbers<[1], [0], [0], [1], [0, 0, 1, 1], [], []>} : vector<32x32xf32>, vector<32x32xf32>, vector<32x32xf32> -> vector<32x32xf32>
    %c928 = arith.constant 928 : index
    %c0_78 = arith.constant 0 : index
    %181 = vector.load %arg3[%c928, %c0_78] : memref<1216x128xf32, #tpu.memory_space<vmem>>, vector<1x128xf32>
    %182 = vector.extract_strided_slice %181 {offsets = [0, 0], sizes = [1, 32], strides = [1, 1]} : vector<1x128xf32> to vector<1x32xf32>
    %183 = vector.broadcast %182 : vector<1x32xf32> to vector<32x32xf32>
    %184 = arith.addf %180, %183 : vector<32x32xf32>
    %cst_79 = arith.constant 0.000000e+00 : f32
    %185 = vector.broadcast %cst_79 : f32 to vector<32x32xf32>
    %186 = arith.maximumf %184, %185 : vector<32x32xf32>
    %c936 = arith.constant 936 : index
    %c0_80 = arith.constant 0 : index
    %187 = vector.load %arg3[%c936, %c0_80] : memref<1216x128xf32, #tpu.memory_space<vmem>>, vector<32x128xf32>
    %cst_81 = arith.constant dense<0.000000e+00> : vector<32x128xf32>
    %188 = tpu.matmul %186, %187, %cst_81 {dimension_numbers = #tpu.dot_dimension_numbers<[1], [0], [0], [1], [0, 0, 1, 1], [], []>} : vector<32x32xf32>, vector<32x128xf32>, vector<32x128xf32> -> vector<32x128xf32>
    %c968 = arith.constant 968 : index
    %c0_82 = arith.constant 0 : index
    %189 = vector.load %arg3[%c968, %c0_82] : memref<1216x128xf32, #tpu.memory_space<vmem>>, vector<1x128xf32>
    %190 = vector.broadcast %189 : vector<1x128xf32> to vector<32x128xf32>
    %191 = arith.addf %188, %190 : vector<32x128xf32>
    %192 = arith.index_cast %c0_i32 : i32 to index
    %c0_83 = arith.constant 0 : index
    %c0_84 = arith.constant 0 : index
    %193 = vector.load %arg5[%192, %c0_83, %c0_84] : memref<2x32x128xf32, #tpu.memory_space<vmem>>, vector<1x32x128xf32>
    %194 = vector.shape_cast %193 : vector<1x32x128xf32> to vector<32x128xf32>
    %195 = vector.shape_cast %191 : vector<32x128xf32> to vector<1x32x128xf32>
    tpu.vector_store %arg5[%192, %c0_83, %c0_84], %195 {strides = array<i32>} : memref<2x32x128xf32, #tpu.memory_space<vmem>>, vector<1x32x128xf32>,
    %cst_85 = arith.constant dense<0xFF800000> : vector<32xf32>
    %196 = vector.multi_reduction <maximumf>, %191, %cst_85 [1] : vector<32x128xf32> to vector<32xf32>
    %197 = vector.shape_cast %196 : vector<32xf32> to vector<32x1xf32>
    %198 = vector.broadcast %197 : vector<32x1xf32> to vector<32x128xf32>
    %199 = arith.subf %191, %198 : vector<32x128xf32>
    %200 = math.exp %199 : vector<32x128xf32>
    %cst_86 = arith.constant dense<0.000000e+00> : vector<32xf32>
    %201 = vector.multi_reduction <add>, %200, %cst_86 [1] : vector<32x128xf32> to vector<32xf32>
    %202 = vector.shape_cast %201 : vector<32xf32> to vector<32x1xf32>
    %203 = tpu.reciprocal %202 {approx = true} : vector<32x1xf32> -> vector<32x1xf32>
    %204 = vector.broadcast %203 : vector<32x1xf32> to vector<32x128xf32>
    %205 = arith.mulf %200, %204 : vector<32x128xf32>
    %c0_87 = arith.constant 0 : index
    %c0_88 = arith.constant 0 : index
    %206 = vector.load %arg3[%c0_87, %c0_88] : memref<1216x128xf32, #tpu.memory_space<vmem>>, vector<128x128xf32>
    %207 = vector.extract_strided_slice %206 {offsets = [0, 0], sizes = [128, 16], strides = [1, 1]} : vector<128x128xf32> to vector<128x16xf32>
    %cst_89 = arith.constant dense<0.000000e+00> : vector<32x16xf32>
    %208 = tpu.matmul %205, %207, %cst_89 {dimension_numbers = #tpu.dot_dimension_numbers<[1], [0], [0], [1], [0, 0, 1, 1], [], []>} : vector<32x128xf32>, vector<128x16xf32>, vector<32x16xf32> -> vector<32x16xf32>
    %c128_90 = arith.constant 128 : index
    %c0_91 = arith.constant 0 : index
    %209 = vector.load %arg3[%c128_90, %c0_91] : memref<1216x128xf32, #tpu.memory_space<vmem>>, vector<1x128xf32>
    %210 = vector.extract_strided_slice %209 {offsets = [0, 0], sizes = [1, 16], strides = [1, 1]} : vector<1x128xf32> to vector<1x16xf32>
    %211 = vector.broadcast %210 : vector<1x16xf32> to vector<32x16xf32>
    %212 = arith.addf %208, %211 : vector<32x16xf32>
    %c136_92 = arith.constant 136 : index
    %c0_93 = arith.constant 0 : index
    %213 = vector.load %arg3[%c136_92, %c0_93] : memref<1216x128xf32, #tpu.memory_space<vmem>>, vector<16x128xf32>
    %cst_94 = arith.constant dense<0.000000e+00> : vector<32x128xf32>
    %214 = tpu.matmul %212, %213, %cst_94 {dimension_numbers = #tpu.dot_dimension_numbers<[1], [0], [0], [1], [0, 0, 1, 1], [], []>} : vector<32x16xf32>, vector<16x128xf32>, vector<32x128xf32> -> vector<32x128xf32>
    %c152_95 = arith.constant 152 : index
    %c0_96 = arith.constant 0 : index
    %215 = vector.load %arg3[%c152_95, %c0_96] : memref<1216x128xf32, #tpu.memory_space<vmem>>, vector<1x128xf32>
    %216 = vector.broadcast %215 : vector<1x128xf32> to vector<32x128xf32>
    %217 = arith.addf %214, %216 : vector<32x128xf32>
    %218 = arith.index_cast %c0_i32 : i32 to index
    %c0_97 = arith.constant 0 : index
    %c0_98 = arith.constant 0 : index
    %219 = vector.load %arg6[%218, %c0_97, %c0_98] : memref<2x32x128xf32, #tpu.memory_space<vmem>>, vector<1x32x128xf32>
    %220 = vector.shape_cast %219 : vector<1x32x128xf32> to vector<32x128xf32>
    %221 = vector.shape_cast %217 : vector<32x128xf32> to vector<1x32x128xf32>
    tpu.vector_store %arg6[%218, %c0_97, %c0_98], %221 {strides = array<i32>} : memref<2x32x128xf32, #tpu.memory_space<vmem>>, vector<1x32x128xf32>,
    %c1_i32 = arith.constant 1 : i32
    %c264_99 = arith.constant 264 : index
    %c0_100 = arith.constant 0 : index
    %222 = vector.load %arg3[%c264_99, %c0_100] : memref<1216x128xf32, #tpu.memory_space<vmem>>, vector<32x128xf32>
    %223 = vector.extract_strided_slice %222 {offsets = [0, 0], sizes = [32, 32], strides = [1, 1]} : vector<32x128xf32> to vector<32x32xf32>
    %cst_101 = arith.constant dense<0.000000e+00> : vector<32x32xf32>
    %224 = tpu.matmul %168, %223, %cst_101 {dimension_numbers = #tpu.dot_dimension_numbers<[1], [0], [0], [1], [0, 0, 1, 1], [], []>} : vector<32x32xf32>, vector<32x32xf32>, vector<32x32xf32> -> vector<32x32xf32>
    %c296_102 = arith.constant 296 : index
    %c0_103 = arith.constant 0 : index
    %225 = vector.load %arg3[%c296_102, %c0_103] : memref<1216x128xf32, #tpu.memory_space<vmem>>, vector<32x128xf32>
    %226 = vector.extract_strided_slice %225 {offsets = [0, 0], sizes = [32, 32], strides = [1, 1]} : vector<32x128xf32> to vector<32x32xf32>
    %cst_104 = arith.constant dense<0.000000e+00> : vector<32x32xf32>
    %227 = tpu.matmul %168, %226, %cst_104 {dimension_numbers = #tpu.dot_dimension_numbers<[1], [0], [0], [1], [0, 0, 1, 1], [], []>} : vector<32x32xf32>, vector<32x32xf32>, vector<32x32xf32> -> vector<32x32xf32>
    %c976_105 = arith.constant 976 : index
    %c0_106 = arith.constant 0 : index
    %228 = vector.load %arg3[%c976_105, %c0_106] : memref<1216x128xf32, #tpu.memory_space<vmem>>, vector<112x128xf32>
    %229 = vector.extract_strided_slice %228 {offsets = [0, 0], sizes = [112, 16], strides = [1, 1]} : vector<112x128xf32> to vector<112x16xf32>
    %c1088_107 = arith.constant 1088 : index
    %c0_108 = arith.constant 0 : index
    %230 = vector.load %arg3[%c1088_107, %c0_108] : memref<1216x128xf32, #tpu.memory_space<vmem>>, vector<112x128xf32>
    %231 = vector.extract_strided_slice %230 {offsets = [0, 0], sizes = [112, 16], strides = [1, 1]} : vector<112x128xf32> to vector<112x16xf32>
    %c1200_109 = arith.constant 1200 : index
    %c0_110 = arith.constant 0 : index
    %232 = vector.load %arg3[%c1200_109, %c0_110] : memref<1216x128xf32, #tpu.memory_space<vmem>>, vector<16x128xf32>
    %233 = vector.extract_strided_slice %232 {offsets = [0, 0], sizes = [16, 112], strides = [1, 1]} : vector<16x128xf32> to vector<16x112xf32>
    %234 = vector.extract_strided_slice %224 {offsets = [0, 0], sizes = [16, 32], strides = [1, 1]} : vector<32x32xf32> to vector<16x32xf32>
    %235 = vector.extract_strided_slice %227 {offsets = [0, 0], sizes = [16, 32], strides = [1, 1]} : vector<32x32xf32> to vector<16x32xf32>
    %cst_111 = arith.constant dense<0.000000e+00> : vector<112x32xf32>
    %236 = tpu.matmul %229, %234, %cst_111 {dimension_numbers = #tpu.dot_dimension_numbers<[1], [0], [0], [1], [0, 0, 1, 1], [], []>} : vector<112x16xf32>, vector<16x32xf32>, vector<112x32xf32> -> vector<112x32xf32>
    %cst_112 = arith.constant dense<0.000000e+00> : vector<112x32xf32>
    %237 = tpu.matmul %231, %235, %cst_112 {dimension_numbers = #tpu.dot_dimension_numbers<[1], [0], [0], [1], [0, 0, 1, 1], [], []>} : vector<112x16xf32>, vector<16x32xf32>, vector<112x32xf32> -> vector<112x32xf32>
    %238 = arith.addf %236, %237 : vector<112x32xf32>
    %239 = vector.extract_strided_slice %224 {offsets = [16, 0], sizes = [16, 32], strides = [1, 1]} : vector<32x32xf32> to vector<16x32xf32>
    %240 = vector.extract_strided_slice %227 {offsets = [16, 0], sizes = [16, 32], strides = [1, 1]} : vector<32x32xf32> to vector<16x32xf32>
    %cst_113 = arith.constant dense<0.000000e+00> : vector<112x32xf32>
    %241 = tpu.matmul %229, %239, %cst_113 {dimension_numbers = #tpu.dot_dimension_numbers<[1], [0], [0], [1], [0, 0, 1, 1], [], []>} : vector<112x16xf32>, vector<16x32xf32>, vector<112x32xf32> -> vector<112x32xf32>
    %cst_114 = arith.constant dense<0.000000e+00> : vector<112x32xf32>
    %242 = tpu.matmul %231, %240, %cst_114 {dimension_numbers = #tpu.dot_dimension_numbers<[1], [0], [0], [1], [0, 0, 1, 1], [], []>} : vector<112x16xf32>, vector<16x32xf32>, vector<112x32xf32> -> vector<112x32xf32>
    %243 = arith.addf %241, %242 : vector<112x32xf32>
    %244 = tpu.concatenate %238, %243 in 0 : vector<112x32xf32>, vector<112x32xf32> -> vector<224x32xf32>
    %c328_115 = arith.constant 328 : index
    %c0_116 = arith.constant 0 : index
    %245 = vector.load %arg3[%c328_115, %c0_116] : memref<1216x128xf32, #tpu.memory_space<vmem>>, vector<1x128xf32>
    %246 = vector.extract_strided_slice %245 {offsets = [0, 0], sizes = [1, 32], strides = [1, 1]} : vector<1x128xf32> to vector<1x32xf32>
    %247 = vector.broadcast %246 : vector<1x32xf32> to vector<224x32xf32>
    %248 = arith.addf %244, %247 : vector<224x32xf32>
    %cst_117 = arith.constant 0.000000e+00 : f32
    %249 = vector.broadcast %cst_117 : f32 to vector<224x32xf32>
    %250 = arith.maximumf %248, %249 : vector<224x32xf32>
    %c336_118 = arith.constant 336 : index
    %c0_119 = arith.constant 0 : index
    %251 = vector.load %arg3[%c336_118, %c0_119] : memref<1216x128xf32, #tpu.memory_space<vmem>>, vector<32x128xf32>
    %252 = vector.extract_strided_slice %251 {offsets = [0, 0], sizes = [32, 32], strides = [1, 1]} : vector<32x128xf32> to vector<32x32xf32>
    %cst_120 = arith.constant dense<0.000000e+00> : vector<224x32xf32>
    %253 = tpu.matmul %250, %252, %cst_120 {dimension_numbers = #tpu.dot_dimension_numbers<[1], [0], [0], [1], [0, 0, 1, 1], [], []>} : vector<224x32xf32>, vector<32x32xf32>, vector<224x32xf32> -> vector<224x32xf32>
    %c368_121 = arith.constant 368 : index
    %c0_122 = arith.constant 0 : index
    %254 = vector.load %arg3[%c368_121, %c0_122] : memref<1216x128xf32, #tpu.memory_space<vmem>>, vector<1x128xf32>
    %255 = vector.extract_strided_slice %254 {offsets = [0, 0], sizes = [1, 32], strides = [1, 1]} : vector<1x128xf32> to vector<1x32xf32>
    %256 = vector.broadcast %255 : vector<1x32xf32> to vector<224x32xf32>
    %257 = arith.addf %253, %256 : vector<224x32xf32>
    %cst_123 = arith.constant 0.000000e+00 : f32
    %258 = vector.broadcast %cst_123 : f32 to vector<224x32xf32>
    %259 = arith.maximumf %257, %258 : vector<224x32xf32>
    %c376_124 = arith.constant 376 : index
    %c0_125 = arith.constant 0 : index
    %260 = vector.load %arg3[%c376_124, %c0_125] : memref<1216x128xf32, #tpu.memory_space<vmem>>, vector<32x128xf32>
    %261 = vector.extract_strided_slice %260 {offsets = [0, 0], sizes = [32, 32], strides = [1, 1]} : vector<32x128xf32> to vector<32x32xf32>
    %cst_126 = arith.constant dense<0.000000e+00> : vector<224x32xf32>
    %262 = tpu.matmul %259, %261, %cst_126 {dimension_numbers = #tpu.dot_dimension_numbers<[1], [0], [0], [1], [0, 0, 1, 1], [], []>} : vector<224x32xf32>, vector<32x32xf32>, vector<224x32xf32> -> vector<224x32xf32>
    %c408_127 = arith.constant 408 : index
    %c0_128 = arith.constant 0 : index
    %263 = vector.load %arg3[%c408_127, %c0_128] : memref<1216x128xf32, #tpu.memory_space<vmem>>, vector<1x128xf32>
    %264 = vector.extract_strided_slice %263 {offsets = [0, 0], sizes = [1, 32], strides = [1, 1]} : vector<1x128xf32> to vector<1x32xf32>
    %265 = vector.broadcast %264 : vector<1x32xf32> to vector<224x32xf32>
    %266 = arith.addf %262, %265 : vector<224x32xf32>
    %267 = vector.extract_strided_slice %266 {offsets = [0, 0], sizes = [112, 32], strides = [1, 1]} : vector<224x32xf32> to vector<112x32xf32>
    %cst_129 = arith.constant dense<0.000000e+00> : vector<16x32xf32>
    %268 = tpu.matmul %233, %267, %cst_129 {dimension_numbers = #tpu.dot_dimension_numbers<[1], [0], [0], [1], [0, 0, 1, 1], [], []>} : vector<16x112xf32>, vector<112x32xf32>, vector<16x32xf32> -> vector<16x32xf32>
    %269 = vector.extract_strided_slice %266 {offsets = [112, 0], sizes = [112, 32], strides = [1, 1]} : vector<224x32xf32> to vector<112x32xf32>
    %cst_130 = arith.constant dense<0.000000e+00> : vector<16x32xf32>
    %270 = tpu.matmul %233, %269, %cst_130 {dimension_numbers = #tpu.dot_dimension_numbers<[1], [0], [0], [1], [0, 0, 1, 1], [], []>} : vector<16x112xf32>, vector<112x32xf32>, vector<16x32xf32> -> vector<16x32xf32>
    %271 = tpu.concatenate %268, %270 in 0 : vector<16x32xf32>, vector<16x32xf32> -> vector<32x32xf32>
    %c416_131 = arith.constant 416 : index
    %c0_132 = arith.constant 0 : index
    %272 = vector.load %arg3[%c416_131, %c0_132] : memref<1216x128xf32, #tpu.memory_space<vmem>>, vector<32x128xf32>
    %273 = vector.extract_strided_slice %272 {offsets = [0, 0], sizes = [32, 32], strides = [1, 1]} : vector<32x128xf32> to vector<32x32xf32>
    %cst_133 = arith.constant dense<0.000000e+00> : vector<32x32xf32>
    %274 = tpu.matmul %38, %273, %cst_133 {dimension_numbers = #tpu.dot_dimension_numbers<[1], [0], [0], [1], [0, 0, 1, 1], [], []>} : vector<32x32xf32>, vector<32x32xf32>, vector<32x32xf32> -> vector<32x32xf32>
    %c448_134 = arith.constant 448 : index
    %c0_135 = arith.constant 0 : index
    %275 = vector.load %arg3[%c448_134, %c0_135] : memref<1216x128xf32, #tpu.memory_space<vmem>>, vector<32x128xf32>
    %276 = vector.extract_strided_slice %275 {offsets = [0, 0], sizes = [32, 32], strides = [1, 1]} : vector<32x128xf32> to vector<32x32xf32>
    %cst_136 = arith.constant dense<0.000000e+00> : vector<32x32xf32>
    %277 = tpu.matmul %271, %276, %cst_136 {dimension_numbers = #tpu.dot_dimension_numbers<[1], [0], [0], [1], [0, 0, 1, 1], [], []>} : vector<32x32xf32>, vector<32x32xf32>, vector<32x32xf32> -> vector<32x32xf32>
    %278 = arith.addf %274, %277 : vector<32x32xf32>
    %c480_137 = arith.constant 480 : index
    %c0_138 = arith.constant 0 : index
    %279 = vector.load %arg3[%c480_137, %c0_138] : memref<1216x128xf32, #tpu.memory_space<vmem>>, vector<1x128xf32>
    %280 = vector.extract_strided_slice %279 {offsets = [0, 0], sizes = [1, 32], strides = [1, 1]} : vector<1x128xf32> to vector<1x32xf32>
    %281 = vector.broadcast %280 : vector<1x32xf32> to vector<32x32xf32>
    %282 = arith.addf %278, %281 : vector<32x32xf32>
    %cst_139 = arith.constant 0.000000e+00 : f32
    %283 = vector.broadcast %cst_139 : f32 to vector<32x32xf32>
    %284 = arith.maximumf %282, %283 : vector<32x32xf32>
    %c488_140 = arith.constant 488 : index
    %c0_141 = arith.constant 0 : index
    %285 = vector.load %arg3[%c488_140, %c0_141] : memref<1216x128xf32, #tpu.memory_space<vmem>>, vector<32x128xf32>
    %286 = vector.extract_strided_slice %285 {offsets = [0, 0], sizes = [32, 32], strides = [1, 1]} : vector<32x128xf32> to vector<32x32xf32>
    %cst_142 = arith.constant dense<0.000000e+00> : vector<32x32xf32>
    %287 = tpu.matmul %284, %286, %cst_142 {dimension_numbers = #tpu.dot_dimension_numbers<[1], [0], [0], [1], [0, 0, 1, 1], [], []>} : vector<32x32xf32>, vector<32x32xf32>, vector<32x32xf32> -> vector<32x32xf32>
    %c520_143 = arith.constant 520 : index
    %c0_144 = arith.constant 0 : index
    %288 = vector.load %arg3[%c520_143, %c0_144] : memref<1216x128xf32, #tpu.memory_space<vmem>>, vector<1x128xf32>
    %289 = vector.extract_strided_slice %288 {offsets = [0, 0], sizes = [1, 32], strides = [1, 1]} : vector<1x128xf32> to vector<1x32xf32>
    %290 = vector.broadcast %289 : vector<1x32xf32> to vector<32x32xf32>
    %291 = arith.addf %287, %290 : vector<32x32xf32>
    %cst_145 = arith.constant 0.000000e+00 : f32
    %292 = vector.broadcast %cst_145 : f32 to vector<32x32xf32>
    %293 = arith.maximumf %291, %292 : vector<32x32xf32>
    %c528_146 = arith.constant 528 : index
    %c0_147 = arith.constant 0 : index
    %294 = vector.load %arg3[%c528_146, %c0_147] : memref<1216x128xf32, #tpu.memory_space<vmem>>, vector<32x128xf32>
    %295 = vector.extract_strided_slice %294 {offsets = [0, 0], sizes = [32, 32], strides = [1, 1]} : vector<32x128xf32> to vector<32x32xf32>
    %cst_148 = arith.constant dense<0.000000e+00> : vector<32x32xf32>
    %296 = tpu.matmul %293, %295, %cst_148 {dimension_numbers = #tpu.dot_dimension_numbers<[1], [0], [0], [1], [0, 0, 1, 1], [], []>} : vector<32x32xf32>, vector<32x32xf32>, vector<32x32xf32> -> vector<32x32xf32>
    %c560_149 = arith.constant 560 : index
    %c0_150 = arith.constant 0 : index
    %297 = vector.load %arg3[%c560_149, %c0_150] : memref<1216x128xf32, #tpu.memory_space<vmem>>, vector<1x128xf32>
    %298 = vector.extract_strided_slice %297 {offsets = [0, 0], sizes = [1, 32], strides = [1, 1]} : vector<1x128xf32> to vector<1x32xf32>
    %299 = vector.broadcast %298 : vector<1x32xf32> to vector<32x32xf32>
    %300 = arith.addf %296, %299 : vector<32x32xf32>
    %301 = tpu.concatenate %300, %168 in 1 : vector<32x32xf32>, vector<32x32xf32> -> vector<32x64xf32>
    %c568_151 = arith.constant 568 : index
    %c0_152 = arith.constant 0 : index
    %302 = vector.load %arg3[%c568_151, %c0_152] : memref<1216x128xf32, #tpu.memory_space<vmem>>, vector<64x128xf32>
    %303 = vector.extract_strided_slice %302 {offsets = [0, 0], sizes = [64, 32], strides = [1, 1]} : vector<64x128xf32> to vector<64x32xf32>
    %cst_153 = arith.constant dense<0.000000e+00> : vector<32x32xf32>
    %304 = tpu.matmul %301, %303, %cst_153 {dimension_numbers = #tpu.dot_dimension_numbers<[1], [0], [0], [1], [0, 0, 1, 1], [], []>} : vector<32x64xf32>, vector<64x32xf32>, vector<32x32xf32> -> vector<32x32xf32>
    %c632_154 = arith.constant 632 : index
    %c0_155 = arith.constant 0 : index
    %305 = vector.load %arg3[%c632_154, %c0_155] : memref<1216x128xf32, #tpu.memory_space<vmem>>, vector<1x128xf32>
    %306 = vector.extract_strided_slice %305 {offsets = [0, 0], sizes = [1, 32], strides = [1, 1]} : vector<1x128xf32> to vector<1x32xf32>
    %307 = vector.broadcast %306 : vector<1x32xf32> to vector<32x32xf32>
    %308 = arith.addf %304, %307 : vector<32x32xf32>
    %309 = arith.negf %308 : vector<32x32xf32>
    %310 = math.exp %309 : vector<32x32xf32>
    %cst_156 = arith.constant 1.000000e+00 : f32
    %311 = vector.broadcast %cst_156 : f32 to vector<32x32xf32>
    %312 = arith.addf %311, %310 : vector<32x32xf32>
    %313 = arith.divf %311, %312 : vector<32x32xf32>
    %c640_157 = arith.constant 640 : index
    %c0_158 = arith.constant 0 : index
    %314 = vector.load %arg3[%c640_157, %c0_158] : memref<1216x128xf32, #tpu.memory_space<vmem>>, vector<64x128xf32>
    %315 = vector.extract_strided_slice %314 {offsets = [0, 0], sizes = [64, 32], strides = [1, 1]} : vector<64x128xf32> to vector<64x32xf32>
    %cst_159 = arith.constant dense<0.000000e+00> : vector<32x32xf32>
    %316 = tpu.matmul %301, %315, %cst_159 {dimension_numbers = #tpu.dot_dimension_numbers<[1], [0], [0], [1], [0, 0, 1, 1], [], []>} : vector<32x64xf32>, vector<64x32xf32>, vector<32x32xf32> -> vector<32x32xf32>
    %c704_160 = arith.constant 704 : index
    %c0_161 = arith.constant 0 : index
    %317 = vector.load %arg3[%c704_160, %c0_161] : memref<1216x128xf32, #tpu.memory_space<vmem>>, vector<1x128xf32>
    %318 = vector.extract_strided_slice %317 {offsets = [0, 0], sizes = [1, 32], strides = [1, 1]} : vector<1x128xf32> to vector<1x32xf32>
    %319 = vector.broadcast %318 : vector<1x32xf32> to vector<32x32xf32>
    %320 = arith.addf %316, %319 : vector<32x32xf32>
    %321 = arith.negf %320 : vector<32x32xf32>
    %322 = math.exp %321 : vector<32x32xf32>
    %cst_162 = arith.constant 1.000000e+00 : f32
    %323 = vector.broadcast %cst_162 : f32 to vector<32x32xf32>
    %324 = arith.addf %323, %322 : vector<32x32xf32>
    %325 = arith.divf %323, %324 : vector<32x32xf32>
    %c712_163 = arith.constant 712 : index
    %c0_164 = arith.constant 0 : index
    %326 = vector.load %arg3[%c712_163, %c0_164] : memref<1216x128xf32, #tpu.memory_space<vmem>>, vector<64x128xf32>
    %327 = vector.extract_strided_slice %326 {offsets = [0, 0], sizes = [64, 32], strides = [1, 1]} : vector<64x128xf32> to vector<64x32xf32>
    %cst_165 = arith.constant dense<0.000000e+00> : vector<32x32xf32>
    %328 = tpu.matmul %301, %327, %cst_165 {dimension_numbers = #tpu.dot_dimension_numbers<[1], [0], [0], [1], [0, 0, 1, 1], [], []>} : vector<32x64xf32>, vector<64x32xf32>, vector<32x32xf32> -> vector<32x32xf32>
    %c776_166 = arith.constant 776 : index
    %c0_167 = arith.constant 0 : index
    %329 = vector.load %arg3[%c776_166, %c0_167] : memref<1216x128xf32, #tpu.memory_space<vmem>>, vector<1x128xf32>
    %330 = vector.extract_strided_slice %329 {offsets = [0, 0], sizes = [1, 32], strides = [1, 1]} : vector<1x128xf32> to vector<1x32xf32>
    %331 = vector.broadcast %330 : vector<1x32xf32> to vector<32x32xf32>
    %332 = arith.addf %328, %331 : vector<32x32xf32>
    %333 = math.tanh %332 : vector<32x32xf32>
    %c784_168 = arith.constant 784 : index
    %c0_169 = arith.constant 0 : index
    %334 = vector.load %arg3[%c784_168, %c0_169] : memref<1216x128xf32, #tpu.memory_space<vmem>>, vector<64x128xf32>
    %335 = vector.extract_strided_slice %334 {offsets = [0, 0], sizes = [64, 32], strides = [1, 1]} : vector<64x128xf32> to vector<64x32xf32>
    %cst_170 = arith.constant dense<0.000000e+00> : vector<32x32xf32>
    %336 = tpu.matmul %301, %335, %cst_170 {dimension_numbers = #tpu.dot_dimension_numbers<[1], [0], [0], [1], [0, 0, 1, 1], [], []>} : vector<32x64xf32>, vector<64x32xf32>, vector<32x32xf32> -> vector<32x32xf32>
    %c848_171 = arith.constant 848 : index
    %c0_172 = arith.constant 0 : index
    %337 = vector.load %arg3[%c848_171, %c0_172] : memref<1216x128xf32, #tpu.memory_space<vmem>>, vector<1x128xf32>
    %338 = vector.extract_strided_slice %337 {offsets = [0, 0], sizes = [1, 32], strides = [1, 1]} : vector<1x128xf32> to vector<1x32xf32>
    %339 = vector.broadcast %338 : vector<1x32xf32> to vector<32x32xf32>
    %340 = arith.addf %336, %339 : vector<32x32xf32>
    %341 = arith.negf %340 : vector<32x32xf32>
    %342 = math.exp %341 : vector<32x32xf32>
    %cst_173 = arith.constant 1.000000e+00 : f32
    %343 = vector.broadcast %cst_173 : f32 to vector<32x32xf32>
    %344 = arith.addf %343, %342 : vector<32x32xf32>
    %345 = arith.divf %343, %344 : vector<32x32xf32>
    %346 = arith.mulf %325, %166 : vector<32x32xf32>
    %347 = arith.mulf %313, %333 : vector<32x32xf32>
    %348 = arith.addf %346, %347 : vector<32x32xf32>
    %349 = math.tanh %348 : vector<32x32xf32>
    %350 = arith.mulf %345, %349 : vector<32x32xf32>
    %c856_174 = arith.constant 856 : index
    %c0_175 = arith.constant 0 : index
    %351 = vector.load %arg3[%c856_174, %c0_175] : memref<1216x128xf32, #tpu.memory_space<vmem>>, vector<32x128xf32>
    %352 = vector.extract_strided_slice %351 {offsets = [0, 0], sizes = [32, 32], strides = [1, 1]} : vector<32x128xf32> to vector<32x32xf32>
    %cst_176 = arith.constant dense<0.000000e+00> : vector<32x32xf32>
    %353 = tpu.matmul %350, %352, %cst_176 {dimension_numbers = #tpu.dot_dimension_numbers<[1], [0], [0], [1], [0, 0, 1, 1], [], []>} : vector<32x32xf32>, vector<32x32xf32>, vector<32x32xf32> -> vector<32x32xf32>
    %c888_177 = arith.constant 888 : index
    %c0_178 = arith.constant 0 : index
    %354 = vector.load %arg3[%c888_177, %c0_178] : memref<1216x128xf32, #tpu.memory_space<vmem>>, vector<1x128xf32>
    %355 = vector.extract_strided_slice %354 {offsets = [0, 0], sizes = [1, 32], strides = [1, 1]} : vector<1x128xf32> to vector<1x32xf32>
    %356 = vector.broadcast %355 : vector<1x32xf32> to vector<32x32xf32>
    %357 = arith.addf %353, %356 : vector<32x32xf32>
    %cst_179 = arith.constant 0.000000e+00 : f32
    %358 = vector.broadcast %cst_179 : f32 to vector<32x32xf32>
    %359 = arith.maximumf %357, %358 : vector<32x32xf32>
    %c896_180 = arith.constant 896 : index
    %c0_181 = arith.constant 0 : index
    %360 = vector.load %arg3[%c896_180, %c0_181] : memref<1216x128xf32, #tpu.memory_space<vmem>>, vector<32x128xf32>
    %361 = vector.extract_strided_slice %360 {offsets = [0, 0], sizes = [32, 32], strides = [1, 1]} : vector<32x128xf32> to vector<32x32xf32>
    %cst_182 = arith.constant dense<0.000000e+00> : vector<32x32xf32>
    %362 = tpu.matmul %359, %361, %cst_182 {dimension_numbers = #tpu.dot_dimension_numbers<[1], [0], [0], [1], [0, 0, 1, 1], [], []>} : vector<32x32xf32>, vector<32x32xf32>, vector<32x32xf32> -> vector<32x32xf32>
    %c928_183 = arith.constant 928 : index
    %c0_184 = arith.constant 0 : index
    %363 = vector.load %arg3[%c928_183, %c0_184] : memref<1216x128xf32, #tpu.memory_space<vmem>>, vector<1x128xf32>
    %364 = vector.extract_strided_slice %363 {offsets = [0, 0], sizes = [1, 32], strides = [1, 1]} : vector<1x128xf32> to vector<1x32xf32>
    %365 = vector.broadcast %364 : vector<1x32xf32> to vector<32x32xf32>
    %366 = arith.addf %362, %365 : vector<32x32xf32>
    %cst_185 = arith.constant 0.000000e+00 : f32
    %367 = vector.broadcast %cst_185 : f32 to vector<32x32xf32>
    %368 = arith.maximumf %366, %367 : vector<32x32xf32>
    %c936_186 = arith.constant 936 : index
    %c0_187 = arith.constant 0 : index
    %369 = vector.load %arg3[%c936_186, %c0_187] : memref<1216x128xf32, #tpu.memory_space<vmem>>, vector<32x128xf32>
    %cst_188 = arith.constant dense<0.000000e+00> : vector<32x128xf32>
    %370 = tpu.matmul %368, %369, %cst_188 {dimension_numbers = #tpu.dot_dimension_numbers<[1], [0], [0], [1], [0, 0, 1, 1], [], []>} : vector<32x32xf32>, vector<32x128xf32>, vector<32x128xf32> -> vector<32x128xf32>
    %c968_189 = arith.constant 968 : index
    %c0_190 = arith.constant 0 : index
    %371 = vector.load %arg3[%c968_189, %c0_190] : memref<1216x128xf32, #tpu.memory_space<vmem>>, vector<1x128xf32>
    %372 = vector.broadcast %371 : vector<1x128xf32> to vector<32x128xf32>
    %373 = arith.addf %370, %372 : vector<32x128xf32>
    %374 = arith.index_cast %c1_i32 : i32 to index
    %c0_191 = arith.constant 0 : index
    %c0_192 = arith.constant 0 : index
    %375 = vector.load %arg5[%374, %c0_191, %c0_192] : memref<2x32x128xf32, #tpu.memory_space<vmem>>, vector<1x32x128xf32>
    %376 = vector.shape_cast %375 : vector<1x32x128xf32> to vector<32x128xf32>
    %377 = vector.shape_cast %373 : vector<32x128xf32> to vector<1x32x128xf32>
    tpu.vector_store %arg5[%374, %c0_191, %c0_192], %377 {strides = array<i32>} : memref<2x32x128xf32, #tpu.memory_space<vmem>>, vector<1x32x128xf32>,
    %cst_193 = arith.constant dense<0xFF800000> : vector<32xf32>
    %378 = vector.multi_reduction <maximumf>, %373, %cst_193 [1] : vector<32x128xf32> to vector<32xf32>
    %379 = vector.shape_cast %378 : vector<32xf32> to vector<32x1xf32>
    %380 = vector.broadcast %379 : vector<32x1xf32> to vector<32x128xf32>
    %381 = arith.subf %373, %380 : vector<32x128xf32>
    %382 = math.exp %381 : vector<32x128xf32>
    %cst_194 = arith.constant dense<0.000000e+00> : vector<32xf32>
    %383 = vector.multi_reduction <add>, %382, %cst_194 [1] : vector<32x128xf32> to vector<32xf32>
    %384 = vector.shape_cast %383 : vector<32xf32> to vector<32x1xf32>
    %385 = tpu.reciprocal %384 {approx = true} : vector<32x1xf32> -> vector<32x1xf32>
    %386 = vector.broadcast %385 : vector<32x1xf32> to vector<32x128xf32>
    %387 = arith.mulf %382, %386 : vector<32x128xf32>
    %c0_195 = arith.constant 0 : index
    %c0_196 = arith.constant 0 : index
    %388 = vector.load %arg3[%c0_195, %c0_196] : memref<1216x128xf32, #tpu.memory_space<vmem>>, vector<128x128xf32>
    %389 = vector.extract_strided_slice %388 {offsets = [0, 0], sizes = [128, 16], strides = [1, 1]} : vector<128x128xf32> to vector<128x16xf32>
    %cst_197 = arith.constant dense<0.000000e+00> : vector<32x16xf32>
    %390 = tpu.matmul %387, %389, %cst_197 {dimension_numbers = #tpu.dot_dimension_numbers<[1], [0], [0], [1], [0, 0, 1, 1], [], []>} : vector<32x128xf32>, vector<128x16xf32>, vector<32x16xf32> -> vector<32x16xf32>
    %c128_198 = arith.constant 128 : index
    %c0_199 = arith.constant 0 : index
    %391 = vector.load %arg3[%c128_198, %c0_199] : memref<1216x128xf32, #tpu.memory_space<vmem>>, vector<1x128xf32>
    %392 = vector.extract_strided_slice %391 {offsets = [0, 0], sizes = [1, 16], strides = [1, 1]} : vector<1x128xf32> to vector<1x16xf32>
    %393 = vector.broadcast %392 : vector<1x16xf32> to vector<32x16xf32>
    %394 = arith.addf %390, %393 : vector<32x16xf32>
    %c136_200 = arith.constant 136 : index
    %c0_201 = arith.constant 0 : index
    %395 = vector.load %arg3[%c136_200, %c0_201] : memref<1216x128xf32, #tpu.memory_space<vmem>>, vector<16x128xf32>
    %cst_202 = arith.constant dense<0.000000e+00> : vector<32x128xf32>
    %396 = tpu.matmul %394, %395, %cst_202 {dimension_numbers = #tpu.dot_dimension_numbers<[1], [0], [0], [1], [0, 0, 1, 1], [], []>} : vector<32x16xf32>, vector<16x128xf32>, vector<32x128xf32> -> vector<32x128xf32>
    %c152_203 = arith.constant 152 : index
    %c0_204 = arith.constant 0 : index
    %397 = vector.load %arg3[%c152_203, %c0_204] : memref<1216x128xf32, #tpu.memory_space<vmem>>, vector<1x128xf32>
    %398 = vector.broadcast %397 : vector<1x128xf32> to vector<32x128xf32>
    %399 = arith.addf %396, %398 : vector<32x128xf32>
    %400 = arith.index_cast %c1_i32 : i32 to index
    %c0_205 = arith.constant 0 : index
    %c0_206 = arith.constant 0 : index
    %401 = vector.load %arg6[%400, %c0_205, %c0_206] : memref<2x32x128xf32, #tpu.memory_space<vmem>>, vector<1x32x128xf32>
    %402 = vector.shape_cast %401 : vector<1x32x128xf32> to vector<32x128xf32>
    %403 = vector.shape_cast %399 : vector<32x128xf32> to vector<1x32x128xf32>
    tpu.vector_store %arg6[%400, %c0_205, %c0_206], %403 {strides = array<i32>} : memref<2x32x128xf32, #tpu.memory_space<vmem>>, vector<1x32x128xf32>,
    %c2_i32 = arith.constant 2 : i32
    return
  }
  func.func @transform_0(%arg0: i32) -> (i32, i32) {
    %c0_i32 = arith.constant 0 : i32
    %c0_i32_0 = arith.constant 0 : i32
    %c0_i32_1 = arith.constant 0 : i32
    return %c0_i32, %c0_i32_0 : i32, i32
  }
  func.func @transform_1(%arg0: i32) -> (i32, i32) {
    %c0_i32 = arith.constant 0 : i32
    %c0_i32_0 = arith.constant 0 : i32
    %c0_i32_1 = arith.constant 0 : i32
    return %c0_i32, %c0_i32_0 : i32, i32
  }
  func.func @transform_2(%arg0: i32) -> (i32, i32) {
    %c0_i32 = arith.constant 0 : i32
    %c0_i32_0 = arith.constant 0 : i32
    %c0_i32_1 = arith.constant 0 : i32
    return %c0_i32, %c0_i32_0 : i32, i32
  }
  func.func @transform_3(%arg0: i32) -> (i32, i32) {
    %c0_i32 = arith.constant 0 : i32
    %c0_i32_0 = arith.constant 0 : i32
    %c0_i32_1 = arith.constant 0 : i32
    return %c0_i32, %c0_i32_0 : i32, i32
  }
  func.func @transform_4(%arg0: i32) -> (i32, i32, i32) {
    %c0_i32 = arith.constant 0 : i32
    %c0_i32_0 = arith.constant 0 : i32
    %c0_i32_1 = arith.constant 0 : i32
    %c0_i32_2 = arith.constant 0 : i32
    return %c0_i32, %c0_i32_0, %c0_i32_1 : i32, i32, i32
  }
  func.func @transform_5(%arg0: i32) -> (i32, i32, i32) {
    %c0_i32 = arith.constant 0 : i32
    %c0_i32_0 = arith.constant 0 : i32
    %c0_i32_1 = arith.constant 0 : i32
    %c0_i32_2 = arith.constant 0 : i32
    return %c0_i32, %c0_i32_0, %c0_i32_1 : i32, i32, i32
  }
}

</mosaic_0001>

<llo_original>
// kernel: re_embed_rrn_forward.1
$region0: #{re_embed_rrn_forward.1}
  #allocation0 [shape = 'u32[]', space=smem, size = 0x4, offset = 0x4, fixed_abs, tag = 'smem constant byte address 0x4 - core index']
  #allocation1 [shape = 'u32[144,128]{1,0:T(1,128)}', space=vmem, size = 0x12000, scoped, tag = 'internal scratch']
  %s0 = inlined_call_operand.vmem [shape: f32[32,128], index: 0, kind: input, shape index: {}]
  %s1 = inlined_call_operand.vmem [shape: f32[32,32], index: 1, kind: input, shape index: {}]
  %s2 = inlined_call_operand.vmem [shape: f32[1216,128], index: 2, kind: input, shape index: {}]
  %s3 = inlined_call_operand.vmem [shape: f32[32,128], index: 3, kind: output, shape index: {0}]
  %s4 = inlined_call_operand.vmem [shape: f32[2,32,128], index: 4, kind: output, shape index: {1}]
  %s5 = inlined_call_operand.vmem [shape: f32[2,32,128], index: 5, kind: output, shape index: {2}]
  %6 = xla_tuple %s3, %s4, %s5
  %s7 = sld [smem:[#allocation0]]
  $region38: #{re_embed_rrn_forward.1} parent=0
    _
  %s9 = ssub.s32 1, %s7
  %s10 = scalar_select 0, %s9, %s7
  // Predicated region
  $region2: #{re_embed_rrn_forward.1} parent=0 // pred_check
    _
  $region3: #{re_embed_rrn_forward.1} parent=0 // pred_check_branch
    %12 = sbr.rel (0) target = $region5
  $region4: #{re_embed_rrn_forward.1} parent=0 // pred_region
    _
  $region5: #{re_embed_rrn_forward.1} parent=0 // pred_fallthru
    _
  // Predicated region
  $region6: #{re_embed_rrn_forward.1} parent=0 // pred_check
    _
  $region7: #{re_embed_rrn_forward.1} parent=0 // pred_check_branch
    %14 = sbr.rel (0) target = $region9
  $region8: #{re_embed_rrn_forward.1} parent=0 // pred_region
    _
  $region9: #{re_embed_rrn_forward.1} parent=0 // pred_fallthru
    _
  // Predicated region
  $region10: #{re_embed_rrn_forward.1} parent=0 // pred_check
    _
  $region11: #{re_embed_rrn_forward.1} parent=0 // pred_check_branch
    %16 = sbr.rel (0) target = $region13
  $region12: #{re_embed_rrn_forward.1} parent=0 // pred_region
    _
  $region13: #{re_embed_rrn_forward.1} parent=0 // pred_fallthru
    _
  %v17 = vld [vmem:[%s0] sm:$0xff]
  %v18 = vld [vmem:[%s0 + $0x8] sm:$0xff]
  %v19 = vld [vmem:[%s0 + $0x10] sm:$0xff]
  %v20 = vld [vmem:[%s0 + $0x18] sm:$0xff]
  %v21 = vld [vmem:[%s2] sm:$0xff]
  %v22 = vld [vmem:[%s2 + $0x8] sm:$0xff]
  %v23 = vld [vmem:[%s2 + $0x10] sm:$0xff]
  %v24 = vld [vmem:[%s2 + $0x18] sm:$0xff]
  %v25 = vld [vmem:[%s2 + $0x20] sm:$0xff]
  %v26 = vld [vmem:[%s2 + $0x28] sm:$0xff]
  %v27 = vld [vmem:[%s2 + $0x30] sm:$0xff]
  %v28 = vld [vmem:[%s2 + $0x38] sm:$0xff]
  %v29 = vld [vmem:[%s2 + $0x40] sm:$0xff]
  %v30 = vld [vmem:[%s2 + $0x48] sm:$0xff]
  %v31 = vld [vmem:[%s2 + $0x50] sm:$0xff]
  %v32 = vld [vmem:[%s2 + $0x58] sm:$0xff]
  %v33 = vld [vmem:[%s2 + $0x60] sm:$0xff]
  %v34 = vld [vmem:[%s2 + $0x68] sm:$0xff]
  %v35 = vld [vmem:[%s2 + $0x70] sm:$0xff]
  %v36 = vld [vmem:[%s2 + $0x78] sm:$0xff]
  %v37 = vld [vmem:[%s2 + $0x80] sm:$0x1]
  %v38 = vlaneseq
  %v39 = vshrl.u32 %v38, 7
  %v40 = vsub.s32 0, %v39
  %v41 = vrot.slane %v37, %v40
  %42 = vmatprep.subr.mxu0 0.0
  %43 = vmatpush1.msra.mxu0 %v21
  %44 = vmatprep.subr.mxu0 0.0
  %45 = vmatpush1.msra.mxu0 %v22
  %46 = vmatprep.subr.mxu0 0.0
  %47 = vmatpush1.msra.mxu0 %v23
  %48 = vmatprep.subr.mxu0 0.0
  %49 = vmatpush1.msra.mxu0 %v24
  %50 = vmatprep.subr.mxu0 0.0
  %51 = vmatpush1.msra.mxu0 %v25
  %52 = vmatprep.subr.mxu0 0.0
  %53 = vmatpush1.msra.mxu0 %v26
  %54 = vmatprep.subr.mxu0 0.0
  %55 = vmatpush1.msra.mxu0 %v27
  %56 = vmatprep.subr.mxu0 0.0
  %57 = vmatpush1.msra.mxu0 %v28
  %58 = vmatprep.subr.mxu0 0.0
  %59 = vmatpush1.msra.mxu0 %v29
  %60 = vmatprep.subr.mxu0 0.0
  %61 = vmatpush1.msra.mxu0 %v30
  %62 = vmatprep.subr.mxu0 0.0
  %63 = vmatpush1.msra.mxu0 %v31
  %64 = vmatprep.subr.mxu0 0.0
  %65 = vmatpush1.msra.mxu0 %v32
  %66 = vmatprep.subr.mxu0 0.0
  %67 = vmatpush1.msra.mxu0 %v33
  %68 = vmatprep.subr.mxu0 0.0
  %69 = vmatpush1.msra.mxu0 %v34
  %70 = vmatprep.subr.mxu0 0.0
  %71 = vmatpush1.msra.mxu0 %v35
  %72 = vmatprep.subr.mxu0 0.0
  %73 = vmatpush1.msra.mxu0 %v36
  %74 = vmatprep.subr.mxu0 0.0
  %75 = vmatpush1.msra.mxu0 0.0
  %76 = vmatprep.subr.mxu0 0.0
  %77 = vmatpush1.msra.mxu0 0.0
  %78 = vmatprep.subr.mxu0 0.0
  %79 = vmatpush1.msra.mxu0 0.0
  %80 = vmatprep.subr.mxu0 0.0
  %81 = vmatpush1.msra.mxu0 0.0
  %82 = vmatprep.subr.mxu0 0.0
  %83 = vmatpush1.msra.mxu0 0.0
  %84 = vmatprep.subr.mxu0 0.0
  %85 = vmatpush1.msra.mxu0 0.0
  %86 = vmatprep.subr.mxu0 0.0
  %87 = vmatpush1.msra.mxu0 0.0
  %88 = vmatprep.subr.mxu0 0.0
  %89 = vmatpush1.msra.mxu0 0.0
  %90 = vmatprep.subr.mxu0 0.0
  %91 = vmatpush1.msra.mxu0 0.0
  %92 = vmatprep.subr.mxu0 0.0
  %93 = vmatpush1.msra.mxu0 0.0
  %94 = vmatprep.subr.mxu0 0.0
  %95 = vmatpush1.msra.mxu0 0.0
  %96 = vmatprep.subr.mxu0 0.0
  %97 = vmatpush1.msra.mxu0 0.0
  %98 = vmatprep.subr.mxu0 0.0
  %99 = vmatpush1.msra.mxu0 0.0
  %100 = vmatprep.subr.mxu0 0.0
  %101 = vmatpush1.msra.mxu0 0.0
  %102 = vmatprep.subr.mxu0 0.0
  %103 = vmatpush1.msra.mxu0 0.0
  %104 = vmatprep.subr.mxu0 0.0
  %105 = vmatpush1.msra.mxu0 0.0
  %106 = vmatprep.mubr.f32.mxu0 0.0
  %107 = vmatmul.mubr.f32.gmra.mrb[0].mxu0 %v17
  %v108 = vpop.f32.mrb[0].mxu0
  %v109 = vadd.f32 %v41, %v108
  %v110 = vpop.f32.mrb[0].mxu0
  %111 = vmatprep.mubr.f32.mxu0 0.0
  %112 = vmatmul.mubr.f32.gmra.mrb[0].mxu0 %v18
  %v113 = vpop.f32.mrb[0].mxu0
  %v114 = vadd.f32 %v41, %v113
  %v115 = vpop.f32.mrb[0].mxu0
  %116 = vmatprep.mubr.f32.mxu0 0.0
  %117 = vmatmul.mubr.f32.gmra.mrb[0].mxu0 %v19
  %v118 = vpop.f32.mrb[0].mxu0
  %v119 = vadd.f32 %v41, %v118
  %v120 = vpop.f32.mrb[0].mxu0
  %121 = vmatprep.mubr.f32.mxu0 0.0
  %122 = vmatmul.mubr.f32.gmra.mrb[0].mxu0 %v20
  %v123 = vpop.f32.mrb[0].mxu0
  %v124 = vadd.f32 %v41, %v123
  %v125 = vpop.f32.mrb[0].mxu0
  %126 = vdwg.mxu0
  %v127 = vld [vmem:[%s2 + $0x88] sm:$0xff]
  %v128 = vld [vmem:[%s2 + $0x90] sm:$0xff]
  %v129 = vld [vmem:[%s2 + $0x98] sm:$0x1]
  %v130 = vlaneseq
  %v131 = vshrl.u32 %v130, 7
  %v132 = vsub.s32 0, %v131
  %v133 = vrot.slane %v129, %v132
  %vm134 = vcmask 130048
  %v136 = vsel %vm134, %v109, 0
  %v139 = vsel %vm134, %v114, 0
  %v142 = vsel %vm134, %v119, 0
  %v145 = vsel %vm134, %v124, 0
  %147 = vmatprep.subr.mxu0 0.0
  %148 = vmatpush1.msra.mxu0 %v127
  %149 = vmatprep.subr.mxu0 0.0
  %150 = vmatpush1.msra.mxu0 %v128
  %151 = vmatprep.subr.mxu0 0.0
  %152 = vmatpush1.msra.mxu0 0.0
  %153 = vmatprep.subr.mxu0 0.0
  %154 = vmatpush1.msra.mxu0 0.0
  %155 = vmatprep.subr.mxu0 0.0
  %156 = vmatpush1.msra.mxu0 0.0
  %157 = vmatprep.subr.mxu0 0.0
  %158 = vmatpush1.msra.mxu0 0.0
  %159 = vmatprep.subr.mxu0 0.0
  %160 = vmatpush1.msra.mxu0 0.0
  %161 = vmatprep.subr.mxu0 0.0
  %162 = vmatpush1.msra.mxu0 0.0
  %163 = vmatprep.subr.mxu0 0.0
  %164 = vmatpush1.msra.mxu0 0.0
  %165 = vmatprep.subr.mxu0 0.0
  %166 = vmatpush1.msra.mxu0 0.0
  %167 = vmatprep.subr.mxu0 0.0
  %168 = vmatpush1.msra.mxu0 0.0
  %169 = vmatprep.subr.mxu0 0.0
  %170 = vmatpush1.msra.mxu0 0.0
  %171 = vmatprep.subr.mxu0 0.0
  %172 = vmatpush1.msra.mxu0 0.0
  %173 = vmatprep.subr.mxu0 0.0
  %174 = vmatpush1.msra.mxu0 0.0
  %175 = vmatprep.subr.mxu0 0.0
  %176 = vmatpush1.msra.mxu0 0.0
  %177 = vmatprep.subr.mxu0 0.0
  %178 = vmatpush1.msra.mxu0 0.0
  %179 = vmatprep.subr.mxu0 0.0
  %180 = vmatpush1.msra.mxu0 0.0
  %181 = vmatprep.subr.mxu0 0.0
  %182 = vmatpush1.msra.mxu0 0.0
  %183 = vmatprep.subr.mxu0 0.0
  %184 = vmatpush1.msra.mxu0 0.0
  %185 = vmatprep.subr.mxu0 0.0
  %186 = vmatpush1.msra.mxu0 0.0
  %187 = vmatprep.subr.mxu0 0.0
  %188 = vmatpush1.msra.mxu0 0.0
  %189 = vmatprep.subr.mxu0 0.0
  %190 = vmatpush1.msra.mxu0 0.0
  %191 = vmatprep.subr.mxu0 0.0
  %192 = vmatpush1.msra.mxu0 0.0
  %193 = vmatprep.subr.mxu0 0.0
  %194 = vmatpush1.msra.mxu0 0.0
  %195 = vmatprep.subr.mxu0 0.0
  %196 = vmatpush1.msra.mxu0 0.0
  %197 = vmatprep.subr.mxu0 0.0
  %198 = vmatpush1.msra.mxu0 0.0
  %199 = vmatprep.subr.mxu0 0.0
  %200 = vmatpush1.msra.mxu0 0.0
  %201 = vmatprep.subr.mxu0 0.0
  %202 = vmatpush1.msra.mxu0 0.0
  %203 = vmatprep.subr.mxu0 0.0
  %204 = vmatpush1.msra.mxu0 0.0
  %205 = vmatprep.subr.mxu0 0.0
  %206 = vmatpush1.msra.mxu0 0.0
  %207 = vmatprep.subr.mxu0 0.0
  %208 = vmatpush1.msra.mxu0 0.0
  %209 = vmatprep.subr.mxu0 0.0
  %210 = vmatpush1.msra.mxu0 0.0
  %211 = vmatprep.mubr.f32.mxu0 0.0
  %212 = vmatmul.mubr.f32.gmra.mrb[0].mxu0 %v136
  %v213 = vpop.f32.mrb[0].mxu0
  %v214 = vadd.f32 %v133, %v213
  %v215 = vpop.f32.mrb[0].mxu0
  %216 = vmatprep.mubr.f32.mxu0 0.0
  %217 = vmatmul.mubr.f32.gmra.mrb[0].mxu0 %v139
  %v218 = vpop.f32.mrb[0].mxu0
  %v219 = vadd.f32 %v133, %v218
  %v220 = vpop.f32.mrb[0].mxu0
  %221 = vmatprep.mubr.f32.mxu0 0.0
  %222 = vmatmul.mubr.f32.gmra.mrb[0].mxu0 %v142
  %v223 = vpop.f32.mrb[0].mxu0
  %v224 = vadd.f32 %v133, %v223
  %v225 = vpop.f32.mrb[0].mxu0
  %226 = vmatprep.mubr.f32.mxu0 0.0
  %227 = vmatmul.mubr.f32.gmra.mrb[0].mxu0 %v145
  %v228 = vpop.f32.mrb[0].mxu0
  %v229 = vadd.f32 %v133, %v228
  %v230 = vpop.f32.mrb[0].mxu0
  %231 = vdwg.mxu0
  %232 = vst [vmem:[%s3] sm:$0xff] %v214
  %233 = vst [vmem:[%s3 + $0x8] sm:$0xff] %v219
  %234 = vst [vmem:[%s3 + $0x10] sm:$0xff] %v224
  %235 = vst [vmem:[%s3 + $0x18] sm:$0xff] %v229
  %v236 = vld [vmem:[%s2 + $0xa0] sm:$0xff]
  %v237 = vld [vmem:[%s2 + $0xa8] sm:$0xff]
  %v238 = vld [vmem:[%s2 + $0xb0] sm:$0x1]
  %v239 = vlaneseq
  %v240 = vshrl.u32 %v239, 7
  %v241 = vsub.s32 0, %v240
  %v242 = vrot.slane %v238, %v241
  %243 = vmatprep.subr.mxu0 0.0
  %244 = vmatpush1.msra.mxu0 %v236
  %245 = vmatprep.subr.mxu0 0.0
  %246 = vmatpush1.msra.mxu0 %v237
  %247 = vmatprep.subr.mxu0 0.0
  %248 = vmatpush1.msra.mxu0 0.0
  %249 = vmatprep.subr.mxu0 0.0
  %250 = vmatpush1.msra.mxu0 0.0
  %251 = vmatprep.subr.mxu0 0.0
  %252 = vmatpush1.msra.mxu0 0.0
  %253 = vmatprep.subr.mxu0 0.0
  %254 = vmatpush1.msra.mxu0 0.0
  %255 = vmatprep.subr.mxu0 0.0
  %256 = vmatpush1.msra.mxu0 0.0
  %257 = vmatprep.subr.mxu0 0.0
  %258 = vmatpush1.msra.mxu0 0.0
  %259 = vmatprep.subr.mxu0 0.0
  %260 = vmatpush1.msra.mxu0 0.0
  %261 = vmatprep.subr.mxu0 0.0
  %262 = vmatpush1.msra.mxu0 0.0
  %263 = vmatprep.subr.mxu0 0.0
  %264 = vmatpush1.msra.mxu0 0.0
  %265 = vmatprep.subr.mxu0 0.0
  %266 = vmatpush1.msra.mxu0 0.0
  %267 = vmatprep.subr.mxu0 0.0
  %268 = vmatpush1.msra.mxu0 0.0
  %269 = vmatprep.subr.mxu0 0.0
  %270 = vmatpush1.msra.mxu0 0.0
  %271 = vmatprep.subr.mxu0 0.0
  %272 = vmatpush1.msra.mxu0 0.0
  %273 = vmatprep.subr.mxu0 0.0
  %274 = vmatpush1.msra.mxu0 0.0
  %275 = vmatprep.subr.mxu0 0.0
  %276 = vmatpush1.msra.mxu0 0.0
  %277 = vmatprep.subr.mxu0 0.0
  %278 = vmatpush1.msra.mxu0 0.0
  %279 = vmatprep.subr.mxu0 0.0
  %280 = vmatpush1.msra.mxu0 0.0
  %281 = vmatprep.subr.mxu0 0.0
  %282 = vmatpush1.msra.mxu0 0.0
  %283 = vmatprep.subr.mxu0 0.0
  %284 = vmatpush1.msra.mxu0 0.0
  %285 = vmatprep.subr.mxu0 0.0
  %286 = vmatpush1.msra.mxu0 0.0
  %287 = vmatprep.subr.mxu0 0.0
  %288 = vmatpush1.msra.mxu0 0.0
  %289 = vmatprep.subr.mxu0 0.0
  %290 = vmatpush1.msra.mxu0 0.0
  %291 = vmatprep.subr.mxu0 0.0
  %292 = vmatpush1.msra.mxu0 0.0
  %293 = vmatprep.subr.mxu0 0.0
  %294 = vmatpush1.msra.mxu0 0.0
  %295 = vmatprep.subr.mxu0 0.0
  %296 = vmatpush1.msra.mxu0 0.0
  %297 = vmatprep.subr.mxu0 0.0
  %298 = vmatpush1.msra.mxu0 0.0
  %299 = vmatprep.subr.mxu0 0.0
  %300 = vmatpush1.msra.mxu0 0.0
  %301 = vmatprep.subr.mxu0 0.0
  %302 = vmatpush1.msra.mxu0 0.0
  %303 = vmatprep.subr.mxu0 0.0
  %304 = vmatpush1.msra.mxu0 0.0
  %305 = vmatprep.subr.mxu0 0.0
  %306 = vmatpush1.msra.mxu0 0.0
  %307 = vmatprep.mubr.f32.mxu0 0.0
  %308 = vmatmul.mubr.f32.gmra.mrb[0].mxu0 %v136
  %v309 = vpop.f32.mrb[0].mxu0
  %v310 = vadd.f32 %v242, %v309
  %v311 = vpop.f32.mrb[0].mxu0
  %312 = vmatprep.mubr.f32.mxu0 0.0
  %313 = vmatmul.mubr.f32.gmra.mrb[0].mxu0 %v139
  %v314 = vpop.f32.mrb[0].mxu0
  %v315 = vadd.f32 %v242, %v314
  %v316 = vpop.f32.mrb[0].mxu0
  %317 = vmatprep.mubr.f32.mxu0 0.0
  %318 = vmatmul.mubr.f32.gmra.mrb[0].mxu0 %v142
  %v319 = vpop.f32.mrb[0].mxu0
  %v320 = vadd.f32 %v242, %v319
  %v321 = vpop.f32.mrb[0].mxu0
  %322 = vmatprep.mubr.f32.mxu0 0.0
  %323 = vmatmul.mubr.f32.gmra.mrb[0].mxu0 %v145
  %v324 = vpop.f32.mrb[0].mxu0
  %v325 = vadd.f32 %v242, %v324
  %v326 = vpop.f32.mrb[0].mxu0
  %327 = vdwg.mxu0
  %v328 = vmax.f32 %v310, 0.0
  %v329 = vmax.f32 %v315, 0.0
  %v330 = vmax.f32 %v320, 0.0
  %v331 = vmax.f32 %v325, 0.0
  %v332 = vld [vmem:[%s2 + $0xb8] sm:$0xff]
  %v333 = vld [vmem:[%s2 + $0xc0] sm:$0xff]
  %v334 = vld [vmem:[%s2 + $0xc8] sm:$0xff]
  %v335 = vld [vmem:[%s2 + $0xd0] sm:$0xff]
  %v336 = vld [vmem:[%s2 + $0xd8] sm:$0x1]
  %v337 = vlaneseq
  %v338 = vshrl.u32 %v337, 7
  %v339 = vsub.s32 0, %v338
  %v340 = vrot.slane %v336, %v339
  %vm341 = vcmask 261120
  %v343 = vsel %vm341, %v328, 0
  %v346 = vsel %vm341, %v329, 0
  %v349 = vsel %vm341, %v330, 0
  %v352 = vsel %vm341, %v331, 0
  %354 = vmatprep.subr.mxu0 0.0
  %355 = vmatpush1.msra.mxu0 %v332
  %356 = vmatprep.subr.mxu0 0.0
  %357 = vmatpush1.msra.mxu0 %v333
  %358 = vmatprep.subr.mxu0 0.0
  %359 = vmatpush1.msra.mxu0 %v334
  %360 = vmatprep.subr.mxu0 0.0
  %361 = vmatpush1.msra.mxu0 %v335
  %362 = vmatprep.subr.mxu0 0.0
  %363 = vmatpush1.msra.mxu0 0.0
  %364 = vmatprep.subr.mxu0 0.0
  %365 = vmatpush1.msra.mxu0 0.0
  %366 = vmatprep.subr.mxu0 0.0
  %367 = vmatpush1.msra.mxu0 0.0
  %368 = vmatprep.subr.mxu0 0.0
  %369 = vmatpush1.msra.mxu0 0.0
  %370 = vmatprep.subr.mxu0 0.0
  %371 = vmatpush1.msra.mxu0 0.0
  %372 = vmatprep.subr.mxu0 0.0
  %373 = vmatpush1.msra.mxu0 0.0
  %374 = vmatprep.subr.mxu0 0.0
  %375 = vmatpush1.msra.mxu0 0.0
  %376 = vmatprep.subr.mxu0 0.0
  %377 = vmatpush1.msra.mxu0 0.0
  %378 = vmatprep.subr.mxu0 0.0
  %379 = vmatpush1.msra.mxu0 0.0
  %380 = vmatprep.subr.mxu0 0.0
  %381 = vmatpush1.msra.mxu0 0.0
  %382 = vmatprep.subr.mxu0 0.0
  %383 = vmatpush1.msra.mxu0 0.0
  %384 = vmatprep.subr.mxu0 0.0
  %385 = vmatpush1.msra.mxu0 0.0
  %386 = vmatprep.subr.mxu0 0.0
  %387 = vmatpush1.msra.mxu0 0.0
  %388 = vmatprep.subr.mxu0 0.0
  %389 = vmatpush1.msra.mxu0 0.0
  %390 = vmatprep.subr.mxu0 0.0
  %391 = vmatpush1.msra.mxu0 0.0
  %392 = vmatprep.subr.mxu0 0.0
  %393 = vmatpush1.msra.mxu0 0.0
  %394 = vmatprep.subr.mxu0 0.0
  %395 = vmatpush1.msra.mxu0 0.0
  %396 = vmatprep.subr.mxu0 0.0
  %397 = vmatpush1.msra.mxu0 0.0
  %398 = vmatprep.subr.mxu0 0.0
  %399 = vmatpush1.msra.mxu0 0.0
  %400 = vmatprep.subr.mxu0 0.0
  %401 = vmatpush1.msra.mxu0 0.0
  %402 = vmatprep.subr.mxu0 0.0
  %403 = vmatpush1.msra.mxu0 0.0
  %404 = vmatprep.subr.mxu0 0.0
  %405 = vmatpush1.msra.mxu0 0.0
  %406 = vmatprep.subr.mxu0 0.0
  %407 = vmatpush1.msra.mxu0 0.0
  %408 = vmatprep.subr.mxu0 0.0
  %409 = vmatpush1.msra.mxu0 0.0
  %410 = vmatprep.subr.mxu0 0.0
  %411 = vmatpush1.msra.mxu0 0.0
  %412 = vmatprep.subr.mxu0 0.0
  %413 = vmatpush1.msra.mxu0 0.0
  %414 = vmatprep.subr.mxu0 0.0
  %415 = vmatpush1.msra.mxu0 0.0
  %416 = vmatprep.subr.mxu0 0.0
  %417 = vmatpush1.msra.mxu0 0.0
  %418 = vmatprep.mubr.f32.mxu0 0.0
  %419 = vmatmul.mubr.f32.gmra.mrb[0].mxu0 %v343
  %v420 = vpop.f32.mrb[0].mxu0
  %v421 = vadd.f32 %v340, %v420
  %v422 = vpop.f32.mrb[0].mxu0
  %423 = vmatprep.mubr.f32.mxu0 0.0
  %424 = vmatmul.mubr.f32.gmra.mrb[0].mxu0 %v346
  %v425 = vpop.f32.mrb[0].mxu0
  %v426 = vadd.f32 %v340, %v425
  %v427 = vpop.f32.mrb[0].mxu0
  %428 = vmatprep.mubr.f32.mxu0 0.0
  %429 = vmatmul.mubr.f32.gmra.mrb[0].mxu0 %v349
  %v430 = vpop.f32.mrb[0].mxu0
  %v431 = vadd.f32 %v340, %v430
  %v432 = vpop.f32.mrb[0].mxu0
  %433 = vmatprep.mubr.f32.mxu0 0.0
  %434 = vmatmul.mubr.f32.gmra.mrb[0].mxu0 %v352
  %v435 = vpop.f32.mrb[0].mxu0
  %v436 = vadd.f32 %v340, %v435
  %v437 = vpop.f32.mrb[0].mxu0
  %438 = vdwg.mxu0
  %v439 = vmax.f32 %v421, 0.0
  %v440 = vmax.f32 %v426, 0.0
  %v441 = vmax.f32 %v431, 0.0
  %v442 = vmax.f32 %v436, 0.0
  %v443 = vld [vmem:[%s2 + $0xe0] sm:$0xff]
  %v444 = vld [vmem:[%s2 + $0xe8] sm:$0xff]
  %v445 = vld [vmem:[%s2 + $0xf0] sm:$0xff]
  %v446 = vld [vmem:[%s2 + $0xf8] sm:$0xff]
  %v447 = vld [vmem:[%s2 + $0x100] sm:$0x1]
  %v448 = vlaneseq
  %v449 = vshrl.u32 %v448, 7
  %v450 = vsub.s32 0, %v449
  %v451 = vrot.slane %v447, %v450
  %v453 = vsel %vm341, %v439, 0
  %v456 = vsel %vm341, %v440, 0
  %v459 = vsel %vm341, %v441, 0
  %v462 = vsel %vm341, %v442, 0
  %464 = vmatprep.subr.mxu0 0.0
  %465 = vmatpush1.msra.mxu0 %v443
  %466 = vmatprep.subr.mxu0 0.0
  %467 = vmatpush1.msra.mxu0 %v444
  %468 = vmatprep.subr.mxu0 0.0
  %469 = vmatpush1.msra.mxu0 %v445
  %470 = vmatprep.subr.mxu0 0.0
  %471 = vmatpush1.msra.mxu0 %v446
  %472 = vmatprep.subr.mxu0 0.0
  %473 = vmatpush1.msra.mxu0 0.0
  %474 = vmatprep.subr.mxu0 0.0
  %475 = vmatpush1.msra.mxu0 0.0
  %476 = vmatprep.subr.mxu0 0.0
  %477 = vmatpush1.msra.mxu0 0.0
  %478 = vmatprep.subr.mxu0 0.0
  %479 = vmatpush1.msra.mxu0 0.0
  %480 = vmatprep.subr.mxu0 0.0
  %481 = vmatpush1.msra.mxu0 0.0
  %482 = vmatprep.subr.mxu0 0.0
  %483 = vmatpush1.msra.mxu0 0.0
  %484 = vmatprep.subr.mxu0 0.0
  %485 = vmatpush1.msra.mxu0 0.0
  %486 = vmatprep.subr.mxu0 0.0
  %487 = vmatpush1.msra.mxu0 0.0
  %488 = vmatprep.subr.mxu0 0.0
  %489 = vmatpush1.msra.mxu0 0.0
  %490 = vmatprep.subr.mxu0 0.0
  %491 = vmatpush1.msra.mxu0 0.0
  %492 = vmatprep.subr.mxu0 0.0
  %493 = vmatpush1.msra.mxu0 0.0
  %494 = vmatprep.subr.mxu0 0.0
  %495 = vmatpush1.msra.mxu0 0.0
  %496 = vmatprep.subr.mxu0 0.0
  %497 = vmatpush1.msra.mxu0 0.0
  %498 = vmatprep.subr.mxu0 0.0
  %499 = vmatpush1.msra.mxu0 0.0
  %500 = vmatprep.subr.mxu0 0.0
  %501 = vmatpush1.msra.mxu0 0.0
  %502 = vmatprep.subr.mxu0 0.0
  %503 = vmatpush1.msra.mxu0 0.0
  %504 = vmatprep.subr.mxu0 0.0
  %505 = vmatpush1.msra.mxu0 0.0
  %506 = vmatprep.subr.mxu0 0.0
  %507 = vmatpush1.msra.mxu0 0.0
  %508 = vmatprep.subr.mxu0 0.0
  %509 = vmatpush1.msra.mxu0 0.0
  %510 = vmatprep.subr.mxu0 0.0
  %511 = vmatpush1.msra.mxu0 0.0
  %512 = vmatprep.subr.mxu0 0.0
  %513 = vmatpush1.msra.mxu0 0.0
  %514 = vmatprep.subr.mxu0 0.0
  %515 = vmatpush1.msra.mxu0 0.0
  %516 = vmatprep.subr.mxu0 0.0
  %517 = vmatpush1.msra.mxu0 0.0
  %518 = vmatprep.subr.mxu0 0.0
  %519 = vmatpush1.msra.mxu0 0.0
  %520 = vmatprep.subr.mxu0 0.0
  %521 = vmatpush1.msra.mxu0 0.0
  %522 = vmatprep.subr.mxu0 0.0
  %523 = vmatpush1.msra.mxu0 0.0
  %524 = vmatprep.subr.mxu0 0.0
  %525 = vmatpush1.msra.mxu0 0.0
  %526 = vmatprep.subr.mxu0 0.0
  %527 = vmatpush1.msra.mxu0 0.0
  %528 = vmatprep.mubr.f32.mxu0 0.0
  %529 = vmatmul.mubr.f32.gmra.mrb[0].mxu0 %v453
  %v530 = vpop.f32.mrb[0].mxu0
  %v531 = vadd.f32 %v451, %v530
  %v532 = vpop.f32.mrb[0].mxu0
  %533 = vmatprep.mubr.f32.mxu0 0.0
  %534 = vmatmul.mubr.f32.gmra.mrb[0].mxu0 %v456
  %v535 = vpop.f32.mrb[0].mxu0
  %v536 = vadd.f32 %v451, %v535
  %v537 = vpop.f32.mrb[0].mxu0
  %538 = vmatprep.mubr.f32.mxu0 0.0
  %539 = vmatmul.mubr.f32.gmra.mrb[0].mxu0 %v459
  %v540 = vpop.f32.mrb[0].mxu0
  %v541 = vadd.f32 %v451, %v540
  %v542 = vpop.f32.mrb[0].mxu0
  %543 = vmatprep.mubr.f32.mxu0 0.0
  %544 = vmatmul.mubr.f32.gmra.mrb[0].mxu0 %v462
  %v545 = vpop.f32.mrb[0].mxu0
  %v546 = vadd.f32 %v451, %v545
  %v547 = vpop.f32.mrb[0].mxu0
  %548 = vdwg.mxu0
  %v549 = vld [vmem:[%s1] sm:$0xff]
  %v550 = vld [vmem:[%s1 + $0x8] sm:$0xff]
  %v551 = vld [vmem:[%s1 + $0x10] sm:$0xff]
  %v552 = vld [vmem:[%s1 + $0x18] sm:$0xff]
  %v553 = vld [vmem:[%s2 + $0x108] sm:$0xff]
  %v554 = vld [vmem:[%s2 + $0x110] sm:$0xff]
  %v555 = vld [vmem:[%s2 + $0x118] sm:$0xff]
  %v556 = vld [vmem:[%s2 + $0x120] sm:$0xff]
  %v558 = vsel %vm341, %v531, 0
  %v561 = vsel %vm341, %v536, 0
  %v564 = vsel %vm341, %v541, 0
  %v567 = vsel %vm341, %v546, 0
  %569 = vmatprep.subr.mxu0 0.0
  %570 = vmatpush1.msra.mxu0 %v553
  %571 = vmatprep.subr.mxu0 0.0
  %572 = vmatpush1.msra.mxu0 %v554
  %573 = vmatprep.subr.mxu0 0.0
  %574 = vmatpush1.msra.mxu0 %v555
  %575 = vmatprep.subr.mxu0 0.0
  %576 = vmatpush1.msra.mxu0 %v556
  %577 = vmatprep.subr.mxu0 0.0
  %578 = vmatpush1.msra.mxu0 0.0
  %579 = vmatprep.subr.mxu0 0.0
  %580 = vmatpush1.msra.mxu0 0.0
  %581 = vmatprep.subr.mxu0 0.0
  %582 = vmatpush1.msra.mxu0 0.0
  %583 = vmatprep.subr.mxu0 0.0
  %584 = vmatpush1.msra.mxu0 0.0
  %585 = vmatprep.subr.mxu0 0.0
  %586 = vmatpush1.msra.mxu0 0.0
  %587 = vmatprep.subr.mxu0 0.0
  %588 = vmatpush1.msra.mxu0 0.0
  %589 = vmatprep.subr.mxu0 0.0
  %590 = vmatpush1.msra.mxu0 0.0
  %591 = vmatprep.subr.mxu0 0.0
  %592 = vmatpush1.msra.mxu0 0.0
  %593 = vmatprep.subr.mxu0 0.0
  %594 = vmatpush1.msra.mxu0 0.0
  %595 = vmatprep.subr.mxu0 0.0
  %596 = vmatpush1.msra.mxu0 0.0
  %597 = vmatprep.subr.mxu0 0.0
  %598 = vmatpush1.msra.mxu0 0.0
  %599 = vmatprep.subr.mxu0 0.0
  %600 = vmatpush1.msra.mxu0 0.0
  %601 = vmatprep.subr.mxu0 0.0
  %602 = vmatpush1.msra.mxu0 0.0
  %603 = vmatprep.subr.mxu0 0.0
  %604 = vmatpush1.msra.mxu0 0.0
  %605 = vmatprep.subr.mxu0 0.0
  %606 = vmatpush1.msra.mxu0 0.0
  %607 = vmatprep.subr.mxu0 0.0
  %608 = vmatpush1.msra.mxu0 0.0
  %609 = vmatprep.subr.mxu0 0.0
  %610 = vmatpush1.msra.mxu0 0.0
  %611 = vmatprep.subr.mxu0 0.0
  %612 = vmatpush1.msra.mxu0 0.0
  %613 = vmatprep.subr.mxu0 0.0
  %614 = vmatpush1.msra.mxu0 0.0
  %615 = vmatprep.subr.mxu0 0.0
  %616 = vmatpush1.msra.mxu0 0.0
  %617 = vmatprep.subr.mxu0 0.0
  %618 = vmatpush1.msra.mxu0 0.0
  %619 = vmatprep.subr.mxu0 0.0
  %620 = vmatpush1.msra.mxu0 0.0
  %621 = vmatprep.subr.mxu0 0.0
  %622 = vmatpush1.msra.mxu0 0.0
  %623 = vmatprep.subr.mxu0 0.0
  %624 = vmatpush1.msra.mxu0 0.0
  %625 = vmatprep.subr.mxu0 0.0
  %626 = vmatpush1.msra.mxu0 0.0
  %627 = vmatprep.subr.mxu0 0.0
  %628 = vmatpush1.msra.mxu0 0.0
  %629 = vmatprep.subr.mxu0 0.0
  %630 = vmatpush1.msra.mxu0 0.0
  %631 = vmatprep.subr.mxu0 0.0
  %632 = vmatpush1.msra.mxu0 0.0
  %633 = vmatprep.mubr.f32.mxu0 0.0
  %634 = vmatmul.mubr.f32.gmra.mrb[0].mxu0 %v558
  %v635 = vpop.f32.mrb[0].mxu0
  %v636 = vadd.f32 0.0, %v635
  %v637 = vpop.f32.mrb[0].mxu0
  %638 = vmatprep.mubr.f32.mxu0 0.0
  %639 = vmatmul.mubr.f32.gmra.mrb[0].mxu0 %v561
  %v640 = vpop.f32.mrb[0].mxu0
  %v641 = vadd.f32 0.0, %v640
  %v642 = vpop.f32.mrb[0].mxu0
  %643 = vmatprep.mubr.f32.mxu0 0.0
  %644 = vmatmul.mubr.f32.gmra.mrb[0].mxu0 %v564
  %v645 = vpop.f32.mrb[0].mxu0
  %v646 = vadd.f32 0.0, %v645
  %v647 = vpop.f32.mrb[0].mxu0
  %648 = vmatprep.mubr.f32.mxu0 0.0
  %649 = vmatmul.mubr.f32.gmra.mrb[0].mxu0 %v567
  %v650 = vpop.f32.mrb[0].mxu0
  %v651 = vadd.f32 0.0, %v650
  %v652 = vpop.f32.mrb[0].mxu0
  %653 = vdwg.mxu0
  %v654 = vld [vmem:[%s2 + $0x128] sm:$0xff]
  %v655 = vld [vmem:[%s2 + $0x130] sm:$0xff]
  %v656 = vld [vmem:[%s2 + $0x138] sm:$0xff]
  %v657 = vld [vmem:[%s2 + $0x140] sm:$0xff]
  %658 = vmatprep.subr.mxu0 0.0
  %659 = vmatpush1.msra.mxu0 %v654
  %660 = vmatprep.subr.mxu0 0.0
  %661 = vmatpush1.msra.mxu0 %v655
  %662 = vmatprep.subr.mxu0 0.0
  %663 = vmatpush1.msra.mxu0 %v656
  %664 = vmatprep.subr.mxu0 0.0
  %665 = vmatpush1.msra.mxu0 %v657
  %666 = vmatprep.subr.mxu0 0.0
  %667 = vmatpush1.msra.mxu0 0.0
  %668 = vmatprep.subr.mxu0 0.0
  %669 = vmatpush1.msra.mxu0 0.0
  %670 = vmatprep.subr.mxu0 0.0
  %671 = vmatpush1.msra.mxu0 0.0
  %672 = vmatprep.subr.mxu0 0.0
  %673 = vmatpush1.msra.mxu0 0.0
  %674 = vmatprep.subr.mxu0 0.0
  %675 = vmatpush1.msra.mxu0 0.0
  %676 = vmatprep.subr.mxu0 0.0
  %677 = vmatpush1.msra.mxu0 0.0
  %678 = vmatprep.subr.mxu0 0.0
  %679 = vmatpush1.msra.mxu0 0.0
  %680 = vmatprep.subr.mxu0 0.0
  %681 = vmatpush1.msra.mxu0 0.0
  %682 = vmatprep.subr.mxu0 0.0
  %683 = vmatpush1.msra.mxu0 0.0
  %684 = vmatprep.subr.mxu0 0.0
  %685 = vmatpush1.msra.mxu0 0.0
  %686 = vmatprep.subr.mxu0 0.0
  %687 = vmatpush1.msra.mxu0 0.0
  %688 = vmatprep.subr.mxu0 0.0
  %689 = vmatpush1.msra.mxu0 0.0
  %690 = vmatprep.subr.mxu0 0.0
  %691 = vmatpush1.msra.mxu0 0.0
  %692 = vmatprep.subr.mxu0 0.0
  %693 = vmatpush1.msra.mxu0 0.0
  %694 = vmatprep.subr.mxu0 0.0
  %695 = vmatpush1.msra.mxu0 0.0
  %696 = vmatprep.subr.mxu0 0.0
  %697 = vmatpush1.msra.mxu0 0.0
  %698 = vmatprep.subr.mxu0 0.0
  %699 = vmatpush1.msra.mxu0 0.0
  %700 = vmatprep.subr.mxu0 0.0
  %701 = vmatpush1.msra.mxu0 0.0
  %702 = vmatprep.subr.mxu0 0.0
  %703 = vmatpush1.msra.mxu0 0.0
  %704 = vmatprep.subr.mxu0 0.0
  %705 = vmatpush1.msra.mxu0 0.0
  %706 = vmatprep.subr.mxu0 0.0
  %707 = vmatpush1.msra.mxu0 0.0
  %708 = vmatprep.subr.mxu0 0.0
  %709 = vmatpush1.msra.mxu0 0.0
  %710 = vmatprep.subr.mxu0 0.0
  %711 = vmatpush1.msra.mxu0 0.0
  %712 = vmatprep.subr.mxu0 0.0
  %713 = vmatpush1.msra.mxu0 0.0
  %714 = vmatprep.subr.mxu0 0.0
  %715 = vmatpush1.msra.mxu0 0.0
  %716 = vmatprep.subr.mxu0 0.0
  %717 = vmatpush1.msra.mxu0 0.0
  %718 = vmatprep.subr.mxu0 0.0
  %719 = vmatpush1.msra.mxu0 0.0
  %720 = vmatprep.subr.mxu0 0.0
  %721 = vmatpush1.msra.mxu0 0.0
  %722 = vmatprep.mubr.f32.mxu0 0.0
  %723 = vmatmul.mubr.f32.gmra.mrb[0].mxu0 %v558
  %v724 = vpop.f32.mrb[0].mxu0
  %v725 = vadd.f32 0.0, %v724
  %v726 = vpop.f32.mrb[0].mxu0
  %727 = vmatprep.mubr.f32.mxu0 0.0
  %728 = vmatmul.mubr.f32.gmra.mrb[0].mxu0 %v561
  %v729 = vpop.f32.mrb[0].mxu0
  %v730 = vadd.f32 0.0, %v729
  %v731 = vpop.f32.mrb[0].mxu0
  %732 = vmatprep.mubr.f32.mxu0 0.0
  %733 = vmatmul.mubr.f32.gmra.mrb[0].mxu0 %v564
  %v734 = vpop.f32.mrb[0].mxu0
  %v735 = vadd.f32 0.0, %v734
  %v736 = vpop.f32.mrb[0].mxu0
  %737 = vmatprep.mubr.f32.mxu0 0.0
  %738 = vmatmul.mubr.f32.gmra.mrb[0].mxu0 %v567
  %v739 = vpop.f32.mrb[0].mxu0
  %v740 = vadd.f32 0.0, %v739
  %v741 = vpop.f32.mrb[0].mxu0
  %742 = vdwg.mxu0
  %v743 = vld [vmem:[%s2 + $0x3d0] sm:$0xff]
  %v744 = vld [vmem:[%s2 + $0x3d8] sm:$0xff]
  %v745 = vld [vmem:[%s2 + $0x3e0] sm:$0xff]
  %v746 = vld [vmem:[%s2 + $0x3e8] sm:$0xff]
  %v747 = vld [vmem:[%s2 + $0x3f0] sm:$0xff]
  %v748 = vld [vmem:[%s2 + $0x3f8] sm:$0xff]
  %v749 = vld [vmem:[%s2 + $0x400] sm:$0xff]
  %v750 = vld [vmem:[%s2 + $0x408] sm:$0xff]
  %v751 = vld [vmem:[%s2 + $0x410] sm:$0xff]
  %v752 = vld [vmem:[%s2 + $0x418] sm:$0xff]
  %v753 = vld [vmem:[%s2 + $0x420] sm:$0xff]
  %v754 = vld [vmem:[%s2 + $0x428] sm:$0xff]
  %v755 = vld [vmem:[%s2 + $0x430] sm:$0xff]
  %v756 = vld [vmem:[%s2 + $0x438] sm:$0xff]
  %v757 = vld [vmem:[%s2 + $0x440] sm:$0xff]
  %v758 = vld [vmem:[%s2 + $0x448] sm:$0xff]
  %v759 = vld [vmem:[%s2 + $0x450] sm:$0xff]
  %v760 = vld [vmem:[%s2 + $0x458] sm:$0xff]
  %v761 = vld [vmem:[%s2 + $0x460] sm:$0xff]
  %v762 = vld [vmem:[%s2 + $0x468] sm:$0xff]
  %v763 = vld [vmem:[%s2 + $0x470] sm:$0xff]
  %v764 = vld [vmem:[%s2 + $0x478] sm:$0xff]
  %v765 = vld [vmem:[%s2 + $0x480] sm:$0xff]
  %v766 = vld [vmem:[%s2 + $0x488] sm:$0xff]
  %v767 = vld [vmem:[%s2 + $0x490] sm:$0xff]
  %v768 = vld [vmem:[%s2 + $0x498] sm:$0xff]
  %v769 = vld [vmem:[%s2 + $0x4a0] sm:$0xff]
  %v770 = vld [vmem:[%s2 + $0x4a8] sm:$0xff]
  %v771 = vld [vmem:[%s2 + $0x4b0] sm:$0xff]
  %v772 = vld [vmem:[%s2 + $0x4b8] sm:$0xff]
  %v774 = vsel %vm134, %v757, 0
  %v777 = vsel %vm134, %v758, 0
  %v780 = vsel %vm134, %v759, 0
  %v783 = vsel %vm134, %v760, 0
  %v786 = vsel %vm134, %v761, 0
  %v789 = vsel %vm134, %v762, 0
  %v792 = vsel %vm134, %v763, 0
  %v795 = vsel %vm134, %v764, 0
  %v798 = vsel %vm134, %v765, 0
  %v801 = vsel %vm134, %v766, 0
  %v804 = vsel %vm134, %v767, 0
  %v807 = vsel %vm134, %v768, 0
  %v810 = vsel %vm134, %v769, 0
  %v813 = vsel %vm134, %v770, 0
  %815 = vmatprep.subr.mxu0 0.0
  %816 = vmatpush1.msra.mxu0 %v725
  %817 = vmatprep.subr.mxu0 0.0
  %818 = vmatpush1.msra.mxu0 %v730
  %819 = vmatprep.subr.mxu0 0.0
  %820 = vmatpush1.msra.mxu0 0.0
  %821 = vmatprep.subr.mxu0 0.0
  %822 = vmatpush1.msra.mxu0 0.0
  %823 = vmatprep.subr.mxu0 0.0
  %824 = vmatpush1.msra.mxu0 0.0
  %825 = vmatprep.subr.mxu0 0.0
  %826 = vmatpush1.msra.mxu0 0.0
  %827 = vmatprep.subr.mxu0 0.0
  %828 = vmatpush1.msra.mxu0 0.0
  %829 = vmatprep.subr.mxu0 0.0
  %830 = vmatpush1.msra.mxu0 0.0
  %831 = vmatprep.subr.mxu0 0.0
  %832 = vmatpush1.msra.mxu0 0.0
  %833 = vmatprep.subr.mxu0 0.0
  %834 = vmatpush1.msra.mxu0 0.0
  %835 = vmatprep.subr.mxu0 0.0
  %836 = vmatpush1.msra.mxu0 0.0
  %837 = vmatprep.subr.mxu0 0.0
  %838 = vmatpush1.msra.mxu0 0.0
  %839 = vmatprep.subr.mxu0 0.0
  %840 = vmatpush1.msra.mxu0 0.0
  %841 = vmatprep.subr.mxu0 0.0
  %842 = vmatpush1.msra.mxu0 0.0
  %843 = vmatprep.subr.mxu0 0.0
  %844 = vmatpush1.msra.mxu0 0.0
  %845 = vmatprep.subr.mxu0 0.0
  %846 = vmatpush1.msra.mxu0 0.0
  %847 = vmatprep.subr.mxu0 0.0
  %848 = vmatpush1.msra.mxu0 0.0
  %849 = vmatprep.subr.mxu0 0.0
  %850 = vmatpush1.msra.mxu0 0.0
  %851 = vmatprep.subr.mxu0 0.0
  %852 = vmatpush1.msra.mxu0 0.0
  %853 = vmatprep.subr.mxu0 0.0
  %854 = vmatpush1.msra.mxu0 0.0
  %855 = vmatprep.subr.mxu0 0.0
  %856 = vmatpush1.msra.mxu0 0.0
  %857 = vmatprep.subr.mxu0 0.0
  %858 = vmatpush1.msra.mxu0 0.0
  %859 = vmatprep.subr.mxu0 0.0
  %860 = vmatpush1.msra.mxu0 0.0
  %861 = vmatprep.subr.mxu0 0.0
  %862 = vmatpush1.msra.mxu0 0.0
  %863 = vmatprep.subr.mxu0 0.0
  %864 = vmatpush1.msra.mxu0 0.0
  %865 = vmatprep.subr.mxu0 0.0
  %866 = vmatpush1.msra.mxu0 0.0
  %867 = vmatprep.subr.mxu0 0.0
  %868 = vmatpush1.msra.mxu0 0.0
  %869 = vmatprep.subr.mxu0 0.0
  %870 = vmatpush1.msra.mxu0 0.0
  %871 = vmatprep.subr.mxu0 0.0
  %872 = vmatpush1.msra.mxu0 0.0
  %873 = vmatprep.subr.mxu0 0.0
  %874 = vmatpush1.msra.mxu0 0.0
  %875 = vmatprep.subr.mxu0 0.0
  %876 = vmatpush1.msra.mxu0 0.0
  %877 = vmatprep.subr.mxu0 0.0
  %878 = vmatpush1.msra.mxu0 0.0
  %879 = vmatprep.mubr.f32.mxu0 0.0
  %880 = vmatmul.mubr.f32.gmra.mrb[0].mxu0 %v774
  %v881 = vpop.f32.mrb[0].mxu0
  %v882 = vadd.f32 0.0, %v881
  %v883 = vpop.f32.mrb[0].mxu0
  %884 = vmatprep.mubr.f32.mxu0 0.0
  %885 = vmatmul.mubr.f32.gmra.mrb[0].mxu0 %v777
  %v886 = vpop.f32.mrb[0].mxu0
  %v887 = vadd.f32 0.0, %v886
  %v888 = vpop.f32.mrb[0].mxu0
  %889 = vmatprep.mubr.f32.mxu0 0.0
  %890 = vmatmul.mubr.f32.gmra.mrb[0].mxu0 %v780
  %v891 = vpop.f32.mrb[0].mxu0
  %v892 = vadd.f32 0.0, %v891
  %v893 = vpop.f32.mrb[0].mxu0
  %894 = vmatprep.mubr.f32.mxu0 0.0
  %895 = vmatmul.mubr.f32.gmra.mrb[0].mxu0 %v783
  %v896 = vpop.f32.mrb[0].mxu0
  %v897 = vadd.f32 0.0, %v896
  %v898 = vpop.f32.mrb[0].mxu0
  %899 = vmatprep.mubr.f32.mxu0 0.0
  %900 = vmatmul.mubr.f32.gmra.mrb[0].mxu0 %v786
  %v901 = vpop.f32.mrb[0].mxu0
  %v902 = vadd.f32 0.0, %v901
  %v903 = vpop.f32.mrb[0].mxu0
  %904 = vmatprep.mubr.f32.mxu0 0.0
  %905 = vmatmul.mubr.f32.gmra.mrb[0].mxu0 %v789
  %v906 = vpop.f32.mrb[0].mxu0
  %v907 = vadd.f32 0.0, %v906
  %v908 = vpop.f32.mrb[0].mxu0
  %909 = vmatprep.mubr.f32.mxu0 0.0
  %910 = vmatmul.mubr.f32.gmra.mrb[0].mxu0 %v792
  %v911 = vpop.f32.mrb[0].mxu0
  %v912 = vadd.f32 0.0, %v911
  %v913 = vpop.f32.mrb[0].mxu0
  %914 = vmatprep.mubr.f32.mxu0 0.0
  %915 = vmatmul.mubr.f32.gmra.mrb[0].mxu0 %v795
  %v916 = vpop.f32.mrb[0].mxu0
  %v917 = vadd.f32 0.0, %v916
  %v918 = vpop.f32.mrb[0].mxu0
  %919 = vmatprep.mubr.f32.mxu0 0.0
  %920 = vmatmul.mubr.f32.gmra.mrb[0].mxu0 %v798
  %v921 = vpop.f32.mrb[0].mxu0
  %v922 = vadd.f32 0.0, %v921
  %v923 = vpop.f32.mrb[0].mxu0
  %924 = vmatprep.mubr.f32.mxu0 0.0
  %925 = vmatmul.mubr.f32.gmra.mrb[0].mxu0 %v801
  %v926 = vpop.f32.mrb[0].mxu0
  %v927 = vadd.f32 0.0, %v926
  %v928 = vpop.f32.mrb[0].mxu0
  %929 = vmatprep.mubr.f32.mxu0 0.0
  %930 = vmatmul.mubr.f32.gmra.mrb[0].mxu0 %v804
  %v931 = vpop.f32.mrb[0].mxu0
  %v932 = vadd.f32 0.0, %v931
  %v933 = vpop.f32.mrb[0].mxu0
  %934 = vmatprep.mubr.f32.mxu0 0.0
  %935 = vmatmul.mubr.f32.gmra.mrb[0].mxu0 %v807
  %v936 = vpop.f32.mrb[0].mxu0
  %v937 = vadd.f32 0.0, %v936
  %v938 = vpop.f32.mrb[0].mxu0
  %939 = vmatprep.mubr.f32.mxu0 0.0
  %940 = vmatmul.mubr.f32.gmra.mrb[0].mxu0 %v810
  %v941 = vpop.f32.mrb[0].mxu0
  %v942 = vadd.f32 0.0, %v941
  %v943 = vpop.f32.mrb[0].mxu0
  %944 = vmatprep.mubr.f32.mxu0 0.0
  %945 = vmatmul.mubr.f32.gmra.mrb[0].mxu0 %v813
  %v946 = vpop.f32.mrb[0].mxu0
  %v947 = vadd.f32 0.0, %v946
  %v948 = vpop.f32.mrb[0].mxu0
  %949 = vdwg.mxu0
  %v951 = vsel %vm134, %v743, 0
  %v954 = vsel %vm134, %v744, 0
  %v957 = vsel %vm134, %v745, 0
  %v960 = vsel %vm134, %v746, 0
  %v963 = vsel %vm134, %v747, 0
  %v966 = vsel %vm134, %v748, 0
  %v969 = vsel %vm134, %v749, 0
  %v972 = vsel %vm134, %v750, 0
  %v975 = vsel %vm134, %v751, 0
  %v978 = vsel %vm134, %v752, 0
  %v981 = vsel %vm134, %v753, 0
  %v984 = vsel %vm134, %v754, 0
  %v987 = vsel %vm134, %v755, 0
  %v990 = vsel %vm134, %v756, 0
  %992 = vmatprep.subr.mxu0 0.0
  %993 = vmatpush1.msra.mxu0 %v636
  %994 = vmatprep.subr.mxu0 0.0
  %995 = vmatpush1.msra.mxu0 %v641
  %996 = vmatprep.subr.mxu0 0.0
  %997 = vmatpush1.msra.mxu0 0.0
  %998 = vmatprep.subr.mxu0 0.0
  %999 = vmatpush1.msra.mxu0 0.0
  %1000 = vmatprep.subr.mxu0 0.0
  %1001 = vmatpush1.msra.mxu0 0.0
  %1002 = vmatprep.subr.mxu0 0.0
  %1003 = vmatpush1.msra.mxu0 0.0
  %1004 = vmatprep.subr.mxu0 0.0
  %1005 = vmatpush1.msra.mxu0 0.0
  %1006 = vmatprep.subr.mxu0 0.0
  %1007 = vmatpush1.msra.mxu0 0.0
  %1008 = vmatprep.subr.mxu0 0.0
  %1009 = vmatpush1.msra.mxu0 0.0
  %1010 = vmatprep.subr.mxu0 0.0
  %1011 = vmatpush1.msra.mxu0 0.0
  %1012 = vmatprep.subr.mxu0 0.0
  %1013 = vmatpush1.msra.mxu0 0.0
  %1014 = vmatprep.subr.mxu0 0.0
  %1015 = vmatpush1.msra.mxu0 0.0
  %1016 = vmatprep.subr.mxu0 0.0
  %1017 = vmatpush1.msra.mxu0 0.0
  %1018 = vmatprep.subr.mxu0 0.0
  %1019 = vmatpush1.msra.mxu0 0.0
  %1020 = vmatprep.subr.mxu0 0.0
  %1021 = vmatpush1.msra.mxu0 0.0
  %1022 = vmatprep.subr.mxu0 0.0
  %1023 = vmatpush1.msra.mxu0 0.0
  %1024 = vmatprep.subr.mxu0 0.0
  %1025 = vmatpush1.msra.mxu0 0.0
  %1026 = vmatprep.subr.mxu0 0.0
  %1027 = vmatpush1.msra.mxu0 0.0
  %1028 = vmatprep.subr.mxu0 0.0
  %1029 = vmatpush1.msra.mxu0 0.0
  %1030 = vmatprep.subr.mxu0 0.0
  %1031 = vmatpush1.msra.mxu0 0.0
  %1032 = vmatprep.subr.mxu0 0.0
  %1033 = vmatpush1.msra.mxu0 0.0
  %1034 = vmatprep.subr.mxu0 0.0
  %1035 = vmatpush1.msra.mxu0 0.0
  %1036 = vmatprep.subr.mxu0 0.0
  %1037 = vmatpush1.msra.mxu0 0.0
  %1038 = vmatprep.subr.mxu0 0.0
  %1039 = vmatpush1.msra.mxu0 0.0
  %1040 = vmatprep.subr.mxu0 0.0
  %1041 = vmatpush1.msra.mxu0 0.0
  %1042 = vmatprep.subr.mxu0 0.0
  %1043 = vmatpush1.msra.mxu0 0.0
  %1044 = vmatprep.subr.mxu0 0.0
  %1045 = vmatpush1.msra.mxu0 0.0
  %1046 = vmatprep.subr.mxu0 0.0
  %1047 = vmatpush1.msra.mxu0 0.0
  %1048 = vmatprep.subr.mxu0 0.0
  %1049 = vmatpush1.msra.mxu0 0.0
  %1050 = vmatprep.subr.mxu0 0.0
  %1051 = vmatpush1.msra.mxu0 0.0
  %1052 = vmatprep.subr.mxu0 0.0
  %1053 = vmatpush1.msra.mxu0 0.0
  %1054 = vmatprep.subr.mxu0 0.0
  %1055 = vmatpush1.msra.mxu0 0.0
  %1056 = vmatprep.mubr.f32.mxu0 0.0
  %1057 = vmatmul.mubr.f32.gmra.mrb[0].mxu0 %v951
  %v1058 = vpop.f32.mrb[0].mxu0
  %v1059 = vadd.f32 %v882, %v1058
  %v1060 = vpop.f32.mrb[0].mxu0
  %1061 = vmatprep.mubr.f32.mxu0 0.0
  %1062 = vmatmul.mubr.f32.gmra.mrb[0].mxu0 %v954
  %v1063 = vpop.f32.mrb[0].mxu0
  %v1064 = vadd.f32 %v887, %v1063
  %v1065 = vpop.f32.mrb[0].mxu0
  %1066 = vmatprep.mubr.f32.mxu0 0.0
  %1067 = vmatmul.mubr.f32.gmra.mrb[0].mxu0 %v957
  %v1068 = vpop.f32.mrb[0].mxu0
  %v1069 = vadd.f32 %v892, %v1068
  %v1070 = vpop.f32.mrb[0].mxu0
  %1071 = vmatprep.mubr.f32.mxu0 0.0
  %1072 = vmatmul.mubr.f32.gmra.mrb[0].mxu0 %v960
  %v1073 = vpop.f32.mrb[0].mxu0
  %v1074 = vadd.f32 %v897, %v1073
  %v1075 = vpop.f32.mrb[0].mxu0
  %1076 = vmatprep.mubr.f32.mxu0 0.0
  %1077 = vmatmul.mubr.f32.gmra.mrb[0].mxu0 %v963
  %v1078 = vpop.f32.mrb[0].mxu0
  %v1079 = vadd.f32 %v902, %v1078
  %v1080 = vpop.f32.mrb[0].mxu0
  %1081 = vmatprep.mubr.f32.mxu0 0.0
  %1082 = vmatmul.mubr.f32.gmra.mrb[0].mxu0 %v966
  %v1083 = vpop.f32.mrb[0].mxu0
  %v1084 = vadd.f32 %v907, %v1083
  %v1085 = vpop.f32.mrb[0].mxu0
  %1086 = vmatprep.mubr.f32.mxu0 0.0
  %1087 = vmatmul.mubr.f32.gmra.mrb[0].mxu0 %v969
  %v1088 = vpop.f32.mrb[0].mxu0
  %v1089 = vadd.f32 %v912, %v1088
  %v1090 = vpop.f32.mrb[0].mxu0
  %1091 = vmatprep.mubr.f32.mxu0 0.0
  %1092 = vmatmul.mubr.f32.gmra.mrb[0].mxu0 %v972
  %v1093 = vpop.f32.mrb[0].mxu0
  %v1094 = vadd.f32 %v917, %v1093
  %v1095 = vpop.f32.mrb[0].mxu0
  %1096 = vmatprep.mubr.f32.mxu0 0.0
  %1097 = vmatmul.mubr.f32.gmra.mrb[0].mxu0 %v975
  %v1098 = vpop.f32.mrb[0].mxu0
  %v1099 = vadd.f32 %v922, %v1098
  %v1100 = vpop.f32.mrb[0].mxu0
  %1101 = vmatprep.mubr.f32.mxu0 0.0
  %1102 = vmatmul.mubr.f32.gmra.mrb[0].mxu0 %v978
  %v1103 = vpop.f32.mrb[0].mxu0
  %v1104 = vadd.f32 %v927, %v1103
  %v1105 = vpop.f32.mrb[0].mxu0
  %1106 = vmatprep.mubr.f32.mxu0 0.0
  %1107 = vmatmul.mubr.f32.gmra.mrb[0].mxu0 %v981
  %v1108 = vpop.f32.mrb[0].mxu0
  %v1109 = vadd.f32 %v932, %v1108
  %v1110 = vpop.f32.mrb[0].mxu0
  %1111 = vmatprep.mubr.f32.mxu0 0.0
  %1112 = vmatmul.mubr.f32.gmra.mrb[0].mxu0 %v984
  %v1113 = vpop.f32.mrb[0].mxu0
  %v1114 = vadd.f32 %v937, %v1113
  %v1115 = vpop.f32.mrb[0].mxu0
  %1116 = vmatprep.mubr.f32.mxu0 0.0
  %1117 = vmatmul.mubr.f32.gmra.mrb[0].mxu0 %v987
  %v1118 = vpop.f32.mrb[0].mxu0
  %v1119 = vadd.f32 %v942, %v1118
  %v1120 = vpop.f32.mrb[0].mxu0
  %1121 = vmatprep.mubr.f32.mxu0 0.0
  %1122 = vmatmul.mubr.f32.gmra.mrb[0].mxu0 %v990
  %v1123 = vpop.f32.mrb[0].mxu0
  %v1124 = vadd.f32 %v947, %v1123
  %v1125 = vpop.f32.mrb[0].mxu0
  %1126 = vdwg.mxu0
  %1127 = vmatprep.subr.mxu0 0.0
  %1128 = vmatpush1.msra.mxu0 %v735
  %1129 = vmatprep.subr.mxu0 0.0
  %1130 = vmatpush1.msra.mxu0 %v740
  %1131 = vmatprep.subr.mxu0 0.0
  %1132 = vmatpush1.msra.mxu0 0.0
  %1133 = vmatprep.subr.mxu0 0.0
  %1134 = vmatpush1.msra.mxu0 0.0
  %1135 = vmatprep.subr.mxu0 0.0
  %1136 = vmatpush1.msra.mxu0 0.0
  %1137 = vmatprep.subr.mxu0 0.0
  %1138 = vmatpush1.msra.mxu0 0.0
  %1139 = vmatprep.subr.mxu0 0.0
  %1140 = vmatpush1.msra.mxu0 0.0
  %1141 = vmatprep.subr.mxu0 0.0
  %1142 = vmatpush1.msra.mxu0 0.0
  %1143 = vmatprep.subr.mxu0 0.0
  %1144 = vmatpush1.msra.mxu0 0.0
  %1145 = vmatprep.subr.mxu0 0.0
  %1146 = vmatpush1.msra.mxu0 0.0
  %1147 = vmatprep.subr.mxu0 0.0
  %1148 = vmatpush1.msra.mxu0 0.0
  %1149 = vmatprep.subr.mxu0 0.0
  %1150 = vmatpush1.msra.mxu0 0.0
  %1151 = vmatprep.subr.mxu0 0.0
  %1152 = vmatpush1.msra.mxu0 0.0
  %1153 = vmatprep.subr.mxu0 0.0
  %1154 = vmatpush1.msra.mxu0 0.0
  %1155 = vmatprep.subr.mxu0 0.0
  %1156 = vmatpush1.msra.mxu0 0.0
  %1157 = vmatprep.subr.mxu0 0.0
  %1158 = vmatpush1.msra.mxu0 0.0
  %1159 = vmatprep.subr.mxu0 0.0
  %1160 = vmatpush1.msra.mxu0 0.0
  %1161 = vmatprep.subr.mxu0 0.0
  %1162 = vmatpush1.msra.mxu0 0.0
  %1163 = vmatprep.subr.mxu0 0.0
  %1164 = vmatpush1.msra.mxu0 0.0
  %1165 = vmatprep.subr.mxu0 0.0
  %1166 = vmatpush1.msra.mxu0 0.0
  %1167 = vmatprep.subr.mxu0 0.0
  %1168 = vmatpush1.msra.mxu0 0.0
  %1169 = vmatprep.subr.mxu0 0.0
  %1170 = vmatpush1.msra.mxu0 0.0
  %1171 = vmatprep.subr.mxu0 0.0
  %1172 = vmatpush1.msra.mxu0 0.0
  %1173 = vmatprep.subr.mxu0 0.0
  %1174 = vmatpush1.msra.mxu0 0.0
  %1175 = vmatprep.subr.mxu0 0.0
  %1176 = vmatpush1.msra.mxu0 0.0
  %1177 = vmatprep.subr.mxu0 0.0
  %1178 = vmatpush1.msra.mxu0 0.0
  %1179 = vmatprep.subr.mxu0 0.0
  %1180 = vmatpush1.msra.mxu0 0.0
  %1181 = vmatprep.subr.mxu0 0.0
  %1182 = vmatpush1.msra.mxu0 0.0
  %1183 = vmatprep.subr.mxu0 0.0
  %1184 = vmatpush1.msra.mxu0 0.0
  %1185 = vmatprep.subr.mxu0 0.0
  %1186 = vmatpush1.msra.mxu0 0.0
  %1187 = vmatprep.subr.mxu0 0.0
  %1188 = vmatpush1.msra.mxu0 0.0
  %1189 = vmatprep.subr.mxu0 0.0
  %1190 = vmatpush1.msra.mxu0 0.0
  %1191 = vmatprep.mubr.f32.mxu0 0.0
  %1192 = vmatmul.mubr.f32.gmra.mrb[0].mxu0 %v774
  %v1193 = vpop.f32.mrb[0].mxu0
  %v1194 = vadd.f32 0.0, %v1193
  %v1195 = vpop.f32.mrb[0].mxu0
  %1196 = vmatprep.mubr.f32.mxu0 0.0
  %1197 = vmatmul.mubr.f32.gmra.mrb[0].mxu0 %v777
  %v1198 = vpop.f32.mrb[0].mxu0
  %v1199 = vadd.f32 0.0, %v1198
  %v1200 = vpop.f32.mrb[0].mxu0
  %1201 = vmatprep.mubr.f32.mxu0 0.0
  %1202 = vmatmul.mubr.f32.gmra.mrb[0].mxu0 %v780
  %v1203 = vpop.f32.mrb[0].mxu0
  %v1204 = vadd.f32 0.0, %v1203
  %v1205 = vpop.f32.mrb[0].mxu0
  %1206 = vmatprep.mubr.f32.mxu0 0.0
  %1207 = vmatmul.mubr.f32.gmra.mrb[0].mxu0 %v783
  %v1208 = vpop.f32.mrb[0].mxu0
  %v1209 = vadd.f32 0.0, %v1208
  %v1210 = vpop.f32.mrb[0].mxu0
  %1211 = vmatprep.mubr.f32.mxu0 0.0
  %1212 = vmatmul.mubr.f32.gmra.mrb[0].mxu0 %v786
  %v1213 = vpop.f32.mrb[0].mxu0
  %v1214 = vadd.f32 0.0, %v1213
  %v1215 = vpop.f32.mrb[0].mxu0
  %1216 = vmatprep.mubr.f32.mxu0 0.0
  %1217 = vmatmul.mubr.f32.gmra.mrb[0].mxu0 %v789
  %v1218 = vpop.f32.mrb[0].mxu0
  %v1219 = vadd.f32 0.0, %v1218
  %v1220 = vpop.f32.mrb[0].mxu0
  %1221 = vmatprep.mubr.f32.mxu0 0.0
  %1222 = vmatmul.mubr.f32.gmra.mrb[0].mxu0 %v792
  %v1223 = vpop.f32.mrb[0].mxu0
  %v1224 = vadd.f32 0.0, %v1223
  %v1225 = vpop.f32.mrb[0].mxu0
  %1226 = vmatprep.mubr.f32.mxu0 0.0
  %1227 = vmatmul.mubr.f32.gmra.mrb[0].mxu0 %v795
  %v1228 = vpop.f32.mrb[0].mxu0
  %v1229 = vadd.f32 0.0, %v1228
  %v1230 = vpop.f32.mrb[0].mxu0
  %1231 = vmatprep.mubr.f32.mxu0 0.0
  %1232 = vmatmul.mubr.f32.gmra.mrb[0].mxu0 %v798
  %v1233 = vpop.f32.mrb[0].mxu0
  %v1234 = vadd.f32 0.0, %v1233
  %v1235 = vpop.f32.mrb[0].mxu0
  %1236 = vmatprep.mubr.f32.mxu0 0.0
  %1237 = vmatmul.mubr.f32.gmra.mrb[0].mxu0 %v801
  %v1238 = vpop.f32.mrb[0].mxu0
  %v1239 = vadd.f32 0.0, %v1238
  %v1240 = vpop.f32.mrb[0].mxu0
  %1241 = vmatprep.mubr.f32.mxu0 0.0
  %1242 = vmatmul.mubr.f32.gmra.mrb[0].mxu0 %v804
  %v1243 = vpop.f32.mrb[0].mxu0
  %v1244 = vadd.f32 0.0, %v1243
  %v1245 = vpop.f32.mrb[0].mxu0
  %1246 = vmatprep.mubr.f32.mxu0 0.0
  %1247 = vmatmul.mubr.f32.gmra.mrb[0].mxu0 %v807
  %v1248 = vpop.f32.mrb[0].mxu0
  %v1249 = vadd.f32 0.0, %v1248
  %v1250 = vpop.f32.mrb[0].mxu0
  %1251 = vmatprep.mubr.f32.mxu0 0.0
  %1252 = vmatmul.mubr.f32.gmra.mrb[0].mxu0 %v810
  %v1253 = vpop.f32.mrb[0].mxu0
  %v1254 = vadd.f32 0.0, %v1253
  %v1255 = vpop.f32.mrb[0].mxu0
  %1256 = vmatprep.mubr.f32.mxu0 0.0
  %1257 = vmatmul.mubr.f32.gmra.mrb[0].mxu0 %v813
  %v1258 = vpop.f32.mrb[0].mxu0
  %v1259 = vadd.f32 0.0, %v1258
  %v1260 = vpop.f32.mrb[0].mxu0
  %1261 = vdwg.mxu0
  %1262 = vmatprep.subr.mxu0 0.0
  %1263 = vmatpush1.msra.mxu0 %v646
  %1264 = vmatprep.subr.mxu0 0.0
  %1265 = vmatpush1.msra.mxu0 %v651
  %1266 = vmatprep.subr.mxu0 0.0
  %1267 = vmatpush1.msra.mxu0 0.0
  %1268 = vmatprep.subr.mxu0 0.0
  %1269 = vmatpush1.msra.mxu0 0.0
  %1270 = vmatprep.subr.mxu0 0.0
  %1271 = vmatpush1.msra.mxu0 0.0
  %1272 = vmatprep.subr.mxu0 0.0
  %1273 = vmatpush1.msra.mxu0 0.0
  %1274 = vmatprep.subr.mxu0 0.0
  %1275 = vmatpush1.msra.mxu0 0.0
  %1276 = vmatprep.subr.mxu0 0.0
  %1277 = vmatpush1.msra.mxu0 0.0
  %1278 = vmatprep.subr.mxu0 0.0
  %1279 = vmatpush1.msra.mxu0 0.0
  %1280 = vmatprep.subr.mxu0 0.0
  %1281 = vmatpush1.msra.mxu0 0.0
  %1282 = vmatprep.subr.mxu0 0.0
  %1283 = vmatpush1.msra.mxu0 0.0
  %1284 = vmatprep.subr.mxu0 0.0
  %1285 = vmatpush1.msra.mxu0 0.0
  %1286 = vmatprep.subr.mxu0 0.0
  %1287 = vmatpush1.msra.mxu0 0.0
  %1288 = vmatprep.subr.mxu0 0.0
  %1289 = vmatpush1.msra.mxu0 0.0
  %1290 = vmatprep.subr.mxu0 0.0
  %1291 = vmatpush1.msra.mxu0 0.0
  %1292 = vmatprep.subr.mxu0 0.0
  %1293 = vmatpush1.msra.mxu0 0.0
  %1294 = vmatprep.subr.mxu0 0.0
  %1295 = vmatpush1.msra.mxu0 0.0
  %1296 = vmatprep.subr.mxu0 0.0
  %1297 = vmatpush1.msra.mxu0 0.0
  %1298 = vmatprep.subr.mxu0 0.0
  %1299 = vmatpush1.msra.mxu0 0.0
  %1300 = vmatprep.subr.mxu0 0.0
  %1301 = vmatpush1.msra.mxu0 0.0
  %1302 = vmatprep.subr.mxu0 0.0
  %1303 = vmatpush1.msra.mxu0 0.0
  %1304 = vmatprep.subr.mxu0 0.0
  %1305 = vmatpush1.msra.mxu0 0.0
  %1306 = vmatprep.subr.mxu0 0.0
  %1307 = vmatpush1.msra.mxu0 0.0
  %1308 = vmatprep.subr.mxu0 0.0
  %1309 = vmatpush1.msra.mxu0 0.0
  %1310 = vmatprep.subr.mxu0 0.0
  %1311 = vmatpush1.msra.mxu0 0.0
  %1312 = vmatprep.subr.mxu0 0.0
  %1313 = vmatpush1.msra.mxu0 0.0
  %1314 = vmatprep.subr.mxu0 0.0
  %1315 = vmatpush1.msra.mxu0 0.0
  %1316 = vmatprep.subr.mxu0 0.0
  %1317 = vmatpush1.msra.mxu0 0.0
  %1318 = vmatprep.subr.mxu0 0.0
  %1319 = vmatpush1.msra.mxu0 0.0
  %1320 = vmatprep.subr.mxu0 0.0
  %1321 = vmatpush1.msra.mxu0 0.0
  %1322 = vmatprep.subr.mxu0 0.0
  %1323 = vmatpush1.msra.mxu0 0.0
  %1324 = vmatprep.subr.mxu0 0.0
  %1325 = vmatpush1.msra.mxu0 0.0
  %1326 = vmatprep.mubr.f32.mxu0 0.0
  %1327 = vmatmul.mubr.f32.gmra.mrb[0].mxu0 %v951
  %v1328 = vpop.f32.mrb[0].mxu0
  %v1329 = vadd.f32 %v1194, %v1328
  %v1330 = vpop.f32.mrb[0].mxu0
  %1331 = vmatprep.mubr.f32.mxu0 0.0
  %1332 = vmatmul.mubr.f32.gmra.mrb[0].mxu0 %v954
  %v1333 = vpop.f32.mrb[0].mxu0
  %v1334 = vadd.f32 %v1199, %v1333
  %v1335 = vpop.f32.mrb[0].mxu0
  %1336 = vmatprep.mubr.f32.mxu0 0.0
  %1337 = vmatmul.mubr.f32.gmra.mrb[0].mxu0 %v957
  %v1338 = vpop.f32.mrb[0].mxu0
  %v1339 = vadd.f32 %v1204, %v1338
  %v1340 = vpop.f32.mrb[0].mxu0
  %1341 = vmatprep.mubr.f32.mxu0 0.0
  %1342 = vmatmul.mubr.f32.gmra.mrb[0].mxu0 %v960
  %v1343 = vpop.f32.mrb[0].mxu0
  %v1344 = vadd.f32 %v1209, %v1343
  %v1345 = vpop.f32.mrb[0].mxu0
  %1346 = vmatprep.mubr.f32.mxu0 0.0
  %1347 = vmatmul.mubr.f32.gmra.mrb[0].mxu0 %v963
  %v1348 = vpop.f32.mrb[0].mxu0
  %v1349 = vadd.f32 %v1214, %v1348
  %v1350 = vpop.f32.mrb[0].mxu0
  %1351 = vmatprep.mubr.f32.mxu0 0.0
  %1352 = vmatmul.mubr.f32.gmra.mrb[0].mxu0 %v966
  %v1353 = vpop.f32.mrb[0].mxu0
  %v1354 = vadd.f32 %v1219, %v1353
  %v1355 = vpop.f32.mrb[0].mxu0
  %1356 = vmatprep.mubr.f32.mxu0 0.0
  %1357 = vmatmul.mubr.f32.gmra.mrb[0].mxu0 %v969
  %v1358 = vpop.f32.mrb[0].mxu0
  %v1359 = vadd.f32 %v1224, %v1358
  %v1360 = vpop.f32.mrb[0].mxu0
  %1361 = vmatprep.mubr.f32.mxu0 0.0
  %1362 = vmatmul.mubr.f32.gmra.mrb[0].mxu0 %v972
  %v1363 = vpop.f32.mrb[0].mxu0
  %v1364 = vadd.f32 %v1229, %v1363
  %v1365 = vpop.f32.mrb[0].mxu0
  %1366 = vmatprep.mubr.f32.mxu0 0.0
  %1367 = vmatmul.mubr.f32.gmra.mrb[0].mxu0 %v975
  %v1368 = vpop.f32.mrb[0].mxu0
  %v1369 = vadd.f32 %v1234, %v1368
  %v1370 = vpop.f32.mrb[0].mxu0
  %1371 = vmatprep.mubr.f32.mxu0 0.0
  %1372 = vmatmul.mubr.f32.gmra.mrb[0].mxu0 %v978
  %v1373 = vpop.f32.mrb[0].mxu0
  %v1374 = vadd.f32 %v1239, %v1373
  %v1375 = vpop.f32.mrb[0].mxu0
  %1376 = vmatprep.mubr.f32.mxu0 0.0
  %1377 = vmatmul.mubr.f32.gmra.mrb[0].mxu0 %v981
  %v1378 = vpop.f32.mrb[0].mxu0
  %v1379 = vadd.f32 %v1244, %v1378
  %v1380 = vpop.f32.mrb[0].mxu0
  %1381 = vmatprep.mubr.f32.mxu0 0.0
  %1382 = vmatmul.mubr.f32.gmra.mrb[0].mxu0 %v984
  %v1383 = vpop.f32.mrb[0].mxu0
  %v1384 = vadd.f32 %v1249, %v1383
  %v1385 = vpop.f32.mrb[0].mxu0
  %1386 = vmatprep.mubr.f32.mxu0 0.0
  %1387 = vmatmul.mubr.f32.gmra.mrb[0].mxu0 %v987
  %v1388 = vpop.f32.mrb[0].mxu0
  %v1389 = vadd.f32 %v1254, %v1388
  %v1390 = vpop.f32.mrb[0].mxu0
  %1391 = vmatprep.mubr.f32.mxu0 0.0
  %1392 = vmatmul.mubr.f32.gmra.mrb[0].mxu0 %v990
  %v1393 = vpop.f32.mrb[0].mxu0
  %v1394 = vadd.f32 %v1259, %v1393
  %v1395 = vpop.f32.mrb[0].mxu0
  %1396 = vdwg.mxu0
  %v1397 = vld [vmem:[%s2 + $0x148] sm:$0x1]
  %v1398 = vlaneseq
  %v1399 = vshrl.u32 %v1398, 7
  %v1400 = vsub.s32 0, %v1399
  %v1401 = vrot.slane %v1397, %v1400
  %v1402 = vadd.f32 %v1059, %v1401
  %v1403 = vadd.f32 %v1064, %v1401
  %v1404 = vadd.f32 %v1069, %v1401
  %v1405 = vadd.f32 %v1074, %v1401
  %v1406 = vadd.f32 %v1079, %v1401
  %v1407 = vadd.f32 %v1084, %v1401
  %v1408 = vadd.f32 %v1089, %v1401
  %v1409 = vadd.f32 %v1094, %v1401
  %v1410 = vadd.f32 %v1099, %v1401
  %v1411 = vadd.f32 %v1104, %v1401
  %v1412 = vadd.f32 %v1109, %v1401
  %v1413 = vadd.f32 %v1114, %v1401
  %v1414 = vadd.f32 %v1119, %v1401
  %v1415 = vadd.f32 %v1124, %v1401
  %v1416 = vadd.f32 %v1329, %v1401
  %v1417 = vadd.f32 %v1334, %v1401
  %v1418 = vadd.f32 %v1339, %v1401
  %v1419 = vadd.f32 %v1344, %v1401
  %v1420 = vadd.f32 %v1349, %v1401
  %v1421 = vadd.f32 %v1354, %v1401
  %v1422 = vadd.f32 %v1359, %v1401
  %v1423 = vadd.f32 %v1364, %v1401
  %v1424 = vadd.f32 %v1369, %v1401
  %v1425 = vadd.f32 %v1374, %v1401
  %v1426 = vadd.f32 %v1379, %v1401
  %v1427 = vadd.f32 %v1384, %v1401
  %v1428 = vadd.f32 %v1389, %v1401
  %v1429 = vadd.f32 %v1394, %v1401
  %v1430 = vmax.f32 %v1402, 0.0
  %v1431 = vmax.f32 %v1403, 0.0
  %v1432 = vmax.f32 %v1404, 0.0
  %v1433 = vmax.f32 %v1405, 0.0
  %v1434 = vmax.f32 %v1406, 0.0
  %v1435 = vmax.f32 %v1407, 0.0
  %v1436 = vmax.f32 %v1408, 0.0
  %v1437 = vmax.f32 %v1409, 0.0
  %v1438 = vmax.f32 %v1410, 0.0
  %v1439 = vmax.f32 %v1411, 0.0
  %v1440 = vmax.f32 %v1412, 0.0
  %v1441 = vmax.f32 %v1413, 0.0
  %v1442 = vmax.f32 %v1414, 0.0
  %v1443 = vmax.f32 %v1415, 0.0
  %v1444 = vmax.f32 %v1416, 0.0
  %v1445 = vmax.f32 %v1417, 0.0
  %v1446 = vmax.f32 %v1418, 0.0
  %v1447 = vmax.f32 %v1419, 0.0
  %v1448 = vmax.f32 %v1420, 0.0
  %v1449 = vmax.f32 %v1421, 0.0
  %v1450 = vmax.f32 %v1422, 0.0
  %v1451 = vmax.f32 %v1423, 0.0
  %v1452 = vmax.f32 %v1424, 0.0
  %v1453 = vmax.f32 %v1425, 0.0
  %v1454 = vmax.f32 %v1426, 0.0
  %v1455 = vmax.f32 %v1427, 0.0
  %v1456 = vmax.f32 %v1428, 0.0
  %v1457 = vmax.f32 %v1429, 0.0
  %v1458 = vld [vmem:[%s2 + $0x150] sm:$0xff]
  %v1459 = vld [vmem:[%s2 + $0x158] sm:$0xff]
  %v1460 = vld [vmem:[%s2 + $0x160] sm:$0xff]
  %v1461 = vld [vmem:[%s2 + $0x168] sm:$0xff]
  %v1462 = vld [vmem:[%s2 + $0x170] sm:$0x1]
  %v1463 = vlaneseq
  %v1464 = vshrl.u32 %v1463, 7
  %v1465 = vsub.s32 0, %v1464
  %v1466 = vrot.slane %v1462, %v1465
  %v1468 = vsel %vm341, %v1430, 0
  %v1471 = vsel %vm341, %v1431, 0
  %v1474 = vsel %vm341, %v1432, 0
  %v1477 = vsel %vm341, %v1433, 0
  %v1480 = vsel %vm341, %v1434, 0
  %v1483 = vsel %vm341, %v1435, 0
  %v1486 = vsel %vm341, %v1436, 0
  %v1489 = vsel %vm341, %v1437, 0
  %v1492 = vsel %vm341, %v1438, 0
  %v1495 = vsel %vm341, %v1439, 0
  %v1498 = vsel %vm341, %v1440, 0
  %v1501 = vsel %vm341, %v1441, 0
  %v1504 = vsel %vm341, %v1442, 0
  %v1507 = vsel %vm341, %v1443, 0
  %v1510 = vsel %vm341, %v1444, 0
  %v1513 = vsel %vm341, %v1445, 0
  %v1516 = vsel %vm341, %v1446, 0
  %v1519 = vsel %vm341, %v1447, 0
  %v1522 = vsel %vm341, %v1448, 0
  %v1525 = vsel %vm341, %v1449, 0
  %v1528 = vsel %vm341, %v1450, 0
  %v1531 = vsel %vm341, %v1451, 0
  %v1534 = vsel %vm341, %v1452, 0
  %v1537 = vsel %vm341, %v1453, 0
  %v1540 = vsel %vm341, %v1454, 0
  %v1543 = vsel %vm341, %v1455, 0
  %v1546 = vsel %vm341, %v1456, 0
  %v1549 = vsel %vm341, %v1457, 0
  %1551 = vmatprep.subr.mxu0 0.0
  %1552 = vmatpush1.msra.mxu0 %v1458
  %1553 = vmatprep.subr.mxu0 0.0
  %1554 = vmatpush1.msra.mxu0 %v1459
  %1555 = vmatprep.subr.mxu0 0.0
  %1556 = vmatpush1.msra.mxu0 %v1460
  %1557 = vmatprep.subr.mxu0 0.0
  %1558 = vmatpush1.msra.mxu0 %v1461
  %1559 = vmatprep.subr.mxu0 0.0
  %1560 = vmatpush1.msra.mxu0 0.0
  %1561 = vmatprep.subr.mxu0 0.0
  %1562 = vmatpush1.msra.mxu0 0.0
  %1563 = vmatprep.subr.mxu0 0.0
  %1564 = vmatpush1.msra.mxu0 0.0
  %1565 = vmatprep.subr.mxu0 0.0
  %1566 = vmatpush1.msra.mxu0 0.0
  %1567 = vmatprep.subr.mxu0 0.0
  %1568 = vmatpush1.msra.mxu0 0.0
  %1569 = vmatprep.subr.mxu0 0.0
  %1570 = vmatpush1.msra.mxu0 0.0
  %1571 = vmatprep.subr.mxu0 0.0
  %1572 = vmatpush1.msra.mxu0 0.0
  %1573 = vmatprep.subr.mxu0 0.0
  %1574 = vmatpush1.msra.mxu0 0.0
  %1575 = vmatprep.subr.mxu0 0.0
  %1576 = vmatpush1.msra.mxu0 0.0
  %1577 = vmatprep.subr.mxu0 0.0
  %1578 = vmatpush1.msra.mxu0 0.0
  %1579 = vmatprep.subr.mxu0 0.0
  %1580 = vmatpush1.msra.mxu0 0.0
  %1581 = vmatprep.subr.mxu0 0.0
  %1582 = vmatpush1.msra.mxu0 0.0
  %1583 = vmatprep.subr.mxu0 0.0
  %1584 = vmatpush1.msra.mxu0 0.0
  %1585 = vmatprep.subr.mxu0 0.0
  %1586 = vmatpush1.msra.mxu0 0.0
  %1587 = vmatprep.subr.mxu0 0.0
  %1588 = vmatpush1.msra.mxu0 0.0
  %1589 = vmatprep.subr.mxu0 0.0
  %1590 = vmatpush1.msra.mxu0 0.0
  %1591 = vmatprep.subr.mxu0 0.0
  %1592 = vmatpush1.msra.mxu0 0.0
  %1593 = vmatprep.subr.mxu0 0.0
  %1594 = vmatpush1.msra.mxu0 0.0
  %1595 = vmatprep.subr.mxu0 0.0
  %1596 = vmatpush1.msra.mxu0 0.0
  %1597 = vmatprep.subr.mxu0 0.0
  %1598 = vmatpush1.msra.mxu0 0.0
  %1599 = vmatprep.subr.mxu0 0.0
  %1600 = vmatpush1.msra.mxu0 0.0
  %1601 = vmatprep.subr.mxu0 0.0
  %1602 = vmatpush1.msra.mxu0 0.0
  %1603 = vmatprep.subr.mxu0 0.0
  %1604 = vmatpush1.msra.mxu0 0.0
  %1605 = vmatprep.subr.mxu0 0.0
  %1606 = vmatpush1.msra.mxu0 0.0
  %1607 = vmatprep.subr.mxu0 0.0
  %1608 = vmatpush1.msra.mxu0 0.0
  %1609 = vmatprep.subr.mxu0 0.0
  %1610 = vmatpush1.msra.mxu0 0.0
  %1611 = vmatprep.subr.mxu0 0.0
  %1612 = vmatpush1.msra.mxu0 0.0
  %1613 = vmatprep.subr.mxu0 0.0
  %1614 = vmatpush1.msra.mxu0 0.0
  %1615 = vmatprep.mubr.f32.mxu0 0.0
  %1616 = vmatmul.mubr.f32.gmra.mrb[0].mxu0 %v1468
  %v1617 = vpop.f32.mrb[0].mxu0
  %v1618 = vadd.f32 %v1466, %v1617
  %v1619 = vpop.f32.mrb[0].mxu0
  %1620 = vmatprep.mubr.f32.mxu0 0.0
  %1621 = vmatmul.mubr.f32.gmra.mrb[0].mxu0 %v1471
  %v1622 = vpop.f32.mrb[0].mxu0
  %v1623 = vadd.f32 %v1466, %v1622
  %v1624 = vpop.f32.mrb[0].mxu0
  %1625 = vmatprep.mubr.f32.mxu0 0.0
  %1626 = vmatmul.mubr.f32.gmra.mrb[0].mxu0 %v1474
  %v1627 = vpop.f32.mrb[0].mxu0
  %v1628 = vadd.f32 %v1466, %v1627
  %v1629 = vpop.f32.mrb[0].mxu0
  %1630 = vmatprep.mubr.f32.mxu0 0.0
  %1631 = vmatmul.mubr.f32.gmra.mrb[0].mxu0 %v1477
  %v1632 = vpop.f32.mrb[0].mxu0
  %v1633 = vadd.f32 %v1466, %v1632
  %v1634 = vpop.f32.mrb[0].mxu0
  %1635 = vmatprep.mubr.f32.mxu0 0.0
  %1636 = vmatmul.mubr.f32.gmra.mrb[0].mxu0 %v1480
  %v1637 = vpop.f32.mrb[0].mxu0
  %v1638 = vadd.f32 %v1466, %v1637
  %v1639 = vpop.f32.mrb[0].mxu0
  %1640 = vmatprep.mubr.f32.mxu0 0.0
  %1641 = vmatmul.mubr.f32.gmra.mrb[0].mxu0 %v1483
  %v1642 = vpop.f32.mrb[0].mxu0
  %v1643 = vadd.f32 %v1466, %v1642
  %v1644 = vpop.f32.mrb[0].mxu0
  %1645 = vmatprep.mubr.f32.mxu0 0.0
  %1646 = vmatmul.mubr.f32.gmra.mrb[0].mxu0 %v1486
  %v1647 = vpop.f32.mrb[0].mxu0
  %v1648 = vadd.f32 %v1466, %v1647
  %v1649 = vpop.f32.mrb[0].mxu0
  %1650 = vmatprep.mubr.f32.mxu0 0.0
  %1651 = vmatmul.mubr.f32.gmra.mrb[0].mxu0 %v1489
  %v1652 = vpop.f32.mrb[0].mxu0
  %v1653 = vadd.f32 %v1466, %v1652
  %v1654 = vpop.f32.mrb[0].mxu0
  %1655 = vmatprep.mubr.f32.mxu0 0.0
  %1656 = vmatmul.mubr.f32.gmra.mrb[0].mxu0 %v1492
  %v1657 = vpop.f32.mrb[0].mxu0
  %v1658 = vadd.f32 %v1466, %v1657
  %v1659 = vpop.f32.mrb[0].mxu0
  %1660 = vmatprep.mubr.f32.mxu0 0.0
  %1661 = vmatmul.mubr.f32.gmra.mrb[0].mxu0 %v1495
  %v1662 = vpop.f32.mrb[0].mxu0
  %v1663 = vadd.f32 %v1466, %v1662
  %v1664 = vpop.f32.mrb[0].mxu0
  %1665 = vmatprep.mubr.f32.mxu0 0.0
  %1666 = vmatmul.mubr.f32.gmra.mrb[0].mxu0 %v1498
  %v1667 = vpop.f32.mrb[0].mxu0
  %v1668 = vadd.f32 %v1466, %v1667
  %v1669 = vpop.f32.mrb[0].mxu0
  %1670 = vmatprep.mubr.f32.mxu0 0.0
  %1671 = vmatmul.mubr.f32.gmra.mrb[0].mxu0 %v1501
  %v1672 = vpop.f32.mrb[0].mxu0
  %v1673 = vadd.f32 %v1466, %v1672
  %v1674 = vpop.f32.mrb[0].mxu0
  %1675 = vmatprep.mubr.f32.mxu0 0.0
  %1676 = vmatmul.mubr.f32.gmra.mrb[0].mxu0 %v1504
  %v1677 = vpop.f32.mrb[0].mxu0
  %v1678 = vadd.f32 %v1466, %v1677
  %v1679 = vpop.f32.mrb[0].mxu0
  %1680 = vmatprep.mubr.f32.mxu0 0.0
  %1681 = vmatmul.mubr.f32.gmra.mrb[0].mxu0 %v1507
  %v1682 = vpop.f32.mrb[0].mxu0
  %v1683 = vadd.f32 %v1466, %v1682
  %v1684 = vpop.f32.mrb[0].mxu0
  %1685 = vmatprep.mubr.f32.mxu0 0.0
  %1686 = vmatmul.mubr.f32.gmra.mrb[0].mxu0 %v1510
  %v1687 = vpop.f32.mrb[0].mxu0
  %v1688 = vadd.f32 %v1466, %v1687
  %v1689 = vpop.f32.mrb[0].mxu0
  %1690 = vmatprep.mubr.f32.mxu0 0.0
  %1691 = vmatmul.mubr.f32.gmra.mrb[0].mxu0 %v1513
  %v1692 = vpop.f32.mrb[0].mxu0
  %v1693 = vadd.f32 %v1466, %v1692
  %v1694 = vpop.f32.mrb[0].mxu0
  %1695 = vmatprep.mubr.f32.mxu0 0.0
  %1696 = vmatmul.mubr.f32.gmra.mrb[0].mxu0 %v1516
  %v1697 = vpop.f32.mrb[0].mxu0
  %v1698 = vadd.f32 %v1466, %v1697
  %v1699 = vpop.f32.mrb[0].mxu0
  %1700 = vmatprep.mubr.f32.mxu0 0.0
  %1701 = vmatmul.mubr.f32.gmra.mrb[0].mxu0 %v1519
  %v1702 = vpop.f32.mrb[0].mxu0
  %v1703 = vadd.f32 %v1466, %v1702
  %v1704 = vpop.f32.mrb[0].mxu0
  %1705 = vmatprep.mubr.f32.mxu0 0.0
  %1706 = vmatmul.mubr.f32.gmra.mrb[0].mxu0 %v1522
  %v1707 = vpop.f32.mrb[0].mxu0
  %v1708 = vadd.f32 %v1466, %v1707
  %v1709 = vpop.f32.mrb[0].mxu0
  %1710 = vmatprep.mubr.f32.mxu0 0.0
  %1711 = vmatmul.mubr.f32.gmra.mrb[0].mxu0 %v1525
  %v1712 = vpop.f32.mrb[0].mxu0
  %v1713 = vadd.f32 %v1466, %v1712
  %v1714 = vpop.f32.mrb[0].mxu0
  %1715 = vmatprep.mubr.f32.mxu0 0.0
  %1716 = vmatmul.mubr.f32.gmra.mrb[0].mxu0 %v1528
  %v1717 = vpop.f32.mrb[0].mxu0
  %v1718 = vadd.f32 %v1466, %v1717
  %v1719 = vpop.f32.mrb[0].mxu0
  %1720 = vmatprep.mubr.f32.mxu0 0.0
  %1721 = vmatmul.mubr.f32.gmra.mrb[0].mxu0 %v1531
  %v1722 = vpop.f32.mrb[0].mxu0
  %v1723 = vadd.f32 %v1466, %v1722
  %v1724 = vpop.f32.mrb[0].mxu0
  %1725 = vmatprep.mubr.f32.mxu0 0.0
  %1726 = vmatmul.mubr.f32.gmra.mrb[0].mxu0 %v1534
  %v1727 = vpop.f32.mrb[0].mxu0
  %v1728 = vadd.f32 %v1466, %v1727
  %v1729 = vpop.f32.mrb[0].mxu0
  %1730 = vmatprep.mubr.f32.mxu0 0.0
  %1731 = vmatmul.mubr.f32.gmra.mrb[0].mxu0 %v1537
  %v1732 = vpop.f32.mrb[0].mxu0
  %v1733 = vadd.f32 %v1466, %v1732
  %v1734 = vpop.f32.mrb[0].mxu0
  %1735 = vmatprep.mubr.f32.mxu0 0.0
  %1736 = vmatmul.mubr.f32.gmra.mrb[0].mxu0 %v1540
  %v1737 = vpop.f32.mrb[0].mxu0
  %v1738 = vadd.f32 %v1466, %v1737
  %v1739 = vpop.f32.mrb[0].mxu0
  %1740 = vmatprep.mubr.f32.mxu0 0.0
  %1741 = vmatmul.mubr.f32.gmra.mrb[0].mxu0 %v1543
  %v1742 = vpop.f32.mrb[0].mxu0
  %v1743 = vadd.f32 %v1466, %v1742
  %v1744 = vpop.f32.mrb[0].mxu0
  %1745 = vmatprep.mubr.f32.mxu0 0.0
  %1746 = vmatmul.mubr.f32.gmra.mrb[0].mxu0 %v1546
  %v1747 = vpop.f32.mrb[0].mxu0
  %v1748 = vadd.f32 %v1466, %v1747
  %v1749 = vpop.f32.mrb[0].mxu0
  %1750 = vmatprep.mubr.f32.mxu0 0.0
  %1751 = vmatmul.mubr.f32.gmra.mrb[0].mxu0 %v1549
  %v1752 = vpop.f32.mrb[0].mxu0
  %v1753 = vadd.f32 %v1466, %v1752
  %v1754 = vpop.f32.mrb[0].mxu0
  %1755 = vdwg.mxu0
  %v1756 = vmax.f32 %v1618, 0.0
  %v1757 = vmax.f32 %v1623, 0.0
  %v1758 = vmax.f32 %v1628, 0.0
  %v1759 = vmax.f32 %v1633, 0.0
  %v1760 = vmax.f32 %v1638, 0.0
  %v1761 = vmax.f32 %v1643, 0.0
  %v1762 = vmax.f32 %v1648, 0.0
  %v1763 = vmax.f32 %v1653, 0.0
  %v1764 = vmax.f32 %v1658, 0.0
  %v1765 = vmax.f32 %v1663, 0.0
  %v1766 = vmax.f32 %v1668, 0.0
  %v1767 = vmax.f32 %v1673, 0.0
  %v1768 = vmax.f32 %v1678, 0.0
  %v1769 = vmax.f32 %v1683, 0.0
  %v1770 = vmax.f32 %v1688, 0.0
  %v1771 = vmax.f32 %v1693, 0.0
  %v1772 = vmax.f32 %v1698, 0.0
  %v1773 = vmax.f32 %v1703, 0.0
  %v1774 = vmax.f32 %v1708, 0.0
  %v1775 = vmax.f32 %v1713, 0.0
  %v1776 = vmax.f32 %v1718, 0.0
  %v1777 = vmax.f32 %v1723, 0.0
  %v1778 = vmax.f32 %v1728, 0.0
  %v1779 = vmax.f32 %v1733, 0.0
  %v1780 = vmax.f32 %v1738, 0.0
  %v1781 = vmax.f32 %v1743, 0.0
  %v1782 = vmax.f32 %v1748, 0.0
  %v1783 = vmax.f32 %v1753, 0.0
  %v1784 = vld [vmem:[%s2 + $0x178] sm:$0xff]
  %v1785 = vld [vmem:[%s2 + $0x180] sm:$0xff]
  %v1786 = vld [vmem:[%s2 + $0x188] sm:$0xff]
  %v1787 = vld [vmem:[%s2 + $0x190] sm:$0xff]
  %v1788 = vld [vmem:[%s2 + $0x198] sm:$0x1]
  %v1789 = vlaneseq
  %v1790 = vshrl.u32 %v1789, 7
  %v1791 = vsub.s32 0, %v1790
  %v1792 = vrot.slane %v1788, %v1791
  %v1794 = vsel %vm341, %v1756, 0
  %v1797 = vsel %vm341, %v1757, 0
  %v1800 = vsel %vm341, %v1758, 0
  %v1803 = vsel %vm341, %v1759, 0
  %v1806 = vsel %vm341, %v1760, 0
  %v1809 = vsel %vm341, %v1761, 0
  %v1812 = vsel %vm341, %v1762, 0
  %v1815 = vsel %vm341, %v1763, 0
  %v1818 = vsel %vm341, %v1764, 0
  %v1821 = vsel %vm341, %v1765, 0
  %v1824 = vsel %vm341, %v1766, 0
  %v1827 = vsel %vm341, %v1767, 0
  %v1830 = vsel %vm341, %v1768, 0
  %v1833 = vsel %vm341, %v1769, 0
  %v1836 = vsel %vm341, %v1770, 0
  %v1839 = vsel %vm341, %v1771, 0
  %v1842 = vsel %vm341, %v1772, 0
  %v1845 = vsel %vm341, %v1773, 0
  %v1848 = vsel %vm341, %v1774, 0
  %v1851 = vsel %vm341, %v1775, 0
  %v1854 = vsel %vm341, %v1776, 0
  %v1857 = vsel %vm341, %v1777, 0
  %v1860 = vsel %vm341, %v1778, 0
  %v1863 = vsel %vm341, %v1779, 0
  %v1866 = vsel %vm341, %v1780, 0
  %v1869 = vsel %vm341, %v1781, 0
  %v1872 = vsel %vm341, %v1782, 0
  %v1875 = vsel %vm341, %v1783, 0
  %1877 = vmatprep.subr.mxu0 0.0
  %1878 = vmatpush1.msra.mxu0 %v1784
  %1879 = vmatprep.subr.mxu0 0.0
  %1880 = vmatpush1.msra.mxu0 %v1785
  %1881 = vmatprep.subr.mxu0 0.0
  %1882 = vmatpush1.msra.mxu0 %v1786
  %1883 = vmatprep.subr.mxu0 0.0
  %1884 = vmatpush1.msra.mxu0 %v1787
  %1885 = vmatprep.subr.mxu0 0.0
  %1886 = vmatpush1.msra.mxu0 0.0
  %1887 = vmatprep.subr.mxu0 0.0
  %1888 = vmatpush1.msra.mxu0 0.0
  %1889 = vmatprep.subr.mxu0 0.0
  %1890 = vmatpush1.msra.mxu0 0.0
  %1891 = vmatprep.subr.mxu0 0.0
  %1892 = vmatpush1.msra.mxu0 0.0
  %1893 = vmatprep.subr.mxu0 0.0
  %1894 = vmatpush1.msra.mxu0 0.0
  %1895 = vmatprep.subr.mxu0 0.0
  %1896 = vmatpush1.msra.mxu0 0.0
  %1897 = vmatprep.subr.mxu0 0.0
  %1898 = vmatpush1.msra.mxu0 0.0
  %1899 = vmatprep.subr.mxu0 0.0
  %1900 = vmatpush1.msra.mxu0 0.0
  %1901 = vmatprep.subr.mxu0 0.0
  %1902 = vmatpush1.msra.mxu0 0.0
  %1903 = vmatprep.subr.mxu0 0.0
  %1904 = vmatpush1.msra.mxu0 0.0
  %1905 = vmatprep.subr.mxu0 0.0
  %1906 = vmatpush1.msra.mxu0 0.0
  %1907 = vmatprep.subr.mxu0 0.0
  %1908 = vmatpush1.msra.mxu0 0.0
  %1909 = vmatprep.subr.mxu0 0.0
  %1910 = vmatpush1.msra.mxu0 0.0
  %1911 = vmatprep.subr.mxu0 0.0
  %1912 = vmatpush1.msra.mxu0 0.0
  %1913 = vmatprep.subr.mxu0 0.0
  %1914 = vmatpush1.msra.mxu0 0.0
  %1915 = vmatprep.subr.mxu0 0.0
  %1916 = vmatpush1.msra.mxu0 0.0
  %1917 = vmatprep.subr.mxu0 0.0
  %1918 = vmatpush1.msra.mxu0 0.0
  %1919 = vmatprep.subr.mxu0 0.0
  %1920 = vmatpush1.msra.mxu0 0.0
  %1921 = vmatprep.subr.mxu0 0.0
  %1922 = vmatpush1.msra.mxu0 0.0
  %1923 = vmatprep.subr.mxu0 0.0
  %1924 = vmatpush1.msra.mxu0 0.0
  %1925 = vmatprep.subr.mxu0 0.0
  %1926 = vmatpush1.msra.mxu0 0.0
  %1927 = vmatprep.subr.mxu0 0.0
  %1928 = vmatpush1.msra.mxu0 0.0
  %1929 = vmatprep.subr.mxu0 0.0
  %1930 = vmatpush1.msra.mxu0 0.0
  %1931 = vmatprep.subr.mxu0 0.0
  %1932 = vmatpush1.msra.mxu0 0.0
  %1933 = vmatprep.subr.mxu0 0.0
  %1934 = vmatpush1.msra.mxu0 0.0
  %1935 = vmatprep.subr.mxu0 0.0
  %1936 = vmatpush1.msra.mxu0 0.0
  %1937 = vmatprep.subr.mxu0 0.0
  %1938 = vmatpush1.msra.mxu0 0.0
  %1939 = vmatprep.subr.mxu0 0.0
  %1940 = vmatpush1.msra.mxu0 0.0
  %1941 = vmatprep.mubr.f32.mxu0 0.0
  %1942 = vmatmul.mubr.f32.gmra.mrb[0].mxu0 %v1794
  %v1943 = vpop.f32.mrb[0].mxu0
  %v1944 = vadd.f32 %v1792, %v1943
  %v1945 = vpop.f32.mrb[0].mxu0
  %1946 = vmatprep.mubr.f32.mxu0 0.0
  %1947 = vmatmul.mubr.f32.gmra.mrb[0].mxu0 %v1797
  %v1948 = vpop.f32.mrb[0].mxu0
  %v1949 = vadd.f32 %v1792, %v1948
  %v1950 = vpop.f32.mrb[0].mxu0
  %1951 = vmatprep.mubr.f32.mxu0 0.0
  %1952 = vmatmul.mubr.f32.gmra.mrb[0].mxu0 %v1800
  %v1953 = vpop.f32.mrb[0].mxu0
  %v1954 = vadd.f32 %v1792, %v1953
  %v1955 = vpop.f32.mrb[0].mxu0
  %1956 = vmatprep.mubr.f32.mxu0 0.0
  %1957 = vmatmul.mubr.f32.gmra.mrb[0].mxu0 %v1803
  %v1958 = vpop.f32.mrb[0].mxu0
  %v1959 = vadd.f32 %v1792, %v1958
  %v1960 = vpop.f32.mrb[0].mxu0
  %1961 = vmatprep.mubr.f32.mxu0 0.0
  %1962 = vmatmul.mubr.f32.gmra.mrb[0].mxu0 %v1806
  %v1963 = vpop.f32.mrb[0].mxu0
  %v1964 = vadd.f32 %v1792, %v1963
  %v1965 = vpop.f32.mrb[0].mxu0
  %1966 = vmatprep.mubr.f32.mxu0 0.0
  %1967 = vmatmul.mubr.f32.gmra.mrb[0].mxu0 %v1809
  %v1968 = vpop.f32.mrb[0].mxu0
  %v1969 = vadd.f32 %v1792, %v1968
  %v1970 = vpop.f32.mrb[0].mxu0
  %1971 = vmatprep.mubr.f32.mxu0 0.0
  %1972 = vmatmul.mubr.f32.gmra.mrb[0].mxu0 %v1812
  %v1973 = vpop.f32.mrb[0].mxu0
  %v1974 = vadd.f32 %v1792, %v1973
  %v1975 = vpop.f32.mrb[0].mxu0
  %1976 = vmatprep.mubr.f32.mxu0 0.0
  %1977 = vmatmul.mubr.f32.gmra.mrb[0].mxu0 %v1815
  %v1978 = vpop.f32.mrb[0].mxu0
  %v1979 = vadd.f32 %v1792, %v1978
  %v1980 = vpop.f32.mrb[0].mxu0
  %1981 = vmatprep.mubr.f32.mxu0 0.0
  %1982 = vmatmul.mubr.f32.gmra.mrb[0].mxu0 %v1818
  %v1983 = vpop.f32.mrb[0].mxu0
  %v1984 = vadd.f32 %v1792, %v1983
  %v1985 = vpop.f32.mrb[0].mxu0
  %1986 = vmatprep.mubr.f32.mxu0 0.0
  %1987 = vmatmul.mubr.f32.gmra.mrb[0].mxu0 %v1821
  %v1988 = vpop.f32.mrb[0].mxu0
  %v1989 = vadd.f32 %v1792, %v1988
  %v1990 = vpop.f32.mrb[0].mxu0
  %1991 = vmatprep.mubr.f32.mxu0 0.0
  %1992 = vmatmul.mubr.f32.gmra.mrb[0].mxu0 %v1824
  %v1993 = vpop.f32.mrb[0].mxu0
  %v1994 = vadd.f32 %v1792, %v1993
  %v1995 = vpop.f32.mrb[0].mxu0
  %1996 = vmatprep.mubr.f32.mxu0 0.0
  %1997 = vmatmul.mubr.f32.gmra.mrb[0].mxu0 %v1827
  %v1998 = vpop.f32.mrb[0].mxu0
  %v1999 = vadd.f32 %v1792, %v1998
  %v2000 = vpop.f32.mrb[0].mxu0
  %2001 = vmatprep.mubr.f32.mxu0 0.0
  %2002 = vmatmul.mubr.f32.gmra.mrb[0].mxu0 %v1830
  %v2003 = vpop.f32.mrb[0].mxu0
  %v2004 = vadd.f32 %v1792, %v2003
  %v2005 = vpop.f32.mrb[0].mxu0
  %2006 = vmatprep.mubr.f32.mxu0 0.0
  %2007 = vmatmul.mubr.f32.gmra.mrb[0].mxu0 %v1833
  %v2008 = vpop.f32.mrb[0].mxu0
  %v2009 = vadd.f32 %v1792, %v2008
  %v2010 = vpop.f32.mrb[0].mxu0
  %2011 = vmatprep.mubr.f32.mxu0 0.0
  %2012 = vmatmul.mubr.f32.gmra.mrb[0].mxu0 %v1836
  %v2013 = vpop.f32.mrb[0].mxu0
  %v2014 = vadd.f32 %v1792, %v2013
  %v2015 = vpop.f32.mrb[0].mxu0
  %2016 = vmatprep.mubr.f32.mxu0 0.0
  %2017 = vmatmul.mubr.f32.gmra.mrb[0].mxu0 %v1839
  %v2018 = vpop.f32.mrb[0].mxu0
  %v2019 = vadd.f32 %v1792, %v2018
  %v2020 = vpop.f32.mrb[0].mxu0
  %2021 = vmatprep.mubr.f32.mxu0 0.0
  %2022 = vmatmul.mubr.f32.gmra.mrb[0].mxu0 %v1842
  %v2023 = vpop.f32.mrb[0].mxu0
  %v2024 = vadd.f32 %v1792, %v2023
  %v2025 = vpop.f32.mrb[0].mxu0
  %2026 = vmatprep.mubr.f32.mxu0 0.0
  %2027 = vmatmul.mubr.f32.gmra.mrb[0].mxu0 %v1845
  %v2028 = vpop.f32.mrb[0].mxu0
  %v2029 = vadd.f32 %v1792, %v2028
  %v2030 = vpop.f32.mrb[0].mxu0
  %2031 = vmatprep.mubr.f32.mxu0 0.0
  %2032 = vmatmul.mubr.f32.gmra.mrb[0].mxu0 %v1848
  %v2033 = vpop.f32.mrb[0].mxu0
  %v2034 = vadd.f32 %v1792, %v2033
  %v2035 = vpop.f32.mrb[0].mxu0
  %2036 = vmatprep.mubr.f32.mxu0 0.0
  %2037 = vmatmul.mubr.f32.gmra.mrb[0].mxu0 %v1851
  %v2038 = vpop.f32.mrb[0].mxu0
  %v2039 = vadd.f32 %v1792, %v2038
  %v2040 = vpop.f32.mrb[0].mxu0
  %2041 = vmatprep.mubr.f32.mxu0 0.0
  %2042 = vmatmul.mubr.f32.gmra.mrb[0].mxu0 %v1854
  %v2043 = vpop.f32.mrb[0].mxu0
  %v2044 = vadd.f32 %v1792, %v2043
  %v2045 = vpop.f32.mrb[0].mxu0
  %2046 = vmatprep.mubr.f32.mxu0 0.0
  %2047 = vmatmul.mubr.f32.gmra.mrb[0].mxu0 %v1857
  %v2048 = vpop.f32.mrb[0].mxu0
  %v2049 = vadd.f32 %v1792, %v2048
  %v2050 = vpop.f32.mrb[0].mxu0
  %2051 = vmatprep.mubr.f32.mxu0 0.0
  %2052 = vmatmul.mubr.f32.gmra.mrb[0].mxu0 %v1860
  %v2053 = vpop.f32.mrb[0].mxu0
  %v2054 = vadd.f32 %v1792, %v2053
  %v2055 = vpop.f32.mrb[0].mxu0
  %2056 = vmatprep.mubr.f32.mxu0 0.0
  %2057 = vmatmul.mubr.f32.gmra.mrb[0].mxu0 %v1863
  %v2058 = vpop.f32.mrb[0].mxu0
  %v2059 = vadd.f32 %v1792, %v2058
  %v2060 = vpop.f32.mrb[0].mxu0
  %2061 = vmatprep.mubr.f32.mxu0 0.0
  %2062 = vmatmul.mubr.f32.gmra.mrb[0].mxu0 %v1866
  %v2063 = vpop.f32.mrb[0].mxu0
  %v2064 = vadd.f32 %v1792, %v2063
  %v2065 = vpop.f32.mrb[0].mxu0
  %2066 = vmatprep.mubr.f32.mxu0 0.0
  %2067 = vmatmul.mubr.f32.gmra.mrb[0].mxu0 %v1869
  %v2068 = vpop.f32.mrb[0].mxu0
  %v2069 = vadd.f32 %v1792, %v2068
  %v2070 = vpop.f32.mrb[0].mxu0
  %2071 = vmatprep.mubr.f32.mxu0 0.0
  %2072 = vmatmul.mubr.f32.gmra.mrb[0].mxu0 %v1872
  %v2073 = vpop.f32.mrb[0].mxu0
  %v2074 = vadd.f32 %v1792, %v2073
  %v2075 = vpop.f32.mrb[0].mxu0
  %2076 = vmatprep.mubr.f32.mxu0 0.0
  %2077 = vmatmul.mubr.f32.gmra.mrb[0].mxu0 %v1875
  %v2078 = vpop.f32.mrb[0].mxu0
  %v2079 = vadd.f32 %v1792, %v2078
  %v2080 = vpop.f32.mrb[0].mxu0
  %2081 = vdwg.mxu0
  %vm2082 = vcmask 916480
  %v2084 = vsel %vm2082, %v771, 0
  %v2087 = vsel %vm2082, %v772, 0
  %2089 = vmatprep.subr.mxu0 0.0
  %2090 = vmatpush1.msra.mxu0 %v1944
  %2091 = vmatprep.subr.mxu0 0.0
  %2092 = vmatpush1.msra.mxu0 %v1949
  %2093 = vmatprep.subr.mxu0 0.0
  %2094 = vmatpush1.msra.mxu0 %v1954
  %2095 = vmatprep.subr.mxu0 0.0
  %2096 = vmatpush1.msra.mxu0 %v1959
  %2097 = vmatprep.subr.mxu0 0.0
  %2098 = vmatpush1.msra.mxu0 %v1964
  %2099 = vmatprep.subr.mxu0 0.0
  %2100 = vmatpush1.msra.mxu0 %v1969
  %2101 = vmatprep.subr.mxu0 0.0
  %2102 = vmatpush1.msra.mxu0 %v1974
  %2103 = vmatprep.subr.mxu0 0.0
  %2104 = vmatpush1.msra.mxu0 %v1979
  %2105 = vmatprep.subr.mxu0 0.0
  %2106 = vmatpush1.msra.mxu0 %v1984
  %2107 = vmatprep.subr.mxu0 0.0
  %2108 = vmatpush1.msra.mxu0 %v1989
  %2109 = vmatprep.subr.mxu0 0.0
  %2110 = vmatpush1.msra.mxu0 %v1994
  %2111 = vmatprep.subr.mxu0 0.0
  %2112 = vmatpush1.msra.mxu0 %v1999
  %2113 = vmatprep.subr.mxu0 0.0
  %2114 = vmatpush1.msra.mxu0 %v2004
  %2115 = vmatprep.subr.mxu0 0.0
  %2116 = vmatpush1.msra.mxu0 %v2009
  %2117 = vmatprep.subr.mxu0 0.0
  %2118 = vmatpush1.msra.mxu0 0.0
  %2119 = vmatprep.subr.mxu0 0.0
  %2120 = vmatpush1.msra.mxu0 0.0
  %2121 = vmatprep.subr.mxu0 0.0
  %2122 = vmatpush1.msra.mxu0 0.0
  %2123 = vmatprep.subr.mxu0 0.0
  %2124 = vmatpush1.msra.mxu0 0.0
  %2125 = vmatprep.subr.mxu0 0.0
  %2126 = vmatpush1.msra.mxu0 0.0
  %2127 = vmatprep.subr.mxu0 0.0
  %2128 = vmatpush1.msra.mxu0 0.0
  %2129 = vmatprep.subr.mxu0 0.0
  %2130 = vmatpush1.msra.mxu0 0.0
  %2131 = vmatprep.subr.mxu0 0.0
  %2132 = vmatpush1.msra.mxu0 0.0
  %2133 = vmatprep.subr.mxu0 0.0
  %2134 = vmatpush1.msra.mxu0 0.0
  %2135 = vmatprep.subr.mxu0 0.0
  %2136 = vmatpush1.msra.mxu0 0.0
  %2137 = vmatprep.subr.mxu0 0.0
  %2138 = vmatpush1.msra.mxu0 0.0
  %2139 = vmatprep.subr.mxu0 0.0
  %2140 = vmatpush1.msra.mxu0 0.0
  %2141 = vmatprep.subr.mxu0 0.0
  %2142 = vmatpush1.msra.mxu0 0.0
  %2143 = vmatprep.subr.mxu0 0.0
  %2144 = vmatpush1.msra.mxu0 0.0
  %2145 = vmatprep.subr.mxu0 0.0
  %2146 = vmatpush1.msra.mxu0 0.0
  %2147 = vmatprep.subr.mxu0 0.0
  %2148 = vmatpush1.msra.mxu0 0.0
  %2149 = vmatprep.subr.mxu0 0.0
  %2150 = vmatpush1.msra.mxu0 0.0
  %2151 = vmatprep.subr.mxu0 0.0
  %2152 = vmatpush1.msra.mxu0 0.0
  %2153 = vmatprep.mubr.f32.mxu0 0.0
  %2154 = vmatmul.mubr.f32.gmra.mrb[0].mxu0 %v2084
  %v2155 = vpop.f32.mrb[0].mxu0
  %v2156 = vadd.f32 0.0, %v2155
  %v2157 = vpop.f32.mrb[0].mxu0
  %2158 = vmatprep.mubr.f32.mxu0 0.0
  %2159 = vmatmul.mubr.f32.gmra.mrb[0].mxu0 %v2087
  %v2160 = vpop.f32.mrb[0].mxu0
  %v2161 = vadd.f32 0.0, %v2160
  %v2162 = vpop.f32.mrb[0].mxu0
  %2163 = vdwg.mxu0
  %2164 = vmatprep.subr.mxu0 0.0
  %2165 = vmatpush1.msra.mxu0 %v2014
  %2166 = vmatprep.subr.mxu0 0.0
  %2167 = vmatpush1.msra.mxu0 %v2019
  %2168 = vmatprep.subr.mxu0 0.0
  %2169 = vmatpush1.msra.mxu0 %v2024
  %2170 = vmatprep.subr.mxu0 0.0
  %2171 = vmatpush1.msra.mxu0 %v2029
  %2172 = vmatprep.subr.mxu0 0.0
  %2173 = vmatpush1.msra.mxu0 %v2034
  %2174 = vmatprep.subr.mxu0 0.0
  %2175 = vmatpush1.msra.mxu0 %v2039
  %2176 = vmatprep.subr.mxu0 0.0
  %2177 = vmatpush1.msra.mxu0 %v2044
  %2178 = vmatprep.subr.mxu0 0.0
  %2179 = vmatpush1.msra.mxu0 %v2049
  %2180 = vmatprep.subr.mxu0 0.0
  %2181 = vmatpush1.msra.mxu0 %v2054
  %2182 = vmatprep.subr.mxu0 0.0
  %2183 = vmatpush1.msra.mxu0 %v2059
  %2184 = vmatprep.subr.mxu0 0.0
  %2185 = vmatpush1.msra.mxu0 %v2064
  %2186 = vmatprep.subr.mxu0 0.0
  %2187 = vmatpush1.msra.mxu0 %v2069
  %2188 = vmatprep.subr.mxu0 0.0
  %2189 = vmatpush1.msra.mxu0 %v2074
  %2190 = vmatprep.subr.mxu0 0.0
  %2191 = vmatpush1.msra.mxu0 %v2079
  %2192 = vmatprep.subr.mxu0 0.0
  %2193 = vmatpush1.msra.mxu0 0.0
  %2194 = vmatprep.subr.mxu0 0.0
  %2195 = vmatpush1.msra.mxu0 0.0
  %2196 = vmatprep.subr.mxu0 0.0
  %2197 = vmatpush1.msra.mxu0 0.0
  %2198 = vmatprep.subr.mxu0 0.0
  %2199 = vmatpush1.msra.mxu0 0.0
  %2200 = vmatprep.subr.mxu0 0.0
  %2201 = vmatpush1.msra.mxu0 0.0
  %2202 = vmatprep.subr.mxu0 0.0
  %2203 = vmatpush1.msra.mxu0 0.0
  %2204 = vmatprep.subr.mxu0 0.0
  %2205 = vmatpush1.msra.mxu0 0.0
  %2206 = vmatprep.subr.mxu0 0.0
  %2207 = vmatpush1.msra.mxu0 0.0
  %2208 = vmatprep.subr.mxu0 0.0
  %2209 = vmatpush1.msra.mxu0 0.0
  %2210 = vmatprep.subr.mxu0 0.0
  %2211 = vmatpush1.msra.mxu0 0.0
  %2212 = vmatprep.subr.mxu0 0.0
  %2213 = vmatpush1.msra.mxu0 0.0
  %2214 = vmatprep.subr.mxu0 0.0
  %2215 = vmatpush1.msra.mxu0 0.0
  %2216 = vmatprep.subr.mxu0 0.0
  %2217 = vmatpush1.msra.mxu0 0.0
  %2218 = vmatprep.subr.mxu0 0.0
  %2219 = vmatpush1.msra.mxu0 0.0
  %2220 = vmatprep.subr.mxu0 0.0
  %2221 = vmatpush1.msra.mxu0 0.0
  %2222 = vmatprep.subr.mxu0 0.0
  %2223 = vmatpush1.msra.mxu0 0.0
  %2224 = vmatprep.subr.mxu0 0.0
  %2225 = vmatpush1.msra.mxu0 0.0
  %2226 = vmatprep.subr.mxu0 0.0
  %2227 = vmatpush1.msra.mxu0 0.0
  %2228 = vmatprep.mubr.f32.mxu0 0.0
  %2229 = vmatmul.mubr.f32.gmra.mrb[0].mxu0 %v2084
  %v2230 = vpop.f32.mrb[0].mxu0
  %v2231 = vadd.f32 0.0, %v2230
  %v2232 = vpop.f32.mrb[0].mxu0
  %2233 = vmatprep.mubr.f32.mxu0 0.0
  %2234 = vmatmul.mubr.f32.gmra.mrb[0].mxu0 %v2087
  %v2235 = vpop.f32.mrb[0].mxu0
  %v2236 = vadd.f32 0.0, %v2235
  %v2237 = vpop.f32.mrb[0].mxu0
  %2238 = vdwg.mxu0
  %v2239 = vld [vmem:[%s2 + $0x1a0] sm:$0xff]
  %v2240 = vld [vmem:[%s2 + $0x1a8] sm:$0xff]
  %v2241 = vld [vmem:[%s2 + $0x1b0] sm:$0xff]
  %v2242 = vld [vmem:[%s2 + $0x1b8] sm:$0xff]
  %v2243 = vld [vmem:[%s2 + $0x1c0] sm:$0xff]
  %v2244 = vld [vmem:[%s2 + $0x1c8] sm:$0xff]
  %v2245 = vld [vmem:[%s2 + $0x1d0] sm:$0xff]
  %v2246 = vld [vmem:[%s2 + $0x1d8] sm:$0xff]
  %v2248 = vsel %vm341, %v2156, 0
  %v2251 = vsel %vm341, %v2161, 0
  %v2254 = vsel %vm341, %v2231, 0
  %v2257 = vsel %vm341, %v2236, 0
  %2259 = vmatprep.subr.mxu0 0.0
  %2260 = vmatpush1.msra.mxu0 %v2243
  %2261 = vmatprep.subr.mxu0 0.0
  %2262 = vmatpush1.msra.mxu0 %v2244
  %2263 = vmatprep.subr.mxu0 0.0
  %2264 = vmatpush1.msra.mxu0 %v2245
  %2265 = vmatprep.subr.mxu0 0.0
  %2266 = vmatpush1.msra.mxu0 %v2246
  %2267 = vmatprep.subr.mxu0 0.0
  %2268 = vmatpush1.msra.mxu0 0.0
  %2269 = vmatprep.subr.mxu0 0.0
  %2270 = vmatpush1.msra.mxu0 0.0
  %2271 = vmatprep.subr.mxu0 0.0
  %2272 = vmatpush1.msra.mxu0 0.0
  %2273 = vmatprep.subr.mxu0 0.0
  %2274 = vmatpush1.msra.mxu0 0.0
  %2275 = vmatprep.subr.mxu0 0.0
  %2276 = vmatpush1.msra.mxu0 0.0
  %2277 = vmatprep.subr.mxu0 0.0
  %2278 = vmatpush1.msra.mxu0 0.0
  %2279 = vmatprep.subr.mxu0 0.0
  %2280 = vmatpush1.msra.mxu0 0.0
  %2281 = vmatprep.subr.mxu0 0.0
  %2282 = vmatpush1.msra.mxu0 0.0
  %2283 = vmatprep.subr.mxu0 0.0
  %2284 = vmatpush1.msra.mxu0 0.0
  %2285 = vmatprep.subr.mxu0 0.0
  %2286 = vmatpush1.msra.mxu0 0.0
  %2287 = vmatprep.subr.mxu0 0.0
  %2288 = vmatpush1.msra.mxu0 0.0
  %2289 = vmatprep.subr.mxu0 0.0
  %2290 = vmatpush1.msra.mxu0 0.0
  %2291 = vmatprep.subr.mxu0 0.0
  %2292 = vmatpush1.msra.mxu0 0.0
  %2293 = vmatprep.subr.mxu0 0.0
  %2294 = vmatpush1.msra.mxu0 0.0
  %2295 = vmatprep.subr.mxu0 0.0
  %2296 = vmatpush1.msra.mxu0 0.0
  %2297 = vmatprep.subr.mxu0 0.0
  %2298 = vmatpush1.msra.mxu0 0.0
  %2299 = vmatprep.subr.mxu0 0.0
  %2300 = vmatpush1.msra.mxu0 0.0
  %2301 = vmatprep.subr.mxu0 0.0
  %2302 = vmatpush1.msra.mxu0 0.0
  %2303 = vmatprep.subr.mxu0 0.0
  %2304 = vmatpush1.msra.mxu0 0.0
  %2305 = vmatprep.subr.mxu0 0.0
  %2306 = vmatpush1.msra.mxu0 0.0
  %2307 = vmatprep.subr.mxu0 0.0
  %2308 = vmatpush1.msra.mxu0 0.0
  %2309 = vmatprep.subr.mxu0 0.0
  %2310 = vmatpush1.msra.mxu0 0.0
  %2311 = vmatprep.subr.mxu0 0.0
  %2312 = vmatpush1.msra.mxu0 0.0
  %2313 = vmatprep.subr.mxu0 0.0
  %2314 = vmatpush1.msra.mxu0 0.0
  %2315 = vmatprep.subr.mxu0 0.0
  %2316 = vmatpush1.msra.mxu0 0.0
  %2317 = vmatprep.subr.mxu0 0.0
  %2318 = vmatpush1.msra.mxu0 0.0
  %2319 = vmatprep.subr.mxu0 0.0
  %2320 = vmatpush1.msra.mxu0 0.0
  %2321 = vmatprep.subr.mxu0 0.0
  %2322 = vmatpush1.msra.mxu0 0.0
  %2323 = vmatprep.mubr.f32.mxu0 0.0
  %2324 = vmatmul.mubr.f32.gmra.mrb[0].mxu0 %v2248
  %v2325 = vpop.f32.mrb[0].mxu0
  %v2326 = vadd.f32 0.0, %v2325
  %v2327 = vpop.f32.mrb[0].mxu0
  %2328 = vmatprep.mubr.f32.mxu0 0.0
  %2329 = vmatmul.mubr.f32.gmra.mrb[0].mxu0 %v2251
  %v2330 = vpop.f32.mrb[0].mxu0
  %v2331 = vadd.f32 0.0, %v2330
  %v2332 = vpop.f32.mrb[0].mxu0
  %2333 = vmatprep.mubr.f32.mxu0 0.0
  %2334 = vmatmul.mubr.f32.gmra.mrb[0].mxu0 %v2254
  %v2335 = vpop.f32.mrb[0].mxu0
  %v2336 = vadd.f32 0.0, %v2335
  %v2337 = vpop.f32.mrb[0].mxu0
  %2338 = vmatprep.mubr.f32.mxu0 0.0
  %2339 = vmatmul.mubr.f32.gmra.mrb[0].mxu0 %v2257
  %v2340 = vpop.f32.mrb[0].mxu0
  %v2341 = vadd.f32 0.0, %v2340
  %v2342 = vpop.f32.mrb[0].mxu0
  %2343 = vdwg.mxu0
  %2344 = vmatprep.subr.mxu0 0.0
  %2345 = vmatpush1.msra.mxu0 %v2239
  %2346 = vmatprep.subr.mxu0 0.0
  %2347 = vmatpush1.msra.mxu0 %v2240
  %2348 = vmatprep.subr.mxu0 0.0
  %2349 = vmatpush1.msra.mxu0 %v2241
  %2350 = vmatprep.subr.mxu0 0.0
  %2351 = vmatpush1.msra.mxu0 %v2242
  %2352 = vmatprep.subr.mxu0 0.0
  %2353 = vmatpush1.msra.mxu0 0.0
  %2354 = vmatprep.subr.mxu0 0.0
  %2355 = vmatpush1.msra.mxu0 0.0
  %2356 = vmatprep.subr.mxu0 0.0
  %2357 = vmatpush1.msra.mxu0 0.0
  %2358 = vmatprep.subr.mxu0 0.0
  %2359 = vmatpush1.msra.mxu0 0.0
  %2360 = vmatprep.subr.mxu0 0.0
  %2361 = vmatpush1.msra.mxu0 0.0
  %2362 = vmatprep.subr.mxu0 0.0
  %2363 = vmatpush1.msra.mxu0 0.0
  %2364 = vmatprep.subr.mxu0 0.0
  %2365 = vmatpush1.msra.mxu0 0.0
  %2366 = vmatprep.subr.mxu0 0.0
  %2367 = vmatpush1.msra.mxu0 0.0
  %2368 = vmatprep.subr.mxu0 0.0
  %2369 = vmatpush1.msra.mxu0 0.0
  %2370 = vmatprep.subr.mxu0 0.0
  %2371 = vmatpush1.msra.mxu0 0.0
  %2372 = vmatprep.subr.mxu0 0.0
  %2373 = vmatpush1.msra.mxu0 0.0
  %2374 = vmatprep.subr.mxu0 0.0
  %2375 = vmatpush1.msra.mxu0 0.0
  %2376 = vmatprep.subr.mxu0 0.0
  %2377 = vmatpush1.msra.mxu0 0.0
  %2378 = vmatprep.subr.mxu0 0.0
  %2379 = vmatpush1.msra.mxu0 0.0
  %2380 = vmatprep.subr.mxu0 0.0
  %2381 = vmatpush1.msra.mxu0 0.0
  %2382 = vmatprep.subr.mxu0 0.0
  %2383 = vmatpush1.msra.mxu0 0.0
  %2384 = vmatprep.subr.mxu0 0.0
  %2385 = vmatpush1.msra.mxu0 0.0
  %2386 = vmatprep.subr.mxu0 0.0
  %2387 = vmatpush1.msra.mxu0 0.0
  %2388 = vmatprep.subr.mxu0 0.0
  %2389 = vmatpush1.msra.mxu0 0.0
  %2390 = vmatprep.subr.mxu0 0.0
  %2391 = vmatpush1.msra.mxu0 0.0
  %2392 = vmatprep.subr.mxu0 0.0
  %2393 = vmatpush1.msra.mxu0 0.0
  %2394 = vmatprep.subr.mxu0 0.0
  %2395 = vmatpush1.msra.mxu0 0.0
  %2396 = vmatprep.subr.mxu0 0.0
  %2397 = vmatpush1.msra.mxu0 0.0
  %2398 = vmatprep.subr.mxu0 0.0
  %2399 = vmatpush1.msra.mxu0 0.0
  %2400 = vmatprep.subr.mxu0 0.0
  %2401 = vmatpush1.msra.mxu0 0.0
  %2402 = vmatprep.subr.mxu0 0.0
  %2403 = vmatpush1.msra.mxu0 0.0
  %2404 = vmatprep.subr.mxu0 0.0
  %2405 = vmatpush1.msra.mxu0 0.0
  %2406 = vmatprep.subr.mxu0 0.0
  %2407 = vmatpush1.msra.mxu0 0.0
  %2408 = vmatprep.mubr.f32.mxu0 0.0
  %2409 = vmatmul.mubr.f32.gmra.mrb[0].mxu0 %v558
  %v2410 = vpop.f32.mrb[0].mxu0
  %v2411 = vadd.f32 %v2326, %v2410
  %v2412 = vpop.f32.mrb[0].mxu0
  %2413 = vmatprep.mubr.f32.mxu0 0.0
  %2414 = vmatmul.mubr.f32.gmra.mrb[0].mxu0 %v561
  %v2415 = vpop.f32.mrb[0].mxu0
  %v2416 = vadd.f32 %v2331, %v2415
  %v2417 = vpop.f32.mrb[0].mxu0
  %2418 = vmatprep.mubr.f32.mxu0 0.0
  %2419 = vmatmul.mubr.f32.gmra.mrb[0].mxu0 %v564
  %v2420 = vpop.f32.mrb[0].mxu0
  %v2421 = vadd.f32 %v2336, %v2420
  %v2422 = vpop.f32.mrb[0].mxu0
  %2423 = vmatprep.mubr.f32.mxu0 0.0
  %2424 = vmatmul.mubr.f32.gmra.mrb[0].mxu0 %v567
  %v2425 = vpop.f32.mrb[0].mxu0
  %v2426 = vadd.f32 %v2341, %v2425
  %v2427 = vpop.f32.mrb[0].mxu0
  %2428 = vdwg.mxu0
  %v2429 = vld [vmem:[%s2 + $0x1e0] sm:$0x1]
  %v2430 = vlaneseq
  %v2431 = vshrl.u32 %v2430, 7
  %v2432 = vsub.s32 0, %v2431
  %v2433 = vrot.slane %v2429, %v2432
  %v2434 = vadd.f32 %v2411, %v2433
  %v2435 = vadd.f32 %v2416, %v2433
  %v2436 = vadd.f32 %v2421, %v2433
  %v2437 = vadd.f32 %v2426, %v2433
  %v2438 = vmax.f32 %v2434, 0.0
  %v2439 = vmax.f32 %v2435, 0.0
  %v2440 = vmax.f32 %v2436, 0.0
  %v2441 = vmax.f32 %v2437, 0.0
  %v2442 = vld [vmem:[%s2 + $0x1e8] sm:$0xff]
  %v2443 = vld [vmem:[%s2 + $0x1f0] sm:$0xff]
  %v2444 = vld [vmem:[%s2 + $0x1f8] sm:$0xff]
  %v2445 = vld [vmem:[%s2 + $0x200] sm:$0xff]
  %v2446 = vld [vmem:[%s2 + $0x208] sm:$0x1]
  %v2447 = vlaneseq
  %v2448 = vshrl.u32 %v2447, 7
  %v2449 = vsub.s32 0, %v2448
  %v2450 = vrot.slane %v2446, %v2449
  %v2452 = vsel %vm341, %v2438, 0
  %v2455 = vsel %vm341, %v2439, 0
  %v2458 = vsel %vm341, %v2440, 0
  %v2461 = vsel %vm341, %v2441, 0
  %2463 = vmatprep.subr.mxu0 0.0
  %2464 = vmatpush1.msra.mxu0 %v2442
  %2465 = vmatprep.subr.mxu0 0.0
  %2466 = vmatpush1.msra.mxu0 %v2443
  %2467 = vmatprep.subr.mxu0 0.0
  %2468 = vmatpush1.msra.mxu0 %v2444
  %2469 = vmatprep.subr.mxu0 0.0
  %2470 = vmatpush1.msra.mxu0 %v2445
  %2471 = vmatprep.subr.mxu0 0.0
  %2472 = vmatpush1.msra.mxu0 0.0
  %2473 = vmatprep.subr.mxu0 0.0
  %2474 = vmatpush1.msra.mxu0 0.0
  %2475 = vmatprep.subr.mxu0 0.0
  %2476 = vmatpush1.msra.mxu0 0.0
  %2477 = vmatprep.subr.mxu0 0.0
  %2478 = vmatpush1.msra.mxu0 0.0
  %2479 = vmatprep.subr.mxu0 0.0
  %2480 = vmatpush1.msra.mxu0 0.0
  %2481 = vmatprep.subr.mxu0 0.0
  %2482 = vmatpush1.msra.mxu0 0.0
  %2483 = vmatprep.subr.mxu0 0.0
  %2484 = vmatpush1.msra.mxu0 0.0
  %2485 = vmatprep.subr.mxu0 0.0
  %2486 = vmatpush1.msra.mxu0 0.0
  %2487 = vmatprep.subr.mxu0 0.0
  %2488 = vmatpush1.msra.mxu0 0.0
  %2489 = vmatprep.subr.mxu0 0.0
  %2490 = vmatpush1.msra.mxu0 0.0
  %2491 = vmatprep.subr.mxu0 0.0
  %2492 = vmatpush1.msra.mxu0 0.0
  %2493 = vmatprep.subr.mxu0 0.0
  %2494 = vmatpush1.msra.mxu0 0.0
  %2495 = vmatprep.subr.mxu0 0.0
  %2496 = vmatpush1.msra.mxu0 0.0
  %2497 = vmatprep.subr.mxu0 0.0
  %2498 = vmatpush1.msra.mxu0 0.0
  %2499 = vmatprep.subr.mxu0 0.0
  %2500 = vmatpush1.msra.mxu0 0.0
  %2501 = vmatprep.subr.mxu0 0.0
  %2502 = vmatpush1.msra.mxu0 0.0
  %2503 = vmatprep.subr.mxu0 0.0
  %2504 = vmatpush1.msra.mxu0 0.0
  %2505 = vmatprep.subr.mxu0 0.0
  %2506 = vmatpush1.msra.mxu0 0.0
  %2507 = vmatprep.subr.mxu0 0.0
  %2508 = vmatpush1.msra.mxu0 0.0
  %2509 = vmatprep.subr.mxu0 0.0
  %2510 = vmatpush1.msra.mxu0 0.0
  %2511 = vmatprep.subr.mxu0 0.0
  %2512 = vmatpush1.msra.mxu0 0.0
  %2513 = vmatprep.subr.mxu0 0.0
  %2514 = vmatpush1.msra.mxu0 0.0
  %2515 = vmatprep.subr.mxu0 0.0
  %2516 = vmatpush1.msra.mxu0 0.0
  %2517 = vmatprep.subr.mxu0 0.0
  %2518 = vmatpush1.msra.mxu0 0.0
  %2519 = vmatprep.subr.mxu0 0.0
  %2520 = vmatpush1.msra.mxu0 0.0
  %2521 = vmatprep.subr.mxu0 0.0
  %2522 = vmatpush1.msra.mxu0 0.0
  %2523 = vmatprep.subr.mxu0 0.0
  %2524 = vmatpush1.msra.mxu0 0.0
  %2525 = vmatprep.subr.mxu0 0.0
  %2526 = vmatpush1.msra.mxu0 0.0
  %2527 = vmatprep.mubr.f32.mxu0 0.0
  %2528 = vmatmul.mubr.f32.gmra.mrb[0].mxu0 %v2452
  %v2529 = vpop.f32.mrb[0].mxu0
  %v2530 = vadd.f32 %v2450, %v2529
  %v2531 = vpop.f32.mrb[0].mxu0
  %2532 = vmatprep.mubr.f32.mxu0 0.0
  %2533 = vmatmul.mubr.f32.gmra.mrb[0].mxu0 %v2455
  %v2534 = vpop.f32.mrb[0].mxu0
  %v2535 = vadd.f32 %v2450, %v2534
  %v2536 = vpop.f32.mrb[0].mxu0
  %2537 = vmatprep.mubr.f32.mxu0 0.0
  %2538 = vmatmul.mubr.f32.gmra.mrb[0].mxu0 %v2458
  %v2539 = vpop.f32.mrb[0].mxu0
  %v2540 = vadd.f32 %v2450, %v2539
  %v2541 = vpop.f32.mrb[0].mxu0
  %2542 = vmatprep.mubr.f32.mxu0 0.0
  %2543 = vmatmul.mubr.f32.gmra.mrb[0].mxu0 %v2461
  %v2544 = vpop.f32.mrb[0].mxu0
  %v2545 = vadd.f32 %v2450, %v2544
  %v2546 = vpop.f32.mrb[0].mxu0
  %2547 = vdwg.mxu0
  %v2548 = vmax.f32 %v2530, 0.0
  %v2549 = vmax.f32 %v2535, 0.0
  %v2550 = vmax.f32 %v2540, 0.0
  %v2551 = vmax.f32 %v2545, 0.0
  %v2552 = vld [vmem:[%s2 + $0x210] sm:$0xff]
  %v2553 = vld [vmem:[%s2 + $0x218] sm:$0xff]
  %v2554 = vld [vmem:[%s2 + $0x220] sm:$0xff]
  %v2555 = vld [vmem:[%s2 + $0x228] sm:$0xff]
  %v2556 = vld [vmem:[%s2 + $0x230] sm:$0x1]
  %v2557 = vlaneseq
  %v2558 = vshrl.u32 %v2557, 7
  %v2559 = vsub.s32 0, %v2558
  %v2560 = vrot.slane %v2556, %v2559
  %v2562 = vsel %vm341, %v2548, 0
  %v2565 = vsel %vm341, %v2549, 0
  %v2568 = vsel %vm341, %v2550, 0
  %v2571 = vsel %vm341, %v2551, 0
  %2573 = vmatprep.subr.mxu0 0.0
  %2574 = vmatpush1.msra.mxu0 %v2552
  %2575 = vmatprep.subr.mxu0 0.0
  %2576 = vmatpush1.msra.mxu0 %v2553
  %2577 = vmatprep.subr.mxu0 0.0
  %2578 = vmatpush1.msra.mxu0 %v2554
  %2579 = vmatprep.subr.mxu0 0.0
  %2580 = vmatpush1.msra.mxu0 %v2555
  %2581 = vmatprep.subr.mxu0 0.0
  %2582 = vmatpush1.msra.mxu0 0.0
  %2583 = vmatprep.subr.mxu0 0.0
  %2584 = vmatpush1.msra.mxu0 0.0
  %2585 = vmatprep.subr.mxu0 0.0
  %2586 = vmatpush1.msra.mxu0 0.0
  %2587 = vmatprep.subr.mxu0 0.0
  %2588 = vmatpush1.msra.mxu0 0.0
  %2589 = vmatprep.subr.mxu0 0.0
  %2590 = vmatpush1.msra.mxu0 0.0
  %2591 = vmatprep.subr.mxu0 0.0
  %2592 = vmatpush1.msra.mxu0 0.0
  %2593 = vmatprep.subr.mxu0 0.0
  %2594 = vmatpush1.msra.mxu0 0.0
  %2595 = vmatprep.subr.mxu0 0.0
  %2596 = vmatpush1.msra.mxu0 0.0
  %2597 = vmatprep.subr.mxu0 0.0
  %2598 = vmatpush1.msra.mxu0 0.0
  %2599 = vmatprep.subr.mxu0 0.0
  %2600 = vmatpush1.msra.mxu0 0.0
  %2601 = vmatprep.subr.mxu0 0.0
  %2602 = vmatpush1.msra.mxu0 0.0
  %2603 = vmatprep.subr.mxu0 0.0
  %2604 = vmatpush1.msra.mxu0 0.0
  %2605 = vmatprep.subr.mxu0 0.0
  %2606 = vmatpush1.msra.mxu0 0.0
  %2607 = vmatprep.subr.mxu0 0.0
  %2608 = vmatpush1.msra.mxu0 0.0
  %2609 = vmatprep.subr.mxu0 0.0
  %2610 = vmatpush1.msra.mxu0 0.0
  %2611 = vmatprep.subr.mxu0 0.0
  %2612 = vmatpush1.msra.mxu0 0.0
  %2613 = vmatprep.subr.mxu0 0.0
  %2614 = vmatpush1.msra.mxu0 0.0
  %2615 = vmatprep.subr.mxu0 0.0
  %2616 = vmatpush1.msra.mxu0 0.0
  %2617 = vmatprep.subr.mxu0 0.0
  %2618 = vmatpush1.msra.mxu0 0.0
  %2619 = vmatprep.subr.mxu0 0.0
  %2620 = vmatpush1.msra.mxu0 0.0
  %2621 = vmatprep.subr.mxu0 0.0
  %2622 = vmatpush1.msra.mxu0 0.0
  %2623 = vmatprep.subr.mxu0 0.0
  %2624 = vmatpush1.msra.mxu0 0.0
  %2625 = vmatprep.subr.mxu0 0.0
  %2626 = vmatpush1.msra.mxu0 0.0
  %2627 = vmatprep.subr.mxu0 0.0
  %2628 = vmatpush1.msra.mxu0 0.0
  %2629 = vmatprep.subr.mxu0 0.0
  %2630 = vmatpush1.msra.mxu0 0.0
  %2631 = vmatprep.subr.mxu0 0.0
  %2632 = vmatpush1.msra.mxu0 0.0
  %2633 = vmatprep.subr.mxu0 0.0
  %2634 = vmatpush1.msra.mxu0 0.0
  %2635 = vmatprep.subr.mxu0 0.0
  %2636 = vmatpush1.msra.mxu0 0.0
  %2637 = vmatprep.mubr.f32.mxu0 0.0
  %2638 = vmatmul.mubr.f32.gmra.mrb[0].mxu0 %v2562
  %v2639 = vpop.f32.mrb[0].mxu0
  %v2640 = vadd.f32 %v2560, %v2639
  %v2641 = vpop.f32.mrb[0].mxu0
  %2642 = vmatprep.mubr.f32.mxu0 0.0
  %2643 = vmatmul.mubr.f32.gmra.mrb[0].mxu0 %v2565
  %v2644 = vpop.f32.mrb[0].mxu0
  %v2645 = vadd.f32 %v2560, %v2644
  %v2646 = vpop.f32.mrb[0].mxu0
  %2647 = vmatprep.mubr.f32.mxu0 0.0
  %2648 = vmatmul.mubr.f32.gmra.mrb[0].mxu0 %v2568
  %v2649 = vpop.f32.mrb[0].mxu0
  %v2650 = vadd.f32 %v2560, %v2649
  %v2651 = vpop.f32.mrb[0].mxu0
  %2652 = vmatprep.mubr.f32.mxu0 0.0
  %2653 = vmatmul.mubr.f32.gmra.mrb[0].mxu0 %v2571
  %v2654 = vpop.f32.mrb[0].mxu0
  %v2655 = vadd.f32 %v2560, %v2654
  %v2656 = vpop.f32.mrb[0].mxu0
  %2657 = vdwg.mxu0
  %2658 = vrot.lane.b32.xlu0 %v531, 32
  %v2659 = vpop.permute.xlu0 %2658
  %2660 = vrot.lane.b32.xlu0 %v536, 32
  %v2661 = vpop.permute.xlu0 %2660
  %2662 = vrot.lane.b32.xlu0 %v541, 32
  %v2663 = vpop.permute.xlu0 %2662
  %2664 = vrot.lane.b32.xlu0 %v546, 32
  %v2665 = vpop.permute.xlu0 %2664
  %v2670 = vsel %vm341, %v2640, %v2659
  %v2671 = vsel %vm341, %v2645, %v2661
  %v2672 = vsel %vm341, %v2650, %v2663
  %v2673 = vsel %vm341, %v2655, %v2665
  %v2674 = vld [vmem:[%s2 + $0x238] sm:$0xff]
  %v2675 = vld [vmem:[%s2 + $0x240] sm:$0xff]
  %v2676 = vld [vmem:[%s2 + $0x248] sm:$0xff]
  %v2677 = vld [vmem:[%s2 + $0x250] sm:$0xff]
  %v2678 = vld [vmem:[%s2 + $0x258] sm:$0xff]
  %v2679 = vld [vmem:[%s2 + $0x260] sm:$0xff]
  %v2680 = vld [vmem:[%s2 + $0x268] sm:$0xff]
  %v2681 = vld [vmem:[%s2 + $0x270] sm:$0xff]
  %v2682 = vld [vmem:[%s2 + $0x278] sm:$0x1]
  %v2683 = vlaneseq
  %v2684 = vshrl.u32 %v2683, 7
  %v2685 = vsub.s32 0, %v2684
  %v2686 = vrot.slane %v2682, %v2685
  %vm2687 = vcmask 523264
  %v2689 = vsel %vm2687, %v2670, 0
  %v2692 = vsel %vm2687, %v2671, 0
  %v2695 = vsel %vm2687, %v2672, 0
  %v2698 = vsel %vm2687, %v2673, 0
  %2700 = vmatprep.subr.mxu0 0.0
  %2701 = vmatpush1.msra.mxu0 %v2674
  %2702 = vmatprep.subr.mxu0 0.0
  %2703 = vmatpush1.msra.mxu0 %v2675
  %2704 = vmatprep.subr.mxu0 0.0
  %2705 = vmatpush1.msra.mxu0 %v2676
  %2706 = vmatprep.subr.mxu0 0.0
  %2707 = vmatpush1.msra.mxu0 %v2677
  %2708 = vmatprep.subr.mxu0 0.0
  %2709 = vmatpush1.msra.mxu0 %v2678
  %2710 = vmatprep.subr.mxu0 0.0
  %2711 = vmatpush1.msra.mxu0 %v2679
  %2712 = vmatprep.subr.mxu0 0.0
  %2713 = vmatpush1.msra.mxu0 %v2680
  %2714 = vmatprep.subr.mxu0 0.0
  %2715 = vmatpush1.msra.mxu0 %v2681
  %2716 = vmatprep.subr.mxu0 0.0
  %2717 = vmatpush1.msra.mxu0 0.0
  %2718 = vmatprep.subr.mxu0 0.0
  %2719 = vmatpush1.msra.mxu0 0.0
  %2720 = vmatprep.subr.mxu0 0.0
  %2721 = vmatpush1.msra.mxu0 0.0
  %2722 = vmatprep.subr.mxu0 0.0
  %2723 = vmatpush1.msra.mxu0 0.0
  %2724 = vmatprep.subr.mxu0 0.0
  %2725 = vmatpush1.msra.mxu0 0.0
  %2726 = vmatprep.subr.mxu0 0.0
  %2727 = vmatpush1.msra.mxu0 0.0
  %2728 = vmatprep.subr.mxu0 0.0
  %2729 = vmatpush1.msra.mxu0 0.0
  %2730 = vmatprep.subr.mxu0 0.0
  %2731 = vmatpush1.msra.mxu0 0.0
  %2732 = vmatprep.subr.mxu0 0.0
  %2733 = vmatpush1.msra.mxu0 0.0
  %2734 = vmatprep.subr.mxu0 0.0
  %2735 = vmatpush1.msra.mxu0 0.0
  %2736 = vmatprep.subr.mxu0 0.0
  %2737 = vmatpush1.msra.mxu0 0.0
  %2738 = vmatprep.subr.mxu0 0.0
  %2739 = vmatpush1.msra.mxu0 0.0
  %2740 = vmatprep.subr.mxu0 0.0
  %2741 = vmatpush1.msra.mxu0 0.0
  %2742 = vmatprep.subr.mxu0 0.0
  %2743 = vmatpush1.msra.mxu0 0.0
  %2744 = vmatprep.subr.mxu0 0.0
  %2745 = vmatpush1.msra.mxu0 0.0
  %2746 = vmatprep.subr.mxu0 0.0
  %2747 = vmatpush1.msra.mxu0 0.0
  %2748 = vmatprep.subr.mxu0 0.0
  %2749 = vmatpush1.msra.mxu0 0.0
  %2750 = vmatprep.subr.mxu0 0.0
  %2751 = vmatpush1.msra.mxu0 0.0
  %2752 = vmatprep.subr.mxu0 0.0
  %2753 = vmatpush1.msra.mxu0 0.0
  %2754 = vmatprep.subr.mxu0 0.0
  %2755 = vmatpush1.msra.mxu0 0.0
  %2756 = vmatprep.subr.mxu0 0.0
  %2757 = vmatpush1.msra.mxu0 0.0
  %2758 = vmatprep.subr.mxu0 0.0
  %2759 = vmatpush1.msra.mxu0 0.0
  %2760 = vmatprep.subr.mxu0 0.0
  %2761 = vmatpush1.msra.mxu0 0.0
  %2762 = vmatprep.subr.mxu0 0.0
  %2763 = vmatpush1.msra.mxu0 0.0
  %2764 = vmatprep.mubr.f32.mxu0 0.0
  %2765 = vmatmul.mubr.f32.gmra.mrb[0].mxu0 %v2689
  %v2766 = vpop.f32.mrb[0].mxu0
  %v2767 = vadd.f32 %v2686, %v2766
  %v2768 = vpop.f32.mrb[0].mxu0
  %2769 = vmatprep.mubr.f32.mxu0 0.0
  %2770 = vmatmul.mubr.f32.gmra.mrb[0].mxu0 %v2692
  %v2771 = vpop.f32.mrb[0].mxu0
  %v2772 = vadd.f32 %v2686, %v2771
  %v2773 = vpop.f32.mrb[0].mxu0
  %2774 = vmatprep.mubr.f32.mxu0 0.0
  %2775 = vmatmul.mubr.f32.gmra.mrb[0].mxu0 %v2695
  %v2776 = vpop.f32.mrb[0].mxu0
  %v2777 = vadd.f32 %v2686, %v2776
  %v2778 = vpop.f32.mrb[0].mxu0
  %2779 = vmatprep.mubr.f32.mxu0 0.0
  %2780 = vmatmul.mubr.f32.gmra.mrb[0].mxu0 %v2698
  %v2781 = vpop.f32.mrb[0].mxu0
  %v2782 = vadd.f32 %v2686, %v2781
  %v2783 = vpop.f32.mrb[0].mxu0
  %2784 = vdwg.mxu0
  %v2785 = vxor.u32 %v2767, 2147483648
  %v2786 = vxor.u32 %v2772, 2147483648
  %v2787 = vxor.u32 %v2777, 2147483648
  %v2788 = vxor.u32 %v2782, 2147483648
  %v2789 = vmul.f32 %v2785, 1.442695
  %v2790 = vpow.pop %v2789
  %v2791 = vmul.f32 %v2786, 1.442695
  %v2792 = vpow.pop %v2791
  %v2793 = vmul.f32 %v2787, 1.442695
  %v2794 = vpow.pop %v2793
  %v2795 = vmul.f32 %v2788, 1.442695
  %v2796 = vpow.pop %v2795
  %v2797 = vadd.f32 %v2790, 1.0
  %v2798 = vadd.f32 %v2792, 1.0
  %v2799 = vadd.f32 %v2794, 1.0
  %v2800 = vadd.f32 %v2796, 1.0
  %v2801 = vrcp.pop %v2797
  %v2802 = vmul.f32 1.0, %v2801
  %v2803 = vrcp.pop %v2798
  %v2804 = vmul.f32 1.0, %v2803
  %v2805 = vrcp.pop %v2799
  %v2806 = vmul.f32 1.0, %v2805
  %v2807 = vrcp.pop %v2800
  %v2808 = vmul.f32 1.0, %v2807
  %v2809 = vld [vmem:[%s2 + $0x280] sm:$0xff]
  %v2810 = vld [vmem:[%s2 + $0x288] sm:$0xff]
  %v2811 = vld [vmem:[%s2 + $0x290] sm:$0xff]
  %v2812 = vld [vmem:[%s2 + $0x298] sm:$0xff]
  %v2813 = vld [vmem:[%s2 + $0x2a0] sm:$0xff]
  %v2814 = vld [vmem:[%s2 + $0x2a8] sm:$0xff]
  %v2815 = vld [vmem:[%s2 + $0x2b0] sm:$0xff]
  %v2816 = vld [vmem:[%s2 + $0x2b8] sm:$0xff]
  %v2817 = vld [vmem:[%s2 + $0x2c0] sm:$0x1]
  %v2818 = vlaneseq
  %v2819 = vshrl.u32 %v2818, 7
  %v2820 = vsub.s32 0, %v2819
  %v2821 = vrot.slane %v2817, %v2820
  %2822 = vmatprep.subr.mxu0 0.0
  %2823 = vmatpush1.msra.mxu0 %v2809
  %2824 = vmatprep.subr.mxu0 0.0
  %2825 = vmatpush1.msra.mxu0 %v2810
  %2826 = vmatprep.subr.mxu0 0.0
  %2827 = vmatpush1.msra.mxu0 %v2811
  %2828 = vmatprep.subr.mxu0 0.0
  %2829 = vmatpush1.msra.mxu0 %v2812
  %2830 = vmatprep.subr.mxu0 0.0
  %2831 = vmatpush1.msra.mxu0 %v2813
  %2832 = vmatprep.subr.mxu0 0.0
  %2833 = vmatpush1.msra.mxu0 %v2814
  %2834 = vmatprep.subr.mxu0 0.0
  %2835 = vmatpush1.msra.mxu0 %v2815
  %2836 = vmatprep.subr.mxu0 0.0
  %2837 = vmatpush1.msra.mxu0 %v2816
  %2838 = vmatprep.subr.mxu0 0.0
  %2839 = vmatpush1.msra.mxu0 0.0
  %2840 = vmatprep.subr.mxu0 0.0
  %2841 = vmatpush1.msra.mxu0 0.0
  %2842 = vmatprep.subr.mxu0 0.0
  %2843 = vmatpush1.msra.mxu0 0.0
  %2844 = vmatprep.subr.mxu0 0.0
  %2845 = vmatpush1.msra.mxu0 0.0
  %2846 = vmatprep.subr.mxu0 0.0
  %2847 = vmatpush1.msra.mxu0 0.0
  %2848 = vmatprep.subr.mxu0 0.0
  %2849 = vmatpush1.msra.mxu0 0.0
  %2850 = vmatprep.subr.mxu0 0.0
  %2851 = vmatpush1.msra.mxu0 0.0
  %2852 = vmatprep.subr.mxu0 0.0
  %2853 = vmatpush1.msra.mxu0 0.0
  %2854 = vmatprep.subr.mxu0 0.0
  %2855 = vmatpush1.msra.mxu0 0.0
  %2856 = vmatprep.subr.mxu0 0.0
  %2857 = vmatpush1.msra.mxu0 0.0
  %2858 = vmatprep.subr.mxu0 0.0
  %2859 = vmatpush1.msra.mxu0 0.0
  %2860 = vmatprep.subr.mxu0 0.0
  %2861 = vmatpush1.msra.mxu0 0.0
  %2862 = vmatprep.subr.mxu0 0.0
  %2863 = vmatpush1.msra.mxu0 0.0
  %2864 = vmatprep.subr.mxu0 0.0
  %2865 = vmatpush1.msra.mxu0 0.0
  %2866 = vmatprep.subr.mxu0 0.0
  %2867 = vmatpush1.msra.mxu0 0.0
  %2868 = vmatprep.subr.mxu0 0.0
  %2869 = vmatpush1.msra.mxu0 0.0
  %2870 = vmatprep.subr.mxu0 0.0
  %2871 = vmatpush1.msra.mxu0 0.0
  %2872 = vmatprep.subr.mxu0 0.0
  %2873 = vmatpush1.msra.mxu0 0.0
  %2874 = vmatprep.subr.mxu0 0.0
  %2875 = vmatpush1.msra.mxu0 0.0
  %2876 = vmatprep.subr.mxu0 0.0
  %2877 = vmatpush1.msra.mxu0 0.0
  %2878 = vmatprep.subr.mxu0 0.0
  %2879 = vmatpush1.msra.mxu0 0.0
  %2880 = vmatprep.subr.mxu0 0.0
  %2881 = vmatpush1.msra.mxu0 0.0
  %2882 = vmatprep.subr.mxu0 0.0
  %2883 = vmatpush1.msra.mxu0 0.0
  %2884 = vmatprep.subr.mxu0 0.0
  %2885 = vmatpush1.msra.mxu0 0.0
  %2886 = vmatprep.mubr.f32.mxu0 0.0
  %2887 = vmatmul.mubr.f32.gmra.mrb[0].mxu0 %v2689
  %v2888 = vpop.f32.mrb[0].mxu0
  %v2889 = vadd.f32 %v2821, %v2888
  %v2890 = vpop.f32.mrb[0].mxu0
  %2891 = vmatprep.mubr.f32.mxu0 0.0
  %2892 = vmatmul.mubr.f32.gmra.mrb[0].mxu0 %v2692
  %v2893 = vpop.f32.mrb[0].mxu0
  %v2894 = vadd.f32 %v2821, %v2893
  %v2895 = vpop.f32.mrb[0].mxu0
  %2896 = vmatprep.mubr.f32.mxu0 0.0
  %2897 = vmatmul.mubr.f32.gmra.mrb[0].mxu0 %v2695
  %v2898 = vpop.f32.mrb[0].mxu0
  %v2899 = vadd.f32 %v2821, %v2898
  %v2900 = vpop.f32.mrb[0].mxu0
  %2901 = vmatprep.mubr.f32.mxu0 0.0
  %2902 = vmatmul.mubr.f32.gmra.mrb[0].mxu0 %v2698
  %v2903 = vpop.f32.mrb[0].mxu0
  %v2904 = vadd.f32 %v2821, %v2903
  %v2905 = vpop.f32.mrb[0].mxu0
  %2906 = vdwg.mxu0
  %v2907 = vxor.u32 %v2889, 2147483648
  %v2908 = vxor.u32 %v2894, 2147483648
  %v2909 = vxor.u32 %v2899, 2147483648
  %v2910 = vxor.u32 %v2904, 2147483648
  %v2911 = vmul.f32 %v2907, 1.442695
  %v2912 = vpow.pop %v2911
  %v2913 = vmul.f32 %v2908, 1.442695
  %v2914 = vpow.pop %v2913
  %v2915 = vmul.f32 %v2909, 1.442695
  %v2916 = vpow.pop %v2915
  %v2917 = vmul.f32 %v2910, 1.442695
  %v2918 = vpow.pop %v2917
  %v2919 = vadd.f32 %v2912, 1.0
  %v2920 = vadd.f32 %v2914, 1.0
  %v2921 = vadd.f32 %v2916, 1.0
  %v2922 = vadd.f32 %v2918, 1.0
  %v2923 = vrcp.pop %v2919
  %v2924 = vmul.f32 1.0, %v2923
  %v2925 = vrcp.pop %v2920
  %v2926 = vmul.f32 1.0, %v2925
  %v2927 = vrcp.pop %v2921
  %v2928 = vmul.f32 1.0, %v2927
  %v2929 = vrcp.pop %v2922
  %v2930 = vmul.f32 1.0, %v2929
  %v2931 = vld [vmem:[%s2 + $0x2c8] sm:$0xff]
  %v2932 = vld [vmem:[%s2 + $0x2d0] sm:$0xff]
  %v2933 = vld [vmem:[%s2 + $0x2d8] sm:$0xff]
  %v2934 = vld [vmem:[%s2 + $0x2e0] sm:$0xff]
  %v2935 = vld [vmem:[%s2 + $0x2e8] sm:$0xff]
  %v2936 = vld [vmem:[%s2 + $0x2f0] sm:$0xff]
  %v2937 = vld [vmem:[%s2 + $0x2f8] sm:$0xff]
  %v2938 = vld [vmem:[%s2 + $0x300] sm:$0xff]
  %v2939 = vld [vmem:[%s2 + $0x308] sm:$0x1]
  %v2940 = vlaneseq
  %v2941 = vshrl.u32 %v2940, 7
  %v2942 = vsub.s32 0, %v2941
  %v2943 = vrot.slane %v2939, %v2942
  %2944 = vmatprep.subr.mxu0 0.0
  %2945 = vmatpush1.msra.mxu0 %v2931
  %2946 = vmatprep.subr.mxu0 0.0
  %2947 = vmatpush1.msra.mxu0 %v2932
  %2948 = vmatprep.subr.mxu0 0.0
  %2949 = vmatpush1.msra.mxu0 %v2933
  %2950 = vmatprep.subr.mxu0 0.0
  %2951 = vmatpush1.msra.mxu0 %v2934
  %2952 = vmatprep.subr.mxu0 0.0
  %2953 = vmatpush1.msra.mxu0 %v2935
  %2954 = vmatprep.subr.mxu0 0.0
  %2955 = vmatpush1.msra.mxu0 %v2936
  %2956 = vmatprep.subr.mxu0 0.0
  %2957 = vmatpush1.msra.mxu0 %v2937
  %2958 = vmatprep.subr.mxu0 0.0
  %2959 = vmatpush1.msra.mxu0 %v2938
  %2960 = vmatprep.subr.mxu0 0.0
  %2961 = vmatpush1.msra.mxu0 0.0
  %2962 = vmatprep.subr.mxu0 0.0
  %2963 = vmatpush1.msra.mxu0 0.0
  %2964 = vmatprep.subr.mxu0 0.0
  %2965 = vmatpush1.msra.mxu0 0.0
  %2966 = vmatprep.subr.mxu0 0.0
  %2967 = vmatpush1.msra.mxu0 0.0
  %2968 = vmatprep.subr.mxu0 0.0
  %2969 = vmatpush1.msra.mxu0 0.0
  %2970 = vmatprep.subr.mxu0 0.0
  %2971 = vmatpush1.msra.mxu0 0.0
  %2972 = vmatprep.subr.mxu0 0.0
  %2973 = vmatpush1.msra.mxu0 0.0
  %2974 = vmatprep.subr.mxu0 0.0
  %2975 = vmatpush1.msra.mxu0 0.0
  %2976 = vmatprep.subr.mxu0 0.0
  %2977 = vmatpush1.msra.mxu0 0.0
  %2978 = vmatprep.subr.mxu0 0.0
  %2979 = vmatpush1.msra.mxu0 0.0
  %2980 = vmatprep.subr.mxu0 0.0
  %2981 = vmatpush1.msra.mxu0 0.0
  %2982 = vmatprep.subr.mxu0 0.0
  %2983 = vmatpush1.msra.mxu0 0.0
  %2984 = vmatprep.subr.mxu0 0.0
  %2985 = vmatpush1.msra.mxu0 0.0
  %2986 = vmatprep.subr.mxu0 0.0
  %2987 = vmatpush1.msra.mxu0 0.0
  %2988 = vmatprep.subr.mxu0 0.0
  %2989 = vmatpush1.msra.mxu0 0.0
  %2990 = vmatprep.subr.mxu0 0.0
  %2991 = vmatpush1.msra.mxu0 0.0
  %2992 = vmatprep.subr.mxu0 0.0
  %2993 = vmatpush1.msra.mxu0 0.0
  %2994 = vmatprep.subr.mxu0 0.0
  %2995 = vmatpush1.msra.mxu0 0.0
  %2996 = vmatprep.subr.mxu0 0.0
  %2997 = vmatpush1.msra.mxu0 0.0
  %2998 = vmatprep.subr.mxu0 0.0
  %2999 = vmatpush1.msra.mxu0 0.0
  %3000 = vmatprep.subr.mxu0 0.0
  %3001 = vmatpush1.msra.mxu0 0.0
  %3002 = vmatprep.subr.mxu0 0.0
  %3003 = vmatpush1.msra.mxu0 0.0
  %3004 = vmatprep.subr.mxu0 0.0
  %3005 = vmatpush1.msra.mxu0 0.0
  %3006 = vmatprep.subr.mxu0 0.0
  %3007 = vmatpush1.msra.mxu0 0.0
  %3008 = vmatprep.mubr.f32.mxu0 0.0
  %3009 = vmatmul.mubr.f32.gmra.mrb[0].mxu0 %v2689
  %v3010 = vpop.f32.mrb[0].mxu0
  %v3011 = vadd.f32 %v2943, %v3010
  %v3012 = vpop.f32.mrb[0].mxu0
  %3013 = vmatprep.mubr.f32.mxu0 0.0
  %3014 = vmatmul.mubr.f32.gmra.mrb[0].mxu0 %v2692
  %v3015 = vpop.f32.mrb[0].mxu0
  %v3016 = vadd.f32 %v2943, %v3015
  %v3017 = vpop.f32.mrb[0].mxu0
  %3018 = vmatprep.mubr.f32.mxu0 0.0
  %3019 = vmatmul.mubr.f32.gmra.mrb[0].mxu0 %v2695
  %v3020 = vpop.f32.mrb[0].mxu0
  %v3021 = vadd.f32 %v2943, %v3020
  %v3022 = vpop.f32.mrb[0].mxu0
  %3023 = vmatprep.mubr.f32.mxu0 0.0
  %3024 = vmatmul.mubr.f32.gmra.mrb[0].mxu0 %v2698
  %v3025 = vpop.f32.mrb[0].mxu0
  %v3026 = vadd.f32 %v2943, %v3025
  %v3027 = vpop.f32.mrb[0].mxu0
  %3028 = vdwg.mxu0
  %v3029 = vtanh.pop %v3011
  %v3030 = vtanh.pop %v3016
  %v3031 = vtanh.pop %v3021
  %v3032 = vtanh.pop %v3026
  %v3033 = vld [vmem:[%s2 + $0x310] sm:$0xff]
  %v3034 = vld [vmem:[%s2 + $0x318] sm:$0xff]
  %v3035 = vld [vmem:[%s2 + $0x320] sm:$0xff]
  %v3036 = vld [vmem:[%s2 + $0x328] sm:$0xff]
  %v3037 = vld [vmem:[%s2 + $0x330] sm:$0xff]
  %v3038 = vld [vmem:[%s2 + $0x338] sm:$0xff]
  %v3039 = vld [vmem:[%s2 + $0x340] sm:$0xff]
  %v3040 = vld [vmem:[%s2 + $0x348] sm:$0xff]
  %v3041 = vld [vmem:[%s2 + $0x350] sm:$0x1]
  %v3042 = vlaneseq
  %v3043 = vshrl.u32 %v3042, 7
  %v3044 = vsub.s32 0, %v3043
  %v3045 = vrot.slane %v3041, %v3044
  %3046 = vmatprep.subr.mxu0 0.0
  %3047 = vmatpush1.msra.mxu0 %v3033
  %3048 = vmatprep.subr.mxu0 0.0
  %3049 = vmatpush1.msra.mxu0 %v3034
  %3050 = vmatprep.subr.mxu0 0.0
  %3051 = vmatpush1.msra.mxu0 %v3035
  %3052 = vmatprep.subr.mxu0 0.0
  %3053 = vmatpush1.msra.mxu0 %v3036
  %3054 = vmatprep.subr.mxu0 0.0
  %3055 = vmatpush1.msra.mxu0 %v3037
  %3056 = vmatprep.subr.mxu0 0.0
  %3057 = vmatpush1.msra.mxu0 %v3038
  %3058 = vmatprep.subr.mxu0 0.0
  %3059 = vmatpush1.msra.mxu0 %v3039
  %3060 = vmatprep.subr.mxu0 0.0
  %3061 = vmatpush1.msra.mxu0 %v3040
  %3062 = vmatprep.subr.mxu0 0.0
  %3063 = vmatpush1.msra.mxu0 0.0
  %3064 = vmatprep.subr.mxu0 0.0
  %3065 = vmatpush1.msra.mxu0 0.0
  %3066 = vmatprep.subr.mxu0 0.0
  %3067 = vmatpush1.msra.mxu0 0.0
  %3068 = vmatprep.subr.mxu0 0.0
  %3069 = vmatpush1.msra.mxu0 0.0
  %3070 = vmatprep.subr.mxu0 0.0
  %3071 = vmatpush1.msra.mxu0 0.0
  %3072 = vmatprep.subr.mxu0 0.0
  %3073 = vmatpush1.msra.mxu0 0.0
  %3074 = vmatprep.subr.mxu0 0.0
  %3075 = vmatpush1.msra.mxu0 0.0
  %3076 = vmatprep.subr.mxu0 0.0
  %3077 = vmatpush1.msra.mxu0 0.0
  %3078 = vmatprep.subr.mxu0 0.0
  %3079 = vmatpush1.msra.mxu0 0.0
  %3080 = vmatprep.subr.mxu0 0.0
  %3081 = vmatpush1.msra.mxu0 0.0
  %3082 = vmatprep.subr.mxu0 0.0
  %3083 = vmatpush1.msra.mxu0 0.0
  %3084 = vmatprep.subr.mxu0 0.0
  %3085 = vmatpush1.msra.mxu0 0.0
  %3086 = vmatprep.subr.mxu0 0.0
  %3087 = vmatpush1.msra.mxu0 0.0
  %3088 = vmatprep.subr.mxu0 0.0
  %3089 = vmatpush1.msra.mxu0 0.0
  %3090 = vmatprep.subr.mxu0 0.0
  %3091 = vmatpush1.msra.mxu0 0.0
  %3092 = vmatprep.subr.mxu0 0.0
  %3093 = vmatpush1.msra.mxu0 0.0
  %3094 = vmatprep.subr.mxu0 0.0
  %3095 = vmatpush1.msra.mxu0 0.0
  %3096 = vmatprep.subr.mxu0 0.0
  %3097 = vmatpush1.msra.mxu0 0.0
  %3098 = vmatprep.subr.mxu0 0.0
  %3099 = vmatpush1.msra.mxu0 0.0
  %3100 = vmatprep.subr.mxu0 0.0
  %3101 = vmatpush1.msra.mxu0 0.0
  %3102 = vmatprep.subr.mxu0 0.0
  %3103 = vmatpush1.msra.mxu0 0.0
  %3104 = vmatprep.subr.mxu0 0.0
  %3105 = vmatpush1.msra.mxu0 0.0
  %3106 = vmatprep.subr.mxu0 0.0
  %3107 = vmatpush1.msra.mxu0 0.0
  %3108 = vmatprep.subr.mxu0 0.0
  %3109 = vmatpush1.msra.mxu0 0.0
  %3110 = vmatprep.mubr.f32.mxu0 0.0
  %3111 = vmatmul.mubr.f32.gmra.mrb[0].mxu0 %v2689
  %v3112 = vpop.f32.mrb[0].mxu0
  %v3113 = vadd.f32 %v3045, %v3112
  %v3114 = vpop.f32.mrb[0].mxu0
  %3115 = vmatprep.mubr.f32.mxu0 0.0
  %3116 = vmatmul.mubr.f32.gmra.mrb[0].mxu0 %v2692
  %v3117 = vpop.f32.mrb[0].mxu0
  %v3118 = vadd.f32 %v3045, %v3117
  %v3119 = vpop.f32.mrb[0].mxu0
  %3120 = vmatprep.mubr.f32.mxu0 0.0
  %3121 = vmatmul.mubr.f32.gmra.mrb[0].mxu0 %v2695
  %v3122 = vpop.f32.mrb[0].mxu0
  %v3123 = vadd.f32 %v3045, %v3122
  %v3124 = vpop.f32.mrb[0].mxu0
  %3125 = vmatprep.mubr.f32.mxu0 0.0
  %3126 = vmatmul.mubr.f32.gmra.mrb[0].mxu0 %v2698
  %v3127 = vpop.f32.mrb[0].mxu0
  %v3128 = vadd.f32 %v3045, %v3127
  %v3129 = vpop.f32.mrb[0].mxu0
  %3130 = vdwg.mxu0
  %v3131 = vxor.u32 %v3113, 2147483648
  %v3132 = vxor.u32 %v3118, 2147483648
  %v3133 = vxor.u32 %v3123, 2147483648
  %v3134 = vxor.u32 %v3128, 2147483648
  %v3135 = vmul.f32 %v3131, 1.442695
  %v3136 = vpow.pop %v3135
  %v3137 = vmul.f32 %v3132, 1.442695
  %v3138 = vpow.pop %v3137
  %v3139 = vmul.f32 %v3133, 1.442695
  %v3140 = vpow.pop %v3139
  %v3141 = vmul.f32 %v3134, 1.442695
  %v3142 = vpow.pop %v3141
  %v3143 = vadd.f32 %v3136, 1.0
  %v3144 = vadd.f32 %v3138, 1.0
  %v3145 = vadd.f32 %v3140, 1.0
  %v3146 = vadd.f32 %v3142, 1.0
  %v3147 = vrcp.pop %v3143
  %v3148 = vmul.f32 1.0, %v3147
  %v3149 = vrcp.pop %v3144
  %v3150 = vmul.f32 1.0, %v3149
  %v3151 = vrcp.pop %v3145
  %v3152 = vmul.f32 1.0, %v3151
  %v3153 = vrcp.pop %v3146
  %v3154 = vmul.f32 1.0, %v3153
  %v3155 = vmul.f32 %v2924, %v549
  %v3156 = vmul.f32 %v2926, %v550
  %v3157 = vmul.f32 %v2928, %v551
  %v3158 = vmul.f32 %v2930, %v552
  %v3159 = vmul.f32 %v2802, %v3029
  %v3160 = vmul.f32 %v2804, %v3030
  %v3161 = vmul.f32 %v2806, %v3031
  %v3162 = vmul.f32 %v2808, %v3032
  %v3163 = vadd.f32 %v3155, %v3159
  %v3164 = vadd.f32 %v3156, %v3160
  %v3165 = vadd.f32 %v3157, %v3161
  %v3166 = vadd.f32 %v3158, %v3162
  %v3167 = vtanh.pop %v3163
  %v3168 = vtanh.pop %v3164
  %v3169 = vtanh.pop %v3165
  %v3170 = vtanh.pop %v3166
  %v3171 = vmul.f32 %v3148, %v3167
  %v3172 = vmul.f32 %v3150, %v3168
  %v3173 = vmul.f32 %v3152, %v3169
  %v3174 = vmul.f32 %v3154, %v3170
  %v3175 = vld [vmem:[%s2 + $0x358] sm:$0xff]
  %v3176 = vld [vmem:[%s2 + $0x360] sm:$0xff]
  %v3177 = vld [vmem:[%s2 + $0x368] sm:$0xff]
  %v3178 = vld [vmem:[%s2 + $0x370] sm:$0xff]
  %v3179 = vld [vmem:[%s2 + $0x378] sm:$0x1]
  %v3180 = vlaneseq
  %v3181 = vshrl.u32 %v3180, 7
  %v3182 = vsub.s32 0, %v3181
  %v3183 = vrot.slane %v3179, %v3182
  %v3185 = vsel %vm341, %v3171, 0
  %v3188 = vsel %vm341, %v3172, 0
  %v3191 = vsel %vm341, %v3173, 0
  %v3194 = vsel %vm341, %v3174, 0
  %3196 = vmatprep.subr.mxu0 0.0
  %3197 = vmatpush1.msra.mxu0 %v3175
  %3198 = vmatprep.subr.mxu0 0.0
  %3199 = vmatpush1.msra.mxu0 %v3176
  %3200 = vmatprep.subr.mxu0 0.0
  %3201 = vmatpush1.msra.mxu0 %v3177
  %3202 = vmatprep.subr.mxu0 0.0
  %3203 = vmatpush1.msra.mxu0 %v3178
  %3204 = vmatprep.subr.mxu0 0.0
  %3205 = vmatpush1.msra.mxu0 0.0
  %3206 = vmatprep.subr.mxu0 0.0
  %3207 = vmatpush1.msra.mxu0 0.0
  %3208 = vmatprep.subr.mxu0 0.0
  %3209 = vmatpush1.msra.mxu0 0.0
  %3210 = vmatprep.subr.mxu0 0.0
  %3211 = vmatpush1.msra.mxu0 0.0
  %3212 = vmatprep.subr.mxu0 0.0
  %3213 = vmatpush1.msra.mxu0 0.0
  %3214 = vmatprep.subr.mxu0 0.0
  %3215 = vmatpush1.msra.mxu0 0.0
  %3216 = vmatprep.subr.mxu0 0.0
  %3217 = vmatpush1.msra.mxu0 0.0
  %3218 = vmatprep.subr.mxu0 0.0
  %3219 = vmatpush1.msra.mxu0 0.0
  %3220 = vmatprep.subr.mxu0 0.0
  %3221 = vmatpush1.msra.mxu0 0.0
  %3222 = vmatprep.subr.mxu0 0.0
  %3223 = vmatpush1.msra.mxu0 0.0
  %3224 = vmatprep.subr.mxu0 0.0
  %3225 = vmatpush1.msra.mxu0 0.0
  %3226 = vmatprep.subr.mxu0 0.0
  %3227 = vmatpush1.msra.mxu0 0.0
  %3228 = vmatprep.subr.mxu0 0.0
  %3229 = vmatpush1.msra.mxu0 0.0
  %3230 = vmatprep.subr.mxu0 0.0
  %3231 = vmatpush1.msra.mxu0 0.0
  %3232 = vmatprep.subr.mxu0 0.0
  %3233 = vmatpush1.msra.mxu0 0.0
  %3234 = vmatprep.subr.mxu0 0.0
  %3235 = vmatpush1.msra.mxu0 0.0
  %3236 = vmatprep.subr.mxu0 0.0
  %3237 = vmatpush1.msra.mxu0 0.0
  %3238 = vmatprep.subr.mxu0 0.0
  %3239 = vmatpush1.msra.mxu0 0.0
  %3240 = vmatprep.subr.mxu0 0.0
  %3241 = vmatpush1.msra.mxu0 0.0
  %3242 = vmatprep.subr.mxu0 0.0
  %3243 = vmatpush1.msra.mxu0 0.0
  %3244 = vmatprep.subr.mxu0 0.0
  %3245 = vmatpush1.msra.mxu0 0.0
  %3246 = vmatprep.subr.mxu0 0.0
  %3247 = vmatpush1.msra.mxu0 0.0
  %3248 = vmatprep.subr.mxu0 0.0
  %3249 = vmatpush1.msra.mxu0 0.0
  %3250 = vmatprep.subr.mxu0 0.0
  %3251 = vmatpush1.msra.mxu0 0.0
  %3252 = vmatprep.subr.mxu0 0.0
  %3253 = vmatpush1.msra.mxu0 0.0
  %3254 = vmatprep.subr.mxu0 0.0
  %3255 = vmatpush1.msra.mxu0 0.0
  %3256 = vmatprep.subr.mxu0 0.0
  %3257 = vmatpush1.msra.mxu0 0.0
  %3258 = vmatprep.subr.mxu0 0.0
  %3259 = vmatpush1.msra.mxu0 0.0
  %3260 = vmatprep.mubr.f32.mxu0 0.0
  %3261 = vmatmul.mubr.f32.gmra.mrb[0].mxu0 %v3185
  %v3262 = vpop.f32.mrb[0].mxu0
  %v3263 = vadd.f32 %v3183, %v3262
  %v3264 = vpop.f32.mrb[0].mxu0
  %3265 = vmatprep.mubr.f32.mxu0 0.0
  %3266 = vmatmul.mubr.f32.gmra.mrb[0].mxu0 %v3188
  %v3267 = vpop.f32.mrb[0].mxu0
  %v3268 = vadd.f32 %v3183, %v3267
  %v3269 = vpop.f32.mrb[0].mxu0
  %3270 = vmatprep.mubr.f32.mxu0 0.0
  %3271 = vmatmul.mubr.f32.gmra.mrb[0].mxu0 %v3191
  %v3272 = vpop.f32.mrb[0].mxu0
  %v3273 = vadd.f32 %v3183, %v3272
  %v3274 = vpop.f32.mrb[0].mxu0
  %3275 = vmatprep.mubr.f32.mxu0 0.0
  %3276 = vmatmul.mubr.f32.gmra.mrb[0].mxu0 %v3194
  %v3277 = vpop.f32.mrb[0].mxu0
  %v3278 = vadd.f32 %v3183, %v3277
  %v3279 = vpop.f32.mrb[0].mxu0
  %3280 = vdwg.mxu0
  %v3281 = vmax.f32 %v3263, 0.0
  %v3282 = vmax.f32 %v3268, 0.0
  %v3283 = vmax.f32 %v3273, 0.0
  %v3284 = vmax.f32 %v3278, 0.0
  %v3285 = vld [vmem:[%s2 + $0x380] sm:$0xff]
  %v3286 = vld [vmem:[%s2 + $0x388] sm:$0xff]
  %v3287 = vld [vmem:[%s2 + $0x390] sm:$0xff]
  %v3288 = vld [vmem:[%s2 + $0x398] sm:$0xff]
  %v3289 = vld [vmem:[%s2 + $0x3a0] sm:$0x1]
  %v3290 = vlaneseq
  %v3291 = vshrl.u32 %v3290, 7
  %v3292 = vsub.s32 0, %v3291
  %v3293 = vrot.slane %v3289, %v3292
  %v3295 = vsel %vm341, %v3281, 0
  %v3298 = vsel %vm341, %v3282, 0
  %v3301 = vsel %vm341, %v3283, 0
  %v3304 = vsel %vm341, %v3284, 0
  %3306 = vmatprep.subr.mxu0 0.0
  %3307 = vmatpush1.msra.mxu0 %v3285
  %3308 = vmatprep.subr.mxu0 0.0
  %3309 = vmatpush1.msra.mxu0 %v3286
  %3310 = vmatprep.subr.mxu0 0.0
  %3311 = vmatpush1.msra.mxu0 %v3287
  %3312 = vmatprep.subr.mxu0 0.0
  %3313 = vmatpush1.msra.mxu0 %v3288
  %3314 = vmatprep.subr.mxu0 0.0
  %3315 = vmatpush1.msra.mxu0 0.0
  %3316 = vmatprep.subr.mxu0 0.0
  %3317 = vmatpush1.msra.mxu0 0.0
  %3318 = vmatprep.subr.mxu0 0.0
  %3319 = vmatpush1.msra.mxu0 0.0
  %3320 = vmatprep.subr.mxu0 0.0
  %3321 = vmatpush1.msra.mxu0 0.0
  %3322 = vmatprep.subr.mxu0 0.0
  %3323 = vmatpush1.msra.mxu0 0.0
  %3324 = vmatprep.subr.mxu0 0.0
  %3325 = vmatpush1.msra.mxu0 0.0
  %3326 = vmatprep.subr.mxu0 0.0
  %3327 = vmatpush1.msra.mxu0 0.0
  %3328 = vmatprep.subr.mxu0 0.0
  %3329 = vmatpush1.msra.mxu0 0.0
  %3330 = vmatprep.subr.mxu0 0.0
  %3331 = vmatpush1.msra.mxu0 0.0
  %3332 = vmatprep.subr.mxu0 0.0
  %3333 = vmatpush1.msra.mxu0 0.0
  %3334 = vmatprep.subr.mxu0 0.0
  %3335 = vmatpush1.msra.mxu0 0.0
  %3336 = vmatprep.subr.mxu0 0.0
  %3337 = vmatpush1.msra.mxu0 0.0
  %3338 = vmatprep.subr.mxu0 0.0
  %3339 = vmatpush1.msra.mxu0 0.0
  %3340 = vmatprep.subr.mxu0 0.0
  %3341 = vmatpush1.msra.mxu0 0.0
  %3342 = vmatprep.subr.mxu0 0.0
  %3343 = vmatpush1.msra.mxu0 0.0
  %3344 = vmatprep.subr.mxu0 0.0
  %3345 = vmatpush1.msra.mxu0 0.0
  %3346 = vmatprep.subr.mxu0 0.0
  %3347 = vmatpush1.msra.mxu0 0.0
  %3348 = vmatprep.subr.mxu0 0.0
  %3349 = vmatpush1.msra.mxu0 0.0
  %3350 = vmatprep.subr.mxu0 0.0
  %3351 = vmatpush1.msra.mxu0 0.0
  %3352 = vmatprep.subr.mxu0 0.0
  %3353 = vmatpush1.msra.mxu0 0.0
  %3354 = vmatprep.subr.mxu0 0.0
  %3355 = vmatpush1.msra.mxu0 0.0
  %3356 = vmatprep.subr.mxu0 0.0
  %3357 = vmatpush1.msra.mxu0 0.0
  %3358 = vmatprep.subr.mxu0 0.0
  %3359 = vmatpush1.msra.mxu0 0.0
  %3360 = vmatprep.subr.mxu0 0.0
  %3361 = vmatpush1.msra.mxu0 0.0
  %3362 = vmatprep.subr.mxu0 0.0
  %3363 = vmatpush1.msra.mxu0 0.0
  %3364 = vmatprep.subr.mxu0 0.0
  %3365 = vmatpush1.msra.mxu0 0.0
  %3366 = vmatprep.subr.mxu0 0.0
  %3367 = vmatpush1.msra.mxu0 0.0
  %3368 = vmatprep.subr.mxu0 0.0
  %3369 = vmatpush1.msra.mxu0 0.0
  %3370 = vmatprep.mubr.f32.mxu0 0.0
  %3371 = vmatmul.mubr.f32.gmra.mrb[0].mxu0 %v3295
  %v3372 = vpop.f32.mrb[0].mxu0
  %v3373 = vadd.f32 %v3293, %v3372
  %v3374 = vpop.f32.mrb[0].mxu0
  %3375 = vmatprep.mubr.f32.mxu0 0.0
  %3376 = vmatmul.mubr.f32.gmra.mrb[0].mxu0 %v3298
  %v3377 = vpop.f32.mrb[0].mxu0
  %v3378 = vadd.f32 %v3293, %v3377
  %v3379 = vpop.f32.mrb[0].mxu0
  %3380 = vmatprep.mubr.f32.mxu0 0.0
  %3381 = vmatmul.mubr.f32.gmra.mrb[0].mxu0 %v3301
  %v3382 = vpop.f32.mrb[0].mxu0
  %v3383 = vadd.f32 %v3293, %v3382
  %v3384 = vpop.f32.mrb[0].mxu0
  %3385 = vmatprep.mubr.f32.mxu0 0.0
  %3386 = vmatmul.mubr.f32.gmra.mrb[0].mxu0 %v3304
  %v3387 = vpop.f32.mrb[0].mxu0
  %v3388 = vadd.f32 %v3293, %v3387
  %v3389 = vpop.f32.mrb[0].mxu0
  %3390 = vdwg.mxu0
  %v3391 = vmax.f32 %v3373, 0.0
  %v3392 = vmax.f32 %v3378, 0.0
  %v3393 = vmax.f32 %v3383, 0.0
  %v3394 = vmax.f32 %v3388, 0.0
  %v3395 = vld [vmem:[%s2 + $0x3a8] sm:$0xff]
  %v3396 = vld [vmem:[%s2 + $0x3b0] sm:$0xff]
  %v3397 = vld [vmem:[%s2 + $0x3b8] sm:$0xff]
  %v3398 = vld [vmem:[%s2 + $0x3c0] sm:$0xff]
  %v3399 = vld [vmem:[%s2 + $0x3c8] sm:$0x1]
  %v3400 = vlaneseq
  %v3401 = vshrl.u32 %v3400, 7
  %v3402 = vsub.s32 0, %v3401
  %v3403 = vrot.slane %v3399, %v3402
  %v3405 = vsel %vm341, %v3391, 0
  %v3408 = vsel %vm341, %v3392, 0
  %v3411 = vsel %vm341, %v3393, 0
  %v3414 = vsel %vm341, %v3394, 0
  %3416 = vmatprep.subr.mxu0 0.0
  %3417 = vmatpush1.msra.mxu0 %v3395
  %3418 = vmatprep.subr.mxu0 0.0
  %3419 = vmatpush1.msra.mxu0 %v3396
  %3420 = vmatprep.subr.mxu0 0.0
  %3421 = vmatpush1.msra.mxu0 %v3397
  %3422 = vmatprep.subr.mxu0 0.0
  %3423 = vmatpush1.msra.mxu0 %v3398
  %3424 = vmatprep.subr.mxu0 0.0
  %3425 = vmatpush1.msra.mxu0 0.0
  %3426 = vmatprep.subr.mxu0 0.0
  %3427 = vmatpush1.msra.mxu0 0.0
  %3428 = vmatprep.subr.mxu0 0.0
  %3429 = vmatpush1.msra.mxu0 0.0
  %3430 = vmatprep.subr.mxu0 0.0
  %3431 = vmatpush1.msra.mxu0 0.0
  %3432 = vmatprep.subr.mxu0 0.0
  %3433 = vmatpush1.msra.mxu0 0.0
  %3434 = vmatprep.subr.mxu0 0.0
  %3435 = vmatpush1.msra.mxu0 0.0
  %3436 = vmatprep.subr.mxu0 0.0
  %3437 = vmatpush1.msra.mxu0 0.0
  %3438 = vmatprep.subr.mxu0 0.0
  %3439 = vmatpush1.msra.mxu0 0.0
  %3440 = vmatprep.subr.mxu0 0.0
  %3441 = vmatpush1.msra.mxu0 0.0
  %3442 = vmatprep.subr.mxu0 0.0
  %3443 = vmatpush1.msra.mxu0 0.0
  %3444 = vmatprep.subr.mxu0 0.0
  %3445 = vmatpush1.msra.mxu0 0.0
  %3446 = vmatprep.subr.mxu0 0.0
  %3447 = vmatpush1.msra.mxu0 0.0
  %3448 = vmatprep.subr.mxu0 0.0
  %3449 = vmatpush1.msra.mxu0 0.0
  %3450 = vmatprep.subr.mxu0 0.0
  %3451 = vmatpush1.msra.mxu0 0.0
  %3452 = vmatprep.subr.mxu0 0.0
  %3453 = vmatpush1.msra.mxu0 0.0
  %3454 = vmatprep.subr.mxu0 0.0
  %3455 = vmatpush1.msra.mxu0 0.0
  %3456 = vmatprep.subr.mxu0 0.0
  %3457 = vmatpush1.msra.mxu0 0.0
  %3458 = vmatprep.subr.mxu0 0.0
  %3459 = vmatpush1.msra.mxu0 0.0
  %3460 = vmatprep.subr.mxu0 0.0
  %3461 = vmatpush1.msra.mxu0 0.0
  %3462 = vmatprep.subr.mxu0 0.0
  %3463 = vmatpush1.msra.mxu0 0.0
  %3464 = vmatprep.subr.mxu0 0.0
  %3465 = vmatpush1.msra.mxu0 0.0
  %3466 = vmatprep.subr.mxu0 0.0
  %3467 = vmatpush1.msra.mxu0 0.0
  %3468 = vmatprep.subr.mxu0 0.0
  %3469 = vmatpush1.msra.mxu0 0.0
  %3470 = vmatprep.subr.mxu0 0.0
  %3471 = vmatpush1.msra.mxu0 0.0
  %3472 = vmatprep.subr.mxu0 0.0
  %3473 = vmatpush1.msra.mxu0 0.0
  %3474 = vmatprep.subr.mxu0 0.0
  %3475 = vmatpush1.msra.mxu0 0.0
  %3476 = vmatprep.subr.mxu0 0.0
  %3477 = vmatpush1.msra.mxu0 0.0
  %3478 = vmatprep.subr.mxu0 0.0
  %3479 = vmatpush1.msra.mxu0 0.0
  %3480 = vmatprep.mubr.f32.mxu0 0.0
  %3481 = vmatmul.mubr.f32.gmra.mrb[0].mxu0 %v3405
  %v3482 = vpop.f32.mrb[0].mxu0
  %v3483 = vadd.f32 %v3403, %v3482
  %v3484 = vpop.f32.mrb[0].mxu0
  %3485 = vmatprep.mubr.f32.mxu0 0.0
  %3486 = vmatmul.mubr.f32.gmra.mrb[0].mxu0 %v3408
  %v3487 = vpop.f32.mrb[0].mxu0
  %v3488 = vadd.f32 %v3403, %v3487
  %v3489 = vpop.f32.mrb[0].mxu0
  %3490 = vmatprep.mubr.f32.mxu0 0.0
  %3491 = vmatmul.mubr.f32.gmra.mrb[0].mxu0 %v3411
  %v3492 = vpop.f32.mrb[0].mxu0
  %v3493 = vadd.f32 %v3403, %v3492
  %v3494 = vpop.f32.mrb[0].mxu0
  %3495 = vmatprep.mubr.f32.mxu0 0.0
  %3496 = vmatmul.mubr.f32.gmra.mrb[0].mxu0 %v3414
  %v3497 = vpop.f32.mrb[0].mxu0
  %v3498 = vadd.f32 %v3403, %v3497
  %v3499 = vpop.f32.mrb[0].mxu0
  %3500 = vdwg.mxu0
  %3501 = vst [vmem:[%s4] sm:$0xff] %v3483
  %3502 = vst [vmem:[%s4 + $0x8] sm:$0xff] %v3488
  %3503 = vst [vmem:[%s4 + $0x10] sm:$0xff] %v3493
  %3504 = vst [vmem:[%s4 + $0x18] sm:$0xff] %v3498
  %3505 = vmax.xlane.f32.xlu0 %v3483
  %v3506 = vpop.xlane.xlu0 %3505
  %3507 = vmax.xlane.f32.xlu0 %v3488
  %v3508 = vpop.xlane.xlu0 %3507
  %3509 = vmax.xlane.f32.xlu0 %v3493
  %v3510 = vpop.xlane.xlu0 %3509
  %3511 = vmax.xlane.f32.xlu0 %v3498
  %v3512 = vpop.xlane.xlu0 %3511
  %v3513 = vsub.f32 %v3483, %v3506
  %v3514 = vsub.f32 %v3488, %v3508
  %v3515 = vsub.f32 %v3493, %v3510
  %v3516 = vsub.f32 %v3498, %v3512
  %v3517 = vmul.f32 %v3513, 1.442695
  %v3518 = vpow.pop %v3517
  %v3519 = vmul.f32 %v3514, 1.442695
  %v3520 = vpow.pop %v3519
  %v3521 = vmul.f32 %v3515, 1.442695
  %v3522 = vpow.pop %v3521
  %v3523 = vmul.f32 %v3516, 1.442695
  %v3524 = vpow.pop %v3523
  %3525 = vadd.xlane.f32.xlu0 %v3518
  %v3526 = vpop.xlane.xlu0 %3525
  %3527 = vadd.xlane.f32.xlu0 %v3520
  %v3528 = vpop.xlane.xlu0 %3527
  %3529 = vadd.xlane.f32.xlu0 %v3522
  %v3530 = vpop.xlane.xlu0 %3529
  %3531 = vadd.xlane.f32.xlu0 %v3524
  %v3532 = vpop.xlane.xlu0 %3531
  %v3533 = vrcp.pop %v3526
  %v3534 = vrcp.pop %v3528
  %v3535 = vrcp.pop %v3530
  %v3536 = vrcp.pop %v3532
  %v3537 = vmul.f32 %v3518, %v3533
  %v3538 = vmul.f32 %v3520, %v3534
  %v3539 = vmul.f32 %v3522, %v3535
  %v3540 = vmul.f32 %v3524, %v3536
  %v3541 = vld [vmem:[%s2] sm:$0xff]
  %v3542 = vld [vmem:[%s2 + $0x8] sm:$0xff]
  %v3543 = vld [vmem:[%s2 + $0x10] sm:$0xff]
  %v3544 = vld [vmem:[%s2 + $0x18] sm:$0xff]
  %v3545 = vld [vmem:[%s2 + $0x20] sm:$0xff]
  %v3546 = vld [vmem:[%s2 + $0x28] sm:$0xff]
  %v3547 = vld [vmem:[%s2 + $0x30] sm:$0xff]
  %v3548 = vld [vmem:[%s2 + $0x38] sm:$0xff]
  %v3549 = vld [vmem:[%s2 + $0x40] sm:$0xff]
  %v3550 = vld [vmem:[%s2 + $0x48] sm:$0xff]
  %v3551 = vld [vmem:[%s2 + $0x50] sm:$0xff]
  %v3552 = vld [vmem:[%s2 + $0x58] sm:$0xff]
  %v3553 = vld [vmem:[%s2 + $0x60] sm:$0xff]
  %v3554 = vld [vmem:[%s2 + $0x68] sm:$0xff]
  %v3555 = vld [vmem:[%s2 + $0x70] sm:$0xff]
  %v3556 = vld [vmem:[%s2 + $0x78] sm:$0xff]
  %v3557 = vld [vmem:[%s2 + $0x80] sm:$0x1]
  %v3558 = vlaneseq
  %v3559 = vshrl.u32 %v3558, 7
  %v3560 = vsub.s32 0, %v3559
  %v3561 = vrot.slane %v3557, %v3560
  %3562 = vmatprep.subr.mxu0 0.0
  %3563 = vmatpush1.msra.mxu0 %v3541
  %3564 = vmatprep.subr.mxu0 0.0
  %3565 = vmatpush1.msra.mxu0 %v3542
  %3566 = vmatprep.subr.mxu0 0.0
  %3567 = vmatpush1.msra.mxu0 %v3543
  %3568 = vmatprep.subr.mxu0 0.0
  %3569 = vmatpush1.msra.mxu0 %v3544
  %3570 = vmatprep.subr.mxu0 0.0
  %3571 = vmatpush1.msra.mxu0 %v3545
  %3572 = vmatprep.subr.mxu0 0.0
  %3573 = vmatpush1.msra.mxu0 %v3546
  %3574 = vmatprep.subr.mxu0 0.0
  %3575 = vmatpush1.msra.mxu0 %v3547
  %3576 = vmatprep.subr.mxu0 0.0
  %3577 = vmatpush1.msra.mxu0 %v3548
  %3578 = vmatprep.subr.mxu0 0.0
  %3579 = vmatpush1.msra.mxu0 %v3549
  %3580 = vmatprep.subr.mxu0 0.0
  %3581 = vmatpush1.msra.mxu0 %v3550
  %3582 = vmatprep.subr.mxu0 0.0
  %3583 = vmatpush1.msra.mxu0 %v3551
  %3584 = vmatprep.subr.mxu0 0.0
  %3585 = vmatpush1.msra.mxu0 %v3552
  %3586 = vmatprep.subr.mxu0 0.0
  %3587 = vmatpush1.msra.mxu0 %v3553
  %3588 = vmatprep.subr.mxu0 0.0
  %3589 = vmatpush1.msra.mxu0 %v3554
  %3590 = vmatprep.subr.mxu0 0.0
  %3591 = vmatpush1.msra.mxu0 %v3555
  %3592 = vmatprep.subr.mxu0 0.0
  %3593 = vmatpush1.msra.mxu0 %v3556
  %3594 = vmatprep.subr.mxu0 0.0
  %3595 = vmatpush1.msra.mxu0 0.0
  %3596 = vmatprep.subr.mxu0 0.0
  %3597 = vmatpush1.msra.mxu0 0.0
  %3598 = vmatprep.subr.mxu0 0.0
  %3599 = vmatpush1.msra.mxu0 0.0
  %3600 = vmatprep.subr.mxu0 0.0
  %3601 = vmatpush1.msra.mxu0 0.0
  %3602 = vmatprep.subr.mxu0 0.0
  %3603 = vmatpush1.msra.mxu0 0.0
  %3604 = vmatprep.subr.mxu0 0.0
  %3605 = vmatpush1.msra.mxu0 0.0
  %3606 = vmatprep.subr.mxu0 0.0
  %3607 = vmatpush1.msra.mxu0 0.0
  %3608 = vmatprep.subr.mxu0 0.0
  %3609 = vmatpush1.msra.mxu0 0.0
  %3610 = vmatprep.subr.mxu0 0.0
  %3611 = vmatpush1.msra.mxu0 0.0
  %3612 = vmatprep.subr.mxu0 0.0
  %3613 = vmatpush1.msra.mxu0 0.0
  %3614 = vmatprep.subr.mxu0 0.0
  %3615 = vmatpush1.msra.mxu0 0.0
  %3616 = vmatprep.subr.mxu0 0.0
  %3617 = vmatpush1.msra.mxu0 0.0
  %3618 = vmatprep.subr.mxu0 0.0
  %3619 = vmatpush1.msra.mxu0 0.0
  %3620 = vmatprep.subr.mxu0 0.0
  %3621 = vmatpush1.msra.mxu0 0.0
  %3622 = vmatprep.subr.mxu0 0.0
  %3623 = vmatpush1.msra.mxu0 0.0
  %3624 = vmatprep.subr.mxu0 0.0
  %3625 = vmatpush1.msra.mxu0 0.0
  %3626 = vmatprep.mubr.f32.mxu0 0.0
  %3627 = vmatmul.mubr.f32.gmra.mrb[0].mxu0 %v3537
  %v3628 = vpop.f32.mrb[0].mxu0
  %v3629 = vadd.f32 %v3561, %v3628
  %v3630 = vpop.f32.mrb[0].mxu0
  %3631 = vmatprep.mubr.f32.mxu0 0.0
  %3632 = vmatmul.mubr.f32.gmra.mrb[0].mxu0 %v3538
  %v3633 = vpop.f32.mrb[0].mxu0
  %v3634 = vadd.f32 %v3561, %v3633
  %v3635 = vpop.f32.mrb[0].mxu0
  %3636 = vmatprep.mubr.f32.mxu0 0.0
  %3637 = vmatmul.mubr.f32.gmra.mrb[0].mxu0 %v3539
  %v3638 = vpop.f32.mrb[0].mxu0
  %v3639 = vadd.f32 %v3561, %v3638
  %v3640 = vpop.f32.mrb[0].mxu0
  %3641 = vmatprep.mubr.f32.mxu0 0.0
  %3642 = vmatmul.mubr.f32.gmra.mrb[0].mxu0 %v3540
  %v3643 = vpop.f32.mrb[0].mxu0
  %v3644 = vadd.f32 %v3561, %v3643
  %v3645 = vpop.f32.mrb[0].mxu0
  %3646 = vdwg.mxu0
  %v3647 = vld [vmem:[%s2 + $0x88] sm:$0xff]
  %v3648 = vld [vmem:[%s2 + $0x90] sm:$0xff]
  %v3649 = vld [vmem:[%s2 + $0x98] sm:$0x1]
  %v3650 = vlaneseq
  %v3651 = vshrl.u32 %v3650, 7
  %v3652 = vsub.s32 0, %v3651
  %v3653 = vrot.slane %v3649, %v3652
  %v3655 = vsel %vm134, %v3629, 0
  %v3658 = vsel %vm134, %v3634, 0
  %v3661 = vsel %vm134, %v3639, 0
  %v3664 = vsel %vm134, %v3644, 0
  %3666 = vmatprep.subr.mxu0 0.0
  %3667 = vmatpush1.msra.mxu0 %v3647
  %3668 = vmatprep.subr.mxu0 0.0
  %3669 = vmatpush1.msra.mxu0 %v3648
  %3670 = vmatprep.subr.mxu0 0.0
  %3671 = vmatpush1.msra.mxu0 0.0
  %3672 = vmatprep.subr.mxu0 0.0
  %3673 = vmatpush1.msra.mxu0 0.0
  %3674 = vmatprep.subr.mxu0 0.0
  %3675 = vmatpush1.msra.mxu0 0.0
  %3676 = vmatprep.subr.mxu0 0.0
  %3677 = vmatpush1.msra.mxu0 0.0
  %3678 = vmatprep.subr.mxu0 0.0
  %3679 = vmatpush1.msra.mxu0 0.0
  %3680 = vmatprep.subr.mxu0 0.0
  %3681 = vmatpush1.msra.mxu0 0.0
  %3682 = vmatprep.subr.mxu0 0.0
  %3683 = vmatpush1.msra.mxu0 0.0
  %3684 = vmatprep.subr.mxu0 0.0
  %3685 = vmatpush1.msra.mxu0 0.0
  %3686 = vmatprep.subr.mxu0 0.0
  %3687 = vmatpush1.msra.mxu0 0.0
  %3688 = vmatprep.subr.mxu0 0.0
  %3689 = vmatpush1.msra.mxu0 0.0
  %3690 = vmatprep.subr.mxu0 0.0
  %3691 = vmatpush1.msra.mxu0 0.0
  %3692 = vmatprep.subr.mxu0 0.0
  %3693 = vmatpush1.msra.mxu0 0.0
  %3694 = vmatprep.subr.mxu0 0.0
  %3695 = vmatpush1.msra.mxu0 0.0
  %3696 = vmatprep.subr.mxu0 0.0
  %3697 = vmatpush1.msra.mxu0 0.0
  %3698 = vmatprep.subr.mxu0 0.0
  %3699 = vmatpush1.msra.mxu0 0.0
  %3700 = vmatprep.subr.mxu0 0.0
  %3701 = vmatpush1.msra.mxu0 0.0
  %3702 = vmatprep.subr.mxu0 0.0
  %3703 = vmatpush1.msra.mxu0 0.0
  %3704 = vmatprep.subr.mxu0 0.0
  %3705 = vmatpush1.msra.mxu0 0.0
  %3706 = vmatprep.subr.mxu0 0.0
  %3707 = vmatpush1.msra.mxu0 0.0
  %3708 = vmatprep.subr.mxu0 0.0
  %3709 = vmatpush1.msra.mxu0 0.0
  %3710 = vmatprep.subr.mxu0 0.0
  %3711 = vmatpush1.msra.mxu0 0.0
  %3712 = vmatprep.subr.mxu0 0.0
  %3713 = vmatpush1.msra.mxu0 0.0
  %3714 = vmatprep.subr.mxu0 0.0
  %3715 = vmatpush1.msra.mxu0 0.0
  %3716 = vmatprep.subr.mxu0 0.0
  %3717 = vmatpush1.msra.mxu0 0.0
  %3718 = vmatprep.subr.mxu0 0.0
  %3719 = vmatpush1.msra.mxu0 0.0
  %3720 = vmatprep.subr.mxu0 0.0
  %3721 = vmatpush1.msra.mxu0 0.0
  %3722 = vmatprep.subr.mxu0 0.0
  %3723 = vmatpush1.msra.mxu0 0.0
  %3724 = vmatprep.subr.mxu0 0.0
  %3725 = vmatpush1.msra.mxu0 0.0
  %3726 = vmatprep.subr.mxu0 0.0
  %3727 = vmatpush1.msra.mxu0 0.0
  %3728 = vmatprep.subr.mxu0 0.0
  %3729 = vmatpush1.msra.mxu0 0.0
  %3730 = vmatprep.mubr.f32.mxu0 0.0
  %3731 = vmatmul.mubr.f32.gmra.mrb[0].mxu0 %v3655
  %v3732 = vpop.f32.mrb[0].mxu0
  %v3733 = vadd.f32 %v3653, %v3732
  %v3734 = vpop.f32.mrb[0].mxu0
  %3735 = vmatprep.mubr.f32.mxu0 0.0
  %3736 = vmatmul.mubr.f32.gmra.mrb[0].mxu0 %v3658
  %v3737 = vpop.f32.mrb[0].mxu0
  %v3738 = vadd.f32 %v3653, %v3737
  %v3739 = vpop.f32.mrb[0].mxu0
  %3740 = vmatprep.mubr.f32.mxu0 0.0
  %3741 = vmatmul.mubr.f32.gmra.mrb[0].mxu0 %v3661
  %v3742 = vpop.f32.mrb[0].mxu0
  %v3743 = vadd.f32 %v3653, %v3742
  %v3744 = vpop.f32.mrb[0].mxu0
  %3745 = vmatprep.mubr.f32.mxu0 0.0
  %3746 = vmatmul.mubr.f32.gmra.mrb[0].mxu0 %v3664
  %v3747 = vpop.f32.mrb[0].mxu0
  %v3748 = vadd.f32 %v3653, %v3747
  %v3749 = vpop.f32.mrb[0].mxu0
  %3750 = vdwg.mxu0
  %3751 = vst [vmem:[%s5] sm:$0xff] %v3733
  %3752 = vst [vmem:[%s5 + $0x8] sm:$0xff] %v3738
  %3753 = vst [vmem:[%s5 + $0x10] sm:$0xff] %v3743
  %3754 = vst [vmem:[%s5 + $0x18] sm:$0xff] %v3748
  %v3755 = vld [vmem:[%s2 + $0x108] sm:$0xff]
  %v3756 = vld [vmem:[%s2 + $0x110] sm:$0xff]
  %v3757 = vld [vmem:[%s2 + $0x118] sm:$0xff]
  %v3758 = vld [vmem:[%s2 + $0x120] sm:$0xff]
  %3759 = vmatprep.subr.mxu0 0.0
  %3760 = vmatpush1.msra.mxu0 %v3755
  %3761 = vmatprep.subr.mxu0 0.0
  %3762 = vmatpush1.msra.mxu0 %v3756
  %3763 = vmatprep.subr.mxu0 0.0
  %3764 = vmatpush1.msra.mxu0 %v3757
  %3765 = vmatprep.subr.mxu0 0.0
  %3766 = vmatpush1.msra.mxu0 %v3758
  %3767 = vmatprep.subr.mxu0 0.0
  %3768 = vmatpush1.msra.mxu0 0.0
  %3769 = vmatprep.subr.mxu0 0.0
  %3770 = vmatpush1.msra.mxu0 0.0
  %3771 = vmatprep.subr.mxu0 0.0
  %3772 = vmatpush1.msra.mxu0 0.0
  %3773 = vmatprep.subr.mxu0 0.0
  %3774 = vmatpush1.msra.mxu0 0.0
  %3775 = vmatprep.subr.mxu0 0.0
  %3776 = vmatpush1.msra.mxu0 0.0
  %3777 = vmatprep.subr.mxu0 0.0
  %3778 = vmatpush1.msra.mxu0 0.0
  %3779 = vmatprep.subr.mxu0 0.0
  %3780 = vmatpush1.msra.mxu0 0.0
  %3781 = vmatprep.subr.mxu0 0.0
  %3782 = vmatpush1.msra.mxu0 0.0
  %3783 = vmatprep.subr.mxu0 0.0
  %3784 = vmatpush1.msra.mxu0 0.0
  %3785 = vmatprep.subr.mxu0 0.0
  %3786 = vmatpush1.msra.mxu0 0.0
  %3787 = vmatprep.subr.mxu0 0.0
  %3788 = vmatpush1.msra.mxu0 0.0
  %3789 = vmatprep.subr.mxu0 0.0
  %3790 = vmatpush1.msra.mxu0 0.0
  %3791 = vmatprep.subr.mxu0 0.0
  %3792 = vmatpush1.msra.mxu0 0.0
  %3793 = vmatprep.subr.mxu0 0.0
  %3794 = vmatpush1.msra.mxu0 0.0
  %3795 = vmatprep.subr.mxu0 0.0
  %3796 = vmatpush1.msra.mxu0 0.0
  %3797 = vmatprep.subr.mxu0 0.0
  %3798 = vmatpush1.msra.mxu0 0.0
  %3799 = vmatprep.subr.mxu0 0.0
  %3800 = vmatpush1.msra.mxu0 0.0
  %3801 = vmatprep.subr.mxu0 0.0
  %3802 = vmatpush1.msra.mxu0 0.0
  %3803 = vmatprep.subr.mxu0 0.0
  %3804 = vmatpush1.msra.mxu0 0.0
  %3805 = vmatprep.subr.mxu0 0.0
  %3806 = vmatpush1.msra.mxu0 0.0
  %3807 = vmatprep.subr.mxu0 0.0
  %3808 = vmatpush1.msra.mxu0 0.0
  %3809 = vmatprep.subr.mxu0 0.0
  %3810 = vmatpush1.msra.mxu0 0.0
  %3811 = vmatprep.subr.mxu0 0.0
  %3812 = vmatpush1.msra.mxu0 0.0
  %3813 = vmatprep.subr.mxu0 0.0
  %3814 = vmatpush1.msra.mxu0 0.0
  %3815 = vmatprep.subr.mxu0 0.0
  %3816 = vmatpush1.msra.mxu0 0.0
  %3817 = vmatprep.subr.mxu0 0.0
  %3818 = vmatpush1.msra.mxu0 0.0
  %3819 = vmatprep.subr.mxu0 0.0
  %3820 = vmatpush1.msra.mxu0 0.0
  %3821 = vmatprep.subr.mxu0 0.0
  %3822 = vmatpush1.msra.mxu0 0.0
  %3823 = vmatprep.mubr.f32.mxu0 0.0
  %3824 = vmatmul.mubr.f32.gmra.mrb[0].mxu0 %v3185
  %v3825 = vpop.f32.mrb[0].mxu0
  %v3826 = vadd.f32 0.0, %v3825
  %v3827 = vpop.f32.mrb[0].mxu0
  %3828 = vmatprep.mubr.f32.mxu0 0.0
  %3829 = vmatmul.mubr.f32.gmra.mrb[0].mxu0 %v3188
  %v3830 = vpop.f32.mrb[0].mxu0
  %v3831 = vadd.f32 0.0, %v3830
  %v3832 = vpop.f32.mrb[0].mxu0
  %3833 = vmatprep.mubr.f32.mxu0 0.0
  %3834 = vmatmul.mubr.f32.gmra.mrb[0].mxu0 %v3191
  %v3835 = vpop.f32.mrb[0].mxu0
  %v3836 = vadd.f32 0.0, %v3835
  %v3837 = vpop.f32.mrb[0].mxu0
  %3838 = vmatprep.mubr.f32.mxu0 0.0
  %3839 = vmatmul.mubr.f32.gmra.mrb[0].mxu0 %v3194
  %v3840 = vpop.f32.mrb[0].mxu0
  %v3841 = vadd.f32 0.0, %v3840
  %v3842 = vpop.f32.mrb[0].mxu0
  %3843 = vdwg.mxu0
  %v3844 = vld [vmem:[%s2 + $0x128] sm:$0xff]
  %v3845 = vld [vmem:[%s2 + $0x130] sm:$0xff]
  %v3846 = vld [vmem:[%s2 + $0x138] sm:$0xff]
  %v3847 = vld [vmem:[%s2 + $0x140] sm:$0xff]
  %3848 = vmatprep.subr.mxu0 0.0
  %3849 = vmatpush1.msra.mxu0 %v3844
  %3850 = vmatprep.subr.mxu0 0.0
  %3851 = vmatpush1.msra.mxu0 %v3845
  %3852 = vmatprep.subr.mxu0 0.0
  %3853 = vmatpush1.msra.mxu0 %v3846
  %3854 = vmatprep.subr.mxu0 0.0
  %3855 = vmatpush1.msra.mxu0 %v3847
  %3856 = vmatprep.subr.mxu0 0.0
  %3857 = vmatpush1.msra.mxu0 0.0
  %3858 = vmatprep.subr.mxu0 0.0
  %3859 = vmatpush1.msra.mxu0 0.0
  %3860 = vmatprep.subr.mxu0 0.0
  %3861 = vmatpush1.msra.mxu0 0.0
  %3862 = vmatprep.subr.mxu0 0.0
  %3863 = vmatpush1.msra.mxu0 0.0
  %3864 = vmatprep.subr.mxu0 0.0
  %3865 = vmatpush1.msra.mxu0 0.0
  %3866 = vmatprep.subr.mxu0 0.0
  %3867 = vmatpush1.msra.mxu0 0.0
  %3868 = vmatprep.subr.mxu0 0.0
  %3869 = vmatpush1.msra.mxu0 0.0
  %3870 = vmatprep.subr.mxu0 0.0
  %3871 = vmatpush1.msra.mxu0 0.0
  %3872 = vmatprep.subr.mxu0 0.0
  %3873 = vmatpush1.msra.mxu0 0.0
  %3874 = vmatprep.subr.mxu0 0.0
  %3875 = vmatpush1.msra.mxu0 0.0
  %3876 = vmatprep.subr.mxu0 0.0
  %3877 = vmatpush1.msra.mxu0 0.0
  %3878 = vmatprep.subr.mxu0 0.0
  %3879 = vmatpush1.msra.mxu0 0.0
  %3880 = vmatprep.subr.mxu0 0.0
  %3881 = vmatpush1.msra.mxu0 0.0
  %3882 = vmatprep.subr.mxu0 0.0
  %3883 = vmatpush1.msra.mxu0 0.0
  %3884 = vmatprep.subr.mxu0 0.0
  %3885 = vmatpush1.msra.mxu0 0.0
  %3886 = vmatprep.subr.mxu0 0.0
  %3887 = vmatpush1.msra.mxu0 0.0
  %3888 = vmatprep.subr.mxu0 0.0
  %3889 = vmatpush1.msra.mxu0 0.0
  %3890 = vmatprep.subr.mxu0 0.0
  %3891 = vmatpush1.msra.mxu0 0.0
  %3892 = vmatprep.subr.mxu0 0.0
  %3893 = vmatpush1.msra.mxu0 0.0
  %3894 = vmatprep.subr.mxu0 0.0
  %3895 = vmatpush1.msra.mxu0 0.0
  %3896 = vmatprep.subr.mxu0 0.0
  %3897 = vmatpush1.msra.mxu0 0.0
  %3898 = vmatprep.subr.mxu0 0.0
  %3899 = vmatpush1.msra.mxu0 0.0
  %3900 = vmatprep.subr.mxu0 0.0
  %3901 = vmatpush1.msra.mxu0 0.0
  %3902 = vmatprep.subr.mxu0 0.0
  %3903 = vmatpush1.msra.mxu0 0.0
  %3904 = vmatprep.subr.mxu0 0.0
  %3905 = vmatpush1.msra.mxu0 0.0
  %3906 = vmatprep.subr.mxu0 0.0
  %3907 = vmatpush1.msra.mxu0 0.0
  %3908 = vmatprep.subr.mxu0 0.0
  %3909 = vmatpush1.msra.mxu0 0.0
  %3910 = vmatprep.subr.mxu0 0.0
  %3911 = vmatpush1.msra.mxu0 0.0
  %3912 = vmatprep.mubr.f32.mxu0 0.0
  %3913 = vmatmul.mubr.f32.gmra.mrb[0].mxu0 %v3185
  %v3914 = vpop.f32.mrb[0].mxu0
  %v3915 = vadd.f32 0.0, %v3914
  %v3916 = vpop.f32.mrb[0].mxu0
  %3917 = vmatprep.mubr.f32.mxu0 0.0
  %3918 = vmatmul.mubr.f32.gmra.mrb[0].mxu0 %v3188
  %v3919 = vpop.f32.mrb[0].mxu0
  %v3920 = vadd.f32 0.0, %v3919
  %v3921 = vpop.f32.mrb[0].mxu0
  %3922 = vmatprep.mubr.f32.mxu0 0.0
  %3923 = vmatmul.mubr.f32.gmra.mrb[0].mxu0 %v3191
  %v3924 = vpop.f32.mrb[0].mxu0
  %v3925 = vadd.f32 0.0, %v3924
  %v3926 = vpop.f32.mrb[0].mxu0
  %3927 = vmatprep.mubr.f32.mxu0 0.0
  %3928 = vmatmul.mubr.f32.gmra.mrb[0].mxu0 %v3194
  %v3929 = vpop.f32.mrb[0].mxu0
  %v3930 = vadd.f32 0.0, %v3929
  %v3931 = vpop.f32.mrb[0].mxu0
  %3932 = vdwg.mxu0
  %v3933 = vld [vmem:[%s2 + $0x3d0] sm:$0xff]
  %v3934 = vld [vmem:[%s2 + $0x3d8] sm:$0xff]
  %v3935 = vld [vmem:[%s2 + $0x3e0] sm:$0xff]
  %v3936 = vld [vmem:[%s2 + $0x3e8] sm:$0xff]
  %v3937 = vld [vmem:[%s2 + $0x3f0] sm:$0xff]
  %v3938 = vld [vmem:[%s2 + $0x3f8] sm:$0xff]
  %v3939 = vld [vmem:[%s2 + $0x400] sm:$0xff]
  %v3940 = vld [vmem:[%s2 + $0x408] sm:$0xff]
  %v3941 = vld [vmem:[%s2 + $0x410] sm:$0xff]
  %v3942 = vld [vmem:[%s2 + $0x418] sm:$0xff]
  %v3943 = vld [vmem:[%s2 + $0x420] sm:$0xff]
  %v3944 = vld [vmem:[%s2 + $0x428] sm:$0xff]
  %v3945 = vld [vmem:[%s2 + $0x430] sm:$0xff]
  %v3946 = vld [vmem:[%s2 + $0x438] sm:$0xff]
  %v3947 = vld [vmem:[%s2 + $0x440] sm:$0xff]
  %v3948 = vld [vmem:[%s2 + $0x448] sm:$0xff]
  %v3949 = vld [vmem:[%s2 + $0x450] sm:$0xff]
  %v3950 = vld [vmem:[%s2 + $0x458] sm:$0xff]
  %v3951 = vld [vmem:[%s2 + $0x460] sm:$0xff]
  %v3952 = vld [vmem:[%s2 + $0x468] sm:$0xff]
  %v3953 = vld [vmem:[%s2 + $0x470] sm:$0xff]
  %v3954 = vld [vmem:[%s2 + $0x478] sm:$0xff]
  %v3955 = vld [vmem:[%s2 + $0x480] sm:$0xff]
  %v3956 = vld [vmem:[%s2 + $0x488] sm:$0xff]
  %v3957 = vld [vmem:[%s2 + $0x490] sm:$0xff]
  %v3958 = vld [vmem:[%s2 + $0x498] sm:$0xff]
  %v3959 = vld [vmem:[%s2 + $0x4a0] sm:$0xff]
  %v3960 = vld [vmem:[%s2 + $0x4a8] sm:$0xff]
  %v3961 = vld [vmem:[%s2 + $0x4b0] sm:$0xff]
  %v3962 = vld [vmem:[%s2 + $0x4b8] sm:$0xff]
  %v3964 = vsel %vm134, %v3947, 0
  %v3967 = vsel %vm134, %v3948, 0
  %v3970 = vsel %vm134, %v3949, 0
  %v3973 = vsel %vm134, %v3950, 0
  %v3976 = vsel %vm134, %v3951, 0
  %v3979 = vsel %vm134, %v3952, 0
  %v3982 = vsel %vm134, %v3953, 0
  %v3985 = vsel %vm134, %v3954, 0
  %v3988 = vsel %vm134, %v3955, 0
  %v3991 = vsel %vm134, %v3956, 0
  %v3994 = vsel %vm134, %v3957, 0
  %v3997 = vsel %vm134, %v3958, 0
  %v4000 = vsel %vm134, %v3959, 0
  %v4003 = vsel %vm134, %v3960, 0
  %4005 = vmatprep.subr.mxu0 0.0
  %4006 = vmatpush1.msra.mxu0 %v3915
  %4007 = vmatprep.subr.mxu0 0.0
  %4008 = vmatpush1.msra.mxu0 %v3920
  %4009 = vmatprep.subr.mxu0 0.0
  %4010 = vmatpush1.msra.mxu0 0.0
  %4011 = vmatprep.subr.mxu0 0.0
  %4012 = vmatpush1.msra.mxu0 0.0
  %4013 = vmatprep.subr.mxu0 0.0
  %4014 = vmatpush1.msra.mxu0 0.0
  %4015 = vmatprep.subr.mxu0 0.0
  %4016 = vmatpush1.msra.mxu0 0.0
  %4017 = vmatprep.subr.mxu0 0.0
  %4018 = vmatpush1.msra.mxu0 0.0
  %4019 = vmatprep.subr.mxu0 0.0
  %4020 = vmatpush1.msra.mxu0 0.0
  %4021 = vmatprep.subr.mxu0 0.0
  %4022 = vmatpush1.msra.mxu0 0.0
  %4023 = vmatprep.subr.mxu0 0.0
  %4024 = vmatpush1.msra.mxu0 0.0
  %4025 = vmatprep.subr.mxu0 0.0
  %4026 = vmatpush1.msra.mxu0 0.0
  %4027 = vmatprep.subr.mxu0 0.0
  %4028 = vmatpush1.msra.mxu0 0.0
  %4029 = vmatprep.subr.mxu0 0.0
  %4030 = vmatpush1.msra.mxu0 0.0
  %4031 = vmatprep.subr.mxu0 0.0
  %4032 = vmatpush1.msra.mxu0 0.0
  %4033 = vmatprep.subr.mxu0 0.0
  %4034 = vmatpush1.msra.mxu0 0.0
  %4035 = vmatprep.subr.mxu0 0.0
  %4036 = vmatpush1.msra.mxu0 0.0
  %4037 = vmatprep.subr.mxu0 0.0
  %4038 = vmatpush1.msra.mxu0 0.0
  %4039 = vmatprep.subr.mxu0 0.0
  %4040 = vmatpush1.msra.mxu0 0.0
  %4041 = vmatprep.subr.mxu0 0.0
  %4042 = vmatpush1.msra.mxu0 0.0
  %4043 = vmatprep.subr.mxu0 0.0
  %4044 = vmatpush1.msra.mxu0 0.0
  %4045 = vmatprep.subr.mxu0 0.0
  %4046 = vmatpush1.msra.mxu0 0.0
  %4047 = vmatprep.subr.mxu0 0.0
  %4048 = vmatpush1.msra.mxu0 0.0
  %4049 = vmatprep.subr.mxu0 0.0
  %4050 = vmatpush1.msra.mxu0 0.0
  %4051 = vmatprep.subr.mxu0 0.0
  %4052 = vmatpush1.msra.mxu0 0.0
  %4053 = vmatprep.subr.mxu0 0.0
  %4054 = vmatpush1.msra.mxu0 0.0
  %4055 = vmatprep.subr.mxu0 0.0
  %4056 = vmatpush1.msra.mxu0 0.0
  %4057 = vmatprep.subr.mxu0 0.0
  %4058 = vmatpush1.msra.mxu0 0.0
  %4059 = vmatprep.subr.mxu0 0.0
  %4060 = vmatpush1.msra.mxu0 0.0
  %4061 = vmatprep.subr.mxu0 0.0
  %4062 = vmatpush1.msra.mxu0 0.0
  %4063 = vmatprep.subr.mxu0 0.0
  %4064 = vmatpush1.msra.mxu0 0.0
  %4065 = vmatprep.subr.mxu0 0.0
  %4066 = vmatpush1.msra.mxu0 0.0
  %4067 = vmatprep.subr.mxu0 0.0
  %4068 = vmatpush1.msra.mxu0 0.0
  %4069 = vmatprep.mubr.f32.mxu0 0.0
  %4070 = vmatmul.mubr.f32.gmra.mrb[0].mxu0 %v3964
  %v4071 = vpop.f32.mrb[0].mxu0
  %v4072 = vadd.f32 0.0, %v4071
  %v4073 = vpop.f32.mrb[0].mxu0
  %4074 = vmatprep.mubr.f32.mxu0 0.0
  %4075 = vmatmul.mubr.f32.gmra.mrb[0].mxu0 %v3967
  %v4076 = vpop.f32.mrb[0].mxu0
  %v4077 = vadd.f32 0.0, %v4076
  %v4078 = vpop.f32.mrb[0].mxu0
  %4079 = vmatprep.mubr.f32.mxu0 0.0
  %4080 = vmatmul.mubr.f32.gmra.mrb[0].mxu0 %v3970
  %v4081 = vpop.f32.mrb[0].mxu0
  %v4082 = vadd.f32 0.0, %v4081
  %v4083 = vpop.f32.mrb[0].mxu0
  %4084 = vmatprep.mubr.f32.mxu0 0.0
  %4085 = vmatmul.mubr.f32.gmra.mrb[0].mxu0 %v3973
  %v4086 = vpop.f32.mrb[0].mxu0
  %v4087 = vadd.f32 0.0, %v4086
  %v4088 = vpop.f32.mrb[0].mxu0
  %4089 = vmatprep.mubr.f32.mxu0 0.0
  %4090 = vmatmul.mubr.f32.gmra.mrb[0].mxu0 %v3976
  %v4091 = vpop.f32.mrb[0].mxu0
  %v4092 = vadd.f32 0.0, %v4091
  %v4093 = vpop.f32.mrb[0].mxu0
  %4094 = vmatprep.mubr.f32.mxu0 0.0
  %4095 = vmatmul.mubr.f32.gmra.mrb[0].mxu0 %v3979
  %v4096 = vpop.f32.mrb[0].mxu0
  %v4097 = vadd.f32 0.0, %v4096
  %v4098 = vpop.f32.mrb[0].mxu0
  %4099 = vmatprep.mubr.f32.mxu0 0.0
  %4100 = vmatmul.mubr.f32.gmra.mrb[0].mxu0 %v3982
  %v4101 = vpop.f32.mrb[0].mxu0
  %v4102 = vadd.f32 0.0, %v4101
  %v4103 = vpop.f32.mrb[0].mxu0
  %4104 = vmatprep.mubr.f32.mxu0 0.0
  %4105 = vmatmul.mubr.f32.gmra.mrb[0].mxu0 %v3985
  %v4106 = vpop.f32.mrb[0].mxu0
  %v4107 = vadd.f32 0.0, %v4106
  %v4108 = vpop.f32.mrb[0].mxu0
  %4109 = vmatprep.mubr.f32.mxu0 0.0
  %4110 = vmatmul.mubr.f32.gmra.mrb[0].mxu0 %v3988
  %v4111 = vpop.f32.mrb[0].mxu0
  %v4112 = vadd.f32 0.0, %v4111
  %v4113 = vpop.f32.mrb[0].mxu0
  %4114 = vmatprep.mubr.f32.mxu0 0.0
  %4115 = vmatmul.mubr.f32.gmra.mrb[0].mxu0 %v3991
  %v4116 = vpop.f32.mrb[0].mxu0
  %v4117 = vadd.f32 0.0, %v4116
  %v4118 = vpop.f32.mrb[0].mxu0
  %4119 = vmatprep.mubr.f32.mxu0 0.0
  %4120 = vmatmul.mubr.f32.gmra.mrb[0].mxu0 %v3994
  %v4121 = vpop.f32.mrb[0].mxu0
  %v4122 = vadd.f32 0.0, %v4121
  %v4123 = vpop.f32.mrb[0].mxu0
  %4124 = vmatprep.mubr.f32.mxu0 0.0
  %4125 = vmatmul.mubr.f32.gmra.mrb[0].mxu0 %v3997
  %v4126 = vpop.f32.mrb[0].mxu0
  %v4127 = vadd.f32 0.0, %v4126
  %v4128 = vpop.f32.mrb[0].mxu0
  %4129 = vmatprep.mubr.f32.mxu0 0.0
  %4130 = vmatmul.mubr.f32.gmra.mrb[0].mxu0 %v4000
  %v4131 = vpop.f32.mrb[0].mxu0
  %v4132 = vadd.f32 0.0, %v4131
  %v4133 = vpop.f32.mrb[0].mxu0
  %4134 = vmatprep.mubr.f32.mxu0 0.0
  %4135 = vmatmul.mubr.f32.gmra.mrb[0].mxu0 %v4003
  %v4136 = vpop.f32.mrb[0].mxu0
  %v4137 = vadd.f32 0.0, %v4136
  %v4138 = vpop.f32.mrb[0].mxu0
  %4139 = vdwg.mxu0
  %v4141 = vsel %vm134, %v3933, 0
  %v4144 = vsel %vm134, %v3934, 0
  %v4147 = vsel %vm134, %v3935, 0
  %v4150 = vsel %vm134, %v3936, 0
  %v4153 = vsel %vm134, %v3937, 0
  %v4156 = vsel %vm134, %v3938, 0
  %v4159 = vsel %vm134, %v3939, 0
  %v4162 = vsel %vm134, %v3940, 0
  %v4165 = vsel %vm134, %v3941, 0
  %v4168 = vsel %vm134, %v3942, 0
  %v4171 = vsel %vm134, %v3943, 0
  %v4174 = vsel %vm134, %v3944, 0
  %v4177 = vsel %vm134, %v3945, 0
  %v4180 = vsel %vm134, %v3946, 0
  %4182 = vmatprep.subr.mxu0 0.0
  %4183 = vmatpush1.msra.mxu0 %v3826
  %4184 = vmatprep.subr.mxu0 0.0
  %4185 = vmatpush1.msra.mxu0 %v3831
  %4186 = vmatprep.subr.mxu0 0.0
  %4187 = vmatpush1.msra.mxu0 0.0
  %4188 = vmatprep.subr.mxu0 0.0
  %4189 = vmatpush1.msra.mxu0 0.0
  %4190 = vmatprep.subr.mxu0 0.0
  %4191 = vmatpush1.msra.mxu0 0.0
  %4192 = vmatprep.subr.mxu0 0.0
  %4193 = vmatpush1.msra.mxu0 0.0
  %4194 = vmatprep.subr.mxu0 0.0
  %4195 = vmatpush1.msra.mxu0 0.0
  %4196 = vmatprep.subr.mxu0 0.0
  %4197 = vmatpush1.msra.mxu0 0.0
  %4198 = vmatprep.subr.mxu0 0.0
  %4199 = vmatpush1.msra.mxu0 0.0
  %4200 = vmatprep.subr.mxu0 0.0
  %4201 = vmatpush1.msra.mxu0 0.0
  %4202 = vmatprep.subr.mxu0 0.0
  %4203 = vmatpush1.msra.mxu0 0.0
  %4204 = vmatprep.subr.mxu0 0.0
  %4205 = vmatpush1.msra.mxu0 0.0
  %4206 = vmatprep.subr.mxu0 0.0
  %4207 = vmatpush1.msra.mxu0 0.0
  %4208 = vmatprep.subr.mxu0 0.0
  %4209 = vmatpush1.msra.mxu0 0.0
  %4210 = vmatprep.subr.mxu0 0.0
  %4211 = vmatpush1.msra.mxu0 0.0
  %4212 = vmatprep.subr.mxu0 0.0
  %4213 = vmatpush1.msra.mxu0 0.0
  %4214 = vmatprep.subr.mxu0 0.0
  %4215 = vmatpush1.msra.mxu0 0.0
  %4216 = vmatprep.subr.mxu0 0.0
  %4217 = vmatpush1.msra.mxu0 0.0
  %4218 = vmatprep.subr.mxu0 0.0
  %4219 = vmatpush1.msra.mxu0 0.0
  %4220 = vmatprep.subr.mxu0 0.0
  %4221 = vmatpush1.msra.mxu0 0.0
  %4222 = vmatprep.subr.mxu0 0.0
  %4223 = vmatpush1.msra.mxu0 0.0
  %4224 = vmatprep.subr.mxu0 0.0
  %4225 = vmatpush1.msra.mxu0 0.0
  %4226 = vmatprep.subr.mxu0 0.0
  %4227 = vmatpush1.msra.mxu0 0.0
  %4228 = vmatprep.subr.mxu0 0.0
  %4229 = vmatpush1.msra.mxu0 0.0
  %4230 = vmatprep.subr.mxu0 0.0
  %4231 = vmatpush1.msra.mxu0 0.0
  %4232 = vmatprep.subr.mxu0 0.0
  %4233 = vmatpush1.msra.mxu0 0.0
  %4234 = vmatprep.subr.mxu0 0.0
  %4235 = vmatpush1.msra.mxu0 0.0
  %4236 = vmatprep.subr.mxu0 0.0
  %4237 = vmatpush1.msra.mxu0 0.0
  %4238 = vmatprep.subr.mxu0 0.0
  %4239 = vmatpush1.msra.mxu0 0.0
  %4240 = vmatprep.subr.mxu0 0.0
  %4241 = vmatpush1.msra.mxu0 0.0
  %4242 = vmatprep.subr.mxu0 0.0
  %4243 = vmatpush1.msra.mxu0 0.0
  %4244 = vmatprep.subr.mxu0 0.0
  %4245 = vmatpush1.msra.mxu0 0.0
  %4246 = vmatprep.mubr.f32.mxu0 0.0
  %4247 = vmatmul.mubr.f32.gmra.mrb[0].mxu0 %v4141
  %v4248 = vpop.f32.mrb[0].mxu0
  %v4249 = vadd.f32 %v4072, %v4248
  %v4250 = vpop.f32.mrb[0].mxu0
  %4251 = vmatprep.mubr.f32.mxu0 0.0
  %4252 = vmatmul.mubr.f32.gmra.mrb[0].mxu0 %v4144
  %v4253 = vpop.f32.mrb[0].mxu0
  %v4254 = vadd.f32 %v4077, %v4253
  %v4255 = vpop.f32.mrb[0].mxu0
  %4256 = vmatprep.mubr.f32.mxu0 0.0
  %4257 = vmatmul.mubr.f32.gmra.mrb[0].mxu0 %v4147
  %v4258 = vpop.f32.mrb[0].mxu0
  %v4259 = vadd.f32 %v4082, %v4258
  %v4260 = vpop.f32.mrb[0].mxu0
  %4261 = vmatprep.mubr.f32.mxu0 0.0
  %4262 = vmatmul.mubr.f32.gmra.mrb[0].mxu0 %v4150
  %v4263 = vpop.f32.mrb[0].mxu0
  %v4264 = vadd.f32 %v4087, %v4263
  %v4265 = vpop.f32.mrb[0].mxu0
  %4266 = vmatprep.mubr.f32.mxu0 0.0
  %4267 = vmatmul.mubr.f32.gmra.mrb[0].mxu0 %v4153
  %v4268 = vpop.f32.mrb[0].mxu0
  %v4269 = vadd.f32 %v4092, %v4268
  %v4270 = vpop.f32.mrb[0].mxu0
  %4271 = vmatprep.mubr.f32.mxu0 0.0
  %4272 = vmatmul.mubr.f32.gmra.mrb[0].mxu0 %v4156
  %v4273 = vpop.f32.mrb[0].mxu0
  %v4274 = vadd.f32 %v4097, %v4273
  %v4275 = vpop.f32.mrb[0].mxu0
  %4276 = vmatprep.mubr.f32.mxu0 0.0
  %4277 = vmatmul.mubr.f32.gmra.mrb[0].mxu0 %v4159
  %v4278 = vpop.f32.mrb[0].mxu0
  %v4279 = vadd.f32 %v4102, %v4278
  %v4280 = vpop.f32.mrb[0].mxu0
  %4281 = vmatprep.mubr.f32.mxu0 0.0
  %4282 = vmatmul.mubr.f32.gmra.mrb[0].mxu0 %v4162
  %v4283 = vpop.f32.mrb[0].mxu0
  %v4284 = vadd.f32 %v4107, %v4283
  %v4285 = vpop.f32.mrb[0].mxu0
  %4286 = vmatprep.mubr.f32.mxu0 0.0
  %4287 = vmatmul.mubr.f32.gmra.mrb[0].mxu0 %v4165
  %v4288 = vpop.f32.mrb[0].mxu0
  %v4289 = vadd.f32 %v4112, %v4288
  %v4290 = vpop.f32.mrb[0].mxu0
  %4291 = vmatprep.mubr.f32.mxu0 0.0
  %4292 = vmatmul.mubr.f32.gmra.mrb[0].mxu0 %v4168
  %v4293 = vpop.f32.mrb[0].mxu0
  %v4294 = vadd.f32 %v4117, %v4293
  %v4295 = vpop.f32.mrb[0].mxu0
  %4296 = vmatprep.mubr.f32.mxu0 0.0
  %4297 = vmatmul.mubr.f32.gmra.mrb[0].mxu0 %v4171
  %v4298 = vpop.f32.mrb[0].mxu0
  %v4299 = vadd.f32 %v4122, %v4298
  %v4300 = vpop.f32.mrb[0].mxu0
  %4301 = vmatprep.mubr.f32.mxu0 0.0
  %4302 = vmatmul.mubr.f32.gmra.mrb[0].mxu0 %v4174
  %v4303 = vpop.f32.mrb[0].mxu0
  %v4304 = vadd.f32 %v4127, %v4303
  %v4305 = vpop.f32.mrb[0].mxu0
  %4306 = vmatprep.mubr.f32.mxu0 0.0
  %4307 = vmatmul.mubr.f32.gmra.mrb[0].mxu0 %v4177
  %v4308 = vpop.f32.mrb[0].mxu0
  %v4309 = vadd.f32 %v4132, %v4308
  %v4310 = vpop.f32.mrb[0].mxu0
  %4311 = vmatprep.mubr.f32.mxu0 0.0
  %4312 = vmatmul.mubr.f32.gmra.mrb[0].mxu0 %v4180
  %v4313 = vpop.f32.mrb[0].mxu0
  %v4314 = vadd.f32 %v4137, %v4313
  %v4315 = vpop.f32.mrb[0].mxu0
  %4316 = vdwg.mxu0
  %4317 = vmatprep.subr.mxu0 0.0
  %4318 = vmatpush1.msra.mxu0 %v3925
  %4319 = vmatprep.subr.mxu0 0.0
  %4320 = vmatpush1.msra.mxu0 %v3930
  %4321 = vmatprep.subr.mxu0 0.0
  %4322 = vmatpush1.msra.mxu0 0.0
  %4323 = vmatprep.subr.mxu0 0.0
  %4324 = vmatpush1.msra.mxu0 0.0
  %4325 = vmatprep.subr.mxu0 0.0
  %4326 = vmatpush1.msra.mxu0 0.0
  %4327 = vmatprep.subr.mxu0 0.0
  %4328 = vmatpush1.msra.mxu0 0.0
  %4329 = vmatprep.subr.mxu0 0.0
  %4330 = vmatpush1.msra.mxu0 0.0
  %4331 = vmatprep.subr.mxu0 0.0
  %4332 = vmatpush1.msra.mxu0 0.0
  %4333 = vmatprep.subr.mxu0 0.0
  %4334 = vmatpush1.msra.mxu0 0.0
  %4335 = vmatprep.subr.mxu0 0.0
  %4336 = vmatpush1.msra.mxu0 0.0
  %4337 = vmatprep.subr.mxu0 0.0
  %4338 = vmatpush1.msra.mxu0 0.0
  %4339 = vmatprep.subr.mxu0 0.0
  %4340 = vmatpush1.msra.mxu0 0.0
  %4341 = vmatprep.subr.mxu0 0.0
  %4342 = vmatpush1.msra.mxu0 0.0
  %4343 = vmatprep.subr.mxu0 0.0
  %4344 = vmatpush1.msra.mxu0 0.0
  %4345 = vmatprep.subr.mxu0 0.0
  %4346 = vmatpush1.msra.mxu0 0.0
  %4347 = vmatprep.subr.mxu0 0.0
  %4348 = vmatpush1.msra.mxu0 0.0
  %4349 = vmatprep.subr.mxu0 0.0
  %4350 = vmatpush1.msra.mxu0 0.0
  %4351 = vmatprep.subr.mxu0 0.0
  %4352 = vmatpush1.msra.mxu0 0.0
  %4353 = vmatprep.subr.mxu0 0.0
  %4354 = vmatpush1.msra.mxu0 0.0
  %4355 = vmatprep.subr.mxu0 0.0
  %4356 = vmatpush1.msra.mxu0 0.0
  %4357 = vmatprep.subr.mxu0 0.0
  %4358 = vmatpush1.msra.mxu0 0.0
  %4359 = vmatprep.subr.mxu0 0.0
  %4360 = vmatpush1.msra.mxu0 0.0
  %4361 = vmatprep.subr.mxu0 0.0
  %4362 = vmatpush1.msra.mxu0 0.0
  %4363 = vmatprep.subr.mxu0 0.0
  %4364 = vmatpush1.msra.mxu0 0.0
  %4365 = vmatprep.subr.mxu0 0.0
  %4366 = vmatpush1.msra.mxu0 0.0
  %4367 = vmatprep.subr.mxu0 0.0
  %4368 = vmatpush1.msra.mxu0 0.0
  %4369 = vmatprep.subr.mxu0 0.0
  %4370 = vmatpush1.msra.mxu0 0.0
  %4371 = vmatprep.subr.mxu0 0.0
  %4372 = vmatpush1.msra.mxu0 0.0
  %4373 = vmatprep.subr.mxu0 0.0
  %4374 = vmatpush1.msra.mxu0 0.0
  %4375 = vmatprep.subr.mxu0 0.0
  %4376 = vmatpush1.msra.mxu0 0.0
  %4377 = vmatprep.subr.mxu0 0.0
  %4378 = vmatpush1.msra.mxu0 0.0
  %4379 = vmatprep.subr.mxu0 0.0
  %4380 = vmatpush1.msra.mxu0 0.0
  %4381 = vmatprep.mubr.f32.mxu0 0.0
  %4382 = vmatmul.mubr.f32.gmra.mrb[0].mxu0 %v3964
  %v4383 = vpop.f32.mrb[0].mxu0
  %v4384 = vadd.f32 0.0, %v4383
  %v4385 = vpop.f32.mrb[0].mxu0
  %4386 = vmatprep.mubr.f32.mxu0 0.0
  %4387 = vmatmul.mubr.f32.gmra.mrb[0].mxu0 %v3967
  %v4388 = vpop.f32.mrb[0].mxu0
  %v4389 = vadd.f32 0.0, %v4388
  %v4390 = vpop.f32.mrb[0].mxu0
  %4391 = vmatprep.mubr.f32.mxu0 0.0
  %4392 = vmatmul.mubr.f32.gmra.mrb[0].mxu0 %v3970
  %v4393 = vpop.f32.mrb[0].mxu0
  %v4394 = vadd.f32 0.0, %v4393
  %v4395 = vpop.f32.mrb[0].mxu0
  %4396 = vmatprep.mubr.f32.mxu0 0.0
  %4397 = vmatmul.mubr.f32.gmra.mrb[0].mxu0 %v3973
  %v4398 = vpop.f32.mrb[0].mxu0
  %v4399 = vadd.f32 0.0, %v4398
  %v4400 = vpop.f32.mrb[0].mxu0
  %4401 = vmatprep.mubr.f32.mxu0 0.0
  %4402 = vmatmul.mubr.f32.gmra.mrb[0].mxu0 %v3976
  %v4403 = vpop.f32.mrb[0].mxu0
  %v4404 = vadd.f32 0.0, %v4403
  %v4405 = vpop.f32.mrb[0].mxu0
  %4406 = vmatprep.mubr.f32.mxu0 0.0
  %4407 = vmatmul.mubr.f32.gmra.mrb[0].mxu0 %v3979
  %v4408 = vpop.f32.mrb[0].mxu0
  %v4409 = vadd.f32 0.0, %v4408
  %v4410 = vpop.f32.mrb[0].mxu0
  %4411 = vmatprep.mubr.f32.mxu0 0.0
  %4412 = vmatmul.mubr.f32.gmra.mrb[0].mxu0 %v3982
  %v4413 = vpop.f32.mrb[0].mxu0
  %v4414 = vadd.f32 0.0, %v4413
  %v4415 = vpop.f32.mrb[0].mxu0
  %4416 = vmatprep.mubr.f32.mxu0 0.0
  %4417 = vmatmul.mubr.f32.gmra.mrb[0].mxu0 %v3985
  %v4418 = vpop.f32.mrb[0].mxu0
  %v4419 = vadd.f32 0.0, %v4418
  %v4420 = vpop.f32.mrb[0].mxu0
  %4421 = vmatprep.mubr.f32.mxu0 0.0
  %4422 = vmatmul.mubr.f32.gmra.mrb[0].mxu0 %v3988
  %v4423 = vpop.f32.mrb[0].mxu0
  %v4424 = vadd.f32 0.0, %v4423
  %v4425 = vpop.f32.mrb[0].mxu0
  %4426 = vmatprep.mubr.f32.mxu0 0.0
  %4427 = vmatmul.mubr.f32.gmra.mrb[0].mxu0 %v3991
  %v4428 = vpop.f32.mrb[0].mxu0
  %v4429 = vadd.f32 0.0, %v4428
  %v4430 = vpop.f32.mrb[0].mxu0
  %4431 = vmatprep.mubr.f32.mxu0 0.0
  %4432 = vmatmul.mubr.f32.gmra.mrb[0].mxu0 %v3994
  %v4433 = vpop.f32.mrb[0].mxu0
  %v4434 = vadd.f32 0.0, %v4433
  %v4435 = vpop.f32.mrb[0].mxu0
  %4436 = vmatprep.mubr.f32.mxu0 0.0
  %4437 = vmatmul.mubr.f32.gmra.mrb[0].mxu0 %v3997
  %v4438 = vpop.f32.mrb[0].mxu0
  %v4439 = vadd.f32 0.0, %v4438
  %v4440 = vpop.f32.mrb[0].mxu0
  %4441 = vmatprep.mubr.f32.mxu0 0.0
  %4442 = vmatmul.mubr.f32.gmra.mrb[0].mxu0 %v4000
  %v4443 = vpop.f32.mrb[0].mxu0
  %v4444 = vadd.f32 0.0, %v4443
  %v4445 = vpop.f32.mrb[0].mxu0
  %4446 = vmatprep.mubr.f32.mxu0 0.0
  %4447 = vmatmul.mubr.f32.gmra.mrb[0].mxu0 %v4003
  %v4448 = vpop.f32.mrb[0].mxu0
  %v4449 = vadd.f32 0.0, %v4448
  %v4450 = vpop.f32.mrb[0].mxu0
  %4451 = vdwg.mxu0
  %4452 = vmatprep.subr.mxu0 0.0
  %4453 = vmatpush1.msra.mxu0 %v3836
  %4454 = vmatprep.subr.mxu0 0.0
  %4455 = vmatpush1.msra.mxu0 %v3841
  %4456 = vmatprep.subr.mxu0 0.0
  %4457 = vmatpush1.msra.mxu0 0.0
  %4458 = vmatprep.subr.mxu0 0.0
  %4459 = vmatpush1.msra.mxu0 0.0
  %4460 = vmatprep.subr.mxu0 0.0
  %4461 = vmatpush1.msra.mxu0 0.0
  %4462 = vmatprep.subr.mxu0 0.0
  %4463 = vmatpush1.msra.mxu0 0.0
  %4464 = vmatprep.subr.mxu0 0.0
  %4465 = vmatpush1.msra.mxu0 0.0
  %4466 = vmatprep.subr.mxu0 0.0
  %4467 = vmatpush1.msra.mxu0 0.0
  %4468 = vmatprep.subr.mxu0 0.0
  %4469 = vmatpush1.msra.mxu0 0.0
  %4470 = vmatprep.subr.mxu0 0.0
  %4471 = vmatpush1.msra.mxu0 0.0
  %4472 = vmatprep.subr.mxu0 0.0
  %4473 = vmatpush1.msra.mxu0 0.0
  %4474 = vmatprep.subr.mxu0 0.0
  %4475 = vmatpush1.msra.mxu0 0.0
  %4476 = vmatprep.subr.mxu0 0.0
  %4477 = vmatpush1.msra.mxu0 0.0
  %4478 = vmatprep.subr.mxu0 0.0
  %4479 = vmatpush1.msra.mxu0 0.0
  %4480 = vmatprep.subr.mxu0 0.0
  %4481 = vmatpush1.msra.mxu0 0.0
  %4482 = vmatprep.subr.mxu0 0.0
  %4483 = vmatpush1.msra.mxu0 0.0
  %4484 = vmatprep.subr.mxu0 0.0
  %4485 = vmatpush1.msra.mxu0 0.0
  %4486 = vmatprep.subr.mxu0 0.0
  %4487 = vmatpush1.msra.mxu0 0.0
  %4488 = vmatprep.subr.mxu0 0.0
  %4489 = vmatpush1.msra.mxu0 0.0
  %4490 = vmatprep.subr.mxu0 0.0
  %4491 = vmatpush1.msra.mxu0 0.0
  %4492 = vmatprep.subr.mxu0 0.0
  %4493 = vmatpush1.msra.mxu0 0.0
  %4494 = vmatprep.subr.mxu0 0.0
  %4495 = vmatpush1.msra.mxu0 0.0
  %4496 = vmatprep.subr.mxu0 0.0
  %4497 = vmatpush1.msra.mxu0 0.0
  %4498 = vmatprep.subr.mxu0 0.0
  %4499 = vmatpush1.msra.mxu0 0.0
  %4500 = vmatprep.subr.mxu0 0.0
  %4501 = vmatpush1.msra.mxu0 0.0
  %4502 = vmatprep.subr.mxu0 0.0
  %4503 = vmatpush1.msra.mxu0 0.0
  %4504 = vmatprep.subr.mxu0 0.0
  %4505 = vmatpush1.msra.mxu0 0.0
  %4506 = vmatprep.subr.mxu0 0.0
  %4507 = vmatpush1.msra.mxu0 0.0
  %4508 = vmatprep.subr.mxu0 0.0
  %4509 = vmatpush1.msra.mxu0 0.0
  %4510 = vmatprep.subr.mxu0 0.0
  %4511 = vmatpush1.msra.mxu0 0.0
  %4512 = vmatprep.subr.mxu0 0.0
  %4513 = vmatpush1.msra.mxu0 0.0
  %4514 = vmatprep.subr.mxu0 0.0
  %4515 = vmatpush1.msra.mxu0 0.0
  %4516 = vmatprep.mubr.f32.mxu0 0.0
  %4517 = vmatmul.mubr.f32.gmra.mrb[0].mxu0 %v4141
  %v4518 = vpop.f32.mrb[0].mxu0
  %v4519 = vadd.f32 %v4384, %v4518
  %v4520 = vpop.f32.mrb[0].mxu0
  %4521 = vmatprep.mubr.f32.mxu0 0.0
  %4522 = vmatmul.mubr.f32.gmra.mrb[0].mxu0 %v4144
  %v4523 = vpop.f32.mrb[0].mxu0
  %v4524 = vadd.f32 %v4389, %v4523
  %v4525 = vpop.f32.mrb[0].mxu0
  %4526 = vmatprep.mubr.f32.mxu0 0.0
  %4527 = vmatmul.mubr.f32.gmra.mrb[0].mxu0 %v4147
  %v4528 = vpop.f32.mrb[0].mxu0
  %v4529 = vadd.f32 %v4394, %v4528
  %v4530 = vpop.f32.mrb[0].mxu0
  %4531 = vmatprep.mubr.f32.mxu0 0.0
  %4532 = vmatmul.mubr.f32.gmra.mrb[0].mxu0 %v4150
  %v4533 = vpop.f32.mrb[0].mxu0
  %v4534 = vadd.f32 %v4399, %v4533
  %v4535 = vpop.f32.mrb[0].mxu0
  %4536 = vmatprep.mubr.f32.mxu0 0.0
  %4537 = vmatmul.mubr.f32.gmra.mrb[0].mxu0 %v4153
  %v4538 = vpop.f32.mrb[0].mxu0
  %v4539 = vadd.f32 %v4404, %v4538
  %v4540 = vpop.f32.mrb[0].mxu0
  %4541 = vmatprep.mubr.f32.mxu0 0.0
  %4542 = vmatmul.mubr.f32.gmra.mrb[0].mxu0 %v4156
  %v4543 = vpop.f32.mrb[0].mxu0
  %v4544 = vadd.f32 %v4409, %v4543
  %v4545 = vpop.f32.mrb[0].mxu0
  %4546 = vmatprep.mubr.f32.mxu0 0.0
  %4547 = vmatmul.mubr.f32.gmra.mrb[0].mxu0 %v4159
  %v4548 = vpop.f32.mrb[0].mxu0
  %v4549 = vadd.f32 %v4414, %v4548
  %v4550 = vpop.f32.mrb[0].mxu0
  %4551 = vmatprep.mubr.f32.mxu0 0.0
  %4552 = vmatmul.mubr.f32.gmra.mrb[0].mxu0 %v4162
  %v4553 = vpop.f32.mrb[0].mxu0
  %v4554 = vadd.f32 %v4419, %v4553
  %v4555 = vpop.f32.mrb[0].mxu0
  %4556 = vmatprep.mubr.f32.mxu0 0.0
  %4557 = vmatmul.mubr.f32.gmra.mrb[0].mxu0 %v4165
  %v4558 = vpop.f32.mrb[0].mxu0
  %v4559 = vadd.f32 %v4424, %v4558
  %v4560 = vpop.f32.mrb[0].mxu0
  %4561 = vmatprep.mubr.f32.mxu0 0.0
  %4562 = vmatmul.mubr.f32.gmra.mrb[0].mxu0 %v4168
  %v4563 = vpop.f32.mrb[0].mxu0
  %v4564 = vadd.f32 %v4429, %v4563
  %v4565 = vpop.f32.mrb[0].mxu0
  %4566 = vmatprep.mubr.f32.mxu0 0.0
  %4567 = vmatmul.mubr.f32.gmra.mrb[0].mxu0 %v4171
  %v4568 = vpop.f32.mrb[0].mxu0
  %v4569 = vadd.f32 %v4434, %v4568
  %v4570 = vpop.f32.mrb[0].mxu0
  %4571 = vmatprep.mubr.f32.mxu0 0.0
  %4572 = vmatmul.mubr.f32.gmra.mrb[0].mxu0 %v4174
  %v4573 = vpop.f32.mrb[0].mxu0
  %v4574 = vadd.f32 %v4439, %v4573
  %v4575 = vpop.f32.mrb[0].mxu0
  %4576 = vmatprep.mubr.f32.mxu0 0.0
  %4577 = vmatmul.mubr.f32.gmra.mrb[0].mxu0 %v4177
  %v4578 = vpop.f32.mrb[0].mxu0
  %v4579 = vadd.f32 %v4444, %v4578
  %v4580 = vpop.f32.mrb[0].mxu0
  %4581 = vmatprep.mubr.f32.mxu0 0.0
  %4582 = vmatmul.mubr.f32.gmra.mrb[0].mxu0 %v4180
  %v4583 = vpop.f32.mrb[0].mxu0
  %v4584 = vadd.f32 %v4449, %v4583
  %v4585 = vpop.f32.mrb[0].mxu0
  %4586 = vdwg.mxu0
  %v4587 = vld [vmem:[%s2 + $0x148] sm:$0x1]
  %v4588 = vlaneseq
  %v4589 = vshrl.u32 %v4588, 7
  %v4590 = vsub.s32 0, %v4589
  %v4591 = vrot.slane %v4587, %v4590
  %v4592 = vadd.f32 %v4249, %v4591
  %v4593 = vadd.f32 %v4254, %v4591
  %v4594 = vadd.f32 %v4259, %v4591
  %v4595 = vadd.f32 %v4264, %v4591
  %v4596 = vadd.f32 %v4269, %v4591
  %v4597 = vadd.f32 %v4274, %v4591
  %v4598 = vadd.f32 %v4279, %v4591
  %v4599 = vadd.f32 %v4284, %v4591
  %v4600 = vadd.f32 %v4289, %v4591
  %v4601 = vadd.f32 %v4294, %v4591
  %v4602 = vadd.f32 %v4299, %v4591
  %v4603 = vadd.f32 %v4304, %v4591
  %v4604 = vadd.f32 %v4309, %v4591
  %v4605 = vadd.f32 %v4314, %v4591
  %v4606 = vadd.f32 %v4519, %v4591
  %v4607 = vadd.f32 %v4524, %v4591
  %v4608 = vadd.f32 %v4529, %v4591
  %v4609 = vadd.f32 %v4534, %v4591
  %v4610 = vadd.f32 %v4539, %v4591
  %v4611 = vadd.f32 %v4544, %v4591
  %v4612 = vadd.f32 %v4549, %v4591
  %v4613 = vadd.f32 %v4554, %v4591
  %v4614 = vadd.f32 %v4559, %v4591
  %v4615 = vadd.f32 %v4564, %v4591
  %v4616 = vadd.f32 %v4569, %v4591
  %v4617 = vadd.f32 %v4574, %v4591
  %v4618 = vadd.f32 %v4579, %v4591
  %v4619 = vadd.f32 %v4584, %v4591
  %v4620 = vmax.f32 %v4592, 0.0
  %v4621 = vmax.f32 %v4593, 0.0
  %v4622 = vmax.f32 %v4594, 0.0
  %v4623 = vmax.f32 %v4595, 0.0
  %v4624 = vmax.f32 %v4596, 0.0
  %v4625 = vmax.f32 %v4597, 0.0
  %v4626 = vmax.f32 %v4598, 0.0
  %v4627 = vmax.f32 %v4599, 0.0
  %v4628 = vmax.f32 %v4600, 0.0
  %v4629 = vmax.f32 %v4601, 0.0
  %v4630 = vmax.f32 %v4602, 0.0
  %v4631 = vmax.f32 %v4603, 0.0
  %v4632 = vmax.f32 %v4604, 0.0
  %v4633 = vmax.f32 %v4605, 0.0
  %v4634 = vmax.f32 %v4606, 0.0
  %v4635 = vmax.f32 %v4607, 0.0
  %v4636 = vmax.f32 %v4608, 0.0
  %v4637 = vmax.f32 %v4609, 0.0
  %v4638 = vmax.f32 %v4610, 0.0
  %v4639 = vmax.f32 %v4611, 0.0
  %v4640 = vmax.f32 %v4612, 0.0
  %v4641 = vmax.f32 %v4613, 0.0
  %v4642 = vmax.f32 %v4614, 0.0
  %v4643 = vmax.f32 %v4615, 0.0
  %v4644 = vmax.f32 %v4616, 0.0
  %v4645 = vmax.f32 %v4617, 0.0
  %v4646 = vmax.f32 %v4618, 0.0
  %v4647 = vmax.f32 %v4619, 0.0
  %v4648 = vld [vmem:[%s2 + $0x150] sm:$0xff]
  %v4649 = vld [vmem:[%s2 + $0x158] sm:$0xff]
  %v4650 = vld [vmem:[%s2 + $0x160] sm:$0xff]
  %v4651 = vld [vmem:[%s2 + $0x168] sm:$0xff]
  %v4652 = vld [vmem:[%s2 + $0x170] sm:$0x1]
  %v4653 = vlaneseq
  %v4654 = vshrl.u32 %v4653, 7
  %v4655 = vsub.s32 0, %v4654
  %v4656 = vrot.slane %v4652, %v4655
  %v4658 = vsel %vm341, %v4620, 0
  %v4661 = vsel %vm341, %v4621, 0
  %v4664 = vsel %vm341, %v4622, 0
  %v4667 = vsel %vm341, %v4623, 0
  %v4670 = vsel %vm341, %v4624, 0
  %v4673 = vsel %vm341, %v4625, 0
  %v4676 = vsel %vm341, %v4626, 0
  %v4679 = vsel %vm341, %v4627, 0
  %v4682 = vsel %vm341, %v4628, 0
  %v4685 = vsel %vm341, %v4629, 0
  %v4688 = vsel %vm341, %v4630, 0
  %v4691 = vsel %vm341, %v4631, 0
  %v4694 = vsel %vm341, %v4632, 0
  %v4697 = vsel %vm341, %v4633, 0
  %v4700 = vsel %vm341, %v4634, 0
  %v4703 = vsel %vm341, %v4635, 0
  %v4706 = vsel %vm341, %v4636, 0
  %v4709 = vsel %vm341, %v4637, 0
  %v4712 = vsel %vm341, %v4638, 0
  %v4715 = vsel %vm341, %v4639, 0
  %v4718 = vsel %vm341, %v4640, 0
  %v4721 = vsel %vm341, %v4641, 0
  %v4724 = vsel %vm341, %v4642, 0
  %v4727 = vsel %vm341, %v4643, 0
  %v4730 = vsel %vm341, %v4644, 0
  %v4733 = vsel %vm341, %v4645, 0
  %v4736 = vsel %vm341, %v4646, 0
  %v4739 = vsel %vm341, %v4647, 0
  %4741 = vmatprep.subr.mxu0 0.0
  %4742 = vmatpush1.msra.mxu0 %v4648
  %4743 = vmatprep.subr.mxu0 0.0
  %4744 = vmatpush1.msra.mxu0 %v4649
  %4745 = vmatprep.subr.mxu0 0.0
  %4746 = vmatpush1.msra.mxu0 %v4650
  %4747 = vmatprep.subr.mxu0 0.0
  %4748 = vmatpush1.msra.mxu0 %v4651
  %4749 = vmatprep.subr.mxu0 0.0
  %4750 = vmatpush1.msra.mxu0 0.0
  %4751 = vmatprep.subr.mxu0 0.0
  %4752 = vmatpush1.msra.mxu0 0.0
  %4753 = vmatprep.subr.mxu0 0.0
  %4754 = vmatpush1.msra.mxu0 0.0
  %4755 = vmatprep.subr.mxu0 0.0
  %4756 = vmatpush1.msra.mxu0 0.0
  %4757 = vmatprep.subr.mxu0 0.0
  %4758 = vmatpush1.msra.mxu0 0.0
  %4759 = vmatprep.subr.mxu0 0.0
  %4760 = vmatpush1.msra.mxu0 0.0
  %4761 = vmatprep.subr.mxu0 0.0
  %4762 = vmatpush1.msra.mxu0 0.0
  %4763 = vmatprep.subr.mxu0 0.0
  %4764 = vmatpush1.msra.mxu0 0.0
  %4765 = vmatprep.subr.mxu0 0.0
  %4766 = vmatpush1.msra.mxu0 0.0
  %4767 = vmatprep.subr.mxu0 0.0
  %4768 = vmatpush1.msra.mxu0 0.0
  %4769 = vmatprep.subr.mxu0 0.0
  %4770 = vmatpush1.msra.mxu0 0.0
  %4771 = vmatprep.subr.mxu0 0.0
  %4772 = vmatpush1.msra.mxu0 0.0
  %4773 = vmatprep.subr.mxu0 0.0
  %4774 = vmatpush1.msra.mxu0 0.0
  %4775 = vmatprep.subr.mxu0 0.0
  %4776 = vmatpush1.msra.mxu0 0.0
  %4777 = vmatprep.subr.mxu0 0.0
  %4778 = vmatpush1.msra.mxu0 0.0
  %4779 = vmatprep.subr.mxu0 0.0
  %4780 = vmatpush1.msra.mxu0 0.0
  %4781 = vmatprep.subr.mxu0 0.0
  %4782 = vmatpush1.msra.mxu0 0.0
  %4783 = vmatprep.subr.mxu0 0.0
  %4784 = vmatpush1.msra.mxu0 0.0
  %4785 = vmatprep.subr.mxu0 0.0
  %4786 = vmatpush1.msra.mxu0 0.0
  %4787 = vmatprep.subr.mxu0 0.0
  %4788 = vmatpush1.msra.mxu0 0.0
  %4789 = vmatprep.subr.mxu0 0.0
  %4790 = vmatpush1.msra.mxu0 0.0
  %4791 = vmatprep.subr.mxu0 0.0
  %4792 = vmatpush1.msra.mxu0 0.0
  %4793 = vmatprep.subr.mxu0 0.0
  %4794 = vmatpush1.msra.mxu0 0.0
  %4795 = vmatprep.subr.mxu0 0.0
  %4796 = vmatpush1.msra.mxu0 0.0
  %4797 = vmatprep.subr.mxu0 0.0
  %4798 = vmatpush1.msra.mxu0 0.0
  %4799 = vmatprep.subr.mxu0 0.0
  %4800 = vmatpush1.msra.mxu0 0.0
  %4801 = vmatprep.subr.mxu0 0.0
  %4802 = vmatpush1.msra.mxu0 0.0
  %4803 = vmatprep.subr.mxu0 0.0
  %4804 = vmatpush1.msra.mxu0 0.0
  %4805 = vmatprep.mubr.f32.mxu0 0.0
  %4806 = vmatmul.mubr.f32.gmra.mrb[0].mxu0 %v4658
  %v4807 = vpop.f32.mrb[0].mxu0
  %v4808 = vadd.f32 %v4656, %v4807
  %v4809 = vpop.f32.mrb[0].mxu0
  %4810 = vmatprep.mubr.f32.mxu0 0.0
  %4811 = vmatmul.mubr.f32.gmra.mrb[0].mxu0 %v4661
  %v4812 = vpop.f32.mrb[0].mxu0
  %v4813 = vadd.f32 %v4656, %v4812
  %v4814 = vpop.f32.mrb[0].mxu0
  %4815 = vmatprep.mubr.f32.mxu0 0.0
  %4816 = vmatmul.mubr.f32.gmra.mrb[0].mxu0 %v4664
  %v4817 = vpop.f32.mrb[0].mxu0
  %v4818 = vadd.f32 %v4656, %v4817
  %v4819 = vpop.f32.mrb[0].mxu0
  %4820 = vmatprep.mubr.f32.mxu0 0.0
  %4821 = vmatmul.mubr.f32.gmra.mrb[0].mxu0 %v4667
  %v4822 = vpop.f32.mrb[0].mxu0
  %v4823 = vadd.f32 %v4656, %v4822
  %v4824 = vpop.f32.mrb[0].mxu0
  %4825 = vmatprep.mubr.f32.mxu0 0.0
  %4826 = vmatmul.mubr.f32.gmra.mrb[0].mxu0 %v4670
  %v4827 = vpop.f32.mrb[0].mxu0
  %v4828 = vadd.f32 %v4656, %v4827
  %v4829 = vpop.f32.mrb[0].mxu0
  %4830 = vmatprep.mubr.f32.mxu0 0.0
  %4831 = vmatmul.mubr.f32.gmra.mrb[0].mxu0 %v4673
  %v4832 = vpop.f32.mrb[0].mxu0
  %v4833 = vadd.f32 %v4656, %v4832
  %v4834 = vpop.f32.mrb[0].mxu0
  %4835 = vmatprep.mubr.f32.mxu0 0.0
  %4836 = vmatmul.mubr.f32.gmra.mrb[0].mxu0 %v4676
  %v4837 = vpop.f32.mrb[0].mxu0
  %v4838 = vadd.f32 %v4656, %v4837
  %v4839 = vpop.f32.mrb[0].mxu0
  %4840 = vmatprep.mubr.f32.mxu0 0.0
  %4841 = vmatmul.mubr.f32.gmra.mrb[0].mxu0 %v4679
  %v4842 = vpop.f32.mrb[0].mxu0
  %v4843 = vadd.f32 %v4656, %v4842
  %v4844 = vpop.f32.mrb[0].mxu0
  %4845 = vmatprep.mubr.f32.mxu0 0.0
  %4846 = vmatmul.mubr.f32.gmra.mrb[0].mxu0 %v4682
  %v4847 = vpop.f32.mrb[0].mxu0
  %v4848 = vadd.f32 %v4656, %v4847
  %v4849 = vpop.f32.mrb[0].mxu0
  %4850 = vmatprep.mubr.f32.mxu0 0.0
  %4851 = vmatmul.mubr.f32.gmra.mrb[0].mxu0 %v4685
  %v4852 = vpop.f32.mrb[0].mxu0
  %v4853 = vadd.f32 %v4656, %v4852
  %v4854 = vpop.f32.mrb[0].mxu0
  %4855 = vmatprep.mubr.f32.mxu0 0.0
  %4856 = vmatmul.mubr.f32.gmra.mrb[0].mxu0 %v4688
  %v4857 = vpop.f32.mrb[0].mxu0
  %v4858 = vadd.f32 %v4656, %v4857
  %v4859 = vpop.f32.mrb[0].mxu0
  %4860 = vmatprep.mubr.f32.mxu0 0.0
  %4861 = vmatmul.mubr.f32.gmra.mrb[0].mxu0 %v4691
  %v4862 = vpop.f32.mrb[0].mxu0
  %v4863 = vadd.f32 %v4656, %v4862
  %v4864 = vpop.f32.mrb[0].mxu0
  %4865 = vmatprep.mubr.f32.mxu0 0.0
  %4866 = vmatmul.mubr.f32.gmra.mrb[0].mxu0 %v4694
  %v4867 = vpop.f32.mrb[0].mxu0
  %v4868 = vadd.f32 %v4656, %v4867
  %v4869 = vpop.f32.mrb[0].mxu0
  %4870 = vmatprep.mubr.f32.mxu0 0.0
  %4871 = vmatmul.mubr.f32.gmra.mrb[0].mxu0 %v4697
  %v4872 = vpop.f32.mrb[0].mxu0
  %v4873 = vadd.f32 %v4656, %v4872
  %v4874 = vpop.f32.mrb[0].mxu0
  %4875 = vmatprep.mubr.f32.mxu0 0.0
  %4876 = vmatmul.mubr.f32.gmra.mrb[0].mxu0 %v4700
  %v4877 = vpop.f32.mrb[0].mxu0
  %v4878 = vadd.f32 %v4656, %v4877
  %v4879 = vpop.f32.mrb[0].mxu0
  %4880 = vmatprep.mubr.f32.mxu0 0.0
  %4881 = vmatmul.mubr.f32.gmra.mrb[0].mxu0 %v4703
  %v4882 = vpop.f32.mrb[0].mxu0
  %v4883 = vadd.f32 %v4656, %v4882
  %v4884 = vpop.f32.mrb[0].mxu0
  %4885 = vmatprep.mubr.f32.mxu0 0.0
  %4886 = vmatmul.mubr.f32.gmra.mrb[0].mxu0 %v4706
  %v4887 = vpop.f32.mrb[0].mxu0
  %v4888 = vadd.f32 %v4656, %v4887
  %v4889 = vpop.f32.mrb[0].mxu0
  %4890 = vmatprep.mubr.f32.mxu0 0.0
  %4891 = vmatmul.mubr.f32.gmra.mrb[0].mxu0 %v4709
  %v4892 = vpop.f32.mrb[0].mxu0
  %v4893 = vadd.f32 %v4656, %v4892
  %v4894 = vpop.f32.mrb[0].mxu0
  %4895 = vmatprep.mubr.f32.mxu0 0.0
  %4896 = vmatmul.mubr.f32.gmra.mrb[0].mxu0 %v4712
  %v4897 = vpop.f32.mrb[0].mxu0
  %v4898 = vadd.f32 %v4656, %v4897
  %v4899 = vpop.f32.mrb[0].mxu0
  %4900 = vmatprep.mubr.f32.mxu0 0.0
  %4901 = vmatmul.mubr.f32.gmra.mrb[0].mxu0 %v4715
  %v4902 = vpop.f32.mrb[0].mxu0
  %v4903 = vadd.f32 %v4656, %v4902
  %v4904 = vpop.f32.mrb[0].mxu0
  %4905 = vmatprep.mubr.f32.mxu0 0.0
  %4906 = vmatmul.mubr.f32.gmra.mrb[0].mxu0 %v4718
  %v4907 = vpop.f32.mrb[0].mxu0
  %v4908 = vadd.f32 %v4656, %v4907
  %v4909 = vpop.f32.mrb[0].mxu0
  %4910 = vmatprep.mubr.f32.mxu0 0.0
  %4911 = vmatmul.mubr.f32.gmra.mrb[0].mxu0 %v4721
  %v4912 = vpop.f32.mrb[0].mxu0
  %v4913 = vadd.f32 %v4656, %v4912
  %v4914 = vpop.f32.mrb[0].mxu0
  %4915 = vmatprep.mubr.f32.mxu0 0.0
  %4916 = vmatmul.mubr.f32.gmra.mrb[0].mxu0 %v4724
  %v4917 = vpop.f32.mrb[0].mxu0
  %v4918 = vadd.f32 %v4656, %v4917
  %v4919 = vpop.f32.mrb[0].mxu0
  %4920 = vmatprep.mubr.f32.mxu0 0.0
  %4921 = vmatmul.mubr.f32.gmra.mrb[0].mxu0 %v4727
  %v4922 = vpop.f32.mrb[0].mxu0
  %v4923 = vadd.f32 %v4656, %v4922
  %v4924 = vpop.f32.mrb[0].mxu0
  %4925 = vmatprep.mubr.f32.mxu0 0.0
  %4926 = vmatmul.mubr.f32.gmra.mrb[0].mxu0 %v4730
  %v4927 = vpop.f32.mrb[0].mxu0
  %v4928 = vadd.f32 %v4656, %v4927
  %v4929 = vpop.f32.mrb[0].mxu0
  %4930 = vmatprep.mubr.f32.mxu0 0.0
  %4931 = vmatmul.mubr.f32.gmra.mrb[0].mxu0 %v4733
  %v4932 = vpop.f32.mrb[0].mxu0
  %v4933 = vadd.f32 %v4656, %v4932
  %v4934 = vpop.f32.mrb[0].mxu0
  %4935 = vmatprep.mubr.f32.mxu0 0.0
  %4936 = vmatmul.mubr.f32.gmra.mrb[0].mxu0 %v4736
  %v4937 = vpop.f32.mrb[0].mxu0
  %v4938 = vadd.f32 %v4656, %v4937
  %v4939 = vpop.f32.mrb[0].mxu0
  %4940 = vmatprep.mubr.f32.mxu0 0.0
  %4941 = vmatmul.mubr.f32.gmra.mrb[0].mxu0 %v4739
  %v4942 = vpop.f32.mrb[0].mxu0
  %v4943 = vadd.f32 %v4656, %v4942
  %v4944 = vpop.f32.mrb[0].mxu0
  %4945 = vdwg.mxu0
  %v4946 = vmax.f32 %v4808, 0.0
  %v4947 = vmax.f32 %v4813, 0.0
  %v4948 = vmax.f32 %v4818, 0.0
  %v4949 = vmax.f32 %v4823, 0.0
  %v4950 = vmax.f32 %v4828, 0.0
  %v4951 = vmax.f32 %v4833, 0.0
  %v4952 = vmax.f32 %v4838, 0.0
  %v4953 = vmax.f32 %v4843, 0.0
  %v4954 = vmax.f32 %v4848, 0.0
  %v4955 = vmax.f32 %v4853, 0.0
  %v4956 = vmax.f32 %v4858, 0.0
  %v4957 = vmax.f32 %v4863, 0.0
  %v4958 = vmax.f32 %v4868, 0.0
  %v4959 = vmax.f32 %v4873, 0.0
  %v4960 = vmax.f32 %v4878, 0.0
  %v4961 = vmax.f32 %v4883, 0.0
  %v4962 = vmax.f32 %v4888, 0.0
  %v4963 = vmax.f32 %v4893, 0.0
  %v4964 = vmax.f32 %v4898, 0.0
  %v4965 = vmax.f32 %v4903, 0.0
  %v4966 = vmax.f32 %v4908, 0.0
  %v4967 = vmax.f32 %v4913, 0.0
  %v4968 = vmax.f32 %v4918, 0.0
  %v4969 = vmax.f32 %v4923, 0.0
  %v4970 = vmax.f32 %v4928, 0.0
  %v4971 = vmax.f32 %v4933, 0.0
  %v4972 = vmax.f32 %v4938, 0.0
  %v4973 = vmax.f32 %v4943, 0.0
  %v4974 = vld [vmem:[%s2 + $0x178] sm:$0xff]
  %v4975 = vld [vmem:[%s2 + $0x180] sm:$0xff]
  %v4976 = vld [vmem:[%s2 + $0x188] sm:$0xff]
  %v4977 = vld [vmem:[%s2 + $0x190] sm:$0xff]
  %v4978 = vld [vmem:[%s2 + $0x198] sm:$0x1]
  %v4979 = vlaneseq
  %v4980 = vshrl.u32 %v4979, 7
  %v4981 = vsub.s32 0, %v4980
  %v4982 = vrot.slane %v4978, %v4981
  %v4984 = vsel %vm341, %v4946, 0
  %v4987 = vsel %vm341, %v4947, 0
  %v4990 = vsel %vm341, %v4948, 0
  %v4993 = vsel %vm341, %v4949, 0
  %v4996 = vsel %vm341, %v4950, 0
  %v4999 = vsel %vm341, %v4951, 0
  %v5002 = vsel %vm341, %v4952, 0
  %v5005 = vsel %vm341, %v4953, 0
  %v5008 = vsel %vm341, %v4954, 0
  %v5011 = vsel %vm341, %v4955, 0
  %v5014 = vsel %vm341, %v4956, 0
  %v5017 = vsel %vm341, %v4957, 0
  %v5020 = vsel %vm341, %v4958, 0
  %v5023 = vsel %vm341, %v4959, 0
  %v5026 = vsel %vm341, %v4960, 0
  %v5029 = vsel %vm341, %v4961, 0
  %v5032 = vsel %vm341, %v4962, 0
  %v5035 = vsel %vm341, %v4963, 0
  %v5038 = vsel %vm341, %v4964, 0
  %v5041 = vsel %vm341, %v4965, 0
  %v5044 = vsel %vm341, %v4966, 0
  %v5047 = vsel %vm341, %v4967, 0
  %v5050 = vsel %vm341, %v4968, 0
  %v5053 = vsel %vm341, %v4969, 0
  %v5056 = vsel %vm341, %v4970, 0
  %v5059 = vsel %vm341, %v4971, 0
  %v5062 = vsel %vm341, %v4972, 0
  %v5065 = vsel %vm341, %v4973, 0
  %5067 = vmatprep.subr.mxu0 0.0
  %5068 = vmatpush1.msra.mxu0 %v4974
  %5069 = vmatprep.subr.mxu0 0.0
  %5070 = vmatpush1.msra.mxu0 %v4975
  %5071 = vmatprep.subr.mxu0 0.0
  %5072 = vmatpush1.msra.mxu0 %v4976
  %5073 = vmatprep.subr.mxu0 0.0
  %5074 = vmatpush1.msra.mxu0 %v4977
  %5075 = vmatprep.subr.mxu0 0.0
  %5076 = vmatpush1.msra.mxu0 0.0
  %5077 = vmatprep.subr.mxu0 0.0
  %5078 = vmatpush1.msra.mxu0 0.0
  %5079 = vmatprep.subr.mxu0 0.0
  %5080 = vmatpush1.msra.mxu0 0.0
  %5081 = vmatprep.subr.mxu0 0.0
  %5082 = vmatpush1.msra.mxu0 0.0
  %5083 = vmatprep.subr.mxu0 0.0
  %5084 = vmatpush1.msra.mxu0 0.0
  %5085 = vmatprep.subr.mxu0 0.0
  %5086 = vmatpush1.msra.mxu0 0.0
  %5087 = vmatprep.subr.mxu0 0.0
  %5088 = vmatpush1.msra.mxu0 0.0
  %5089 = vmatprep.subr.mxu0 0.0
  %5090 = vmatpush1.msra.mxu0 0.0
  %5091 = vmatprep.subr.mxu0 0.0
  %5092 = vmatpush1.msra.mxu0 0.0
  %5093 = vmatprep.subr.mxu0 0.0
  %5094 = vmatpush1.msra.mxu0 0.0
  %5095 = vmatprep.subr.mxu0 0.0
  %5096 = vmatpush1.msra.mxu0 0.0
  %5097 = vmatprep.subr.mxu0 0.0
  %5098 = vmatpush1.msra.mxu0 0.0
  %5099 = vmatprep.subr.mxu0 0.0
  %5100 = vmatpush1.msra.mxu0 0.0
  %5101 = vmatprep.subr.mxu0 0.0
  %5102 = vmatpush1.msra.mxu0 0.0
  %5103 = vmatprep.subr.mxu0 0.0
  %5104 = vmatpush1.msra.mxu0 0.0
  %5105 = vmatprep.subr.mxu0 0.0
  %5106 = vmatpush1.msra.mxu0 0.0
  %5107 = vmatprep.subr.mxu0 0.0
  %5108 = vmatpush1.msra.mxu0 0.0
  %5109 = vmatprep.subr.mxu0 0.0
  %5110 = vmatpush1.msra.mxu0 0.0
  %5111 = vmatprep.subr.mxu0 0.0
  %5112 = vmatpush1.msra.mxu0 0.0
  %5113 = vmatprep.subr.mxu0 0.0
  %5114 = vmatpush1.msra.mxu0 0.0
  %5115 = vmatprep.subr.mxu0 0.0
  %5116 = vmatpush1.msra.mxu0 0.0
  %5117 = vmatprep.subr.mxu0 0.0
  %5118 = vmatpush1.msra.mxu0 0.0
  %5119 = vmatprep.subr.mxu0 0.0
  %5120 = vmatpush1.msra.mxu0 0.0
  %5121 = vmatprep.subr.mxu0 0.0
  %5122 = vmatpush1.msra.mxu0 0.0
  %5123 = vmatprep.subr.mxu0 0.0
  %5124 = vmatpush1.msra.mxu0 0.0
  %5125 = vmatprep.subr.mxu0 0.0
  %5126 = vmatpush1.msra.mxu0 0.0
  %5127 = vmatprep.subr.mxu0 0.0
  %5128 = vmatpush1.msra.mxu0 0.0
  %5129 = vmatprep.subr.mxu0 0.0
  %5130 = vmatpush1.msra.mxu0 0.0
  %5131 = vmatprep.mubr.f32.mxu0 0.0
  %5132 = vmatmul.mubr.f32.gmra.mrb[0].mxu0 %v4984
  %v5133 = vpop.f32.mrb[0].mxu0
  %v5134 = vadd.f32 %v4982, %v5133
  %v5135 = vpop.f32.mrb[0].mxu0
  %5136 = vmatprep.mubr.f32.mxu0 0.0
  %5137 = vmatmul.mubr.f32.gmra.mrb[0].mxu0 %v4987
  %v5138 = vpop.f32.mrb[0].mxu0
  %v5139 = vadd.f32 %v4982, %v5138
  %v5140 = vpop.f32.mrb[0].mxu0
  %5141 = vmatprep.mubr.f32.mxu0 0.0
  %5142 = vmatmul.mubr.f32.gmra.mrb[0].mxu0 %v4990
  %v5143 = vpop.f32.mrb[0].mxu0
  %v5144 = vadd.f32 %v4982, %v5143
  %v5145 = vpop.f32.mrb[0].mxu0
  %5146 = vmatprep.mubr.f32.mxu0 0.0
  %5147 = vmatmul.mubr.f32.gmra.mrb[0].mxu0 %v4993
  %v5148 = vpop.f32.mrb[0].mxu0
  %v5149 = vadd.f32 %v4982, %v5148
  %v5150 = vpop.f32.mrb[0].mxu0
  %5151 = vmatprep.mubr.f32.mxu0 0.0
  %5152 = vmatmul.mubr.f32.gmra.mrb[0].mxu0 %v4996
  %v5153 = vpop.f32.mrb[0].mxu0
  %v5154 = vadd.f32 %v4982, %v5153
  %v5155 = vpop.f32.mrb[0].mxu0
  %5156 = vmatprep.mubr.f32.mxu0 0.0
  %5157 = vmatmul.mubr.f32.gmra.mrb[0].mxu0 %v4999
  %v5158 = vpop.f32.mrb[0].mxu0
  %v5159 = vadd.f32 %v4982, %v5158
  %v5160 = vpop.f32.mrb[0].mxu0
  %5161 = vmatprep.mubr.f32.mxu0 0.0
  %5162 = vmatmul.mubr.f32.gmra.mrb[0].mxu0 %v5002
  %v5163 = vpop.f32.mrb[0].mxu0
  %v5164 = vadd.f32 %v4982, %v5163
  %v5165 = vpop.f32.mrb[0].mxu0
  %5166 = vmatprep.mubr.f32.mxu0 0.0
  %5167 = vmatmul.mubr.f32.gmra.mrb[0].mxu0 %v5005
  %v5168 = vpop.f32.mrb[0].mxu0
  %v5169 = vadd.f32 %v4982, %v5168
  %v5170 = vpop.f32.mrb[0].mxu0
  %5171 = vmatprep.mubr.f32.mxu0 0.0
  %5172 = vmatmul.mubr.f32.gmra.mrb[0].mxu0 %v5008
  %v5173 = vpop.f32.mrb[0].mxu0
  %v5174 = vadd.f32 %v4982, %v5173
  %v5175 = vpop.f32.mrb[0].mxu0
  %5176 = vmatprep.mubr.f32.mxu0 0.0
  %5177 = vmatmul.mubr.f32.gmra.mrb[0].mxu0 %v5011
  %v5178 = vpop.f32.mrb[0].mxu0
  %v5179 = vadd.f32 %v4982, %v5178
  %v5180 = vpop.f32.mrb[0].mxu0
  %5181 = vmatprep.mubr.f32.mxu0 0.0
  %5182 = vmatmul.mubr.f32.gmra.mrb[0].mxu0 %v5014
  %v5183 = vpop.f32.mrb[0].mxu0
  %v5184 = vadd.f32 %v4982, %v5183
  %v5185 = vpop.f32.mrb[0].mxu0
  %5186 = vmatprep.mubr.f32.mxu0 0.0
  %5187 = vmatmul.mubr.f32.gmra.mrb[0].mxu0 %v5017
  %v5188 = vpop.f32.mrb[0].mxu0
  %v5189 = vadd.f32 %v4982, %v5188
  %v5190 = vpop.f32.mrb[0].mxu0
  %5191 = vmatprep.mubr.f32.mxu0 0.0
  %5192 = vmatmul.mubr.f32.gmra.mrb[0].mxu0 %v5020
  %v5193 = vpop.f32.mrb[0].mxu0
  %v5194 = vadd.f32 %v4982, %v5193
  %v5195 = vpop.f32.mrb[0].mxu0
  %5196 = vmatprep.mubr.f32.mxu0 0.0
  %5197 = vmatmul.mubr.f32.gmra.mrb[0].mxu0 %v5023
  %v5198 = vpop.f32.mrb[0].mxu0
  %v5199 = vadd.f32 %v4982, %v5198
  %v5200 = vpop.f32.mrb[0].mxu0
  %5201 = vmatprep.mubr.f32.mxu0 0.0
  %5202 = vmatmul.mubr.f32.gmra.mrb[0].mxu0 %v5026
  %v5203 = vpop.f32.mrb[0].mxu0
  %v5204 = vadd.f32 %v4982, %v5203
  %v5205 = vpop.f32.mrb[0].mxu0
  %5206 = vmatprep.mubr.f32.mxu0 0.0
  %5207 = vmatmul.mubr.f32.gmra.mrb[0].mxu0 %v5029
  %v5208 = vpop.f32.mrb[0].mxu0
  %v5209 = vadd.f32 %v4982, %v5208
  %v5210 = vpop.f32.mrb[0].mxu0
  %5211 = vmatprep.mubr.f32.mxu0 0.0
  %5212 = vmatmul.mubr.f32.gmra.mrb[0].mxu0 %v5032
  %v5213 = vpop.f32.mrb[0].mxu0
  %v5214 = vadd.f32 %v4982, %v5213
  %v5215 = vpop.f32.mrb[0].mxu0
  %5216 = vmatprep.mubr.f32.mxu0 0.0
  %5217 = vmatmul.mubr.f32.gmra.mrb[0].mxu0 %v5035
  %v5218 = vpop.f32.mrb[0].mxu0
  %v5219 = vadd.f32 %v4982, %v5218
  %v5220 = vpop.f32.mrb[0].mxu0
  %5221 = vmatprep.mubr.f32.mxu0 0.0
  %5222 = vmatmul.mubr.f32.gmra.mrb[0].mxu0 %v5038
  %v5223 = vpop.f32.mrb[0].mxu0
  %v5224 = vadd.f32 %v4982, %v5223
  %v5225 = vpop.f32.mrb[0].mxu0
  %5226 = vmatprep.mubr.f32.mxu0 0.0
  %5227 = vmatmul.mubr.f32.gmra.mrb[0].mxu0 %v5041
  %v5228 = vpop.f32.mrb[0].mxu0
  %v5229 = vadd.f32 %v4982, %v5228
  %v5230 = vpop.f32.mrb[0].mxu0
  %5231 = vmatprep.mubr.f32.mxu0 0.0
  %5232 = vmatmul.mubr.f32.gmra.mrb[0].mxu0 %v5044
  %v5233 = vpop.f32.mrb[0].mxu0
  %v5234 = vadd.f32 %v4982, %v5233
  %v5235 = vpop.f32.mrb[0].mxu0
  %5236 = vmatprep.mubr.f32.mxu0 0.0
  %5237 = vmatmul.mubr.f32.gmra.mrb[0].mxu0 %v5047
  %v5238 = vpop.f32.mrb[0].mxu0
  %v5239 = vadd.f32 %v4982, %v5238
  %v5240 = vpop.f32.mrb[0].mxu0
  %5241 = vmatprep.mubr.f32.mxu0 0.0
  %5242 = vmatmul.mubr.f32.gmra.mrb[0].mxu0 %v5050
  %v5243 = vpop.f32.mrb[0].mxu0
  %v5244 = vadd.f32 %v4982, %v5243
  %v5245 = vpop.f32.mrb[0].mxu0
  %5246 = vmatprep.mubr.f32.mxu0 0.0
  %5247 = vmatmul.mubr.f32.gmra.mrb[0].mxu0 %v5053
  %v5248 = vpop.f32.mrb[0].mxu0
  %v5249 = vadd.f32 %v4982, %v5248
  %v5250 = vpop.f32.mrb[0].mxu0
  %5251 = vmatprep.mubr.f32.mxu0 0.0
  %5252 = vmatmul.mubr.f32.gmra.mrb[0].mxu0 %v5056
  %v5253 = vpop.f32.mrb[0].mxu0
  %v5254 = vadd.f32 %v4982, %v5253
  %v5255 = vpop.f32.mrb[0].mxu0
  %5256 = vmatprep.mubr.f32.mxu0 0.0
  %5257 = vmatmul.mubr.f32.gmra.mrb[0].mxu0 %v5059
  %v5258 = vpop.f32.mrb[0].mxu0
  %v5259 = vadd.f32 %v4982, %v5258
  %v5260 = vpop.f32.mrb[0].mxu0
  %5261 = vmatprep.mubr.f32.mxu0 0.0
  %5262 = vmatmul.mubr.f32.gmra.mrb[0].mxu0 %v5062
  %v5263 = vpop.f32.mrb[0].mxu0
  %v5264 = vadd.f32 %v4982, %v5263
  %v5265 = vpop.f32.mrb[0].mxu0
  %5266 = vmatprep.mubr.f32.mxu0 0.0
  %5267 = vmatmul.mubr.f32.gmra.mrb[0].mxu0 %v5065
  %v5268 = vpop.f32.mrb[0].mxu0
  %v5269 = vadd.f32 %v4982, %v5268
  %v5270 = vpop.f32.mrb[0].mxu0
  %5271 = vdwg.mxu0
  %v5273 = vsel %vm2082, %v3961, 0
  %v5276 = vsel %vm2082, %v3962, 0
  %5278 = vmatprep.subr.mxu0 0.0
  %5279 = vmatpush1.msra.mxu0 %v5134
  %5280 = vmatprep.subr.mxu0 0.0
  %5281 = vmatpush1.msra.mxu0 %v5139
  %5282 = vmatprep.subr.mxu0 0.0
  %5283 = vmatpush1.msra.mxu0 %v5144
  %5284 = vmatprep.subr.mxu0 0.0
  %5285 = vmatpush1.msra.mxu0 %v5149
  %5286 = vmatprep.subr.mxu0 0.0
  %5287 = vmatpush1.msra.mxu0 %v5154
  %5288 = vmatprep.subr.mxu0 0.0
  %5289 = vmatpush1.msra.mxu0 %v5159
  %5290 = vmatprep.subr.mxu0 0.0
  %5291 = vmatpush1.msra.mxu0 %v5164
  %5292 = vmatprep.subr.mxu0 0.0
  %5293 = vmatpush1.msra.mxu0 %v5169
  %5294 = vmatprep.subr.mxu0 0.0
  %5295 = vmatpush1.msra.mxu0 %v5174
  %5296 = vmatprep.subr.mxu0 0.0
  %5297 = vmatpush1.msra.mxu0 %v5179
  %5298 = vmatprep.subr.mxu0 0.0
  %5299 = vmatpush1.msra.mxu0 %v5184
  %5300 = vmatprep.subr.mxu0 0.0
  %5301 = vmatpush1.msra.mxu0 %v5189
  %5302 = vmatprep.subr.mxu0 0.0
  %5303 = vmatpush1.msra.mxu0 %v5194
  %5304 = vmatprep.subr.mxu0 0.0
  %5305 = vmatpush1.msra.mxu0 %v5199
  %5306 = vmatprep.subr.mxu0 0.0
  %5307 = vmatpush1.msra.mxu0 0.0
  %5308 = vmatprep.subr.mxu0 0.0
  %5309 = vmatpush1.msra.mxu0 0.0
  %5310 = vmatprep.subr.mxu0 0.0
  %5311 = vmatpush1.msra.mxu0 0.0
  %5312 = vmatprep.subr.mxu0 0.0
  %5313 = vmatpush1.msra.mxu0 0.0
  %5314 = vmatprep.subr.mxu0 0.0
  %5315 = vmatpush1.msra.mxu0 0.0
  %5316 = vmatprep.subr.mxu0 0.0
  %5317 = vmatpush1.msra.mxu0 0.0
  %5318 = vmatprep.subr.mxu0 0.0
  %5319 = vmatpush1.msra.mxu0 0.0
  %5320 = vmatprep.subr.mxu0 0.0
  %5321 = vmatpush1.msra.mxu0 0.0
  %5322 = vmatprep.subr.mxu0 0.0
  %5323 = vmatpush1.msra.mxu0 0.0
  %5324 = vmatprep.subr.mxu0 0.0
  %5325 = vmatpush1.msra.mxu0 0.0
  %5326 = vmatprep.subr.mxu0 0.0
  %5327 = vmatpush1.msra.mxu0 0.0
  %5328 = vmatprep.subr.mxu0 0.0
  %5329 = vmatpush1.msra.mxu0 0.0
  %5330 = vmatprep.subr.mxu0 0.0
  %5331 = vmatpush1.msra.mxu0 0.0
  %5332 = vmatprep.subr.mxu0 0.0
  %5333 = vmatpush1.msra.mxu0 0.0
  %5334 = vmatprep.subr.mxu0 0.0
  %5335 = vmatpush1.msra.mxu0 0.0
  %5336 = vmatprep.subr.mxu0 0.0
  %5337 = vmatpush1.msra.mxu0 0.0
  %5338 = vmatprep.subr.mxu0 0.0
  %5339 = vmatpush1.msra.mxu0 0.0
  %5340 = vmatprep.subr.mxu0 0.0
  %5341 = vmatpush1.msra.mxu0 0.0
  %5342 = vmatprep.mubr.f32.mxu0 0.0
  %5343 = vmatmul.mubr.f32.gmra.mrb[0].mxu0 %v5273
  %v5344 = vpop.f32.mrb[0].mxu0
  %v5345 = vadd.f32 0.0, %v5344
  %v5346 = vpop.f32.mrb[0].mxu0
  %5347 = vmatprep.mubr.f32.mxu0 0.0
  %5348 = vmatmul.mubr.f32.gmra.mrb[0].mxu0 %v5276
  %v5349 = vpop.f32.mrb[0].mxu0
  %v5350 = vadd.f32 0.0, %v5349
  %v5351 = vpop.f32.mrb[0].mxu0
  %5352 = vdwg.mxu0
  %5353 = vmatprep.subr.mxu0 0.0
  %5354 = vmatpush1.msra.mxu0 %v5204
  %5355 = vmatprep.subr.mxu0 0.0
  %5356 = vmatpush1.msra.mxu0 %v5209
  %5357 = vmatprep.subr.mxu0 0.0
  %5358 = vmatpush1.msra.mxu0 %v5214
  %5359 = vmatprep.subr.mxu0 0.0
  %5360 = vmatpush1.msra.mxu0 %v5219
  %5361 = vmatprep.subr.mxu0 0.0
  %5362 = vmatpush1.msra.mxu0 %v5224
  %5363 = vmatprep.subr.mxu0 0.0
  %5364 = vmatpush1.msra.mxu0 %v5229
  %5365 = vmatprep.subr.mxu0 0.0
  %5366 = vmatpush1.msra.mxu0 %v5234
  %5367 = vmatprep.subr.mxu0 0.0
  %5368 = vmatpush1.msra.mxu0 %v5239
  %5369 = vmatprep.subr.mxu0 0.0
  %5370 = vmatpush1.msra.mxu0 %v5244
  %5371 = vmatprep.subr.mxu0 0.0
  %5372 = vmatpush1.msra.mxu0 %v5249
  %5373 = vmatprep.subr.mxu0 0.0
  %5374 = vmatpush1.msra.mxu0 %v5254
  %5375 = vmatprep.subr.mxu0 0.0
  %5376 = vmatpush1.msra.mxu0 %v5259
  %5377 = vmatprep.subr.mxu0 0.0
  %5378 = vmatpush1.msra.mxu0 %v5264
  %5379 = vmatprep.subr.mxu0 0.0
  %5380 = vmatpush1.msra.mxu0 %v5269
  %5381 = vmatprep.subr.mxu0 0.0
  %5382 = vmatpush1.msra.mxu0 0.0
  %5383 = vmatprep.subr.mxu0 0.0
  %5384 = vmatpush1.msra.mxu0 0.0
  %5385 = vmatprep.subr.mxu0 0.0
  %5386 = vmatpush1.msra.mxu0 0.0
  %5387 = vmatprep.subr.mxu0 0.0
  %5388 = vmatpush1.msra.mxu0 0.0
  %5389 = vmatprep.subr.mxu0 0.0
  %5390 = vmatpush1.msra.mxu0 0.0
  %5391 = vmatprep.subr.mxu0 0.0
  %5392 = vmatpush1.msra.mxu0 0.0
  %5393 = vmatprep.subr.mxu0 0.0
  %5394 = vmatpush1.msra.mxu0 0.0
  %5395 = vmatprep.subr.mxu0 0.0
  %5396 = vmatpush1.msra.mxu0 0.0
  %5397 = vmatprep.subr.mxu0 0.0
  %5398 = vmatpush1.msra.mxu0 0.0
  %5399 = vmatprep.subr.mxu0 0.0
  %5400 = vmatpush1.msra.mxu0 0.0
  %5401 = vmatprep.subr.mxu0 0.0
  %5402 = vmatpush1.msra.mxu0 0.0
  %5403 = vmatprep.subr.mxu0 0.0
  %5404 = vmatpush1.msra.mxu0 0.0
  %5405 = vmatprep.subr.mxu0 0.0
  %5406 = vmatpush1.msra.mxu0 0.0
  %5407 = vmatprep.subr.mxu0 0.0
  %5408 = vmatpush1.msra.mxu0 0.0
  %5409 = vmatprep.subr.mxu0 0.0
  %5410 = vmatpush1.msra.mxu0 0.0
  %5411 = vmatprep.subr.mxu0 0.0
  %5412 = vmatpush1.msra.mxu0 0.0
  %5413 = vmatprep.subr.mxu0 0.0
  %5414 = vmatpush1.msra.mxu0 0.0
  %5415 = vmatprep.subr.mxu0 0.0
  %5416 = vmatpush1.msra.mxu0 0.0
  %5417 = vmatprep.mubr.f32.mxu0 0.0
  %5418 = vmatmul.mubr.f32.gmra.mrb[0].mxu0 %v5273
  %v5419 = vpop.f32.mrb[0].mxu0
  %v5420 = vadd.f32 0.0, %v5419
  %v5421 = vpop.f32.mrb[0].mxu0
  %5422 = vmatprep.mubr.f32.mxu0 0.0
  %5423 = vmatmul.mubr.f32.gmra.mrb[0].mxu0 %v5276
  %v5424 = vpop.f32.mrb[0].mxu0
  %v5425 = vadd.f32 0.0, %v5424
  %v5426 = vpop.f32.mrb[0].mxu0
  %5427 = vdwg.mxu0
  %v5428 = vld [vmem:[%s2 + $0x1a0] sm:$0xff]
  %v5429 = vld [vmem:[%s2 + $0x1a8] sm:$0xff]
  %v5430 = vld [vmem:[%s2 + $0x1b0] sm:$0xff]
  %v5431 = vld [vmem:[%s2 + $0x1b8] sm:$0xff]
  %v5432 = vld [vmem:[%s2 + $0x1c0] sm:$0xff]
  %v5433 = vld [vmem:[%s2 + $0x1c8] sm:$0xff]
  %v5434 = vld [vmem:[%s2 + $0x1d0] sm:$0xff]
  %v5435 = vld [vmem:[%s2 + $0x1d8] sm:$0xff]
  %v5437 = vsel %vm341, %v5345, 0
  %v5440 = vsel %vm341, %v5350, 0
  %v5443 = vsel %vm341, %v5420, 0
  %v5446 = vsel %vm341, %v5425, 0
  %5448 = vmatprep.subr.mxu0 0.0
  %5449 = vmatpush1.msra.mxu0 %v5432
  %5450 = vmatprep.subr.mxu0 0.0
  %5451 = vmatpush1.msra.mxu0 %v5433
  %5452 = vmatprep.subr.mxu0 0.0
  %5453 = vmatpush1.msra.mxu0 %v5434
  %5454 = vmatprep.subr.mxu0 0.0
  %5455 = vmatpush1.msra.mxu0 %v5435
  %5456 = vmatprep.subr.mxu0 0.0
  %5457 = vmatpush1.msra.mxu0 0.0
  %5458 = vmatprep.subr.mxu0 0.0
  %5459 = vmatpush1.msra.mxu0 0.0
  %5460 = vmatprep.subr.mxu0 0.0
  %5461 = vmatpush1.msra.mxu0 0.0
  %5462 = vmatprep.subr.mxu0 0.0
  %5463 = vmatpush1.msra.mxu0 0.0
  %5464 = vmatprep.subr.mxu0 0.0
  %5465 = vmatpush1.msra.mxu0 0.0
  %5466 = vmatprep.subr.mxu0 0.0
  %5467 = vmatpush1.msra.mxu0 0.0
  %5468 = vmatprep.subr.mxu0 0.0
  %5469 = vmatpush1.msra.mxu0 0.0
  %5470 = vmatprep.subr.mxu0 0.0
  %5471 = vmatpush1.msra.mxu0 0.0
  %5472 = vmatprep.subr.mxu0 0.0
  %5473 = vmatpush1.msra.mxu0 0.0
  %5474 = vmatprep.subr.mxu0 0.0
  %5475 = vmatpush1.msra.mxu0 0.0
  %5476 = vmatprep.subr.mxu0 0.0
  %5477 = vmatpush1.msra.mxu0 0.0
  %5478 = vmatprep.subr.mxu0 0.0
  %5479 = vmatpush1.msra.mxu0 0.0
  %5480 = vmatprep.subr.mxu0 0.0
  %5481 = vmatpush1.msra.mxu0 0.0
  %5482 = vmatprep.subr.mxu0 0.0
  %5483 = vmatpush1.msra.mxu0 0.0
  %5484 = vmatprep.subr.mxu0 0.0
  %5485 = vmatpush1.msra.mxu0 0.0
  %5486 = vmatprep.subr.mxu0 0.0
  %5487 = vmatpush1.msra.mxu0 0.0
  %5488 = vmatprep.subr.mxu0 0.0
  %5489 = vmatpush1.msra.mxu0 0.0
  %5490 = vmatprep.subr.mxu0 0.0
  %5491 = vmatpush1.msra.mxu0 0.0
  %5492 = vmatprep.subr.mxu0 0.0
  %5493 = vmatpush1.msra.mxu0 0.0
  %5494 = vmatprep.subr.mxu0 0.0
  %5495 = vmatpush1.msra.mxu0 0.0
  %5496 = vmatprep.subr.mxu0 0.0
  %5497 = vmatpush1.msra.mxu0 0.0
  %5498 = vmatprep.subr.mxu0 0.0
  %5499 = vmatpush1.msra.mxu0 0.0
  %5500 = vmatprep.subr.mxu0 0.0
  %5501 = vmatpush1.msra.mxu0 0.0
  %5502 = vmatprep.subr.mxu0 0.0
  %5503 = vmatpush1.msra.mxu0 0.0
  %5504 = vmatprep.subr.mxu0 0.0
  %5505 = vmatpush1.msra.mxu0 0.0
  %5506 = vmatprep.subr.mxu0 0.0
  %5507 = vmatpush1.msra.mxu0 0.0
  %5508 = vmatprep.subr.mxu0 0.0
  %5509 = vmatpush1.msra.mxu0 0.0
  %5510 = vmatprep.subr.mxu0 0.0
  %5511 = vmatpush1.msra.mxu0 0.0
  %5512 = vmatprep.mubr.f32.mxu0 0.0
  %5513 = vmatmul.mubr.f32.gmra.mrb[0].mxu0 %v5437
  %v5514 = vpop.f32.mrb[0].mxu0
  %v5515 = vadd.f32 0.0, %v5514
  %v5516 = vpop.f32.mrb[0].mxu0
  %5517 = vmatprep.mubr.f32.mxu0 0.0
  %5518 = vmatmul.mubr.f32.gmra.mrb[0].mxu0 %v5440
  %v5519 = vpop.f32.mrb[0].mxu0
  %v5520 = vadd.f32 0.0, %v5519
  %v5521 = vpop.f32.mrb[0].mxu0
  %5522 = vmatprep.mubr.f32.mxu0 0.0
  %5523 = vmatmul.mubr.f32.gmra.mrb[0].mxu0 %v5443
  %v5524 = vpop.f32.mrb[0].mxu0
  %v5525 = vadd.f32 0.0, %v5524
  %v5526 = vpop.f32.mrb[0].mxu0
  %5527 = vmatprep.mubr.f32.mxu0 0.0
  %5528 = vmatmul.mubr.f32.gmra.mrb[0].mxu0 %v5446
  %v5529 = vpop.f32.mrb[0].mxu0
  %v5530 = vadd.f32 0.0, %v5529
  %v5531 = vpop.f32.mrb[0].mxu0
  %5532 = vdwg.mxu0
  %5533 = vmatprep.subr.mxu0 0.0
  %5534 = vmatpush1.msra.mxu0 %v5428
  %5535 = vmatprep.subr.mxu0 0.0
  %5536 = vmatpush1.msra.mxu0 %v5429
  %5537 = vmatprep.subr.mxu0 0.0
  %5538 = vmatpush1.msra.mxu0 %v5430
  %5539 = vmatprep.subr.mxu0 0.0
  %5540 = vmatpush1.msra.mxu0 %v5431
  %5541 = vmatprep.subr.mxu0 0.0
  %5542 = vmatpush1.msra.mxu0 0.0
  %5543 = vmatprep.subr.mxu0 0.0
  %5544 = vmatpush1.msra.mxu0 0.0
  %5545 = vmatprep.subr.mxu0 0.0
  %5546 = vmatpush1.msra.mxu0 0.0
  %5547 = vmatprep.subr.mxu0 0.0
  %5548 = vmatpush1.msra.mxu0 0.0
  %5549 = vmatprep.subr.mxu0 0.0
  %5550 = vmatpush1.msra.mxu0 0.0
  %5551 = vmatprep.subr.mxu0 0.0
  %5552 = vmatpush1.msra.mxu0 0.0
  %5553 = vmatprep.subr.mxu0 0.0
  %5554 = vmatpush1.msra.mxu0 0.0
  %5555 = vmatprep.subr.mxu0 0.0
  %5556 = vmatpush1.msra.mxu0 0.0
  %5557 = vmatprep.subr.mxu0 0.0
  %5558 = vmatpush1.msra.mxu0 0.0
  %5559 = vmatprep.subr.mxu0 0.0
  %5560 = vmatpush1.msra.mxu0 0.0
  %5561 = vmatprep.subr.mxu0 0.0
  %5562 = vmatpush1.msra.mxu0 0.0
  %5563 = vmatprep.subr.mxu0 0.0
  %5564 = vmatpush1.msra.mxu0 0.0
  %5565 = vmatprep.subr.mxu0 0.0
  %5566 = vmatpush1.msra.mxu0 0.0
  %5567 = vmatprep.subr.mxu0 0.0
  %5568 = vmatpush1.msra.mxu0 0.0
  %5569 = vmatprep.subr.mxu0 0.0
  %5570 = vmatpush1.msra.mxu0 0.0
  %5571 = vmatprep.subr.mxu0 0.0
  %5572 = vmatpush1.msra.mxu0 0.0
  %5573 = vmatprep.subr.mxu0 0.0
  %5574 = vmatpush1.msra.mxu0 0.0
  %5575 = vmatprep.subr.mxu0 0.0
  %5576 = vmatpush1.msra.mxu0 0.0
  %5577 = vmatprep.subr.mxu0 0.0
  %5578 = vmatpush1.msra.mxu0 0.0
  %5579 = vmatprep.subr.mxu0 0.0
  %5580 = vmatpush1.msra.mxu0 0.0
  %5581 = vmatprep.subr.mxu0 0.0
  %5582 = vmatpush1.msra.mxu0 0.0
  %5583 = vmatprep.subr.mxu0 0.0
  %5584 = vmatpush1.msra.mxu0 0.0
  %5585 = vmatprep.subr.mxu0 0.0
  %5586 = vmatpush1.msra.mxu0 0.0
  %5587 = vmatprep.subr.mxu0 0.0
  %5588 = vmatpush1.msra.mxu0 0.0
  %5589 = vmatprep.subr.mxu0 0.0
  %5590 = vmatpush1.msra.mxu0 0.0
  %5591 = vmatprep.subr.mxu0 0.0
  %5592 = vmatpush1.msra.mxu0 0.0
  %5593 = vmatprep.subr.mxu0 0.0
  %5594 = vmatpush1.msra.mxu0 0.0
  %5595 = vmatprep.subr.mxu0 0.0
  %5596 = vmatpush1.msra.mxu0 0.0
  %5597 = vmatprep.mubr.f32.mxu0 0.0
  %5598 = vmatmul.mubr.f32.gmra.mrb[0].mxu0 %v558
  %v5599 = vpop.f32.mrb[0].mxu0
  %v5600 = vadd.f32 %v5515, %v5599
  %v5601 = vpop.f32.mrb[0].mxu0
  %5602 = vmatprep.mubr.f32.mxu0 0.0
  %5603 = vmatmul.mubr.f32.gmra.mrb[0].mxu0 %v561
  %v5604 = vpop.f32.mrb[0].mxu0
  %v5605 = vadd.f32 %v5520, %v5604
  %v5606 = vpop.f32.mrb[0].mxu0
  %5607 = vmatprep.mubr.f32.mxu0 0.0
  %5608 = vmatmul.mubr.f32.gmra.mrb[0].mxu0 %v564
  %v5609 = vpop.f32.mrb[0].mxu0
  %v5610 = vadd.f32 %v5525, %v5609
  %v5611 = vpop.f32.mrb[0].mxu0
  %5612 = vmatprep.mubr.f32.mxu0 0.0
  %5613 = vmatmul.mubr.f32.gmra.mrb[0].mxu0 %v567
  %v5614 = vpop.f32.mrb[0].mxu0
  %v5615 = vadd.f32 %v5530, %v5614
  %v5616 = vpop.f32.mrb[0].mxu0
  %5617 = vdwg.mxu0
  %v5618 = vld [vmem:[%s2 + $0x1e0] sm:$0x1]
  %v5619 = vlaneseq
  %v5620 = vshrl.u32 %v5619, 7
  %v5621 = vsub.s32 0, %v5620
  %v5622 = vrot.slane %v5618, %v5621
  %v5623 = vadd.f32 %v5600, %v5622
  %v5624 = vadd.f32 %v5605, %v5622
  %v5625 = vadd.f32 %v5610, %v5622
  %v5626 = vadd.f32 %v5615, %v5622
  %v5627 = vmax.f32 %v5623, 0.0
  %v5628 = vmax.f32 %v5624, 0.0
  %v5629 = vmax.f32 %v5625, 0.0
  %v5630 = vmax.f32 %v5626, 0.0
  %v5631 = vld [vmem:[%s2 + $0x1e8] sm:$0xff]
  %v5632 = vld [vmem:[%s2 + $0x1f0] sm:$0xff]
  %v5633 = vld [vmem:[%s2 + $0x1f8] sm:$0xff]
  %v5634 = vld [vmem:[%s2 + $0x200] sm:$0xff]
  %v5635 = vld [vmem:[%s2 + $0x208] sm:$0x1]
  %v5636 = vlaneseq
  %v5637 = vshrl.u32 %v5636, 7
  %v5638 = vsub.s32 0, %v5637
  %v5639 = vrot.slane %v5635, %v5638
  %v5641 = vsel %vm341, %v5627, 0
  %v5644 = vsel %vm341, %v5628, 0
  %v5647 = vsel %vm341, %v5629, 0
  %v5650 = vsel %vm341, %v5630, 0
  %5652 = vmatprep.subr.mxu0 0.0
  %5653 = vmatpush1.msra.mxu0 %v5631
  %5654 = vmatprep.subr.mxu0 0.0
  %5655 = vmatpush1.msra.mxu0 %v5632
  %5656 = vmatprep.subr.mxu0 0.0
  %5657 = vmatpush1.msra.mxu0 %v5633
  %5658 = vmatprep.subr.mxu0 0.0
  %5659 = vmatpush1.msra.mxu0 %v5634
  %5660 = vmatprep.subr.mxu0 0.0
  %5661 = vmatpush1.msra.mxu0 0.0
  %5662 = vmatprep.subr.mxu0 0.0
  %5663 = vmatpush1.msra.mxu0 0.0
  %5664 = vmatprep.subr.mxu0 0.0
  %5665 = vmatpush1.msra.mxu0 0.0
  %5666 = vmatprep.subr.mxu0 0.0
  %5667 = vmatpush1.msra.mxu0 0.0
  %5668 = vmatprep.subr.mxu0 0.0
  %5669 = vmatpush1.msra.mxu0 0.0
  %5670 = vmatprep.subr.mxu0 0.0
  %5671 = vmatpush1.msra.mxu0 0.0
  %5672 = vmatprep.subr.mxu0 0.0
  %5673 = vmatpush1.msra.mxu0 0.0
  %5674 = vmatprep.subr.mxu0 0.0
  %5675 = vmatpush1.msra.mxu0 0.0
  %5676 = vmatprep.subr.mxu0 0.0
  %5677 = vmatpush1.msra.mxu0 0.0
  %5678 = vmatprep.subr.mxu0 0.0
  %5679 = vmatpush1.msra.mxu0 0.0
  %5680 = vmatprep.subr.mxu0 0.0
  %5681 = vmatpush1.msra.mxu0 0.0
  %5682 = vmatprep.subr.mxu0 0.0
  %5683 = vmatpush1.msra.mxu0 0.0
  %5684 = vmatprep.subr.mxu0 0.0
  %5685 = vmatpush1.msra.mxu0 0.0
  %5686 = vmatprep.subr.mxu0 0.0
  %5687 = vmatpush1.msra.mxu0 0.0
  %5688 = vmatprep.subr.mxu0 0.0
  %5689 = vmatpush1.msra.mxu0 0.0
  %5690 = vmatprep.subr.mxu0 0.0
  %5691 = vmatpush1.msra.mxu0 0.0
  %5692 = vmatprep.subr.mxu0 0.0
  %5693 = vmatpush1.msra.mxu0 0.0
  %5694 = vmatprep.subr.mxu0 0.0
  %5695 = vmatpush1.msra.mxu0 0.0
  %5696 = vmatprep.subr.mxu0 0.0
  %5697 = vmatpush1.msra.mxu0 0.0
  %5698 = vmatprep.subr.mxu0 0.0
  %5699 = vmatpush1.msra.mxu0 0.0
  %5700 = vmatprep.subr.mxu0 0.0
  %5701 = vmatpush1.msra.mxu0 0.0
  %5702 = vmatprep.subr.mxu0 0.0
  %5703 = vmatpush1.msra.mxu0 0.0
  %5704 = vmatprep.subr.mxu0 0.0
  %5705 = vmatpush1.msra.mxu0 0.0
  %5706 = vmatprep.subr.mxu0 0.0
  %5707 = vmatpush1.msra.mxu0 0.0
  %5708 = vmatprep.subr.mxu0 0.0
  %5709 = vmatpush1.msra.mxu0 0.0
  %5710 = vmatprep.subr.mxu0 0.0
  %5711 = vmatpush1.msra.mxu0 0.0
  %5712 = vmatprep.subr.mxu0 0.0
  %5713 = vmatpush1.msra.mxu0 0.0
  %5714 = vmatprep.subr.mxu0 0.0
  %5715 = vmatpush1.msra.mxu0 0.0
  %5716 = vmatprep.mubr.f32.mxu0 0.0
  %5717 = vmatmul.mubr.f32.gmra.mrb[0].mxu0 %v5641
  %v5718 = vpop.f32.mrb[0].mxu0
  %v5719 = vadd.f32 %v5639, %v5718
  %v5720 = vpop.f32.mrb[0].mxu0
  %5721 = vmatprep.mubr.f32.mxu0 0.0
  %5722 = vmatmul.mubr.f32.gmra.mrb[0].mxu0 %v5644
  %v5723 = vpop.f32.mrb[0].mxu0
  %v5724 = vadd.f32 %v5639, %v5723
  %v5725 = vpop.f32.mrb[0].mxu0
  %5726 = vmatprep.mubr.f32.mxu0 0.0
  %5727 = vmatmul.mubr.f32.gmra.mrb[0].mxu0 %v5647
  %v5728 = vpop.f32.mrb[0].mxu0
  %v5729 = vadd.f32 %v5639, %v5728
  %v5730 = vpop.f32.mrb[0].mxu0
  %5731 = vmatprep.mubr.f32.mxu0 0.0
  %5732 = vmatmul.mubr.f32.gmra.mrb[0].mxu0 %v5650
  %v5733 = vpop.f32.mrb[0].mxu0
  %v5734 = vadd.f32 %v5639, %v5733
  %v5735 = vpop.f32.mrb[0].mxu0
  %5736 = vdwg.mxu0
  %v5737 = vmax.f32 %v5719, 0.0
  %v5738 = vmax.f32 %v5724, 0.0
  %v5739 = vmax.f32 %v5729, 0.0
  %v5740 = vmax.f32 %v5734, 0.0
  %v5741 = vld [vmem:[%s2 + $0x210] sm:$0xff]
  %v5742 = vld [vmem:[%s2 + $0x218] sm:$0xff]
  %v5743 = vld [vmem:[%s2 + $0x220] sm:$0xff]
  %v5744 = vld [vmem:[%s2 + $0x228] sm:$0xff]
  %v5745 = vld [vmem:[%s2 + $0x230] sm:$0x1]
  %v5746 = vlaneseq
  %v5747 = vshrl.u32 %v5746, 7
  %v5748 = vsub.s32 0, %v5747
  %v5749 = vrot.slane %v5745, %v5748
  %v5751 = vsel %vm341, %v5737, 0
  %v5754 = vsel %vm341, %v5738, 0
  %v5757 = vsel %vm341, %v5739, 0
  %v5760 = vsel %vm341, %v5740, 0
  %5762 = vmatprep.subr.mxu0 0.0
  %5763 = vmatpush1.msra.mxu0 %v5741
  %5764 = vmatprep.subr.mxu0 0.0
  %5765 = vmatpush1.msra.mxu0 %v5742
  %5766 = vmatprep.subr.mxu0 0.0
  %5767 = vmatpush1.msra.mxu0 %v5743
  %5768 = vmatprep.subr.mxu0 0.0
  %5769 = vmatpush1.msra.mxu0 %v5744
  %5770 = vmatprep.subr.mxu0 0.0
  %5771 = vmatpush1.msra.mxu0 0.0
  %5772 = vmatprep.subr.mxu0 0.0
  %5773 = vmatpush1.msra.mxu0 0.0
  %5774 = vmatprep.subr.mxu0 0.0
  %5775 = vmatpush1.msra.mxu0 0.0
  %5776 = vmatprep.subr.mxu0 0.0
  %5777 = vmatpush1.msra.mxu0 0.0
  %5778 = vmatprep.subr.mxu0 0.0
  %5779 = vmatpush1.msra.mxu0 0.0
  %5780 = vmatprep.subr.mxu0 0.0
  %5781 = vmatpush1.msra.mxu0 0.0
  %5782 = vmatprep.subr.mxu0 0.0
  %5783 = vmatpush1.msra.mxu0 0.0
  %5784 = vmatprep.subr.mxu0 0.0
  %5785 = vmatpush1.msra.mxu0 0.0
  %5786 = vmatprep.subr.mxu0 0.0
  %5787 = vmatpush1.msra.mxu0 0.0
  %5788 = vmatprep.subr.mxu0 0.0
  %5789 = vmatpush1.msra.mxu0 0.0
  %5790 = vmatprep.subr.mxu0 0.0
  %5791 = vmatpush1.msra.mxu0 0.0
  %5792 = vmatprep.subr.mxu0 0.0
  %5793 = vmatpush1.msra.mxu0 0.0
  %5794 = vmatprep.subr.mxu0 0.0
  %5795 = vmatpush1.msra.mxu0 0.0
  %5796 = vmatprep.subr.mxu0 0.0
  %5797 = vmatpush1.msra.mxu0 0.0
  %5798 = vmatprep.subr.mxu0 0.0
  %5799 = vmatpush1.msra.mxu0 0.0
  %5800 = vmatprep.subr.mxu0 0.0
  %5801 = vmatpush1.msra.mxu0 0.0
  %5802 = vmatprep.subr.mxu0 0.0
  %5803 = vmatpush1.msra.mxu0 0.0
  %5804 = vmatprep.subr.mxu0 0.0
  %5805 = vmatpush1.msra.mxu0 0.0
  %5806 = vmatprep.subr.mxu0 0.0
  %5807 = vmatpush1.msra.mxu0 0.0
  %5808 = vmatprep.subr.mxu0 0.0
  %5809 = vmatpush1.msra.mxu0 0.0
  %5810 = vmatprep.subr.mxu0 0.0
  %5811 = vmatpush1.msra.mxu0 0.0
  %5812 = vmatprep.subr.mxu0 0.0
  %5813 = vmatpush1.msra.mxu0 0.0
  %5814 = vmatprep.subr.mxu0 0.0
  %5815 = vmatpush1.msra.mxu0 0.0
  %5816 = vmatprep.subr.mxu0 0.0
  %5817 = vmatpush1.msra.mxu0 0.0
  %5818 = vmatprep.subr.mxu0 0.0
  %5819 = vmatpush1.msra.mxu0 0.0
  %5820 = vmatprep.subr.mxu0 0.0
  %5821 = vmatpush1.msra.mxu0 0.0
  %5822 = vmatprep.subr.mxu0 0.0
  %5823 = vmatpush1.msra.mxu0 0.0
  %5824 = vmatprep.subr.mxu0 0.0
  %5825 = vmatpush1.msra.mxu0 0.0
  %5826 = vmatprep.mubr.f32.mxu0 0.0
  %5827 = vmatmul.mubr.f32.gmra.mrb[0].mxu0 %v5751
  %v5828 = vpop.f32.mrb[0].mxu0
  %v5829 = vadd.f32 %v5749, %v5828
  %v5830 = vpop.f32.mrb[0].mxu0
  %5831 = vmatprep.mubr.f32.mxu0 0.0
  %5832 = vmatmul.mubr.f32.gmra.mrb[0].mxu0 %v5754
  %v5833 = vpop.f32.mrb[0].mxu0
  %v5834 = vadd.f32 %v5749, %v5833
  %v5835 = vpop.f32.mrb[0].mxu0
  %5836 = vmatprep.mubr.f32.mxu0 0.0
  %5837 = vmatmul.mubr.f32.gmra.mrb[0].mxu0 %v5757
  %v5838 = vpop.f32.mrb[0].mxu0
  %v5839 = vadd.f32 %v5749, %v5838
  %v5840 = vpop.f32.mrb[0].mxu0
  %5841 = vmatprep.mubr.f32.mxu0 0.0
  %5842 = vmatmul.mubr.f32.gmra.mrb[0].mxu0 %v5760
  %v5843 = vpop.f32.mrb[0].mxu0
  %v5844 = vadd.f32 %v5749, %v5843
  %v5845 = vpop.f32.mrb[0].mxu0
  %5846 = vdwg.mxu0
  %5847 = vrot.lane.b32.xlu0 %v3171, 32
  %v5848 = vpop.permute.xlu0 %5847
  %5849 = vrot.lane.b32.xlu0 %v3172, 32
  %v5850 = vpop.permute.xlu0 %5849
  %5851 = vrot.lane.b32.xlu0 %v3173, 32
  %v5852 = vpop.permute.xlu0 %5851
  %5853 = vrot.lane.b32.xlu0 %v3174, 32
  %v5854 = vpop.permute.xlu0 %5853
  %v5859 = vsel %vm341, %v5829, %v5848
  %v5860 = vsel %vm341, %v5834, %v5850
  %v5861 = vsel %vm341, %v5839, %v5852
  %v5862 = vsel %vm341, %v5844, %v5854
  %v5863 = vld [vmem:[%s2 + $0x238] sm:$0xff]
  %v5864 = vld [vmem:[%s2 + $0x240] sm:$0xff]
  %v5865 = vld [vmem:[%s2 + $0x248] sm:$0xff]
  %v5866 = vld [vmem:[%s2 + $0x250] sm:$0xff]
  %v5867 = vld [vmem:[%s2 + $0x258] sm:$0xff]
  %v5868 = vld [vmem:[%s2 + $0x260] sm:$0xff]
  %v5869 = vld [vmem:[%s2 + $0x268] sm:$0xff]
  %v5870 = vld [vmem:[%s2 + $0x270] sm:$0xff]
  %v5871 = vld [vmem:[%s2 + $0x278] sm:$0x1]
  %v5872 = vlaneseq
  %v5873 = vshrl.u32 %v5872, 7
  %v5874 = vsub.s32 0, %v5873
  %v5875 = vrot.slane %v5871, %v5874
  %v5877 = vsel %vm2687, %v5859, 0
  %v5880 = vsel %vm2687, %v5860, 0
  %v5883 = vsel %vm2687, %v5861, 0
  %v5886 = vsel %vm2687, %v5862, 0
  %5888 = vmatprep.subr.mxu0 0.0
  %5889 = vmatpush1.msra.mxu0 %v5863
  %5890 = vmatprep.subr.mxu0 0.0
  %5891 = vmatpush1.msra.mxu0 %v5864
  %5892 = vmatprep.subr.mxu0 0.0
  %5893 = vmatpush1.msra.mxu0 %v5865
  %5894 = vmatprep.subr.mxu0 0.0
  %5895 = vmatpush1.msra.mxu0 %v5866
  %5896 = vmatprep.subr.mxu0 0.0
  %5897 = vmatpush1.msra.mxu0 %v5867
  %5898 = vmatprep.subr.mxu0 0.0
  %5899 = vmatpush1.msra.mxu0 %v5868
  %5900 = vmatprep.subr.mxu0 0.0
  %5901 = vmatpush1.msra.mxu0 %v5869
  %5902 = vmatprep.subr.mxu0 0.0
  %5903 = vmatpush1.msra.mxu0 %v5870
  %5904 = vmatprep.subr.mxu0 0.0
  %5905 = vmatpush1.msra.mxu0 0.0
  %5906 = vmatprep.subr.mxu0 0.0
  %5907 = vmatpush1.msra.mxu0 0.0
  %5908 = vmatprep.subr.mxu0 0.0
  %5909 = vmatpush1.msra.mxu0 0.0
  %5910 = vmatprep.subr.mxu0 0.0
  %5911 = vmatpush1.msra.mxu0 0.0
  %5912 = vmatprep.subr.mxu0 0.0
  %5913 = vmatpush1.msra.mxu0 0.0
  %5914 = vmatprep.subr.mxu0 0.0
  %5915 = vmatpush1.msra.mxu0 0.0
  %5916 = vmatprep.subr.mxu0 0.0
  %5917 = vmatpush1.msra.mxu0 0.0
  %5918 = vmatprep.subr.mxu0 0.0
  %5919 = vmatpush1.msra.mxu0 0.0
  %5920 = vmatprep.subr.mxu0 0.0
  %5921 = vmatpush1.msra.mxu0 0.0
  %5922 = vmatprep.subr.mxu0 0.0
  %5923 = vmatpush1.msra.mxu0 0.0
  %5924 = vmatprep.subr.mxu0 0.0
  %5925 = vmatpush1.msra.mxu0 0.0
  %5926 = vmatprep.subr.mxu0 0.0
  %5927 = vmatpush1.msra.mxu0 0.0
  %5928 = vmatprep.subr.mxu0 0.0
  %5929 = vmatpush1.msra.mxu0 0.0
  %5930 = vmatprep.subr.mxu0 0.0
  %5931 = vmatpush1.msra.mxu0 0.0
  %5932 = vmatprep.subr.mxu0 0.0
  %5933 = vmatpush1.msra.mxu0 0.0
  %5934 = vmatprep.subr.mxu0 0.0
  %5935 = vmatpush1.msra.mxu0 0.0
  %5936 = vmatprep.subr.mxu0 0.0
  %5937 = vmatpush1.msra.mxu0 0.0
  %5938 = vmatprep.subr.mxu0 0.0
  %5939 = vmatpush1.msra.mxu0 0.0
  %5940 = vmatprep.subr.mxu0 0.0
  %5941 = vmatpush1.msra.mxu0 0.0
  %5942 = vmatprep.subr.mxu0 0.0
  %5943 = vmatpush1.msra.mxu0 0.0
  %5944 = vmatprep.subr.mxu0 0.0
  %5945 = vmatpush1.msra.mxu0 0.0
  %5946 = vmatprep.subr.mxu0 0.0
  %5947 = vmatpush1.msra.mxu0 0.0
  %5948 = vmatprep.subr.mxu0 0.0
  %5949 = vmatpush1.msra.mxu0 0.0
  %5950 = vmatprep.subr.mxu0 0.0
  %5951 = vmatpush1.msra.mxu0 0.0
  %5952 = vmatprep.mubr.f32.mxu0 0.0
  %5953 = vmatmul.mubr.f32.gmra.mrb[0].mxu0 %v5877
  %v5954 = vpop.f32.mrb[0].mxu0
  %v5955 = vadd.f32 %v5875, %v5954
  %v5956 = vpop.f32.mrb[0].mxu0
  %5957 = vmatprep.mubr.f32.mxu0 0.0
  %5958 = vmatmul.mubr.f32.gmra.mrb[0].mxu0 %v5880
  %v5959 = vpop.f32.mrb[0].mxu0
  %v5960 = vadd.f32 %v5875, %v5959
  %v5961 = vpop.f32.mrb[0].mxu0
  %5962 = vmatprep.mubr.f32.mxu0 0.0
  %5963 = vmatmul.mubr.f32.gmra.mrb[0].mxu0 %v5883
  %v5964 = vpop.f32.mrb[0].mxu0
  %v5965 = vadd.f32 %v5875, %v5964
  %v5966 = vpop.f32.mrb[0].mxu0
  %5967 = vmatprep.mubr.f32.mxu0 0.0
  %5968 = vmatmul.mubr.f32.gmra.mrb[0].mxu0 %v5886
  %v5969 = vpop.f32.mrb[0].mxu0
  %v5970 = vadd.f32 %v5875, %v5969
  %v5971 = vpop.f32.mrb[0].mxu0
  %5972 = vdwg.mxu0
  %v5973 = vxor.u32 %v5955, 2147483648
  %v5974 = vxor.u32 %v5960, 2147483648
  %v5975 = vxor.u32 %v5965, 2147483648
  %v5976 = vxor.u32 %v5970, 2147483648
  %v5977 = vmul.f32 %v5973, 1.442695
  %v5978 = vpow.pop %v5977
  %v5979 = vmul.f32 %v5974, 1.442695
  %v5980 = vpow.pop %v5979
  %v5981 = vmul.f32 %v5975, 1.442695
  %v5982 = vpow.pop %v5981
  %v5983 = vmul.f32 %v5976, 1.442695
  %v5984 = vpow.pop %v5983
  %v5985 = vadd.f32 %v5978, 1.0
  %v5986 = vadd.f32 %v5980, 1.0
  %v5987 = vadd.f32 %v5982, 1.0
  %v5988 = vadd.f32 %v5984, 1.0
  %v5989 = vrcp.pop %v5985
  %v5990 = vmul.f32 1.0, %v5989
  %v5991 = vrcp.pop %v5986
  %v5992 = vmul.f32 1.0, %v5991
  %v5993 = vrcp.pop %v5987
  %v5994 = vmul.f32 1.0, %v5993
  %v5995 = vrcp.pop %v5988
  %v5996 = vmul.f32 1.0, %v5995
  %v5997 = vld [vmem:[%s2 + $0x280] sm:$0xff]
  %v5998 = vld [vmem:[%s2 + $0x288] sm:$0xff]
  %v5999 = vld [vmem:[%s2 + $0x290] sm:$0xff]
  %v6000 = vld [vmem:[%s2 + $0x298] sm:$0xff]
  %v6001 = vld [vmem:[%s2 + $0x2a0] sm:$0xff]
  %v6002 = vld [vmem:[%s2 + $0x2a8] sm:$0xff]
  %v6003 = vld [vmem:[%s2 + $0x2b0] sm:$0xff]
  %v6004 = vld [vmem:[%s2 + $0x2b8] sm:$0xff]
  %v6005 = vld [vmem:[%s2 + $0x2c0] sm:$0x1]
  %v6006 = vlaneseq
  %v6007 = vshrl.u32 %v6006, 7
  %v6008 = vsub.s32 0, %v6007
  %v6009 = vrot.slane %v6005, %v6008
  %6010 = vmatprep.subr.mxu0 0.0
  %6011 = vmatpush1.msra.mxu0 %v5997
  %6012 = vmatprep.subr.mxu0 0.0
  %6013 = vmatpush1.msra.mxu0 %v5998
  %6014 = vmatprep.subr.mxu0 0.0
  %6015 = vmatpush1.msra.mxu0 %v5999
  %6016 = vmatprep.subr.mxu0 0.0
  %6017 = vmatpush1.msra.mxu0 %v6000
  %6018 = vmatprep.subr.mxu0 0.0
  %6019 = vmatpush1.msra.mxu0 %v6001
  %6020 = vmatprep.subr.mxu0 0.0
  %6021 = vmatpush1.msra.mxu0 %v6002
  %6022 = vmatprep.subr.mxu0 0.0
  %6023 = vmatpush1.msra.mxu0 %v6003
  %6024 = vmatprep.subr.mxu0 0.0
  %6025 = vmatpush1.msra.mxu0 %v6004
  %6026 = vmatprep.subr.mxu0 0.0
  %6027 = vmatpush1.msra.mxu0 0.0
  %6028 = vmatprep.subr.mxu0 0.0
  %6029 = vmatpush1.msra.mxu0 0.0
  %6030 = vmatprep.subr.mxu0 0.0
  %6031 = vmatpush1.msra.mxu0 0.0
  %6032 = vmatprep.subr.mxu0 0.0
  %6033 = vmatpush1.msra.mxu0 0.0
  %6034 = vmatprep.subr.mxu0 0.0
  %6035 = vmatpush1.msra.mxu0 0.0
  %6036 = vmatprep.subr.mxu0 0.0
  %6037 = vmatpush1.msra.mxu0 0.0
  %6038 = vmatprep.subr.mxu0 0.0
  %6039 = vmatpush1.msra.mxu0 0.0
  %6040 = vmatprep.subr.mxu0 0.0
  %6041 = vmatpush1.msra.mxu0 0.0
  %6042 = vmatprep.subr.mxu0 0.0
  %6043 = vmatpush1.msra.mxu0 0.0
  %6044 = vmatprep.subr.mxu0 0.0
  %6045 = vmatpush1.msra.mxu0 0.0
  %6046 = vmatprep.subr.mxu0 0.0
  %6047 = vmatpush1.msra.mxu0 0.0
  %6048 = vmatprep.subr.mxu0 0.0
  %6049 = vmatpush1.msra.mxu0 0.0
  %6050 = vmatprep.subr.mxu0 0.0
  %6051 = vmatpush1.msra.mxu0 0.0
  %6052 = vmatprep.subr.mxu0 0.0
  %6053 = vmatpush1.msra.mxu0 0.0
  %6054 = vmatprep.subr.mxu0 0.0
  %6055 = vmatpush1.msra.mxu0 0.0
  %6056 = vmatprep.subr.mxu0 0.0
  %6057 = vmatpush1.msra.mxu0 0.0
  %6058 = vmatprep.subr.mxu0 0.0
  %6059 = vmatpush1.msra.mxu0 0.0
  %6060 = vmatprep.subr.mxu0 0.0
  %6061 = vmatpush1.msra.mxu0 0.0
  %6062 = vmatprep.subr.mxu0 0.0
  %6063 = vmatpush1.msra.mxu0 0.0
  %6064 = vmatprep.subr.mxu0 0.0
  %6065 = vmatpush1.msra.mxu0 0.0
  %6066 = vmatprep.subr.mxu0 0.0
  %6067 = vmatpush1.msra.mxu0 0.0
  %6068 = vmatprep.subr.mxu0 0.0
  %6069 = vmatpush1.msra.mxu0 0.0
  %6070 = vmatprep.subr.mxu0 0.0
  %6071 = vmatpush1.msra.mxu0 0.0
  %6072 = vmatprep.subr.mxu0 0.0
  %6073 = vmatpush1.msra.mxu0 0.0
  %6074 = vmatprep.mubr.f32.mxu0 0.0
  %6075 = vmatmul.mubr.f32.gmra.mrb[0].mxu0 %v5877
  %v6076 = vpop.f32.mrb[0].mxu0
  %v6077 = vadd.f32 %v6009, %v6076
  %v6078 = vpop.f32.mrb[0].mxu0
  %6079 = vmatprep.mubr.f32.mxu0 0.0
  %6080 = vmatmul.mubr.f32.gmra.mrb[0].mxu0 %v5880
  %v6081 = vpop.f32.mrb[0].mxu0
  %v6082 = vadd.f32 %v6009, %v6081
  %v6083 = vpop.f32.mrb[0].mxu0
  %6084 = vmatprep.mubr.f32.mxu0 0.0
  %6085 = vmatmul.mubr.f32.gmra.mrb[0].mxu0 %v5883
  %v6086 = vpop.f32.mrb[0].mxu0
  %v6087 = vadd.f32 %v6009, %v6086
  %v6088 = vpop.f32.mrb[0].mxu0
  %6089 = vmatprep.mubr.f32.mxu0 0.0
  %6090 = vmatmul.mubr.f32.gmra.mrb[0].mxu0 %v5886
  %v6091 = vpop.f32.mrb[0].mxu0
  %v6092 = vadd.f32 %v6009, %v6091
  %v6093 = vpop.f32.mrb[0].mxu0
  %6094 = vdwg.mxu0
  %v6095 = vxor.u32 %v6077, 2147483648
  %v6096 = vxor.u32 %v6082, 2147483648
  %v6097 = vxor.u32 %v6087, 2147483648
  %v6098 = vxor.u32 %v6092, 2147483648
  %v6099 = vmul.f32 %v6095, 1.442695
  %v6100 = vpow.pop %v6099
  %v6101 = vmul.f32 %v6096, 1.442695
  %v6102 = vpow.pop %v6101
  %v6103 = vmul.f32 %v6097, 1.442695
  %v6104 = vpow.pop %v6103
  %v6105 = vmul.f32 %v6098, 1.442695
  %v6106 = vpow.pop %v6105
  %v6107 = vadd.f32 %v6100, 1.0
  %v6108 = vadd.f32 %v6102, 1.0
  %v6109 = vadd.f32 %v6104, 1.0
  %v6110 = vadd.f32 %v6106, 1.0
  %v6111 = vrcp.pop %v6107
  %v6112 = vmul.f32 1.0, %v6111
  %v6113 = vrcp.pop %v6108
  %v6114 = vmul.f32 1.0, %v6113
  %v6115 = vrcp.pop %v6109
  %v6116 = vmul.f32 1.0, %v6115
  %v6117 = vrcp.pop %v6110
  %v6118 = vmul.f32 1.0, %v6117
  %v6119 = vld [vmem:[%s2 + $0x2c8] sm:$0xff]
  %v6120 = vld [vmem:[%s2 + $0x2d0] sm:$0xff]
  %v6121 = vld [vmem:[%s2 + $0x2d8] sm:$0xff]
  %v6122 = vld [vmem:[%s2 + $0x2e0] sm:$0xff]
  %v6123 = vld [vmem:[%s2 + $0x2e8] sm:$0xff]
  %v6124 = vld [vmem:[%s2 + $0x2f0] sm:$0xff]
  %v6125 = vld [vmem:[%s2 + $0x2f8] sm:$0xff]
  %v6126 = vld [vmem:[%s2 + $0x300] sm:$0xff]
  %v6127 = vld [vmem:[%s2 + $0x308] sm:$0x1]
  %v6128 = vlaneseq
  %v6129 = vshrl.u32 %v6128, 7
  %v6130 = vsub.s32 0, %v6129
  %v6131 = vrot.slane %v6127, %v6130
  %6132 = vmatprep.subr.mxu0 0.0
  %6133 = vmatpush1.msra.mxu0 %v6119
  %6134 = vmatprep.subr.mxu0 0.0
  %6135 = vmatpush1.msra.mxu0 %v6120
  %6136 = vmatprep.subr.mxu0 0.0
  %6137 = vmatpush1.msra.mxu0 %v6121
  %6138 = vmatprep.subr.mxu0 0.0
  %6139 = vmatpush1.msra.mxu0 %v6122
  %6140 = vmatprep.subr.mxu0 0.0
  %6141 = vmatpush1.msra.mxu0 %v6123
  %6142 = vmatprep.subr.mxu0 0.0
  %6143 = vmatpush1.msra.mxu0 %v6124
  %6144 = vmatprep.subr.mxu0 0.0
  %6145 = vmatpush1.msra.mxu0 %v6125
  %6146 = vmatprep.subr.mxu0 0.0
  %6147 = vmatpush1.msra.mxu0 %v6126
  %6148 = vmatprep.subr.mxu0 0.0
  %6149 = vmatpush1.msra.mxu0 0.0
  %6150 = vmatprep.subr.mxu0 0.0
  %6151 = vmatpush1.msra.mxu0 0.0
  %6152 = vmatprep.subr.mxu0 0.0
  %6153 = vmatpush1.msra.mxu0 0.0
  %6154 = vmatprep.subr.mxu0 0.0
  %6155 = vmatpush1.msra.mxu0 0.0
  %6156 = vmatprep.subr.mxu0 0.0
  %6157 = vmatpush1.msra.mxu0 0.0
  %6158 = vmatprep.subr.mxu0 0.0
  %6159 = vmatpush1.msra.mxu0 0.0
  %6160 = vmatprep.subr.mxu0 0.0
  %6161 = vmatpush1.msra.mxu0 0.0
  %6162 = vmatprep.subr.mxu0 0.0
  %6163 = vmatpush1.msra.mxu0 0.0
  %6164 = vmatprep.subr.mxu0 0.0
  %6165 = vmatpush1.msra.mxu0 0.0
  %6166 = vmatprep.subr.mxu0 0.0
  %6167 = vmatpush1.msra.mxu0 0.0
  %6168 = vmatprep.subr.mxu0 0.0
  %6169 = vmatpush1.msra.mxu0 0.0
  %6170 = vmatprep.subr.mxu0 0.0
  %6171 = vmatpush1.msra.mxu0 0.0
  %6172 = vmatprep.subr.mxu0 0.0
  %6173 = vmatpush1.msra.mxu0 0.0
  %6174 = vmatprep.subr.mxu0 0.0
  %6175 = vmatpush1.msra.mxu0 0.0
  %6176 = vmatprep.subr.mxu0 0.0
  %6177 = vmatpush1.msra.mxu0 0.0
  %6178 = vmatprep.subr.mxu0 0.0
  %6179 = vmatpush1.msra.mxu0 0.0
  %6180 = vmatprep.subr.mxu0 0.0
  %6181 = vmatpush1.msra.mxu0 0.0
  %6182 = vmatprep.subr.mxu0 0.0
  %6183 = vmatpush1.msra.mxu0 0.0
  %6184 = vmatprep.subr.mxu0 0.0
  %6185 = vmatpush1.msra.mxu0 0.0
  %6186 = vmatprep.subr.mxu0 0.0
  %6187 = vmatpush1.msra.mxu0 0.0
  %6188 = vmatprep.subr.mxu0 0.0
  %6189 = vmatpush1.msra.mxu0 0.0
  %6190 = vmatprep.subr.mxu0 0.0
  %6191 = vmatpush1.msra.mxu0 0.0
  %6192 = vmatprep.subr.mxu0 0.0
  %6193 = vmatpush1.msra.mxu0 0.0
  %6194 = vmatprep.subr.mxu0 0.0
  %6195 = vmatpush1.msra.mxu0 0.0
  %6196 = vmatprep.mubr.f32.mxu0 0.0
  %6197 = vmatmul.mubr.f32.gmra.mrb[0].mxu0 %v5877
  %v6198 = vpop.f32.mrb[0].mxu0
  %v6199 = vadd.f32 %v6131, %v6198
  %v6200 = vpop.f32.mrb[0].mxu0
  %6201 = vmatprep.mubr.f32.mxu0 0.0
  %6202 = vmatmul.mubr.f32.gmra.mrb[0].mxu0 %v5880
  %v6203 = vpop.f32.mrb[0].mxu0
  %v6204 = vadd.f32 %v6131, %v6203
  %v6205 = vpop.f32.mrb[0].mxu0
  %6206 = vmatprep.mubr.f32.mxu0 0.0
  %6207 = vmatmul.mubr.f32.gmra.mrb[0].mxu0 %v5883
  %v6208 = vpop.f32.mrb[0].mxu0
  %v6209 = vadd.f32 %v6131, %v6208
  %v6210 = vpop.f32.mrb[0].mxu0
  %6211 = vmatprep.mubr.f32.mxu0 0.0
  %6212 = vmatmul.mubr.f32.gmra.mrb[0].mxu0 %v5886
  %v6213 = vpop.f32.mrb[0].mxu0
  %v6214 = vadd.f32 %v6131, %v6213
  %v6215 = vpop.f32.mrb[0].mxu0
  %6216 = vdwg.mxu0
  %v6217 = vtanh.pop %v6199
  %v6218 = vtanh.pop %v6204
  %v6219 = vtanh.pop %v6209
  %v6220 = vtanh.pop %v6214
  %v6221 = vld [vmem:[%s2 + $0x310] sm:$0xff]
  %v6222 = vld [vmem:[%s2 + $0x318] sm:$0xff]
  %v6223 = vld [vmem:[%s2 + $0x320] sm:$0xff]
  %v6224 = vld [vmem:[%s2 + $0x328] sm:$0xff]
  %v6225 = vld [vmem:[%s2 + $0x330] sm:$0xff]
  %v6226 = vld [vmem:[%s2 + $0x338] sm:$0xff]
  %v6227 = vld [vmem:[%s2 + $0x340] sm:$0xff]
  %v6228 = vld [vmem:[%s2 + $0x348] sm:$0xff]
  %v6229 = vld [vmem:[%s2 + $0x350] sm:$0x1]
  %v6230 = vlaneseq
  %v6231 = vshrl.u32 %v6230, 7
  %v6232 = vsub.s32 0, %v6231
  %v6233 = vrot.slane %v6229, %v6232
  %6234 = vmatprep.subr.mxu0 0.0
  %6235 = vmatpush1.msra.mxu0 %v6221
  %6236 = vmatprep.subr.mxu0 0.0
  %6237 = vmatpush1.msra.mxu0 %v6222
  %6238 = vmatprep.subr.mxu0 0.0
  %6239 = vmatpush1.msra.mxu0 %v6223
  %6240 = vmatprep.subr.mxu0 0.0
  %6241 = vmatpush1.msra.mxu0 %v6224
  %6242 = vmatprep.subr.mxu0 0.0
  %6243 = vmatpush1.msra.mxu0 %v6225
  %6244 = vmatprep.subr.mxu0 0.0
  %6245 = vmatpush1.msra.mxu0 %v6226
  %6246 = vmatprep.subr.mxu0 0.0
  %6247 = vmatpush1.msra.mxu0 %v6227
  %6248 = vmatprep.subr.mxu0 0.0
  %6249 = vmatpush1.msra.mxu0 %v6228
  %6250 = vmatprep.subr.mxu0 0.0
  %6251 = vmatpush1.msra.mxu0 0.0
  %6252 = vmatprep.subr.mxu0 0.0
  %6253 = vmatpush1.msra.mxu0 0.0
  %6254 = vmatprep.subr.mxu0 0.0
  %6255 = vmatpush1.msra.mxu0 0.0
  %6256 = vmatprep.subr.mxu0 0.0
  %6257 = vmatpush1.msra.mxu0 0.0
  %6258 = vmatprep.subr.mxu0 0.0
  %6259 = vmatpush1.msra.mxu0 0.0
  %6260 = vmatprep.subr.mxu0 0.0
  %6261 = vmatpush1.msra.mxu0 0.0
  %6262 = vmatprep.subr.mxu0 0.0
  %6263 = vmatpush1.msra.mxu0 0.0
  %6264 = vmatprep.subr.mxu0 0.0
  %6265 = vmatpush1.msra.mxu0 0.0
  %6266 = vmatprep.subr.mxu0 0.0
  %6267 = vmatpush1.msra.mxu0 0.0
  %6268 = vmatprep.subr.mxu0 0.0
  %6269 = vmatpush1.msra.mxu0 0.0
  %6270 = vmatprep.subr.mxu0 0.0
  %6271 = vmatpush1.msra.mxu0 0.0
  %6272 = vmatprep.subr.mxu0 0.0
  %6273 = vmatpush1.msra.mxu0 0.0
  %6274 = vmatprep.subr.mxu0 0.0
  %6275 = vmatpush1.msra.mxu0 0.0
  %6276 = vmatprep.subr.mxu0 0.0
  %6277 = vmatpush1.msra.mxu0 0.0
  %6278 = vmatprep.subr.mxu0 0.0
  %6279 = vmatpush1.msra.mxu0 0.0
  %6280 = vmatprep.subr.mxu0 0.0
  %6281 = vmatpush1.msra.mxu0 0.0
  %6282 = vmatprep.subr.mxu0 0.0
  %6283 = vmatpush1.msra.mxu0 0.0
  %6284 = vmatprep.subr.mxu0 0.0
  %6285 = vmatpush1.msra.mxu0 0.0
  %6286 = vmatprep.subr.mxu0 0.0
  %6287 = vmatpush1.msra.mxu0 0.0
  %6288 = vmatprep.subr.mxu0 0.0
  %6289 = vmatpush1.msra.mxu0 0.0
  %6290 = vmatprep.subr.mxu0 0.0
  %6291 = vmatpush1.msra.mxu0 0.0
  %6292 = vmatprep.subr.mxu0 0.0
  %6293 = vmatpush1.msra.mxu0 0.0
  %6294 = vmatprep.subr.mxu0 0.0
  %6295 = vmatpush1.msra.mxu0 0.0
  %6296 = vmatprep.subr.mxu0 0.0
  %6297 = vmatpush1.msra.mxu0 0.0
  %6298 = vmatprep.mubr.f32.mxu0 0.0
  %6299 = vmatmul.mubr.f32.gmra.mrb[0].mxu0 %v5877
  %v6300 = vpop.f32.mrb[0].mxu0
  %v6301 = vadd.f32 %v6233, %v6300
  %v6302 = vpop.f32.mrb[0].mxu0
  %6303 = vmatprep.mubr.f32.mxu0 0.0
  %6304 = vmatmul.mubr.f32.gmra.mrb[0].mxu0 %v5880
  %v6305 = vpop.f32.mrb[0].mxu0
  %v6306 = vadd.f32 %v6233, %v6305
  %v6307 = vpop.f32.mrb[0].mxu0
  %6308 = vmatprep.mubr.f32.mxu0 0.0
  %6309 = vmatmul.mubr.f32.gmra.mrb[0].mxu0 %v5883
  %v6310 = vpop.f32.mrb[0].mxu0
  %v6311 = vadd.f32 %v6233, %v6310
  %v6312 = vpop.f32.mrb[0].mxu0
  %6313 = vmatprep.mubr.f32.mxu0 0.0
  %6314 = vmatmul.mubr.f32.gmra.mrb[0].mxu0 %v5886
  %v6315 = vpop.f32.mrb[0].mxu0
  %v6316 = vadd.f32 %v6233, %v6315
  %v6317 = vpop.f32.mrb[0].mxu0
  %6318 = vdwg.mxu0
  %v6319 = vxor.u32 %v6301, 2147483648
  %v6320 = vxor.u32 %v6306, 2147483648
  %v6321 = vxor.u32 %v6311, 2147483648
  %v6322 = vxor.u32 %v6316, 2147483648
  %v6323 = vmul.f32 %v6319, 1.442695
  %v6324 = vpow.pop %v6323
  %v6325 = vmul.f32 %v6320, 1.442695
  %v6326 = vpow.pop %v6325
  %v6327 = vmul.f32 %v6321, 1.442695
  %v6328 = vpow.pop %v6327
  %v6329 = vmul.f32 %v6322, 1.442695
  %v6330 = vpow.pop %v6329
  %v6331 = vadd.f32 %v6324, 1.0
  %v6332 = vadd.f32 %v6326, 1.0
  %v6333 = vadd.f32 %v6328, 1.0
  %v6334 = vadd.f32 %v6330, 1.0
  %v6335 = vrcp.pop %v6331
  %v6336 = vmul.f32 1.0, %v6335
  %v6337 = vrcp.pop %v6332
  %v6338 = vmul.f32 1.0, %v6337
  %v6339 = vrcp.pop %v6333
  %v6340 = vmul.f32 1.0, %v6339
  %v6341 = vrcp.pop %v6334
  %v6342 = vmul.f32 1.0, %v6341
  %v6343 = vmul.f32 %v6112, %v3163
  %v6344 = vmul.f32 %v6114, %v3164
  %v6345 = vmul.f32 %v6116, %v3165
  %v6346 = vmul.f32 %v6118, %v3166
  %v6347 = vmul.f32 %v5990, %v6217
  %v6348 = vmul.f32 %v5992, %v6218
  %v6349 = vmul.f32 %v5994, %v6219
  %v6350 = vmul.f32 %v5996, %v6220
  %v6351 = vadd.f32 %v6343, %v6347
  %v6352 = vadd.f32 %v6344, %v6348
  %v6353 = vadd.f32 %v6345, %v6349
  %v6354 = vadd.f32 %v6346, %v6350
  %v6355 = vtanh.pop %v6351
  %v6356 = vtanh.pop %v6352
  %v6357 = vtanh.pop %v6353
  %v6358 = vtanh.pop %v6354
  %v6359 = vmul.f32 %v6336, %v6355
  %v6360 = vmul.f32 %v6338, %v6356
  %v6361 = vmul.f32 %v6340, %v6357
  %v6362 = vmul.f32 %v6342, %v6358
  %v6363 = vld [vmem:[%s2 + $0x358] sm:$0xff]
  %v6364 = vld [vmem:[%s2 + $0x360] sm:$0xff]
  %v6365 = vld [vmem:[%s2 + $0x368] sm:$0xff]
  %v6366 = vld [vmem:[%s2 + $0x370] sm:$0xff]
  %v6367 = vld [vmem:[%s2 + $0x378] sm:$0x1]
  %v6368 = vlaneseq
  %v6369 = vshrl.u32 %v6368, 7
  %v6370 = vsub.s32 0, %v6369
  %v6371 = vrot.slane %v6367, %v6370
  %v6373 = vsel %vm341, %v6359, 0
  %v6376 = vsel %vm341, %v6360, 0
  %v6379 = vsel %vm341, %v6361, 0
  %v6382 = vsel %vm341, %v6362, 0
  %6384 = vmatprep.subr.mxu0 0.0
  %6385 = vmatpush1.msra.mxu0 %v6363
  %6386 = vmatprep.subr.mxu0 0.0
  %6387 = vmatpush1.msra.mxu0 %v6364
  %6388 = vmatprep.subr.mxu0 0.0
  %6389 = vmatpush1.msra.mxu0 %v6365
  %6390 = vmatprep.subr.mxu0 0.0
  %6391 = vmatpush1.msra.mxu0 %v6366
  %6392 = vmatprep.subr.mxu0 0.0
  %6393 = vmatpush1.msra.mxu0 0.0
  %6394 = vmatprep.subr.mxu0 0.0
  %6395 = vmatpush1.msra.mxu0 0.0
  %6396 = vmatprep.subr.mxu0 0.0
  %6397 = vmatpush1.msra.mxu0 0.0
  %6398 = vmatprep.subr.mxu0 0.0
  %6399 = vmatpush1.msra.mxu0 0.0
  %6400 = vmatprep.subr.mxu0 0.0
  %6401 = vmatpush1.msra.mxu0 0.0
  %6402 = vmatprep.subr.mxu0 0.0
  %6403 = vmatpush1.msra.mxu0 0.0
  %6404 = vmatprep.subr.mxu0 0.0
  %6405 = vmatpush1.msra.mxu0 0.0
  %6406 = vmatprep.subr.mxu0 0.0
  %6407 = vmatpush1.msra.mxu0 0.0
  %6408 = vmatprep.subr.mxu0 0.0
  %6409 = vmatpush1.msra.mxu0 0.0
  %6410 = vmatprep.subr.mxu0 0.0
  %6411 = vmatpush1.msra.mxu0 0.0
  %6412 = vmatprep.subr.mxu0 0.0
  %6413 = vmatpush1.msra.mxu0 0.0
  %6414 = vmatprep.subr.mxu0 0.0
  %6415 = vmatpush1.msra.mxu0 0.0
  %6416 = vmatprep.subr.mxu0 0.0
  %6417 = vmatpush1.msra.mxu0 0.0
  %6418 = vmatprep.subr.mxu0 0.0
  %6419 = vmatpush1.msra.mxu0 0.0
  %6420 = vmatprep.subr.mxu0 0.0
  %6421 = vmatpush1.msra.mxu0 0.0
  %6422 = vmatprep.subr.mxu0 0.0
  %6423 = vmatpush1.msra.mxu0 0.0
  %6424 = vmatprep.subr.mxu0 0.0
  %6425 = vmatpush1.msra.mxu0 0.0
  %6426 = vmatprep.subr.mxu0 0.0
  %6427 = vmatpush1.msra.mxu0 0.0
  %6428 = vmatprep.subr.mxu0 0.0
  %6429 = vmatpush1.msra.mxu0 0.0
  %6430 = vmatprep.subr.mxu0 0.0
  %6431 = vmatpush1.msra.mxu0 0.0
  %6432 = vmatprep.subr.mxu0 0.0
  %6433 = vmatpush1.msra.mxu0 0.0
  %6434 = vmatprep.subr.mxu0 0.0
  %6435 = vmatpush1.msra.mxu0 0.0
  %6436 = vmatprep.subr.mxu0 0.0
  %6437 = vmatpush1.msra.mxu0 0.0
  %6438 = vmatprep.subr.mxu0 0.0
  %6439 = vmatpush1.msra.mxu0 0.0
  %6440 = vmatprep.subr.mxu0 0.0
  %6441 = vmatpush1.msra.mxu0 0.0
  %6442 = vmatprep.subr.mxu0 0.0
  %6443 = vmatpush1.msra.mxu0 0.0
  %6444 = vmatprep.subr.mxu0 0.0
  %6445 = vmatpush1.msra.mxu0 0.0
  %6446 = vmatprep.subr.mxu0 0.0
  %6447 = vmatpush1.msra.mxu0 0.0
  %6448 = vmatprep.mubr.f32.mxu0 0.0
  %6449 = vmatmul.mubr.f32.gmra.mrb[0].mxu0 %v6373
  %v6450 = vpop.f32.mrb[0].mxu0
  %v6451 = vadd.f32 %v6371, %v6450
  %v6452 = vpop.f32.mrb[0].mxu0
  %6453 = vmatprep.mubr.f32.mxu0 0.0
  %6454 = vmatmul.mubr.f32.gmra.mrb[0].mxu0 %v6376
  %v6455 = vpop.f32.mrb[0].mxu0
  %v6456 = vadd.f32 %v6371, %v6455
  %v6457 = vpop.f32.mrb[0].mxu0
  %6458 = vmatprep.mubr.f32.mxu0 0.0
  %6459 = vmatmul.mubr.f32.gmra.mrb[0].mxu0 %v6379
  %v6460 = vpop.f32.mrb[0].mxu0
  %v6461 = vadd.f32 %v6371, %v6460
  %v6462 = vpop.f32.mrb[0].mxu0
  %6463 = vmatprep.mubr.f32.mxu0 0.0
  %6464 = vmatmul.mubr.f32.gmra.mrb[0].mxu0 %v6382
  %v6465 = vpop.f32.mrb[0].mxu0
  %v6466 = vadd.f32 %v6371, %v6465
  %v6467 = vpop.f32.mrb[0].mxu0
  %6468 = vdwg.mxu0
  %v6469 = vmax.f32 %v6451, 0.0
  %v6470 = vmax.f32 %v6456, 0.0
  %v6471 = vmax.f32 %v6461, 0.0
  %v6472 = vmax.f32 %v6466, 0.0
  %v6473 = vld [vmem:[%s2 + $0x380] sm:$0xff]
  %v6474 = vld [vmem:[%s2 + $0x388] sm:$0xff]
  %v6475 = vld [vmem:[%s2 + $0x390] sm:$0xff]
  %v6476 = vld [vmem:[%s2 + $0x398] sm:$0xff]
  %v6477 = vld [vmem:[%s2 + $0x3a0] sm:$0x1]
  %v6478 = vlaneseq
  %v6479 = vshrl.u32 %v6478, 7
  %v6480 = vsub.s32 0, %v6479
  %v6481 = vrot.slane %v6477, %v6480
  %v6483 = vsel %vm341, %v6469, 0
  %v6486 = vsel %vm341, %v6470, 0
  %v6489 = vsel %vm341, %v6471, 0
  %v6492 = vsel %vm341, %v6472, 0
  %6494 = vmatprep.subr.mxu0 0.0
  %6495 = vmatpush1.msra.mxu0 %v6473
  %6496 = vmatprep.subr.mxu0 0.0
  %6497 = vmatpush1.msra.mxu0 %v6474
  %6498 = vmatprep.subr.mxu0 0.0
  %6499 = vmatpush1.msra.mxu0 %v6475
  %6500 = vmatprep.subr.mxu0 0.0
  %6501 = vmatpush1.msra.mxu0 %v6476
  %6502 = vmatprep.subr.mxu0 0.0
  %6503 = vmatpush1.msra.mxu0 0.0
  %6504 = vmatprep.subr.mxu0 0.0
  %6505 = vmatpush1.msra.mxu0 0.0
  %6506 = vmatprep.subr.mxu0 0.0
  %6507 = vmatpush1.msra.mxu0 0.0
  %6508 = vmatprep.subr.mxu0 0.0
  %6509 = vmatpush1.msra.mxu0 0.0
  %6510 = vmatprep.subr.mxu0 0.0
  %6511 = vmatpush1.msra.mxu0 0.0
  %6512 = vmatprep.subr.mxu0 0.0
  %6513 = vmatpush1.msra.mxu0 0.0
  %6514 = vmatprep.subr.mxu0 0.0
  %6515 = vmatpush1.msra.mxu0 0.0
  %6516 = vmatprep.subr.mxu0 0.0
  %6517 = vmatpush1.msra.mxu0 0.0
  %6518 = vmatprep.subr.mxu0 0.0
  %6519 = vmatpush1.msra.mxu0 0.0
  %6520 = vmatprep.subr.mxu0 0.0
  %6521 = vmatpush1.msra.mxu0 0.0
  %6522 = vmatprep.subr.mxu0 0.0
  %6523 = vmatpush1.msra.mxu0 0.0
  %6524 = vmatprep.subr.mxu0 0.0
  %6525 = vmatpush1.msra.mxu0 0.0
  %6526 = vmatprep.subr.mxu0 0.0
  %6527 = vmatpush1.msra.mxu0 0.0
  %6528 = vmatprep.subr.mxu0 0.0
  %6529 = vmatpush1.msra.mxu0 0.0
  %6530 = vmatprep.subr.mxu0 0.0
  %6531 = vmatpush1.msra.mxu0 0.0
  %6532 = vmatprep.subr.mxu0 0.0
  %6533 = vmatpush1.msra.mxu0 0.0
  %6534 = vmatprep.subr.mxu0 0.0
  %6535 = vmatpush1.msra.mxu0 0.0
  %6536 = vmatprep.subr.mxu0 0.0
  %6537 = vmatpush1.msra.mxu0 0.0
  %6538 = vmatprep.subr.mxu0 0.0
  %6539 = vmatpush1.msra.mxu0 0.0
  %6540 = vmatprep.subr.mxu0 0.0
  %6541 = vmatpush1.msra.mxu0 0.0
  %6542 = vmatprep.subr.mxu0 0.0
  %6543 = vmatpush1.msra.mxu0 0.0
  %6544 = vmatprep.subr.mxu0 0.0
  %6545 = vmatpush1.msra.mxu0 0.0
  %6546 = vmatprep.subr.mxu0 0.0
  %6547 = vmatpush1.msra.mxu0 0.0
  %6548 = vmatprep.subr.mxu0 0.0
  %6549 = vmatpush1.msra.mxu0 0.0
  %6550 = vmatprep.subr.mxu0 0.0
  %6551 = vmatpush1.msra.mxu0 0.0
  %6552 = vmatprep.subr.mxu0 0.0
  %6553 = vmatpush1.msra.mxu0 0.0
  %6554 = vmatprep.subr.mxu0 0.0
  %6555 = vmatpush1.msra.mxu0 0.0
  %6556 = vmatprep.subr.mxu0 0.0
  %6557 = vmatpush1.msra.mxu0 0.0
  %6558 = vmatprep.mubr.f32.mxu0 0.0
  %6559 = vmatmul.mubr.f32.gmra.mrb[0].mxu0 %v6483
  %v6560 = vpop.f32.mrb[0].mxu0
  %v6561 = vadd.f32 %v6481, %v6560
  %v6562 = vpop.f32.mrb[0].mxu0
  %6563 = vmatprep.mubr.f32.mxu0 0.0
  %6564 = vmatmul.mubr.f32.gmra.mrb[0].mxu0 %v6486
  %v6565 = vpop.f32.mrb[0].mxu0
  %v6566 = vadd.f32 %v6481, %v6565
  %v6567 = vpop.f32.mrb[0].mxu0
  %6568 = vmatprep.mubr.f32.mxu0 0.0
  %6569 = vmatmul.mubr.f32.gmra.mrb[0].mxu0 %v6489
  %v6570 = vpop.f32.mrb[0].mxu0
  %v6571 = vadd.f32 %v6481, %v6570
  %v6572 = vpop.f32.mrb[0].mxu0
  %6573 = vmatprep.mubr.f32.mxu0 0.0
  %6574 = vmatmul.mubr.f32.gmra.mrb[0].mxu0 %v6492
  %v6575 = vpop.f32.mrb[0].mxu0
  %v6576 = vadd.f32 %v6481, %v6575
  %v6577 = vpop.f32.mrb[0].mxu0
  %6578 = vdwg.mxu0
  %v6579 = vmax.f32 %v6561, 0.0
  %v6580 = vmax.f32 %v6566, 0.0
  %v6581 = vmax.f32 %v6571, 0.0
  %v6582 = vmax.f32 %v6576, 0.0
  %v6583 = vld [vmem:[%s2 + $0x3a8] sm:$0xff]
  %v6584 = vld [vmem:[%s2 + $0x3b0] sm:$0xff]
  %v6585 = vld [vmem:[%s2 + $0x3b8] sm:$0xff]
  %v6586 = vld [vmem:[%s2 + $0x3c0] sm:$0xff]
  %v6587 = vld [vmem:[%s2 + $0x3c8] sm:$0x1]
  %v6588 = vlaneseq
  %v6589 = vshrl.u32 %v6588, 7
  %v6590 = vsub.s32 0, %v6589
  %v6591 = vrot.slane %v6587, %v6590
  %v6593 = vsel %vm341, %v6579, 0
  %v6596 = vsel %vm341, %v6580, 0
  %v6599 = vsel %vm341, %v6581, 0
  %v6602 = vsel %vm341, %v6582, 0
  %6604 = vmatprep.subr.mxu0 0.0
  %6605 = vmatpush1.msra.mxu0 %v6583
  %6606 = vmatprep.subr.mxu0 0.0
  %6607 = vmatpush1.msra.mxu0 %v6584
  %6608 = vmatprep.subr.mxu0 0.0
  %6609 = vmatpush1.msra.mxu0 %v6585
  %6610 = vmatprep.subr.mxu0 0.0
  %6611 = vmatpush1.msra.mxu0 %v6586
  %6612 = vmatprep.subr.mxu0 0.0
  %6613 = vmatpush1.msra.mxu0 0.0
  %6614 = vmatprep.subr.mxu0 0.0
  %6615 = vmatpush1.msra.mxu0 0.0
  %6616 = vmatprep.subr.mxu0 0.0
  %6617 = vmatpush1.msra.mxu0 0.0
  %6618 = vmatprep.subr.mxu0 0.0
  %6619 = vmatpush1.msra.mxu0 0.0
  %6620 = vmatprep.subr.mxu0 0.0
  %6621 = vmatpush1.msra.mxu0 0.0
  %6622 = vmatprep.subr.mxu0 0.0
  %6623 = vmatpush1.msra.mxu0 0.0
  %6624 = vmatprep.subr.mxu0 0.0
  %6625 = vmatpush1.msra.mxu0 0.0
  %6626 = vmatprep.subr.mxu0 0.0
  %6627 = vmatpush1.msra.mxu0 0.0
  %6628 = vmatprep.subr.mxu0 0.0
  %6629 = vmatpush1.msra.mxu0 0.0
  %6630 = vmatprep.subr.mxu0 0.0
  %6631 = vmatpush1.msra.mxu0 0.0
  %6632 = vmatprep.subr.mxu0 0.0
  %6633 = vmatpush1.msra.mxu0 0.0
  %6634 = vmatprep.subr.mxu0 0.0
  %6635 = vmatpush1.msra.mxu0 0.0
  %6636 = vmatprep.subr.mxu0 0.0
  %6637 = vmatpush1.msra.mxu0 0.0
  %6638 = vmatprep.subr.mxu0 0.0
  %6639 = vmatpush1.msra.mxu0 0.0
  %6640 = vmatprep.subr.mxu0 0.0
  %6641 = vmatpush1.msra.mxu0 0.0
  %6642 = vmatprep.subr.mxu0 0.0
  %6643 = vmatpush1.msra.mxu0 0.0
  %6644 = vmatprep.subr.mxu0 0.0
  %6645 = vmatpush1.msra.mxu0 0.0
  %6646 = vmatprep.subr.mxu0 0.0
  %6647 = vmatpush1.msra.mxu0 0.0
  %6648 = vmatprep.subr.mxu0 0.0
  %6649 = vmatpush1.msra.mxu0 0.0
  %6650 = vmatprep.subr.mxu0 0.0
  %6651 = vmatpush1.msra.mxu0 0.0
  %6652 = vmatprep.subr.mxu0 0.0
  %6653 = vmatpush1.msra.mxu0 0.0
  %6654 = vmatprep.subr.mxu0 0.0
  %6655 = vmatpush1.msra.mxu0 0.0
  %6656 = vmatprep.subr.mxu0 0.0
  %6657 = vmatpush1.msra.mxu0 0.0
  %6658 = vmatprep.subr.mxu0 0.0
  %6659 = vmatpush1.msra.mxu0 0.0
  %6660 = vmatprep.subr.mxu0 0.0
  %6661 = vmatpush1.msra.mxu0 0.0
  %6662 = vmatprep.subr.mxu0 0.0
  %6663 = vmatpush1.msra.mxu0 0.0
  %6664 = vmatprep.subr.mxu0 0.0
  %6665 = vmatpush1.msra.mxu0 0.0
  %6666 = vmatprep.subr.mxu0 0.0
  %6667 = vmatpush1.msra.mxu0 0.0
  %6668 = vmatprep.mubr.f32.mxu0 0.0
  %6669 = vmatmul.mubr.f32.gmra.mrb[0].mxu0 %v6593
  %v6670 = vpop.f32.mrb[0].mxu0
  %v6671 = vadd.f32 %v6591, %v6670
  %v6672 = vpop.f32.mrb[0].mxu0
  %6673 = vmatprep.mubr.f32.mxu0 0.0
  %6674 = vmatmul.mubr.f32.gmra.mrb[0].mxu0 %v6596
  %v6675 = vpop.f32.mrb[0].mxu0
  %v6676 = vadd.f32 %v6591, %v6675
  %v6677 = vpop.f32.mrb[0].mxu0
  %6678 = vmatprep.mubr.f32.mxu0 0.0
  %6679 = vmatmul.mubr.f32.gmra.mrb[0].mxu0 %v6599
  %v6680 = vpop.f32.mrb[0].mxu0
  %v6681 = vadd.f32 %v6591, %v6680
  %v6682 = vpop.f32.mrb[0].mxu0
  %6683 = vmatprep.mubr.f32.mxu0 0.0
  %6684 = vmatmul.mubr.f32.gmra.mrb[0].mxu0 %v6602
  %v6685 = vpop.f32.mrb[0].mxu0
  %v6686 = vadd.f32 %v6591, %v6685
  %v6687 = vpop.f32.mrb[0].mxu0
  %6688 = vdwg.mxu0
  %s6689 = scalar_lea.vmem %s4, 32
  %6690 = vst [vmem:[%s6689] sm:$0xff] %v6671
  %6691 = vst [vmem:[%s6689 + $0x8] sm:$0xff] %v6676
  %6692 = vst [vmem:[%s6689 + $0x10] sm:$0xff] %v6681
  %6693 = vst [vmem:[%s6689 + $0x18] sm:$0xff] %v6686
  %6694 = vmax.xlane.f32.xlu0 %v6671
  %v6695 = vpop.xlane.xlu0 %6694
  %6696 = vmax.xlane.f32.xlu0 %v6676
  %v6697 = vpop.xlane.xlu0 %6696
  %6698 = vmax.xlane.f32.xlu0 %v6681
  %v6699 = vpop.xlane.xlu0 %6698
  %6700 = vmax.xlane.f32.xlu0 %v6686
  %v6701 = vpop.xlane.xlu0 %6700
  %v6702 = vsub.f32 %v6671, %v6695
  %v6703 = vsub.f32 %v6676, %v6697
  %v6704 = vsub.f32 %v6681, %v6699
  %v6705 = vsub.f32 %v6686, %v6701
  %v6706 = vmul.f32 %v6702, 1.442695
  %v6707 = vpow.pop %v6706
  %v6708 = vmul.f32 %v6703, 1.442695
  %v6709 = vpow.pop %v6708
  %v6710 = vmul.f32 %v6704, 1.442695
  %v6711 = vpow.pop %v6710
  %v6712 = vmul.f32 %v6705, 1.442695
  %v6713 = vpow.pop %v6712
  %6714 = vadd.xlane.f32.xlu0 %v6707
  %v6715 = vpop.xlane.xlu0 %6714
  %6716 = vadd.xlane.f32.xlu0 %v6709
  %v6717 = vpop.xlane.xlu0 %6716
  %6718 = vadd.xlane.f32.xlu0 %v6711
  %v6719 = vpop.xlane.xlu0 %6718
  %6720 = vadd.xlane.f32.xlu0 %v6713
  %v6721 = vpop.xlane.xlu0 %6720
  %v6722 = vrcp.pop %v6715
  %v6723 = vrcp.pop %v6717
  %v6724 = vrcp.pop %v6719
  %v6725 = vrcp.pop %v6721
  %v6726 = vmul.f32 %v6707, %v6722
  %v6727 = vmul.f32 %v6709, %v6723
  %v6728 = vmul.f32 %v6711, %v6724
  %v6729 = vmul.f32 %v6713, %v6725
  %v6730 = vld [vmem:[%s2] sm:$0xff]
  %v6731 = vld [vmem:[%s2 + $0x8] sm:$0xff]
  %v6732 = vld [vmem:[%s2 + $0x10] sm:$0xff]
  %v6733 = vld [vmem:[%s2 + $0x18] sm:$0xff]
  %v6734 = vld [vmem:[%s2 + $0x20] sm:$0xff]
  %v6735 = vld [vmem:[%s2 + $0x28] sm:$0xff]
  %v6736 = vld [vmem:[%s2 + $0x30] sm:$0xff]
  %v6737 = vld [vmem:[%s2 + $0x38] sm:$0xff]
  %v6738 = vld [vmem:[%s2 + $0x40] sm:$0xff]
  %v6739 = vld [vmem:[%s2 + $0x48] sm:$0xff]
  %v6740 = vld [vmem:[%s2 + $0x50] sm:$0xff]
  %v6741 = vld [vmem:[%s2 + $0x58] sm:$0xff]
  %v6742 = vld [vmem:[%s2 + $0x60] sm:$0xff]
  %v6743 = vld [vmem:[%s2 + $0x68] sm:$0xff]
  %v6744 = vld [vmem:[%s2 + $0x70] sm:$0xff]
  %v6745 = vld [vmem:[%s2 + $0x78] sm:$0xff]
  %v6746 = vld [vmem:[%s2 + $0x80] sm:$0x1]
  %v6747 = vlaneseq
  %v6748 = vshrl.u32 %v6747, 7
  %v6749 = vsub.s32 0, %v6748
  %v6750 = vrot.slane %v6746, %v6749
  %6751 = vmatprep.subr.mxu0 0.0
  %6752 = vmatpush1.msra.mxu0 %v6730
  %6753 = vmatprep.subr.mxu0 0.0
  %6754 = vmatpush1.msra.mxu0 %v6731
  %6755 = vmatprep.subr.mxu0 0.0
  %6756 = vmatpush1.msra.mxu0 %v6732
  %6757 = vmatprep.subr.mxu0 0.0
  %6758 = vmatpush1.msra.mxu0 %v6733
  %6759 = vmatprep.subr.mxu0 0.0
  %6760 = vmatpush1.msra.mxu0 %v6734
  %6761 = vmatprep.subr.mxu0 0.0
  %6762 = vmatpush1.msra.mxu0 %v6735
  %6763 = vmatprep.subr.mxu0 0.0
  %6764 = vmatpush1.msra.mxu0 %v6736
  %6765 = vmatprep.subr.mxu0 0.0
  %6766 = vmatpush1.msra.mxu0 %v6737
  %6767 = vmatprep.subr.mxu0 0.0
  %6768 = vmatpush1.msra.mxu0 %v6738
  %6769 = vmatprep.subr.mxu0 0.0
  %6770 = vmatpush1.msra.mxu0 %v6739
  %6771 = vmatprep.subr.mxu0 0.0
  %6772 = vmatpush1.msra.mxu0 %v6740
  %6773 = vmatprep.subr.mxu0 0.0
  %6774 = vmatpush1.msra.mxu0 %v6741
  %6775 = vmatprep.subr.mxu0 0.0
  %6776 = vmatpush1.msra.mxu0 %v6742
  %6777 = vmatprep.subr.mxu0 0.0
  %6778 = vmatpush1.msra.mxu0 %v6743
  %6779 = vmatprep.subr.mxu0 0.0
  %6780 = vmatpush1.msra.mxu0 %v6744
  %6781 = vmatprep.subr.mxu0 0.0
  %6782 = vmatpush1.msra.mxu0 %v6745
  %6783 = vmatprep.subr.mxu0 0.0
  %6784 = vmatpush1.msra.mxu0 0.0
  %6785 = vmatprep.subr.mxu0 0.0
  %6786 = vmatpush1.msra.mxu0 0.0
  %6787 = vmatprep.subr.mxu0 0.0
  %6788 = vmatpush1.msra.mxu0 0.0
  %6789 = vmatprep.subr.mxu0 0.0
  %6790 = vmatpush1.msra.mxu0 0.0
  %6791 = vmatprep.subr.mxu0 0.0
  %6792 = vmatpush1.msra.mxu0 0.0
  %6793 = vmatprep.subr.mxu0 0.0
  %6794 = vmatpush1.msra.mxu0 0.0
  %6795 = vmatprep.subr.mxu0 0.0
  %6796 = vmatpush1.msra.mxu0 0.0
  %6797 = vmatprep.subr.mxu0 0.0
  %6798 = vmatpush1.msra.mxu0 0.0
  %6799 = vmatprep.subr.mxu0 0.0
  %6800 = vmatpush1.msra.mxu0 0.0
  %6801 = vmatprep.subr.mxu0 0.0
  %6802 = vmatpush1.msra.mxu0 0.0
  %6803 = vmatprep.subr.mxu0 0.0
  %6804 = vmatpush1.msra.mxu0 0.0
  %6805 = vmatprep.subr.mxu0 0.0
  %6806 = vmatpush1.msra.mxu0 0.0
  %6807 = vmatprep.subr.mxu0 0.0
  %6808 = vmatpush1.msra.mxu0 0.0
  %6809 = vmatprep.subr.mxu0 0.0
  %6810 = vmatpush1.msra.mxu0 0.0
  %6811 = vmatprep.subr.mxu0 0.0
  %6812 = vmatpush1.msra.mxu0 0.0
  %6813 = vmatprep.subr.mxu0 0.0
  %6814 = vmatpush1.msra.mxu0 0.0
  %6815 = vmatprep.mubr.f32.mxu0 0.0
  %6816 = vmatmul.mubr.f32.gmra.mrb[0].mxu0 %v6726
  %v6817 = vpop.f32.mrb[0].mxu0
  %v6818 = vadd.f32 %v6750, %v6817
  %v6819 = vpop.f32.mrb[0].mxu0
  %6820 = vmatprep.mubr.f32.mxu0 0.0
  %6821 = vmatmul.mubr.f32.gmra.mrb[0].mxu0 %v6727
  %v6822 = vpop.f32.mrb[0].mxu0
  %v6823 = vadd.f32 %v6750, %v6822
  %v6824 = vpop.f32.mrb[0].mxu0
  %6825 = vmatprep.mubr.f32.mxu0 0.0
  %6826 = vmatmul.mubr.f32.gmra.mrb[0].mxu0 %v6728
  %v6827 = vpop.f32.mrb[0].mxu0
  %v6828 = vadd.f32 %v6750, %v6827
  %v6829 = vpop.f32.mrb[0].mxu0
  %6830 = vmatprep.mubr.f32.mxu0 0.0
  %6831 = vmatmul.mubr.f32.gmra.mrb[0].mxu0 %v6729
  %v6832 = vpop.f32.mrb[0].mxu0
  %v6833 = vadd.f32 %v6750, %v6832
  %v6834 = vpop.f32.mrb[0].mxu0
  %6835 = vdwg.mxu0
  %v6836 = vld [vmem:[%s2 + $0x88] sm:$0xff]
  %v6837 = vld [vmem:[%s2 + $0x90] sm:$0xff]
  %v6838 = vld [vmem:[%s2 + $0x98] sm:$0x1]
  %v6839 = vlaneseq
  %v6840 = vshrl.u32 %v6839, 7
  %v6841 = vsub.s32 0, %v6840
  %v6842 = vrot.slane %v6838, %v6841
  %v6844 = vsel %vm134, %v6818, 0
  %v6847 = vsel %vm134, %v6823, 0
  %v6850 = vsel %vm134, %v6828, 0
  %v6853 = vsel %vm134, %v6833, 0
  %6855 = vmatprep.subr.mxu0 0.0
  %6856 = vmatpush1.msra.mxu0 %v6836
  %6857 = vmatprep.subr.mxu0 0.0
  %6858 = vmatpush1.msra.mxu0 %v6837
  %6859 = vmatprep.subr.mxu0 0.0
  %6860 = vmatpush1.msra.mxu0 0.0
  %6861 = vmatprep.subr.mxu0 0.0
  %6862 = vmatpush1.msra.mxu0 0.0
  %6863 = vmatprep.subr.mxu0 0.0
  %6864 = vmatpush1.msra.mxu0 0.0
  %6865 = vmatprep.subr.mxu0 0.0
  %6866 = vmatpush1.msra.mxu0 0.0
  %6867 = vmatprep.subr.mxu0 0.0
  %6868 = vmatpush1.msra.mxu0 0.0
  %6869 = vmatprep.subr.mxu0 0.0
  %6870 = vmatpush1.msra.mxu0 0.0
  %6871 = vmatprep.subr.mxu0 0.0
  %6872 = vmatpush1.msra.mxu0 0.0
  %6873 = vmatprep.subr.mxu0 0.0
  %6874 = vmatpush1.msra.mxu0 0.0
  %6875 = vmatprep.subr.mxu0 0.0
  %6876 = vmatpush1.msra.mxu0 0.0
  %6877 = vmatprep.subr.mxu0 0.0
  %6878 = vmatpush1.msra.mxu0 0.0
  %6879 = vmatprep.subr.mxu0 0.0
  %6880 = vmatpush1.msra.mxu0 0.0
  %6881 = vmatprep.subr.mxu0 0.0
  %6882 = vmatpush1.msra.mxu0 0.0
  %6883 = vmatprep.subr.mxu0 0.0
  %6884 = vmatpush1.msra.mxu0 0.0
  %6885 = vmatprep.subr.mxu0 0.0
  %6886 = vmatpush1.msra.mxu0 0.0
  %6887 = vmatprep.subr.mxu0 0.0
  %6888 = vmatpush1.msra.mxu0 0.0
  %6889 = vmatprep.subr.mxu0 0.0
  %6890 = vmatpush1.msra.mxu0 0.0
  %6891 = vmatprep.subr.mxu0 0.0
  %6892 = vmatpush1.msra.mxu0 0.0
  %6893 = vmatprep.subr.mxu0 0.0
  %6894 = vmatpush1.msra.mxu0 0.0
  %6895 = vmatprep.subr.mxu0 0.0
  %6896 = vmatpush1.msra.mxu0 0.0
  %6897 = vmatprep.subr.mxu0 0.0
  %6898 = vmatpush1.msra.mxu0 0.0
  %6899 = vmatprep.subr.mxu0 0.0
  %6900 = vmatpush1.msra.mxu0 0.0
  %6901 = vmatprep.subr.mxu0 0.0
  %6902 = vmatpush1.msra.mxu0 0.0
  %6903 = vmatprep.subr.mxu0 0.0
  %6904 = vmatpush1.msra.mxu0 0.0
  %6905 = vmatprep.subr.mxu0 0.0
  %6906 = vmatpush1.msra.mxu0 0.0
  %6907 = vmatprep.subr.mxu0 0.0
  %6908 = vmatpush1.msra.mxu0 0.0
  %6909 = vmatprep.subr.mxu0 0.0
  %6910 = vmatpush1.msra.mxu0 0.0
  %6911 = vmatprep.subr.mxu0 0.0
  %6912 = vmatpush1.msra.mxu0 0.0
  %6913 = vmatprep.subr.mxu0 0.0
  %6914 = vmatpush1.msra.mxu0 0.0
  %6915 = vmatprep.subr.mxu0 0.0
  %6916 = vmatpush1.msra.mxu0 0.0
  %6917 = vmatprep.subr.mxu0 0.0
  %6918 = vmatpush1.msra.mxu0 0.0
  %6919 = vmatprep.mubr.f32.mxu0 0.0
  %6920 = vmatmul.mubr.f32.gmra.mrb[0].mxu0 %v6844
  %v6921 = vpop.f32.mrb[0].mxu0
  %v6922 = vadd.f32 %v6842, %v6921
  %v6923 = vpop.f32.mrb[0].mxu0
  %6924 = vmatprep.mubr.f32.mxu0 0.0
  %6925 = vmatmul.mubr.f32.gmra.mrb[0].mxu0 %v6847
  %v6926 = vpop.f32.mrb[0].mxu0
  %v6927 = vadd.f32 %v6842, %v6926
  %v6928 = vpop.f32.mrb[0].mxu0
  %6929 = vmatprep.mubr.f32.mxu0 0.0
  %6930 = vmatmul.mubr.f32.gmra.mrb[0].mxu0 %v6850
  %v6931 = vpop.f32.mrb[0].mxu0
  %v6932 = vadd.f32 %v6842, %v6931
  %v6933 = vpop.f32.mrb[0].mxu0
  %6934 = vmatprep.mubr.f32.mxu0 0.0
  %6935 = vmatmul.mubr.f32.gmra.mrb[0].mxu0 %v6853
  %v6936 = vpop.f32.mrb[0].mxu0
  %v6937 = vadd.f32 %v6842, %v6936
  %v6938 = vpop.f32.mrb[0].mxu0
  %6939 = vdwg.mxu0
  %s6940 = scalar_lea.vmem %s5, 32
  %6941 = vst [vmem:[%s6940] sm:$0xff] %v6922
  %6942 = vst [vmem:[%s6940 + $0x8] sm:$0xff] %v6927
  %6943 = vst [vmem:[%s6940 + $0x10] sm:$0xff] %v6932
  %6944 = vst [vmem:[%s6940 + $0x18] sm:$0xff] %v6937
  // Predicated region
  $region14: #{re_embed_rrn_forward.1} parent=0 // pred_check
    _
  $region15: #{re_embed_rrn_forward.1} parent=0 // pred_check_branch
    %6946 = sbr.rel (0) target = $region17
  $region16: #{re_embed_rrn_forward.1} parent=0 // pred_region
    _
  $region17: #{re_embed_rrn_forward.1} parent=0 // pred_fallthru
    _
  // Predicated region
  $region18: #{re_embed_rrn_forward.1} parent=0 // pred_check
    _
  $region19: #{re_embed_rrn_forward.1} parent=0 // pred_check_branch
    %6948 = sbr.rel (0) target = $region21
  $region20: #{re_embed_rrn_forward.1} parent=0 // pred_region
    _
  $region21: #{re_embed_rrn_forward.1} parent=0 // pred_fallthru
    _
  // Predicated region
  $region22: #{re_embed_rrn_forward.1} parent=0 // pred_check
    _
  $region23: #{re_embed_rrn_forward.1} parent=0 // pred_check_branch
    %6950 = sbr.rel (0) target = $region25
  $region24: #{re_embed_rrn_forward.1} parent=0 // pred_region
    _
  $region25: #{re_embed_rrn_forward.1} parent=0 // pred_fallthru
    _
  // Predicated region
  $region26: #{re_embed_rrn_forward.1} parent=0 // pred_check
    _
  $region27: #{re_embed_rrn_forward.1} parent=0 // pred_check_branch
    %6952 = sbr.rel (0) target = $region29
  $region28: #{re_embed_rrn_forward.1} parent=0 // pred_region
    _
  $region29: #{re_embed_rrn_forward.1} parent=0 // pred_fallthru
    _
  // Predicated region
  $region30: #{re_embed_rrn_forward.1} parent=0 // pred_check
    _
  $region31: #{re_embed_rrn_forward.1} parent=0 // pred_check_branch
    %6954 = sbr.rel (0) target = $region33
  $region32: #{re_embed_rrn_forward.1} parent=0 // pred_region
    _
  $region33: #{re_embed_rrn_forward.1} parent=0 // pred_fallthru
    _
  // Predicated region
  $region34: #{re_embed_rrn_forward.1} parent=0 // pred_check
    _
  $region35: #{re_embed_rrn_forward.1} parent=0 // pred_check_branch
    %6956 = sbr.rel (0) target = $region37
  $region36: #{re_embed_rrn_forward.1} parent=0 // pred_region
    _
  $region37: #{re_embed_rrn_forward.1} parent=0 // pred_fallthru
    _

</llo_original>
